<compile_context>
chip_gen: v5e
topology: v5e:2x2
jax: 0.10.0
libtpu: 0.0.40
codegen_flags: <defaults>
</compile_context>

<pallas_src>
import functools

import jax
import jax.numpy as jnp
from jax.experimental import pallas as pl
from jax.experimental.pallas import tpu as pltpu


# ---------------------------------------------------------------------------
# helpers
# ---------------------------------------------------------------------------
def _round_up(x, m):
    return (x + m - 1) // m * m


def _cdiv(a, b):
    return -(-a // b)


def _pad_to(a, shape):
    pads = [(0, s - d) for d, s in zip(a.shape, shape)]
    return jnp.pad(a, pads)


def _fold_bn(gamma, beta, mean, var, eps=1e-5):
    scale = gamma / jnp.sqrt(var + eps)
    bias = beta - mean * scale
    return scale.astype(jnp.float32), bias.astype(jnp.float32)


# ---------------------------------------------------------------------------
# fused bottleneck kernel
# ---------------------------------------------------------------------------
def _bottleneck_kernel(xp_ref, w1_ref, b1_ref, w2_ref, b2_ref, w3_ref, b3_ref,
                       o_ref, x_buf, h1_buf, acc_ref, dma_sem, *,
                       H, W, tile_h, wp_pad, cin_p, cmid_p, cout_p,
                       n_row_tiles, bot0):
    n = pl.program_id(0)
    t = pl.program_id(1)
    th2 = tile_h + 2
    mt = tile_h * W
    slot = t % 2

    def slab_copy(batch, tile, s):
        row0 = pl.multiple_of(tile * tile_h, tile_h)
        return pltpu.make_async_copy(xp_ref.at[batch, pl.ds(row0, th2)],
                                     x_buf.at[s], dma_sem.at[s])

    # ---- double-buffered halo slab DMA ------------------------------------
    @pl.when(t == 0)                       # prime: first row tile of this image
    def _():
        slab_copy(n, t, slot).start()

    if n_row_tiles > 1:                    # prefetch next row tile, other slot
        @pl.when(t + 1 < n_row_tiles)
        def _():
            slab_copy(n, t + 1, 1 - slot).start()

    slab_copy(n, t, slot).wait()

    # ---- conv1 (1x1, BN scale folded into w1) + bias + relu on the slab ----
    x2d = x_buf[slot].reshape(th2 * wp_pad, cin_p)
    y1 = jnp.dot(x2d, w1_ref[...], preferred_element_type=jnp.float32)
    y1 = jnp.maximum(y1 + b1_ref[...], 0.0)
    h1_buf[...] = y1.reshape(th2, wp_pad, cmid_p).astype(h1_buf.dtype)

    # conv2 needs h1 zero at the spatial padding; bias+relu made pad pixels
    # relu(b1) != 0.  Zero only the border columns / halo rows (no full-slab
    # iota mask).
    h1_buf[:, 0:1, :] = jnp.zeros((th2, 1, cmid_p), h1_buf.dtype)
    h1_buf[:, W + 1:, :] = jnp.zeros((th2, wp_pad - (W + 1), cmid_p),
                                     h1_buf.dtype)

    @pl.when(t == 0)                       # top halo row is zero padding
    def _():
        h1_buf[0:1, :, :] = jnp.zeros((1, wp_pad, cmid_p), h1_buf.dtype)

    @pl.when(t == n_row_tiles - 1)         # bottom halo / ragged-H pad rows
    def _():
        h1_buf[bot0:, :, :] = jnp.zeros((th2 - bot0, wp_pad, cmid_p),
                                        h1_buf.dtype)

    # ---- conv2 (3x3): 3 matmuls, kx taps packed along K, f32 VMEM acc ------
    def packed_window(ky):
        parts = [h1_buf[ky:ky + tile_h, kx:kx + W, :] for kx in range(3)]
        return jnp.concatenate(parts, axis=-1).reshape(mt, 3 * cmid_p)

    acc_ref[...] = jnp.dot(packed_window(0), w2_ref[0],
                           preferred_element_type=jnp.float32)
    acc_ref[...] += jnp.dot(packed_window(1), w2_ref[1],
                            preferred_element_type=jnp.float32)
    acc_ref[...] += jnp.dot(packed_window(2), w2_ref[2],
                            preferred_element_type=jnp.float32)
    h2 = jnp.maximum(acc_ref[...] + b2_ref[...], 0.0).astype(jnp.bfloat16)

    # ---- conv3 (1x1) + bias + residual add + relu ---------------------------
    res = x_buf[slot, 1:1 + tile_h, 1:1 + W, :].reshape(mt, cin_p)
    y3 = jnp.dot(h2, w3_ref[...], preferred_element_type=jnp.float32)
    out = jnp.maximum(y3 + b3_ref[...] + res.astype(jnp.float32), 0.0)
    o_ref[...] = out.reshape(1, tile_h, W, cout_p).astype(o_ref.dtype)


# ---------------------------------------------------------------------------
# wrapper: layout plumbing + parameter folding (plain JAX), single pallas_call
# ---------------------------------------------------------------------------
def bottleneck_forward(x_nchw, params, *, tile_h=None, eps=1e-5,
                       single_buffer_weights=True):
    N, Cin, H, W = x_nchw.shape
    cmid = params["conv1_w"].shape[0]
    cout = params["conv3_w"].shape[0]
    assert cout == Cin, ("stride=1 / downsample=None Bottleneck needs "
                         "inplanes == planes*4")

    cin_p = _round_up(Cin, 128)
    cmid_p = _round_up(cmid, 128)
    cout_p = _round_up(cout, 128)
    assert cout_p == cin_p
    wp_pad = _round_up(W + 2, 8)           # sublane-clean slab width

    # ---- VMEM budget / generation-aware tile height -------------------------
    try:
        vmem_cap = int(getattr(pltpu.get_tpu_info(), "vmem_capacity_bytes",
                               64 * 1024 * 1024))
    except Exception:
        vmem_cap = 64 * 1024 * 1024        # conservative (v7x per-TC size)

    def vmem_bytes(th):
        th2 = th + 2
        mt = th * W
        wbytes = (cin_p * cmid_p + 9 * cmid_p * cmid_p + cmid_p * cout_p) * 2
        if not single_buffer_weights:
            wbytes *= 2
        return (2 * th2 * wp_pad * cin_p * 2      # x slab (double buffered)
                + th2 * wp_pad * cmid_p * 2       # h1
                + mt * cmid_p * 4                 # conv2 f32 accumulator
                + 2 * mt * cout_p * 2             # output block (pipelined)
                + wbytes)

    budget = int(vmem_cap * 0.55)
    if tile_h is None:
        tile_h = _round_up(max(8, _cdiv(1024, W)), 8)   # M >= ~1024 for the MXU
        tile_h = min(tile_h, _round_up(H, 8))
        while tile_h > 8 and vmem_bytes(tile_h) > budget:
            tile_h -= 8
        if N * _cdiv(H, min(tile_h, H)) < 2 and H >= 2:
            tile_h = _cdiv(H, 2)                        # keep both v7x cores busy
    tile_h = max(1, min(tile_h, H))

    h_t = _round_up(H, tile_h)
    n_row_tiles = h_t // tile_h
    bot0 = H + 1 - (h_t - tile_h)          # first bottom pad row in last slab

    # ---- layout plumbing: NCHW f32 -> NHWC bf16, channel + halo padding ------
    x = jnp.transpose(x_nchw, (0, 2, 3, 1))
    x = _pad_to(x, (N, H, W, cin_p)).astype(jnp.bfloat16)
    xp = jnp.pad(x, ((0, 0), (1, h_t - H + 1), (1, wp_pad - W - 1), (0, 0)))

    # ---- fold BN scale into weight columns, biases stay f32 ------------------
    s1, b1 = _fold_bn(*params["bn1"], eps=eps)
    s2, b2 = _fold_bn(*params["bn2"], eps=eps)
    s3, b3 = _fold_bn(*params["bn3"], eps=eps)

    w1 = params["conv1_w"][:, :, 0, 0].T * s1[None, :]               # (Cin, Cmid)
    w1 = _pad_to(w1, (cin_p, cmid_p)).astype(jnp.bfloat16)

    # conv2: (O,I,3,3) -> (ky,kx,I,O), fold scale, pad channels, then pack the
    # 3 kx taps along K -> (3, 3*Cmid_p, Cmid_p)
    w2 = jnp.transpose(params["conv2_w"], (2, 3, 1, 0)) * s2
    w2 = _pad_to(w2, (3, 3, cmid_p, cmid_p)).astype(jnp.bfloat16)
    w2 = w2.reshape(3, 3 * cmid_p, cmid_p)

    w3 = params["conv3_w"][:, :, 0, 0].T * s3[None, :]               # (Cmid, Cout)
    w3 = _pad_to(w3, (cmid_p, cout_p)).astype(jnp.bfloat16)

    b1 = _pad_to(b1.reshape(1, -1), (1, cmid_p))
    b2 = _pad_to(b2.reshape(1, -1), (1, cmid_p))
    b3 = _pad_to(b3.reshape(1, -1), (1, cout_p))

    kernel = functools.partial(
        _bottleneck_kernel, H=H, W=W, tile_h=tile_h, wp_pad=wp_pad,
        cin_p=cin_p, cmid_p=cmid_p, cout_p=cout_p,
        n_row_tiles=n_row_tiles, bot0=bot0)

    def const_spec(shape):
        idx_map = lambda n, t: (0,) * len(shape)
        if single_buffer_weights:
            # constant index_map -> never re-fetched; one VMEM buffer is enough
            return pl.BlockSpec(shape, idx_map, pipeline_mode=pl.Buffered(1))
        return pl.BlockSpec(shape, idx_map)

    est = vmem_bytes(tile_h)
    vmem_limit = int(min(max(est * 3 // 2 + (8 << 20), 32 << 20),
                         int(vmem_cap * 0.85)))

    out = pl.pallas_call(
        kernel,
        out_shape=jax.ShapeDtypeStruct((N, h_t, W, cout_p), jnp.bfloat16),
        grid_spec=pltpu.PrefetchScalarGridSpec(
            num_scalar_prefetch=0,
            grid=(N, n_row_tiles),
            in_specs=[
                pl.BlockSpec(memory_space=pl.ANY),        # xp in HBM (manual DMA)
                const_spec((cin_p, cmid_p)),              # w1
                const_spec((1, cmid_p)),                  # b1
                const_spec((3, 3 * cmid_p, cmid_p)),      # w2 (kx packed on K)
                const_spec((1, cmid_p)),                  # b2
                const_spec((cmid_p, cout_p)),             # w3
                const_spec((1, cout_p)),                  # b3
            ],
            out_specs=pl.BlockSpec((1, tile_h, W, cout_p),
                                   lambda n, t: (n, t, 0, 0)),
            scratch_shapes=[
                pltpu.VMEM((2, tile_h + 2, wp_pad, cin_p), jnp.bfloat16),  # x slabs
                pltpu.VMEM((tile_h + 2, wp_pad, cmid_p), jnp.bfloat16),    # h1
                pltpu.VMEM((tile_h * W, cmid_p), jnp.float32),             # conv2 acc
                pltpu.SemaphoreType.DMA((2,)),
            ],
        ),
        compiler_params=pltpu.CompilerParams(
            # n is megacore-parallel; t must stay sequential on a core because
            # the slab-prefetch state machine crosses row-tile steps.
            dimension_semantics=("parallel", "arbitrary"),
            vmem_limit_bytes=vmem_limit,
        ),
    )(xp, w1, b1, w2, b2, w3, b3)

    out = out[:, :H, :, :cout].astype(jnp.float32)
    return jnp.transpose(out, (0, 3, 1, 2))                # back to NCHW


# ---------------------------------------------------------------------------
# pure-JAX reference (lax.conv, f32) for correctness checking
# ---------------------------------------------------------------------------
def reference_forward(x, params, eps=1e-5):
    def bn(y, g, b, m, v):
        g, b, m, v = (t[None, :, None, None] for t in (g, b, m, v))
        return (y - m) / jnp.sqrt(v + eps) * g + b

    def conv(y, w, pad):
        dn = jax.lax.conv_dimension_numbers(y.shape, w.shape, ("NCHW", "OIHW", "NCHW"))
        return jax.lax.conv_general_dilated(y, w, (1, 1), pad, dimension_numbers=dn)

    out = jax.nn.relu(bn(conv(x, params["conv1_w"], "VALID"), *params["bn1"]))
    out = jax.nn.relu(bn(conv(out, params["conv2_w"], ((1, 1), (1, 1))), *params["bn2"]))
    out = bn(conv(out, params["conv3_w"], "VALID"), *params["bn3"])
    return jax.nn.relu(out + x)


# ---------------------------------------------------------------------------
if __name__ == "__main__":
    key = jax.random.PRNGKey(0)
    keys = jax.random.split(key, 8)

    planes = 4
    inplanes = planes * 4          # downsample=None -> inplanes == planes*4
    N, H, W = 2, 16, 16

    def make_bn(k, c):
        k1, k2, k3, k4 = jax.random.split(k, 4)
        gamma = jax.random.uniform(k1, (c,), jnp.float32, 0.5, 1.5)
        beta = 0.1 * jax.random.normal(k2, (c,), jnp.float32)
        mean = 0.1 * jax.random.normal(k3, (c,), jnp.float32)
        var = jax.random.uniform(k4, (c,), jnp.float32, 0.5, 1.5)
        return (gamma, beta, mean, var)

    params = {
        "conv1_w": 0.1 * jax.random.normal(keys[1], (planes, inplanes, 1, 1), jnp.float32),
        "bn1": make_bn(keys[2], planes),
        "conv2_w": 0.1 * jax.random.normal(keys[3], (planes, planes, 3, 3), jnp.float32),
        "bn2": make_bn(keys[4], planes),
        "conv3_w": 0.1 * jax.random.normal(keys[5], (planes * 4, planes, 1, 1), jnp.float32),
        "bn3": make_bn(keys[6], planes * 4),
    }

    x = jax.random.normal(keys[0], (N, inplanes, H, W), jnp.float32)
    ref = reference_forward(x, params)

    def run(tile_h=None):
        try:
            fn = jax.jit(functools.partial(bottleneck_forward, tile_h=tile_h,
                                           single_buffer_weights=True))
            return jax.block_until_ready(fn(x, params))
        except Exception:
            # pl.Buffered(1) not supported on this jax build -> default buffering
            fn = jax.jit(functools.partial(bottleneck_forward, tile_h=tile_h,
                                           single_buffer_weights=False))
            return jax.block_until_ready(fn(x, params))

    # auto tile_h (one row tile per image) + a ragged multi-tile configuration
    # that exercises the double-buffered halo DMA and top/bottom border zeroing.
    for th in (None, 6):
        out = run(th)
        assert out.shape == (N, planes * 4, H, W)
        max_err = float(jnp.max(jnp.abs(out - ref)))
        # bf16 activations / bf16 output with f32 accumulation -> loose tolerance.
        assert bool(jnp.allclose(out, ref, rtol=3e-2, atol=3e-2)), \
            f"tile_h={th}: mismatch vs reference (max abs err {max_err})"

    print("KERNEL_OK")
</pallas_src>

<mosaic_0001>
module attributes {stable_mosaic.version = 11 : i64} {
  func.func @_bottleneck_kernel(%arg0: i32, %arg1: i32, %arg2: memref<2x18x24x128xbf16, #tpu.memory_space<any>>, %arg3: memref<128x128xbf16, #tpu.memory_space<vmem>>, %arg4: memref<1x128xf32, #tpu.memory_space<vmem>>, %arg5: memref<3x384x128xbf16, #tpu.memory_space<vmem>>, %arg6: memref<1x128xf32, #tpu.memory_space<vmem>>, %arg7: memref<128x128xbf16, #tpu.memory_space<vmem>>, %arg8: memref<1x128xf32, #tpu.memory_space<vmem>>, %arg9: memref<1x16x16x128xbf16, #tpu.memory_space<vmem>>, %arg10: memref<2x18x24x128xbf16, #tpu.memory_space<vmem>>, %arg11: memref<18x24x128xbf16, #tpu.memory_space<vmem>>, %arg12: memref<256x128xf32, #tpu.memory_space<vmem>>, %arg13: memref<2x!tpu.dma_semaphore, #tpu.memory_space<semaphore_mem>>) attributes {dimension_semantics = [#tpu.dimension_semantics<parallel>, #tpu.dimension_semantics<arbitrary>], iteration_bounds = array<i64: 2, 1>, scalar_prefetch = 0 : i64, scratch_operands = 4 : i64, tpu.core_type = #tpu.core_type<tc>, window_params = [{}, {pipeline_mode = #tpu.pipeline_mode<synchronous>, transform_indices = @transform_1, window_bounds = array<i64: 128, 128>}, {pipeline_mode = #tpu.pipeline_mode<synchronous>, transform_indices = @transform_2, window_bounds = array<i64: 1, 128>}, {pipeline_mode = #tpu.pipeline_mode<synchronous>, transform_indices = @transform_3, window_bounds = array<i64: 3, 384, 128>}, {pipeline_mode = #tpu.pipeline_mode<synchronous>, transform_indices = @transform_4, window_bounds = array<i64: 1, 128>}, {pipeline_mode = #tpu.pipeline_mode<synchronous>, transform_indices = @transform_5, window_bounds = array<i64: 128, 128>}, {pipeline_mode = #tpu.pipeline_mode<synchronous>, transform_indices = @transform_6, window_bounds = array<i64: 1, 128>}, {transform_indices = @transform_7, window_bounds = array<i64: 1, 16, 16, 128>}]} {
    %c2_i32 = arith.constant 2 : i32
    %c0_i32 = arith.constant 0 : i32
    %0 = arith.cmpi eq, %c2_i32, %c0_i32 : i32
    %c1_i32 = arith.constant 1 : i32
    %1 = arith.select %0, %c1_i32, %c2_i32 : i32
    %2 = arith.remsi %arg1, %1 : i32
    %c0_i32_0 = arith.constant 0 : i32
    %3 = arith.cmpi ne, %2, %c0_i32_0 : i32
    %c0_i32_1 = arith.constant 0 : i32
    %4 = arith.cmpi slt, %2, %c0_i32_1 : i32
    %c0_i32_2 = arith.constant 0 : i32
    %5 = arith.cmpi slt, %1, %c0_i32_2 : i32
    %6 = arith.xori %4, %5 : i1
    %7 = arith.andi %6, %3 : i1
    %8 = arith.addi %2, %1 : i32
    %9 = arith.select %7, %8, %2 : i32
    %c0_i32_3 = arith.constant 0 : i32
    %10 = arith.cmpi eq, %arg1, %c0_i32_3 : i32
    %11 = arith.extui %10 : i1 to i32
    %c0_i32_4 = arith.constant 0 : i32
    %12 = arith.cmpi ne, %11, %c0_i32_4 : i32
    scf.if %12 {
      %c16_i32_96 = arith.constant 16 : i32
      %99 = arith.muli %arg1, %c16_i32_96 : i32
      %100 = tpu.assume_multiple %99, 16 : i32
      %c0_i32_97 = arith.constant 0 : i32
      %c0_i32_98 = arith.constant 0 : i32
      %101 = tpu.memref_slice %arg2[%arg0, %100, %c0_i32_97, %c0_i32_98] : memref<2x18x24x128xbf16, #tpu.memory_space<any>> -> memref<1x18x24x128xbf16, #tpu.memory_space<any>>
      %102 = tpu.memref_squeeze %101 : memref<1x18x24x128xbf16, #tpu.memory_space<any>> -> memref<18x24x128xbf16, #tpu.memory_space<any>>
      %c0_i32_99 = arith.constant 0 : i32
      %c0_i32_100 = arith.constant 0 : i32
      %c0_i32_101 = arith.constant 0 : i32
      %103 = tpu.memref_slice %arg10[%9, %c0_i32_99, %c0_i32_100, %c0_i32_101] : memref<2x18x24x128xbf16, #tpu.memory_space<vmem>> -> memref<1x18x24x128xbf16, #tpu.memory_space<vmem>>
      %104 = tpu.memref_squeeze %103 : memref<1x18x24x128xbf16, #tpu.memory_space<vmem>> -> memref<18x24x128xbf16, #tpu.memory_space<vmem>>
      %105 = tpu.memref_slice %arg13[%9] : memref<2x!tpu.dma_semaphore, #tpu.memory_space<semaphore_mem>> -> memref<1x!tpu.dma_semaphore, #tpu.memory_space<semaphore_mem>>
      %106 = tpu.memref_squeeze %105 : memref<1x!tpu.dma_semaphore, #tpu.memory_space<semaphore_mem>> -> memref<!tpu.dma_semaphore, #tpu.memory_space<semaphore_mem>>
      tpu.enqueue_dma source(%102 : memref<18x24x128xbf16, #tpu.memory_space<any>>) target(%104 : memref<18x24x128xbf16, #tpu.memory_space<vmem>>) target_semaphore(%106 : memref<!tpu.dma_semaphore, #tpu.memory_space<semaphore_mem>>)
    } else {
    }
    %c16_i32 = arith.constant 16 : i32
    %13 = arith.muli %arg1, %c16_i32 : i32
    %14 = tpu.assume_multiple %13, 16 : i32
    %c0_i32_5 = arith.constant 0 : i32
    %c0_i32_6 = arith.constant 0 : i32
    %15 = tpu.memref_slice %arg2[%arg0, %14, %c0_i32_5, %c0_i32_6] : memref<2x18x24x128xbf16, #tpu.memory_space<any>> -> memref<1x18x24x128xbf16, #tpu.memory_space<any>>
    %16 = tpu.memref_squeeze %15 : memref<1x18x24x128xbf16, #tpu.memory_space<any>> -> memref<18x24x128xbf16, #tpu.memory_space<any>>
    %c0_i32_7 = arith.constant 0 : i32
    %c0_i32_8 = arith.constant 0 : i32
    %c0_i32_9 = arith.constant 0 : i32
    %17 = tpu.memref_slice %arg10[%9, %c0_i32_7, %c0_i32_8, %c0_i32_9] : memref<2x18x24x128xbf16, #tpu.memory_space<vmem>> -> memref<1x18x24x128xbf16, #tpu.memory_space<vmem>>
    %18 = tpu.memref_squeeze %17 : memref<1x18x24x128xbf16, #tpu.memory_space<vmem>> -> memref<18x24x128xbf16, #tpu.memory_space<vmem>>
    %19 = tpu.memref_slice %arg13[%9] : memref<2x!tpu.dma_semaphore, #tpu.memory_space<semaphore_mem>> -> memref<1x!tpu.dma_semaphore, #tpu.memory_space<semaphore_mem>>
    %20 = tpu.memref_squeeze %19 : memref<1x!tpu.dma_semaphore, #tpu.memory_space<semaphore_mem>> -> memref<!tpu.dma_semaphore, #tpu.memory_space<semaphore_mem>>
    tpu.wait_dma2 semaphore(%20 : memref<!tpu.dma_semaphore, #tpu.memory_space<semaphore_mem>>) src(%16 : memref<18x24x128xbf16, #tpu.memory_space<any>>) dst(%18 : memref<18x24x128xbf16, #tpu.memory_space<vmem>>)
    %21 = arith.index_cast %9 : i32 to index
    %c0 = arith.constant 0 : index
    %c0_10 = arith.constant 0 : index
    %c0_11 = arith.constant 0 : index
    %22 = vector.load %arg10[%21, %c0, %c0_10, %c0_11] : memref<2x18x24x128xbf16, #tpu.memory_space<vmem>>, vector<1x18x24x128xbf16>
    %23 = vector.shape_cast %22 : vector<1x18x24x128xbf16> to vector<18x24x128xbf16>
    %24 = vector.shape_cast %23 : vector<18x24x128xbf16> to vector<432x128xbf16>
    %c0_12 = arith.constant 0 : index
    %c0_13 = arith.constant 0 : index
    %25 = vector.load %arg3[%c0_12, %c0_13] : memref<128x128xbf16, #tpu.memory_space<vmem>>, vector<128x128xbf16>
    %cst = arith.constant dense<0.000000e+00> : vector<432x128xf32>
    %26 = tpu.matmul %24, %25, %cst {dimension_numbers = #tpu.dot_dimension_numbers<[1], [0], [0], [1], [0, 0, 1, 1], [], []>} : vector<432x128xbf16>, vector<128x128xbf16>, vector<432x128xf32> -> vector<432x128xf32>
    %c0_14 = arith.constant 0 : index
    %c0_15 = arith.constant 0 : index
    %27 = vector.load %arg4[%c0_14, %c0_15] : memref<1x128xf32, #tpu.memory_space<vmem>>, vector<1x128xf32>
    %28 = vector.broadcast %27 : vector<1x128xf32> to vector<432x128xf32>
    %29 = arith.addf %26, %28 : vector<432x128xf32>
    %cst_16 = arith.constant 0.000000e+00 : f32
    %30 = vector.broadcast %cst_16 : f32 to vector<432x128xf32>
    %31 = arith.maximumf %29, %30 : vector<432x128xf32>
    %32 = vector.shape_cast %31 : vector<432x128xf32> to vector<18x24x128xf32>
    %33 = arith.truncf %32 : vector<18x24x128xf32> to vector<18x24x128xbf16>
    %c0_17 = arith.constant 0 : index
    %c0_18 = arith.constant 0 : index
    %c0_19 = arith.constant 0 : index
    %34 = vector.load %arg11[%c0_17, %c0_18, %c0_19] : memref<18x24x128xbf16, #tpu.memory_space<vmem>>, vector<18x24x128xbf16>
    tpu.vector_store %arg11[%c0_17, %c0_18, %c0_19], %33 {strides = array<i32>} : memref<18x24x128xbf16, #tpu.memory_space<vmem>>, vector<18x24x128xbf16>,
    %cst_20 = arith.constant 0.000000e+00 : bf16
    %35 = vector.broadcast %cst_20 : bf16 to vector<18x1x128xbf16>
    %c0_21 = arith.constant 0 : index
    %c0_22 = arith.constant 0 : index
    %c0_23 = arith.constant 0 : index
    %36 = vector.load %arg11[%c0_21, %c0_22, %c0_23] : memref<18x24x128xbf16, #tpu.memory_space<vmem>>, vector<18x1x128xbf16>
    tpu.vector_store %arg11[%c0_21, %c0_22, %c0_23], %35 {strides = array<i32>} : memref<18x24x128xbf16, #tpu.memory_space<vmem>>, vector<18x1x128xbf16>,
    %cst_24 = arith.constant 0.000000e+00 : bf16
    %37 = vector.broadcast %cst_24 : bf16 to vector<18x7x128xbf16>
    %c0_25 = arith.constant 0 : index
    %c17 = arith.constant 17 : index
    %c0_26 = arith.constant 0 : index
    %38 = vector.load %arg11[%c0_25, %c17, %c0_26] : memref<18x24x128xbf16, #tpu.memory_space<vmem>>, vector<18x7x128xbf16>
    tpu.vector_store %arg11[%c0_25, %c17, %c0_26], %37 {strides = array<i32>} : memref<18x24x128xbf16, #tpu.memory_space<vmem>>, vector<18x7x128xbf16>,
    %c0_i32_27 = arith.constant 0 : i32
    %39 = arith.cmpi eq, %arg1, %c0_i32_27 : i32
    %40 = arith.extui %39 : i1 to i32
    %c0_i32_28 = arith.constant 0 : i32
    %41 = arith.cmpi ne, %40, %c0_i32_28 : i32
    scf.if %41 {
      %cst_96 = arith.constant 0.000000e+00 : bf16
      %99 = vector.broadcast %cst_96 : bf16 to vector<1x24x128xbf16>
      %c0_97 = arith.constant 0 : index
      %c0_98 = arith.constant 0 : index
      %c0_99 = arith.constant 0 : index
      %100 = vector.load %arg11[%c0_97, %c0_98, %c0_99] : memref<18x24x128xbf16, #tpu.memory_space<vmem>>, vector<1x24x128xbf16>
      tpu.vector_store %arg11[%c0_97, %c0_98, %c0_99], %99 {strides = array<i32>} : memref<18x24x128xbf16, #tpu.memory_space<vmem>>, vector<1x24x128xbf16>,
    } else {
    }
    %c0_i32_29 = arith.constant 0 : i32
    %42 = arith.cmpi eq, %arg1, %c0_i32_29 : i32
    %43 = arith.extui %42 : i1 to i32
    %c0_i32_30 = arith.constant 0 : i32
    %44 = arith.cmpi ne, %43, %c0_i32_30 : i32
    scf.if %44 {
      %cst_96 = arith.constant 0.000000e+00 : bf16
      %99 = vector.broadcast %cst_96 : bf16 to vector<1x24x128xbf16>
      %c17_97 = arith.constant 17 : index
      %c0_98 = arith.constant 0 : index
      %c0_99 = arith.constant 0 : index
      %100 = vector.load %arg11[%c17_97, %c0_98, %c0_99] : memref<18x24x128xbf16, #tpu.memory_space<vmem>>, vector<1x24x128xbf16>
      tpu.vector_store %arg11[%c17_97, %c0_98, %c0_99], %99 {strides = array<i32>} : memref<18x24x128xbf16, #tpu.memory_space<vmem>>, vector<1x24x128xbf16>,
    } else {
    }
    %c0_31 = arith.constant 0 : index
    %c0_32 = arith.constant 0 : index
    %c0_33 = arith.constant 0 : index
    %45 = vector.load %arg11[%c0_31, %c0_32, %c0_33] : memref<18x24x128xbf16, #tpu.memory_space<vmem>>, vector<16x16x128xbf16>
    %c0_34 = arith.constant 0 : index
    %c1 = arith.constant 1 : index
    %c0_35 = arith.constant 0 : index
    %46 = vector.load %arg11[%c0_34, %c1, %c0_35] : memref<18x24x128xbf16, #tpu.memory_space<vmem>>, vector<16x16x128xbf16>
    %c0_36 = arith.constant 0 : index
    %c2 = arith.constant 2 : index
    %c0_37 = arith.constant 0 : index
    %47 = vector.load %arg11[%c0_36, %c2, %c0_37] : memref<18x24x128xbf16, #tpu.memory_space<vmem>>, vector<16x16x128xbf16>
    %48 = tpu.concatenate %45, %46, %47 in 2 : vector<16x16x128xbf16>, vector<16x16x128xbf16>, vector<16x16x128xbf16> -> vector<16x16x384xbf16>
    %49 = vector.shape_cast %48 : vector<16x16x384xbf16> to vector<256x384xbf16>
    %c0_38 = arith.constant 0 : index
    %c0_39 = arith.constant 0 : index
    %c0_40 = arith.constant 0 : index
    %50 = vector.load %arg5[%c0_38, %c0_39, %c0_40] : memref<3x384x128xbf16, #tpu.memory_space<vmem>>, vector<1x384x128xbf16>
    %51 = vector.shape_cast %50 : vector<1x384x128xbf16> to vector<384x128xbf16>
    %cst_41 = arith.constant dense<0.000000e+00> : vector<256x128xf32>
    %52 = tpu.matmul %49, %51, %cst_41 {dimension_numbers = #tpu.dot_dimension_numbers<[1], [0], [0], [1], [0, 0, 1, 1], [], []>} : vector<256x384xbf16>, vector<384x128xbf16>, vector<256x128xf32> -> vector<256x128xf32>
    %c0_42 = arith.constant 0 : index
    %c0_43 = arith.constant 0 : index
    %53 = vector.load %arg12[%c0_42, %c0_43] : memref<256x128xf32, #tpu.memory_space<vmem>>, vector<256x128xf32>
    tpu.vector_store %arg12[%c0_42, %c0_43], %52 {strides = array<i32>} : memref<256x128xf32, #tpu.memory_space<vmem>>, vector<256x128xf32>,
    %c0_44 = arith.constant 0 : index
    %c0_45 = arith.constant 0 : index
    %54 = vector.load %arg12[%c0_44, %c0_45] : memref<256x128xf32, #tpu.memory_space<vmem>>, vector<256x128xf32>
    %c1_46 = arith.constant 1 : index
    %c0_47 = arith.constant 0 : index
    %c0_48 = arith.constant 0 : index
    %55 = vector.load %arg11[%c1_46, %c0_47, %c0_48] : memref<18x24x128xbf16, #tpu.memory_space<vmem>>, vector<16x16x128xbf16>
    %c1_49 = arith.constant 1 : index
    %c1_50 = arith.constant 1 : index
    %c0_51 = arith.constant 0 : index
    %56 = vector.load %arg11[%c1_49, %c1_50, %c0_51] : memref<18x24x128xbf16, #tpu.memory_space<vmem>>, vector<16x16x128xbf16>
    %c1_52 = arith.constant 1 : index
    %c2_53 = arith.constant 2 : index
    %c0_54 = arith.constant 0 : index
    %57 = vector.load %arg11[%c1_52, %c2_53, %c0_54] : memref<18x24x128xbf16, #tpu.memory_space<vmem>>, vector<16x16x128xbf16>
    %58 = tpu.concatenate %55, %56, %57 in 2 : vector<16x16x128xbf16>, vector<16x16x128xbf16>, vector<16x16x128xbf16> -> vector<16x16x384xbf16>
    %59 = vector.shape_cast %58 : vector<16x16x384xbf16> to vector<256x384xbf16>
    %c1_55 = arith.constant 1 : index
    %c0_56 = arith.constant 0 : index
    %c0_57 = arith.constant 0 : index
    %60 = vector.load %arg5[%c1_55, %c0_56, %c0_57] : memref<3x384x128xbf16, #tpu.memory_space<vmem>>, vector<1x384x128xbf16>
    %61 = vector.shape_cast %60 : vector<1x384x128xbf16> to vector<384x128xbf16>
    %cst_58 = arith.constant dense<0.000000e+00> : vector<256x128xf32>
    %62 = tpu.matmul %59, %61, %cst_58 {dimension_numbers = #tpu.dot_dimension_numbers<[1], [0], [0], [1], [0, 0, 1, 1], [], []>} : vector<256x384xbf16>, vector<384x128xbf16>, vector<256x128xf32> -> vector<256x128xf32>
    %63 = arith.addf %54, %62 : vector<256x128xf32>
    %c0_59 = arith.constant 0 : index
    %c0_60 = arith.constant 0 : index
    %64 = vector.load %arg12[%c0_59, %c0_60] : memref<256x128xf32, #tpu.memory_space<vmem>>, vector<256x128xf32>
    tpu.vector_store %arg12[%c0_59, %c0_60], %63 {strides = array<i32>} : memref<256x128xf32, #tpu.memory_space<vmem>>, vector<256x128xf32>,
    %c0_61 = arith.constant 0 : index
    %c0_62 = arith.constant 0 : index
    %65 = vector.load %arg12[%c0_61, %c0_62] : memref<256x128xf32, #tpu.memory_space<vmem>>, vector<256x128xf32>
    %c2_63 = arith.constant 2 : index
    %c0_64 = arith.constant 0 : index
    %c0_65 = arith.constant 0 : index
    %66 = vector.load %arg11[%c2_63, %c0_64, %c0_65] : memref<18x24x128xbf16, #tpu.memory_space<vmem>>, vector<16x16x128xbf16>
    %c2_66 = arith.constant 2 : index
    %c1_67 = arith.constant 1 : index
    %c0_68 = arith.constant 0 : index
    %67 = vector.load %arg11[%c2_66, %c1_67, %c0_68] : memref<18x24x128xbf16, #tpu.memory_space<vmem>>, vector<16x16x128xbf16>
    %c2_69 = arith.constant 2 : index
    %c2_70 = arith.constant 2 : index
    %c0_71 = arith.constant 0 : index
    %68 = vector.load %arg11[%c2_69, %c2_70, %c0_71] : memref<18x24x128xbf16, #tpu.memory_space<vmem>>, vector<16x16x128xbf16>
    %69 = tpu.concatenate %66, %67, %68 in 2 : vector<16x16x128xbf16>, vector<16x16x128xbf16>, vector<16x16x128xbf16> -> vector<16x16x384xbf16>
    %70 = vector.shape_cast %69 : vector<16x16x384xbf16> to vector<256x384xbf16>
    %c2_72 = arith.constant 2 : index
    %c0_73 = arith.constant 0 : index
    %c0_74 = arith.constant 0 : index
    %71 = vector.load %arg5[%c2_72, %c0_73, %c0_74] : memref<3x384x128xbf16, #tpu.memory_space<vmem>>, vector<1x384x128xbf16>
    %72 = vector.shape_cast %71 : vector<1x384x128xbf16> to vector<384x128xbf16>
    %cst_75 = arith.constant dense<0.000000e+00> : vector<256x128xf32>
    %73 = tpu.matmul %70, %72, %cst_75 {dimension_numbers = #tpu.dot_dimension_numbers<[1], [0], [0], [1], [0, 0, 1, 1], [], []>} : vector<256x384xbf16>, vector<384x128xbf16>, vector<256x128xf32> -> vector<256x128xf32>
    %74 = arith.addf %65, %73 : vector<256x128xf32>
    %c0_76 = arith.constant 0 : index
    %c0_77 = arith.constant 0 : index
    %75 = vector.load %arg12[%c0_76, %c0_77] : memref<256x128xf32, #tpu.memory_space<vmem>>, vector<256x128xf32>
    tpu.vector_store %arg12[%c0_76, %c0_77], %74 {strides = array<i32>} : memref<256x128xf32, #tpu.memory_space<vmem>>, vector<256x128xf32>,
    %c0_78 = arith.constant 0 : index
    %c0_79 = arith.constant 0 : index
    %76 = vector.load %arg12[%c0_78, %c0_79] : memref<256x128xf32, #tpu.memory_space<vmem>>, vector<256x128xf32>
    %c0_80 = arith.constant 0 : index
    %c0_81 = arith.constant 0 : index
    %77 = vector.load %arg6[%c0_80, %c0_81] : memref<1x128xf32, #tpu.memory_space<vmem>>, vector<1x128xf32>
    %78 = vector.broadcast %77 : vector<1x128xf32> to vector<256x128xf32>
    %79 = arith.addf %76, %78 : vector<256x128xf32>
    %cst_82 = arith.constant 0.000000e+00 : f32
    %80 = vector.broadcast %cst_82 : f32 to vector<256x128xf32>
    %81 = arith.maximumf %79, %80 : vector<256x128xf32>
    %82 = arith.truncf %81 : vector<256x128xf32> to vector<256x128xbf16>
    %83 = arith.index_cast %9 : i32 to index
    %c1_83 = arith.constant 1 : index
    %c1_84 = arith.constant 1 : index
    %c0_85 = arith.constant 0 : index
    %84 = vector.load %arg10[%83, %c1_83, %c1_84, %c0_85] : memref<2x18x24x128xbf16, #tpu.memory_space<vmem>>, vector<1x16x16x128xbf16>
    %85 = vector.shape_cast %84 : vector<1x16x16x128xbf16> to vector<16x16x128xbf16>
    %86 = vector.shape_cast %85 : vector<16x16x128xbf16> to vector<256x128xbf16>
    %c0_86 = arith.constant 0 : index
    %c0_87 = arith.constant 0 : index
    %87 = vector.load %arg7[%c0_86, %c0_87] : memref<128x128xbf16, #tpu.memory_space<vmem>>, vector<128x128xbf16>
    %cst_88 = arith.constant dense<0.000000e+00> : vector<256x128xf32>
    %88 = tpu.matmul %82, %87, %cst_88 {dimension_numbers = #tpu.dot_dimension_numbers<[1], [0], [0], [1], [0, 0, 1, 1], [], []>} : vector<256x128xbf16>, vector<128x128xbf16>, vector<256x128xf32> -> vector<256x128xf32>
    %c0_89 = arith.constant 0 : index
    %c0_90 = arith.constant 0 : index
    %89 = vector.load %arg8[%c0_89, %c0_90] : memref<1x128xf32, #tpu.memory_space<vmem>>, vector<1x128xf32>
    %90 = vector.broadcast %89 : vector<1x128xf32> to vector<256x128xf32>
    %91 = arith.addf %88, %90 : vector<256x128xf32>
    %92 = arith.extf %86 : vector<256x128xbf16> to vector<256x128xf32>
    %93 = arith.addf %91, %92 : vector<256x128xf32>
    %cst_91 = arith.constant 0.000000e+00 : f32
    %94 = vector.broadcast %cst_91 : f32 to vector<256x128xf32>
    %95 = arith.maximumf %93, %94 : vector<256x128xf32>
    %96 = vector.shape_cast %95 : vector<256x128xf32> to vector<1x16x16x128xf32>
    %97 = arith.truncf %96 : vector<1x16x16x128xf32> to vector<1x16x16x128xbf16>
    %c0_92 = arith.constant 0 : index
    %c0_93 = arith.constant 0 : index
    %c0_94 = arith.constant 0 : index
    %c0_95 = arith.constant 0 : index
    %98 = vector.load %arg9[%c0_92, %c0_93, %c0_94, %c0_95] : memref<1x16x16x128xbf16, #tpu.memory_space<vmem>>, vector<1x16x16x128xbf16>
    tpu.vector_store %arg9[%c0_92, %c0_93, %c0_94, %c0_95], %97 {strides = array<i32>} : memref<1x16x16x128xbf16, #tpu.memory_space<vmem>>, vector<1x16x16x128xbf16>,
    return
  }
  func.func @transform_1(%arg0: i32, %arg1: i32) -> (i32, i32) {
    %c0_i32 = arith.constant 0 : i32
    %c0_i32_0 = arith.constant 0 : i32
    %c0_i32_1 = arith.constant 0 : i32
    return %c0_i32, %c0_i32_0 : i32, i32
  }
  func.func @transform_2(%arg0: i32, %arg1: i32) -> (i32, i32) {
    %c0_i32 = arith.constant 0 : i32
    %c0_i32_0 = arith.constant 0 : i32
    %c0_i32_1 = arith.constant 0 : i32
    return %c0_i32, %c0_i32_0 : i32, i32
  }
  func.func @transform_3(%arg0: i32, %arg1: i32) -> (i32, i32, i32) {
    %c0_i32 = arith.constant 0 : i32
    %c0_i32_0 = arith.constant 0 : i32
    %c0_i32_1 = arith.constant 0 : i32
    %c0_i32_2 = arith.constant 0 : i32
    return %c0_i32, %c0_i32_0, %c0_i32_1 : i32, i32, i32
  }
  func.func @transform_4(%arg0: i32, %arg1: i32) -> (i32, i32) {
    %c0_i32 = arith.constant 0 : i32
    %c0_i32_0 = arith.constant 0 : i32
    %c0_i32_1 = arith.constant 0 : i32
    return %c0_i32, %c0_i32_0 : i32, i32
  }
  func.func @transform_5(%arg0: i32, %arg1: i32) -> (i32, i32) {
    %c0_i32 = arith.constant 0 : i32
    %c0_i32_0 = arith.constant 0 : i32
    %c0_i32_1 = arith.constant 0 : i32
    return %c0_i32, %c0_i32_0 : i32, i32
  }
  func.func @transform_6(%arg0: i32, %arg1: i32) -> (i32, i32) {
    %c0_i32 = arith.constant 0 : i32
    %c0_i32_0 = arith.constant 0 : i32
    %c0_i32_1 = arith.constant 0 : i32
    return %c0_i32, %c0_i32_0 : i32, i32
  }
  func.func @transform_7(%arg0: i32, %arg1: i32) -> (i32, i32, i32, i32) {
    %c0_i32 = arith.constant 0 : i32
    %c0_i32_0 = arith.constant 0 : i32
    %c0_i32_1 = arith.constant 0 : i32
    return %arg0, %arg1, %c0_i32, %c0_i32_0 : i32, i32, i32, i32
  }
}

module attributes {stable_mosaic.version = 11 : i64} {
  func.func @_bottleneck_kernel(%arg0: i32, %arg1: i32, %arg2: memref<2x18x24x128xbf16, #tpu.memory_space<any>>, %arg3: memref<128x128xbf16, #tpu.memory_space<vmem>>, %arg4: memref<1x128xf32, #tpu.memory_space<vmem>>, %arg5: memref<3x384x128xbf16, #tpu.memory_space<vmem>>, %arg6: memref<1x128xf32, #tpu.memory_space<vmem>>, %arg7: memref<128x128xbf16, #tpu.memory_space<vmem>>, %arg8: memref<1x128xf32, #tpu.memory_space<vmem>>, %arg9: memref<1x16x16x128xbf16, #tpu.memory_space<vmem>>, %arg10: memref<2x18x24x128xbf16, #tpu.memory_space<vmem>>, %arg11: memref<18x24x128xbf16, #tpu.memory_space<vmem>>, %arg12: memref<256x128xf32, #tpu.memory_space<vmem>>, %arg13: memref<2x!tpu.dma_semaphore, #tpu.memory_space<semaphore_mem>>) attributes {dimension_semantics = [#tpu.dimension_semantics<parallel>, #tpu.dimension_semantics<arbitrary>], iteration_bounds = array<i64: 2, 1>, scalar_prefetch = 0 : i64, scratch_operands = 4 : i64, tpu.core_type = #tpu.core_type<tc>, window_params = [{}, {pipeline_mode = #tpu.pipeline_mode<synchronous>, transform_indices = @transform_1, window_bounds = array<i64: 128, 128>}, {pipeline_mode = #tpu.pipeline_mode<synchronous>, transform_indices = @transform_2, window_bounds = array<i64: 1, 128>}, {pipeline_mode = #tpu.pipeline_mode<synchronous>, transform_indices = @transform_3, window_bounds = array<i64: 3, 384, 128>}, {pipeline_mode = #tpu.pipeline_mode<synchronous>, transform_indices = @transform_4, window_bounds = array<i64: 1, 128>}, {pipeline_mode = #tpu.pipeline_mode<synchronous>, transform_indices = @transform_5, window_bounds = array<i64: 128, 128>}, {pipeline_mode = #tpu.pipeline_mode<synchronous>, transform_indices = @transform_6, window_bounds = array<i64: 1, 128>}, {transform_indices = @transform_7, window_bounds = array<i64: 1, 16, 16, 128>}]} {
    %c2_i32 = arith.constant 2 : i32
    %c0_i32 = arith.constant 0 : i32
    %0 = arith.cmpi eq, %c2_i32, %c0_i32 : i32
    %c1_i32 = arith.constant 1 : i32
    %1 = arith.select %0, %c1_i32, %c2_i32 : i32
    %2 = arith.remsi %arg1, %1 : i32
    %c0_i32_0 = arith.constant 0 : i32
    %3 = arith.cmpi ne, %2, %c0_i32_0 : i32
    %c0_i32_1 = arith.constant 0 : i32
    %4 = arith.cmpi slt, %2, %c0_i32_1 : i32
    %c0_i32_2 = arith.constant 0 : i32
    %5 = arith.cmpi slt, %1, %c0_i32_2 : i32
    %6 = arith.xori %4, %5 : i1
    %7 = arith.andi %6, %3 : i1
    %8 = arith.addi %2, %1 : i32
    %9 = arith.select %7, %8, %2 : i32
    %c0_i32_3 = arith.constant 0 : i32
    %10 = arith.cmpi eq, %arg1, %c0_i32_3 : i32
    %11 = arith.extui %10 : i1 to i32
    %c0_i32_4 = arith.constant 0 : i32
    %12 = arith.cmpi ne, %11, %c0_i32_4 : i32
    scf.if %12 {
      %c16_i32_96 = arith.constant 16 : i32
      %99 = arith.muli %arg1, %c16_i32_96 : i32
      %100 = tpu.assume_multiple %99, 16 : i32
      %c0_i32_97 = arith.constant 0 : i32
      %c0_i32_98 = arith.constant 0 : i32
      %101 = tpu.memref_slice %arg2[%arg0, %100, %c0_i32_97, %c0_i32_98] : memref<2x18x24x128xbf16, #tpu.memory_space<any>> -> memref<1x18x24x128xbf16, #tpu.memory_space<any>>
      %102 = tpu.memref_squeeze %101 : memref<1x18x24x128xbf16, #tpu.memory_space<any>> -> memref<18x24x128xbf16, #tpu.memory_space<any>>
      %c0_i32_99 = arith.constant 0 : i32
      %c0_i32_100 = arith.constant 0 : i32
      %c0_i32_101 = arith.constant 0 : i32
      %103 = tpu.memref_slice %arg10[%9, %c0_i32_99, %c0_i32_100, %c0_i32_101] : memref<2x18x24x128xbf16, #tpu.memory_space<vmem>> -> memref<1x18x24x128xbf16, #tpu.memory_space<vmem>>
      %104 = tpu.memref_squeeze %103 : memref<1x18x24x128xbf16, #tpu.memory_space<vmem>> -> memref<18x24x128xbf16, #tpu.memory_space<vmem>>
      %105 = tpu.memref_slice %arg13[%9] : memref<2x!tpu.dma_semaphore, #tpu.memory_space<semaphore_mem>> -> memref<1x!tpu.dma_semaphore, #tpu.memory_space<semaphore_mem>>
      %106 = tpu.memref_squeeze %105 : memref<1x!tpu.dma_semaphore, #tpu.memory_space<semaphore_mem>> -> memref<!tpu.dma_semaphore, #tpu.memory_space<semaphore_mem>>
      tpu.enqueue_dma source(%102 : memref<18x24x128xbf16, #tpu.memory_space<any>>) target(%104 : memref<18x24x128xbf16, #tpu.memory_space<vmem>>) target_semaphore(%106 : memref<!tpu.dma_semaphore, #tpu.memory_space<semaphore_mem>>)
    } else {
    }
    %c16_i32 = arith.constant 16 : i32
    %13 = arith.muli %arg1, %c16_i32 : i32
    %14 = tpu.assume_multiple %13, 16 : i32
    %c0_i32_5 = arith.constant 0 : i32
    %c0_i32_6 = arith.constant 0 : i32
    %15 = tpu.memref_slice %arg2[%arg0, %14, %c0_i32_5, %c0_i32_6] : memref<2x18x24x128xbf16, #tpu.memory_space<any>> -> memref<1x18x24x128xbf16, #tpu.memory_space<any>>
    %16 = tpu.memref_squeeze %15 : memref<1x18x24x128xbf16, #tpu.memory_space<any>> -> memref<18x24x128xbf16, #tpu.memory_space<any>>
    %c0_i32_7 = arith.constant 0 : i32
    %c0_i32_8 = arith.constant 0 : i32
    %c0_i32_9 = arith.constant 0 : i32
    %17 = tpu.memref_slice %arg10[%9, %c0_i32_7, %c0_i32_8, %c0_i32_9] : memref<2x18x24x128xbf16, #tpu.memory_space<vmem>> -> memref<1x18x24x128xbf16, #tpu.memory_space<vmem>>
    %18 = tpu.memref_squeeze %17 : memref<1x18x24x128xbf16, #tpu.memory_space<vmem>> -> memref<18x24x128xbf16, #tpu.memory_space<vmem>>
    %19 = tpu.memref_slice %arg13[%9] : memref<2x!tpu.dma_semaphore, #tpu.memory_space<semaphore_mem>> -> memref<1x!tpu.dma_semaphore, #tpu.memory_space<semaphore_mem>>
    %20 = tpu.memref_squeeze %19 : memref<1x!tpu.dma_semaphore, #tpu.memory_space<semaphore_mem>> -> memref<!tpu.dma_semaphore, #tpu.memory_space<semaphore_mem>>
    tpu.wait_dma2 semaphore(%20 : memref<!tpu.dma_semaphore, #tpu.memory_space<semaphore_mem>>) src(%16 : memref<18x24x128xbf16, #tpu.memory_space<any>>) dst(%18 : memref<18x24x128xbf16, #tpu.memory_space<vmem>>)
    %21 = arith.index_cast %9 : i32 to index
    %c0 = arith.constant 0 : index
    %c0_10 = arith.constant 0 : index
    %c0_11 = arith.constant 0 : index
    %22 = vector.load %arg10[%21, %c0, %c0_10, %c0_11] : memref<2x18x24x128xbf16, #tpu.memory_space<vmem>>, vector<1x18x24x128xbf16>
    %23 = vector.shape_cast %22 : vector<1x18x24x128xbf16> to vector<18x24x128xbf16>
    %24 = vector.shape_cast %23 : vector<18x24x128xbf16> to vector<432x128xbf16>
    %c0_12 = arith.constant 0 : index
    %c0_13 = arith.constant 0 : index
    %25 = vector.load %arg3[%c0_12, %c0_13] : memref<128x128xbf16, #tpu.memory_space<vmem>>, vector<128x128xbf16>
    %cst = arith.constant dense<0.000000e+00> : vector<432x128xf32>
    %26 = tpu.matmul %24, %25, %cst {dimension_numbers = #tpu.dot_dimension_numbers<[1], [0], [0], [1], [0, 0, 1, 1], [], []>} : vector<432x128xbf16>, vector<128x128xbf16>, vector<432x128xf32> -> vector<432x128xf32>
    %c0_14 = arith.constant 0 : index
    %c0_15 = arith.constant 0 : index
    %27 = vector.load %arg4[%c0_14, %c0_15] : memref<1x128xf32, #tpu.memory_space<vmem>>, vector<1x128xf32>
    %28 = vector.broadcast %27 : vector<1x128xf32> to vector<432x128xf32>
    %29 = arith.addf %26, %28 : vector<432x128xf32>
    %cst_16 = arith.constant 0.000000e+00 : f32
    %30 = vector.broadcast %cst_16 : f32 to vector<432x128xf32>
    %31 = arith.maximumf %29, %30 : vector<432x128xf32>
    %32 = vector.shape_cast %31 : vector<432x128xf32> to vector<18x24x128xf32>
    %33 = arith.truncf %32 : vector<18x24x128xf32> to vector<18x24x128xbf16>
    %c0_17 = arith.constant 0 : index
    %c0_18 = arith.constant 0 : index
    %c0_19 = arith.constant 0 : index
    %34 = vector.load %arg11[%c0_17, %c0_18, %c0_19] : memref<18x24x128xbf16, #tpu.memory_space<vmem>>, vector<18x24x128xbf16>
    tpu.vector_store %arg11[%c0_17, %c0_18, %c0_19], %33 {strides = array<i32>} : memref<18x24x128xbf16, #tpu.memory_space<vmem>>, vector<18x24x128xbf16>,
    %cst_20 = arith.constant 0.000000e+00 : bf16
    %35 = vector.broadcast %cst_20 : bf16 to vector<18x1x128xbf16>
    %c0_21 = arith.constant 0 : index
    %c0_22 = arith.constant 0 : index
    %c0_23 = arith.constant 0 : index
    %36 = vector.load %arg11[%c0_21, %c0_22, %c0_23] : memref<18x24x128xbf16, #tpu.memory_space<vmem>>, vector<18x1x128xbf16>
    tpu.vector_store %arg11[%c0_21, %c0_22, %c0_23], %35 {strides = array<i32>} : memref<18x24x128xbf16, #tpu.memory_space<vmem>>, vector<18x1x128xbf16>,
    %cst_24 = arith.constant 0.000000e+00 : bf16
    %37 = vector.broadcast %cst_24 : bf16 to vector<18x7x128xbf16>
    %c0_25 = arith.constant 0 : index
    %c17 = arith.constant 17 : index
    %c0_26 = arith.constant 0 : index
    %38 = vector.load %arg11[%c0_25, %c17, %c0_26] : memref<18x24x128xbf16, #tpu.memory_space<vmem>>, vector<18x7x128xbf16>
    tpu.vector_store %arg11[%c0_25, %c17, %c0_26], %37 {strides = array<i32>} : memref<18x24x128xbf16, #tpu.memory_space<vmem>>, vector<18x7x128xbf16>,
    %c0_i32_27 = arith.constant 0 : i32
    %39 = arith.cmpi eq, %arg1, %c0_i32_27 : i32
    %40 = arith.extui %39 : i1 to i32
    %c0_i32_28 = arith.constant 0 : i32
    %41 = arith.cmpi ne, %40, %c0_i32_28 : i32
    scf.if %41 {
      %cst_96 = arith.constant 0.000000e+00 : bf16
      %99 = vector.broadcast %cst_96 : bf16 to vector<1x24x128xbf16>
      %c0_97 = arith.constant 0 : index
      %c0_98 = arith.constant 0 : index
      %c0_99 = arith.constant 0 : index
      %100 = vector.load %arg11[%c0_97, %c0_98, %c0_99] : memref<18x24x128xbf16, #tpu.memory_space<vmem>>, vector<1x24x128xbf16>
      tpu.vector_store %arg11[%c0_97, %c0_98, %c0_99], %99 {strides = array<i32>} : memref<18x24x128xbf16, #tpu.memory_space<vmem>>, vector<1x24x128xbf16>,
    } else {
    }
    %c0_i32_29 = arith.constant 0 : i32
    %42 = arith.cmpi eq, %arg1, %c0_i32_29 : i32
    %43 = arith.extui %42 : i1 to i32
    %c0_i32_30 = arith.constant 0 : i32
    %44 = arith.cmpi ne, %43, %c0_i32_30 : i32
    scf.if %44 {
      %cst_96 = arith.constant 0.000000e+00 : bf16
      %99 = vector.broadcast %cst_96 : bf16 to vector<1x24x128xbf16>
      %c17_97 = arith.constant 17 : index
      %c0_98 = arith.constant 0 : index
      %c0_99 = arith.constant 0 : index
      %100 = vector.load %arg11[%c17_97, %c0_98, %c0_99] : memref<18x24x128xbf16, #tpu.memory_space<vmem>>, vector<1x24x128xbf16>
      tpu.vector_store %arg11[%c17_97, %c0_98, %c0_99], %99 {strides = array<i32>} : memref<18x24x128xbf16, #tpu.memory_space<vmem>>, vector<1x24x128xbf16>,
    } else {
    }
    %c0_31 = arith.constant 0 : index
    %c0_32 = arith.constant 0 : index
    %c0_33 = arith.constant 0 : index
    %45 = vector.load %arg11[%c0_31, %c0_32, %c0_33] : memref<18x24x128xbf16, #tpu.memory_space<vmem>>, vector<16x16x128xbf16>
    %c0_34 = arith.constant 0 : index
    %c1 = arith.constant 1 : index
    %c0_35 = arith.constant 0 : index
    %46 = vector.load %arg11[%c0_34, %c1, %c0_35] : memref<18x24x128xbf16, #tpu.memory_space<vmem>>, vector<16x16x128xbf16>
    %c0_36 = arith.constant 0 : index
    %c2 = arith.constant 2 : index
    %c0_37 = arith.constant 0 : index
    %47 = vector.load %arg11[%c0_36, %c2, %c0_37] : memref<18x24x128xbf16, #tpu.memory_space<vmem>>, vector<16x16x128xbf16>
    %48 = tpu.concatenate %45, %46, %47 in 2 : vector<16x16x128xbf16>, vector<16x16x128xbf16>, vector<16x16x128xbf16> -> vector<16x16x384xbf16>
    %49 = vector.shape_cast %48 : vector<16x16x384xbf16> to vector<256x384xbf16>
    %c0_38 = arith.constant 0 : index
    %c0_39 = arith.constant 0 : index
    %c0_40 = arith.constant 0 : index
    %50 = vector.load %arg5[%c0_38, %c0_39, %c0_40] : memref<3x384x128xbf16, #tpu.memory_space<vmem>>, vector<1x384x128xbf16>
    %51 = vector.shape_cast %50 : vector<1x384x128xbf16> to vector<384x128xbf16>
    %cst_41 = arith.constant dense<0.000000e+00> : vector<256x128xf32>
    %52 = tpu.matmul %49, %51, %cst_41 {dimension_numbers = #tpu.dot_dimension_numbers<[1], [0], [0], [1], [0, 0, 1, 1], [], []>} : vector<256x384xbf16>, vector<384x128xbf16>, vector<256x128xf32> -> vector<256x128xf32>
    %c0_42 = arith.constant 0 : index
    %c0_43 = arith.constant 0 : index
    %53 = vector.load %arg12[%c0_42, %c0_43] : memref<256x128xf32, #tpu.memory_space<vmem>>, vector<256x128xf32>
    tpu.vector_store %arg12[%c0_42, %c0_43], %52 {strides = array<i32>} : memref<256x128xf32, #tpu.memory_space<vmem>>, vector<256x128xf32>,
    %c0_44 = arith.constant 0 : index
    %c0_45 = arith.constant 0 : index
    %54 = vector.load %arg12[%c0_44, %c0_45] : memref<256x128xf32, #tpu.memory_space<vmem>>, vector<256x128xf32>
    %c1_46 = arith.constant 1 : index
    %c0_47 = arith.constant 0 : index
    %c0_48 = arith.constant 0 : index
    %55 = vector.load %arg11[%c1_46, %c0_47, %c0_48] : memref<18x24x128xbf16, #tpu.memory_space<vmem>>, vector<16x16x128xbf16>
    %c1_49 = arith.constant 1 : index
    %c1_50 = arith.constant 1 : index
    %c0_51 = arith.constant 0 : index
    %56 = vector.load %arg11[%c1_49, %c1_50, %c0_51] : memref<18x24x128xbf16, #tpu.memory_space<vmem>>, vector<16x16x128xbf16>
    %c1_52 = arith.constant 1 : index
    %c2_53 = arith.constant 2 : index
    %c0_54 = arith.constant 0 : index
    %57 = vector.load %arg11[%c1_52, %c2_53, %c0_54] : memref<18x24x128xbf16, #tpu.memory_space<vmem>>, vector<16x16x128xbf16>
    %58 = tpu.concatenate %55, %56, %57 in 2 : vector<16x16x128xbf16>, vector<16x16x128xbf16>, vector<16x16x128xbf16> -> vector<16x16x384xbf16>
    %59 = vector.shape_cast %58 : vector<16x16x384xbf16> to vector<256x384xbf16>
    %c1_55 = arith.constant 1 : index
    %c0_56 = arith.constant 0 : index
    %c0_57 = arith.constant 0 : index
    %60 = vector.load %arg5[%c1_55, %c0_56, %c0_57] : memref<3x384x128xbf16, #tpu.memory_space<vmem>>, vector<1x384x128xbf16>
    %61 = vector.shape_cast %60 : vector<1x384x128xbf16> to vector<384x128xbf16>
    %cst_58 = arith.constant dense<0.000000e+00> : vector<256x128xf32>
    %62 = tpu.matmul %59, %61, %cst_58 {dimension_numbers = #tpu.dot_dimension_numbers<[1], [0], [0], [1], [0, 0, 1, 1], [], []>} : vector<256x384xbf16>, vector<384x128xbf16>, vector<256x128xf32> -> vector<256x128xf32>
    %63 = arith.addf %54, %62 : vector<256x128xf32>
    %c0_59 = arith.constant 0 : index
    %c0_60 = arith.constant 0 : index
    %64 = vector.load %arg12[%c0_59, %c0_60] : memref<256x128xf32, #tpu.memory_space<vmem>>, vector<256x128xf32>
    tpu.vector_store %arg12[%c0_59, %c0_60], %63 {strides = array<i32>} : memref<256x128xf32, #tpu.memory_space<vmem>>, vector<256x128xf32>,
    %c0_61 = arith.constant 0 : index
    %c0_62 = arith.constant 0 : index
    %65 = vector.load %arg12[%c0_61, %c0_62] : memref<256x128xf32, #tpu.memory_space<vmem>>, vector<256x128xf32>
    %c2_63 = arith.constant 2 : index
    %c0_64 = arith.constant 0 : index
    %c0_65 = arith.constant 0 : index
    %66 = vector.load %arg11[%c2_63, %c0_64, %c0_65] : memref<18x24x128xbf16, #tpu.memory_space<vmem>>, vector<16x16x128xbf16>
    %c2_66 = arith.constant 2 : index
    %c1_67 = arith.constant 1 : index
    %c0_68 = arith.constant 0 : index
    %67 = vector.load %arg11[%c2_66, %c1_67, %c0_68] : memref<18x24x128xbf16, #tpu.memory_space<vmem>>, vector<16x16x128xbf16>
    %c2_69 = arith.constant 2 : index
    %c2_70 = arith.constant 2 : index
    %c0_71 = arith.constant 0 : index
    %68 = vector.load %arg11[%c2_69, %c2_70, %c0_71] : memref<18x24x128xbf16, #tpu.memory_space<vmem>>, vector<16x16x128xbf16>
    %69 = tpu.concatenate %66, %67, %68 in 2 : vector<16x16x128xbf16>, vector<16x16x128xbf16>, vector<16x16x128xbf16> -> vector<16x16x384xbf16>
    %70 = vector.shape_cast %69 : vector<16x16x384xbf16> to vector<256x384xbf16>
    %c2_72 = arith.constant 2 : index
    %c0_73 = arith.constant 0 : index
    %c0_74 = arith.constant 0 : index
    %71 = vector.load %arg5[%c2_72, %c0_73, %c0_74] : memref<3x384x128xbf16, #tpu.memory_space<vmem>>, vector<1x384x128xbf16>
    %72 = vector.shape_cast %71 : vector<1x384x128xbf16> to vector<384x128xbf16>
    %cst_75 = arith.constant dense<0.000000e+00> : vector<256x128xf32>
    %73 = tpu.matmul %70, %72, %cst_75 {dimension_numbers = #tpu.dot_dimension_numbers<[1], [0], [0], [1], [0, 0, 1, 1], [], []>} : vector<256x384xbf16>, vector<384x128xbf16>, vector<256x128xf32> -> vector<256x128xf32>
    %74 = arith.addf %65, %73 : vector<256x128xf32>
    %c0_76 = arith.constant 0 : index
    %c0_77 = arith.constant 0 : index
    %75 = vector.load %arg12[%c0_76, %c0_77] : memref<256x128xf32, #tpu.memory_space<vmem>>, vector<256x128xf32>
    tpu.vector_store %arg12[%c0_76, %c0_77], %74 {strides = array<i32>} : memref<256x128xf32, #tpu.memory_space<vmem>>, vector<256x128xf32>,
    %c0_78 = arith.constant 0 : index
    %c0_79 = arith.constant 0 : index
    %76 = vector.load %arg12[%c0_78, %c0_79] : memref<256x128xf32, #tpu.memory_space<vmem>>, vector<256x128xf32>
    %c0_80 = arith.constant 0 : index
    %c0_81 = arith.constant 0 : index
    %77 = vector.load %arg6[%c0_80, %c0_81] : memref<1x128xf32, #tpu.memory_space<vmem>>, vector<1x128xf32>
    %78 = vector.broadcast %77 : vector<1x128xf32> to vector<256x128xf32>
    %79 = arith.addf %76, %78 : vector<256x128xf32>
    %cst_82 = arith.constant 0.000000e+00 : f32
    %80 = vector.broadcast %cst_82 : f32 to vector<256x128xf32>
    %81 = arith.maximumf %79, %80 : vector<256x128xf32>
    %82 = arith.truncf %81 : vector<256x128xf32> to vector<256x128xbf16>
    %83 = arith.index_cast %9 : i32 to index
    %c1_83 = arith.constant 1 : index
    %c1_84 = arith.constant 1 : index
    %c0_85 = arith.constant 0 : index
    %84 = vector.load %arg10[%83, %c1_83, %c1_84, %c0_85] : memref<2x18x24x128xbf16, #tpu.memory_space<vmem>>, vector<1x16x16x128xbf16>
    %85 = vector.shape_cast %84 : vector<1x16x16x128xbf16> to vector<16x16x128xbf16>
    %86 = vector.shape_cast %85 : vector<16x16x128xbf16> to vector<256x128xbf16>
    %c0_86 = arith.constant 0 : index
    %c0_87 = arith.constant 0 : index
    %87 = vector.load %arg7[%c0_86, %c0_87] : memref<128x128xbf16, #tpu.memory_space<vmem>>, vector<128x128xbf16>
    %cst_88 = arith.constant dense<0.000000e+00> : vector<256x128xf32>
    %88 = tpu.matmul %82, %87, %cst_88 {dimension_numbers = #tpu.dot_dimension_numbers<[1], [0], [0], [1], [0, 0, 1, 1], [], []>} : vector<256x128xbf16>, vector<128x128xbf16>, vector<256x128xf32> -> vector<256x128xf32>
    %c0_89 = arith.constant 0 : index
    %c0_90 = arith.constant 0 : index
    %89 = vector.load %arg8[%c0_89, %c0_90] : memref<1x128xf32, #tpu.memory_space<vmem>>, vector<1x128xf32>
    %90 = vector.broadcast %89 : vector<1x128xf32> to vector<256x128xf32>
    %91 = arith.addf %88, %90 : vector<256x128xf32>
    %92 = arith.extf %86 : vector<256x128xbf16> to vector<256x128xf32>
    %93 = arith.addf %91, %92 : vector<256x128xf32>
    %cst_91 = arith.constant 0.000000e+00 : f32
    %94 = vector.broadcast %cst_91 : f32 to vector<256x128xf32>
    %95 = arith.maximumf %93, %94 : vector<256x128xf32>
    %96 = vector.shape_cast %95 : vector<256x128xf32> to vector<1x16x16x128xf32>
    %97 = arith.truncf %96 : vector<1x16x16x128xf32> to vector<1x16x16x128xbf16>
    %c0_92 = arith.constant 0 : index
    %c0_93 = arith.constant 0 : index
    %c0_94 = arith.constant 0 : index
    %c0_95 = arith.constant 0 : index
    %98 = vector.load %arg9[%c0_92, %c0_93, %c0_94, %c0_95] : memref<1x16x16x128xbf16, #tpu.memory_space<vmem>>, vector<1x16x16x128xbf16>
    tpu.vector_store %arg9[%c0_92, %c0_93, %c0_94, %c0_95], %97 {strides = array<i32>} : memref<1x16x16x128xbf16, #tpu.memory_space<vmem>>, vector<1x16x16x128xbf16>,
    return
  }
  func.func @transform_1(%arg0: i32, %arg1: i32) -> (i32, i32) {
    %c0_i32 = arith.constant 0 : i32
    %c0_i32_0 = arith.constant 0 : i32
    %c0_i32_1 = arith.constant 0 : i32
    return %c0_i32, %c0_i32_0 : i32, i32
  }
  func.func @transform_2(%arg0: i32, %arg1: i32) -> (i32, i32) {
    %c0_i32 = arith.constant 0 : i32
    %c0_i32_0 = arith.constant 0 : i32
    %c0_i32_1 = arith.constant 0 : i32
    return %c0_i32, %c0_i32_0 : i32, i32
  }
  func.func @transform_3(%arg0: i32, %arg1: i32) -> (i32, i32, i32) {
    %c0_i32 = arith.constant 0 : i32
    %c0_i32_0 = arith.constant 0 : i32
    %c0_i32_1 = arith.constant 0 : i32
    %c0_i32_2 = arith.constant 0 : i32
    return %c0_i32, %c0_i32_0, %c0_i32_1 : i32, i32, i32
  }
  func.func @transform_4(%arg0: i32, %arg1: i32) -> (i32, i32) {
    %c0_i32 = arith.constant 0 : i32
    %c0_i32_0 = arith.constant 0 : i32
    %c0_i32_1 = arith.constant 0 : i32
    return %c0_i32, %c0_i32_0 : i32, i32
  }
  func.func @transform_5(%arg0: i32, %arg1: i32) -> (i32, i32) {
    %c0_i32 = arith.constant 0 : i32
    %c0_i32_0 = arith.constant 0 : i32
    %c0_i32_1 = arith.constant 0 : i32
    return %c0_i32, %c0_i32_0 : i32, i32
  }
  func.func @transform_6(%arg0: i32, %arg1: i32) -> (i32, i32) {
    %c0_i32 = arith.constant 0 : i32
    %c0_i32_0 = arith.constant 0 : i32
    %c0_i32_1 = arith.constant 0 : i32
    return %c0_i32, %c0_i32_0 : i32, i32
  }
  func.func @transform_7(%arg0: i32, %arg1: i32) -> (i32, i32, i32, i32) {
    %c0_i32 = arith.constant 0 : i32
    %c0_i32_0 = arith.constant 0 : i32
    %c0_i32_1 = arith.constant 0 : i32
    return %arg0, %arg1, %c0_i32, %c0_i32_0 : i32, i32, i32, i32
  }
}

</mosaic_0001>

<llo_original>
// kernel: bottleneck_forward.1
$region0: #{bottleneck_forward.1}
  #allocation0 [shape = 'u32[]', space=smem, size = 0x4, offset = 0x4, fixed_abs, tag = 'smem constant byte address 0x4 - core index']
  #allocation1 [shape = 'u32[72,128]{1,0:T(1,128)}', space=vmem, size = 0x9000, scoped, tag = 'internal scratch']
  #allocation2 [shape = 'bf16[2,18,24,128]{3,2,1,0:T(8,128)(2,1)}', space=vmem, size = 0x36000, scoped, tag = 'scratch operand']
  #allocation3 [shape = 'bf16[18,24,128]{2,1,0:T(8,128)(2,1)}', space=vmem, size = 0x1b000, scoped, tag = 'scratch operand']
  #allocation4 [shape = 'f32[256,128]{1,0:T(8,128)}', space=vmem, size = 0x20000, scoped, tag = 'scratch operand']
  #allocation5 [shape = 's32[2]{0}', space=sflag, size = 0x8, scoped, tag = 'scratch operand']
  #allocation6 [shape = 's32[]', space=sflag, size = 0x4, offset = 0, fixed_abs, tag = 'sflag constant byte address 0x0 - dummy sync flag']
  %s0 = inlined_call_operand.vmem [shape: bf16[2,18,24,128], index: 0, kind: input, shape index: {}]
  %s1 = inlined_call_operand.vmem [shape: bf16[128,128], index: 1, kind: input, shape index: {}]
  %s2 = inlined_call_operand.vmem [shape: f32[1,128], index: 2, kind: input, shape index: {}]
  %s3 = inlined_call_operand.vmem [shape: bf16[3,384,128], index: 3, kind: input, shape index: {}]
  %s4 = inlined_call_operand.vmem [shape: f32[1,128], index: 4, kind: input, shape index: {}]
  %s5 = inlined_call_operand.vmem [shape: bf16[128,128], index: 5, kind: input, shape index: {}]
  %s6 = inlined_call_operand.vmem [shape: f32[1,128], index: 6, kind: input, shape index: {}]
  %s7 = inlined_call_operand.vmem [shape: bf16[2,16,16,128], index: 7, kind: output, shape index: {}]
  %s8 = sld [smem:[#allocation0]]
  $region84: #{bottleneck_forward.1} parent=0
    _
  %s10 = ssub.s32 1, %s8
  %s11 = scalar_select 0, %s10, %s8
  loop: start=0, step=1, limit=4
  $region2: #{bottleneck_forward.1} parent=0 // loop_pre_header
    _
  $region3: #{bottleneck_forward.1} parent=0 // loop_header
    %s13 = sphi 0, %s17
    %p14 = scmp.ge.s32.totalorder %s13, 4
    %s20 = sphi 0, %s32
    %s21 = sphi 0, %s28
    %s22 = sphi 0, %s20
    %s23 = sphi 0, %s21
    %s24 = sphi 0, %s22
    %s25 = sphi 0, %s23
    %s33 = sphi 0, %s33
    %s35 = sphi 0, %s33
    %s36 = sphi 0, %s35
    %s50 = sphi 0, %s36
    %s54 = sphi 0, %s54
    %s56 = sphi 0, %s54
    %s57 = sphi 0, %s56
    %s71 = sphi 0, %s57
    %s75 = sphi 0, %s75
    %s77 = sphi 0, %s75
    %s78 = sphi 0, %s77
    %s92 = sphi 0, %s78
    %s96 = sphi 0, %s96
    %s98 = sphi 0, %s96
    %s99 = sphi 0, %s98
    %s113 = sphi 0, %s99
    %s117 = sphi 0, %s117
    %s119 = sphi 0, %s117
    %s120 = sphi 0, %s119
    %s134 = sphi 0, %s120
    %s138 = sphi 0, %s138
    %s140 = sphi 0, %s138
    %s141 = sphi 0, %s140
    %s155 = sphi 0, %s141
    %s163 = sphi 0, %s165
    %s166 = sphi 0, %s163
    %s167 = sphi 0, %s166
    %s183 = sphi 0, %s167
  $region4: #{bottleneck_forward.1} parent=0 // loop_header_branch
    %16 = sbr.rel (%p14) target = $region8
  $region5: #{bottleneck_forward.1} parent=0 // loop_body
    %s18 = ssub.s32 %s13, 1
    %s19 = ssub.s32 %s13, 2
    %s26 = sadd.s32 1, %s21
    %p27 = scmp.ge.s32.totalorder %s26, 1
    %s28 = scalar_select %p27, 0, %s26
    %s29 = sadd.s32 1, %s20
    %s30 = scalar_select %p27, %s29, %s20
    %p31 = scmp.ge.s32.totalorder %s30, 2
    %s32 = scalar_select %p31, 0, %s30
    %s34 = sadd.s32 %s33, 1
    %p37 = scmp.eq.s32.totalorder %s13, 1
    %p38 = scmp.ne.s32.totalorder %s33, %s35
    %p39 = scmp.eq.s32.totalorder %s13, 0
    %p40 = por %p38, %p39
    %p41 = scmp.ne.s32.totalorder %s33, %s35
    %p42 = scmp.eq.s32.totalorder %s18, 1
    %p43 = por %p41, %p42
    %p44 = scmp.ne.s32.totalorder %s35, %s36
    %p45 = scmp.eq.s32.totalorder %s18, 0
    %p46 = por %p44, %p45
    %p47 = scmp.ne.s32.totalorder %s35, %s36
    %p48 = scmp.eq.s32.totalorder %s19, 1
    %p49 = por %p47, %p48
    %p51 = scmp.ne.s32.totalorder %s36, %s50
    %p52 = scmp.eq.s32.totalorder %s19, 0
    %p53 = por %p51, %p52
    %s55 = sadd.s32 %s54, 1
    %p58 = scmp.eq.s32.totalorder %s13, 1
    %p59 = scmp.ne.s32.totalorder %s54, %s56
    %p60 = scmp.eq.s32.totalorder %s13, 0
    %p61 = por %p59, %p60
    %p62 = scmp.ne.s32.totalorder %s54, %s56
    %p63 = scmp.eq.s32.totalorder %s18, 1
    %p64 = por %p62, %p63
    %p65 = scmp.ne.s32.totalorder %s56, %s57
    %p66 = scmp.eq.s32.totalorder %s18, 0
    %p67 = por %p65, %p66
    %p68 = scmp.ne.s32.totalorder %s56, %s57
    %p69 = scmp.eq.s32.totalorder %s19, 1
    %p70 = por %p68, %p69
    %p72 = scmp.ne.s32.totalorder %s57, %s71
    %p73 = scmp.eq.s32.totalorder %s19, 0
    %p74 = por %p72, %p73
    %s76 = sadd.s32 %s75, 1
    %p79 = scmp.eq.s32.totalorder %s13, 1
    %p80 = scmp.ne.s32.totalorder %s75, %s77
    %p81 = scmp.eq.s32.totalorder %s13, 0
    %p82 = por %p80, %p81
    %p83 = scmp.ne.s32.totalorder %s75, %s77
    %p84 = scmp.eq.s32.totalorder %s18, 1
    %p85 = por %p83, %p84
    %p86 = scmp.ne.s32.totalorder %s77, %s78
    %p87 = scmp.eq.s32.totalorder %s18, 0
    %p88 = por %p86, %p87
    %p89 = scmp.ne.s32.totalorder %s77, %s78
    %p90 = scmp.eq.s32.totalorder %s19, 1
    %p91 = por %p89, %p90
    %p93 = scmp.ne.s32.totalorder %s78, %s92
    %p94 = scmp.eq.s32.totalorder %s19, 0
    %p95 = por %p93, %p94
    %s97 = sadd.s32 %s96, 1
    %p100 = scmp.eq.s32.totalorder %s13, 1
    %p101 = scmp.ne.s32.totalorder %s96, %s98
    %p102 = scmp.eq.s32.totalorder %s13, 0
    %p103 = por %p101, %p102
    %p104 = scmp.ne.s32.totalorder %s96, %s98
    %p105 = scmp.eq.s32.totalorder %s18, 1
    %p106 = por %p104, %p105
    %p107 = scmp.ne.s32.totalorder %s98, %s99
    %p108 = scmp.eq.s32.totalorder %s18, 0
    %p109 = por %p107, %p108
    %p110 = scmp.ne.s32.totalorder %s98, %s99
    %p111 = scmp.eq.s32.totalorder %s19, 1
    %p112 = por %p110, %p111
    %p114 = scmp.ne.s32.totalorder %s99, %s113
    %p115 = scmp.eq.s32.totalorder %s19, 0
    %p116 = por %p114, %p115
    %s118 = sadd.s32 %s117, 1
    %p121 = scmp.eq.s32.totalorder %s13, 1
    %p122 = scmp.ne.s32.totalorder %s117, %s119
    %p123 = scmp.eq.s32.totalorder %s13, 0
    %p124 = por %p122, %p123
    %p125 = scmp.ne.s32.totalorder %s117, %s119
    %p126 = scmp.eq.s32.totalorder %s18, 1
    %p127 = por %p125, %p126
    %p128 = scmp.ne.s32.totalorder %s119, %s120
    %p129 = scmp.eq.s32.totalorder %s18, 0
    %p130 = por %p128, %p129
    %p131 = scmp.ne.s32.totalorder %s119, %s120
    %p132 = scmp.eq.s32.totalorder %s19, 1
    %p133 = por %p131, %p132
    %p135 = scmp.ne.s32.totalorder %s120, %s134
    %p136 = scmp.eq.s32.totalorder %s19, 0
    %p137 = por %p135, %p136
    %s139 = sadd.s32 %s138, 1
    %p142 = scmp.eq.s32.totalorder %s13, 1
    %p143 = scmp.ne.s32.totalorder %s138, %s140
    %p144 = scmp.eq.s32.totalorder %s13, 0
    %p145 = por %p143, %p144
    %p146 = scmp.ne.s32.totalorder %s138, %s140
    %p147 = scmp.eq.s32.totalorder %s18, 1
    %p148 = por %p146, %p147
    %p149 = scmp.ne.s32.totalorder %s140, %s141
    %p150 = scmp.eq.s32.totalorder %s18, 0
    %p151 = por %p149, %p150
    %p152 = scmp.ne.s32.totalorder %s140, %s141
    %p153 = scmp.eq.s32.totalorder %s19, 1
    %p154 = por %p152, %p153
    %p156 = scmp.ne.s32.totalorder %s141, %s155
    %p157 = scmp.eq.s32.totalorder %s19, 0
    %p158 = por %p156, %p157
    %s159 = ssub.s32 %s20, %s32
    %s160 = ssub.s32 %s21, %s28
    %s161 = sor.u32 %s159, %s160
    %p162 = scmp.eq.s32.totalorder %s161, 0
    %s164 = sadd.s32 %s163, 1
    %s165 = scalar_select %p162, %s163, %s164
    %p168 = pneg %p162
    %p169 = scmp.eq.s32.totalorder %s13, 1
    %p170 = por %p168, %p169
    %p171 = scmp.ne.s32.totalorder %s163, %s166
    %p172 = scmp.eq.s32.totalorder %s13, 0
    %p173 = por %p171, %p172
    %p174 = scmp.ne.s32.totalorder %s163, %s166
    %p175 = scmp.eq.s32.totalorder %s18, 1
    %p176 = por %p174, %p175
    %p177 = scmp.ne.s32.totalorder %s166, %s167
    %p178 = scmp.eq.s32.totalorder %s18, 0
    %p179 = por %p177, %p178
    %p180 = scmp.ne.s32.totalorder %s166, %s167
    %p181 = scmp.eq.s32.totalorder %s19, 1
    %p182 = por %p180, %p181
    %p184 = scmp.ne.s32.totalorder %s167, %s183
    %p185 = scmp.eq.s32.totalorder %s19, 0
    %p186 = por %p184, %p185
    %p187 = scmp.le.s32.totalorder 1, %s13
    %p188 = scmp.lt.s32.totalorder %s13, 3
    %p189 = pnand %p187, %p188
    %p190 = pneg %p189
    // Predicated region
    $region9: #{bottleneck_forward.1} parent=5 // pred_check
      _
    $region10: #{bottleneck_forward.1} parent=5 // pred_check_branch
      %192 = sbr.rel (%p189) target = $region12
    $region11: #{bottleneck_forward.1} parent=5 // pred_region
      %s193 = ssub.s32 %s13, 1
      // Predicated region
      $region13: #{bottleneck_forward.1} parent=11 // pred_check
        %p194 = pneg %p46
      $region14: #{bottleneck_forward.1} parent=11 // pred_check_branch
        %196 = sbr.rel (%p194) target = $region16
      $region15: #{bottleneck_forward.1} parent=11 // pred_region
        _
      $region16: #{bottleneck_forward.1} parent=11 // pred_fallthru
        _
      // Predicated region
      $region17: #{bottleneck_forward.1} parent=11 // pred_check
        %p197 = pneg %p67
      $region18: #{bottleneck_forward.1} parent=11 // pred_check_branch
        %199 = sbr.rel (%p197) target = $region20
      $region19: #{bottleneck_forward.1} parent=11 // pred_region
        _
      $region20: #{bottleneck_forward.1} parent=11 // pred_fallthru
        _
      // Predicated region
      $region21: #{bottleneck_forward.1} parent=11 // pred_check
        %p200 = pneg %p88
      $region22: #{bottleneck_forward.1} parent=11 // pred_check_branch
        %202 = sbr.rel (%p200) target = $region24
      $region23: #{bottleneck_forward.1} parent=11 // pred_region
        _
      $region24: #{bottleneck_forward.1} parent=11 // pred_fallthru
        _
      // Predicated region
      $region25: #{bottleneck_forward.1} parent=11 // pred_check
        %p203 = pneg %p109
      $region26: #{bottleneck_forward.1} parent=11 // pred_check_branch
        %205 = sbr.rel (%p203) target = $region28
      $region27: #{bottleneck_forward.1} parent=11 // pred_region
        _
      $region28: #{bottleneck_forward.1} parent=11 // pred_fallthru
        _
      // Predicated region
      $region29: #{bottleneck_forward.1} parent=11 // pred_check
        %p206 = pneg %p130
      $region30: #{bottleneck_forward.1} parent=11 // pred_check_branch
        %208 = sbr.rel (%p206) target = $region32
      $region31: #{bottleneck_forward.1} parent=11 // pred_region
        _
      $region32: #{bottleneck_forward.1} parent=11 // pred_fallthru
        _
      // Predicated region
      $region33: #{bottleneck_forward.1} parent=11 // pred_check
        %p209 = pneg %p151
      $region34: #{bottleneck_forward.1} parent=11 // pred_check_branch
        %211 = sbr.rel (%p209) target = $region36
      $region35: #{bottleneck_forward.1} parent=11 // pred_region
        _
      $region36: #{bottleneck_forward.1} parent=11 // pred_fallthru
        _
    $region12: #{bottleneck_forward.1} parent=5 // pred_fallthru
      _
    %p212 = scmp.lt.s32.totalorder %s13, 2
    // Predicated region
    $region37: #{bottleneck_forward.1} parent=5 // pred_check
      %p213 = pneg %p212
    $region38: #{bottleneck_forward.1} parent=5 // pred_check_branch
      %215 = sbr.rel (%p213) target = $region40
    $region39: #{bottleneck_forward.1} parent=5 // pred_region
      _
    $region40: #{bottleneck_forward.1} parent=5 // pred_fallthru
      _
    %p216 = scmp.le.s32.totalorder 1, %s13
    %p217 = scmp.lt.s32.totalorder %s13, 3
    %p218 = pnand %p216, %p217
    %p219 = pneg %p218
    // Predicated region
    $region41: #{bottleneck_forward.1} parent=5 // pred_check
      _
    $region42: #{bottleneck_forward.1} parent=5 // pred_check_branch
      %221 = sbr.rel (%p218) target = $region44
    $region43: #{bottleneck_forward.1} parent=5 // pred_region
      %s222 = ssub.s32 %s13, 1
      %p223 = pneg %p46
      %p224 = pneg %p43
      %p225 = pneg %p67
      %p226 = pneg %p64
      %p227 = pneg %p88
      %p228 = pneg %p85
      %p229 = pneg %p109
      %p230 = pneg %p106
      %p231 = pneg %p130
      %p232 = pneg %p127
      %p233 = pneg %p151
      %p234 = pneg %p148
      %p235 = pneg %p179
      %p236 = pneg %p176
      %s237 = smul.u32 16, %s23
      %p238 = scmp.lt.s32.totalorder %s22, 1
      %s239 = scalar_select %p238, %s22, 1
      %p240 = scmp.lt.s32.totalorder %s237, 15
      %s241 = scalar_select %p240, %s237, 15
      %s242 = smul.addr %s241, 2
      %s243 = smul.addr %s239, 32
      %s244 = sadd.s32 %s242, %s243
      %s245 = smul.addr %s244, 4
      %s246 = scalar_lea.vmem %s7, %s245
      %s247 = smul.u32 16, %s23
      %p248 = scmp.lt.s32.totalorder %s22, 1
      %s249 = scalar_select %p248, %s22, 1
      %p250 = scmp.lt.s32.totalorder %s247, 15
      %s251 = scalar_select %p250, %s247, 15
      %s252 = smul.addr %s251, 2
      %s253 = smul.addr %s249, 32
      %s254 = sadd.s32 %s252, %s253
      %s255 = smul.addr %s254, 4
      %s256 = scalar_lea.vmem %s7, %s255
      %s257 = smul.u32 16, %s23
      %p259 = scmp.lt.s32.totalorder %s23, 0
      %s260 = ssub.s32 0, %s23
      %s261 = scalar_select %p259, %s260, %s23
      %s262 = sand.u32 %s261, 1
      %s263 = ssub.s32 0, %s262
      %s264 = scalar_select %p259, %s263, %s262
      %p265 = scmp.ne.s32.totalorder %s264, 0
      %p266 = scmp.lt.s32.totalorder %s264, 0
      %p267 = pnand %p266, %p265
      %p268 = pneg %p267
      %s269 = sadd.s32 %s264, 2
      %s270 = scalar_select %p268, %s269, %s264
      %p271 = scmp.eq.s32.totalorder %s23, 0
      // Predicated region
      $region45: #{bottleneck_forward.1} parent=43 // pred_check
        %p272 = pneg %p271
      $region46: #{bottleneck_forward.1} parent=43 // pred_check_branch
        %274 = sbr.rel (%p272) target = $region48
      $region47: #{bottleneck_forward.1} parent=43 // pred_region
        %s275 = smul.u32 %s23, 16
        %s276 = smul.u32 %s275, 3
        %s277 = smul.u32 %s22, 54
        %s278 = sadd.s32 %s276, %s277
        %s279 = smul.addr %s278, 4
        %s280 = scalar_lea.vmem %s0, %s279
        %s281 = smul.u32 %s270, 54
        %s282 = smul.addr %s281, 4
        %s283 = scalar_lea.vmem [#allocation2], %s282
        %s284 = scalar_lea.sflag [#allocation5], %s270
        // Predicated region
        $region49: #{bottleneck_forward.1} parent=47 // pred_check
          _
        $region50: #{bottleneck_forward.1} parent=47 // pred_check_branch
          %286 = sbr.rel (0) target = $region52
        $region51: #{bottleneck_forward.1} parent=47 // pred_region
          loop: start=0, step=1, limit=1
          $region53: #{bottleneck_forward.1} parent=51 // loop_pre_header
            _
          $region54: #{bottleneck_forward.1} parent=51 // loop_header
            %s288 = sphi 0, %s292
            %p289 = scmp.ge.s32.totalorder %s288, 1
            %s293 = sphi %s280, %s280
            %s294 = sphi %s283, %s283
          $region55: #{bottleneck_forward.1} parent=51 // loop_header_branch
            %291 = sbr.rel (%p289) target = $region59
          $region56: #{bottleneck_forward.1} parent=51 // loop_body
            %v295 = vld [vmem:[%s293] sm:$0xff]
            %296 = vst [vmem:[%s294] sm:$0xff] %v295
            %v297 = vld [vmem:[%s293 + $0x8] sm:$0xff]
            %298 = vst [vmem:[%s294 + $0x8] sm:$0xff] %v297
            %v299 = vld [vmem:[%s293 + $0x10] sm:$0xff]
            %300 = vst [vmem:[%s294 + $0x10] sm:$0xff] %v299
            %v301 = vld [vmem:[%s293 + $0x18] sm:$0xff]
            %302 = vst [vmem:[%s294 + $0x18] sm:$0xff] %v301
            %v303 = vld [vmem:[%s293 + $0x20] sm:$0xff]
            %304 = vst [vmem:[%s294 + $0x20] sm:$0xff] %v303
            %v305 = vld [vmem:[%s293 + $0x28] sm:$0xff]
            %306 = vst [vmem:[%s294 + $0x28] sm:$0xff] %v305
            %v307 = vld [vmem:[%s293 + $0x30] sm:$0xff]
            %308 = vst [vmem:[%s294 + $0x30] sm:$0xff] %v307
            %v309 = vld [vmem:[%s293 + $0x38] sm:$0xff]
            %310 = vst [vmem:[%s294 + $0x38] sm:$0xff] %v309
            %v311 = vld [vmem:[%s293 + $0x40] sm:$0xff]
            %312 = vst [vmem:[%s294 + $0x40] sm:$0xff] %v311
            %v313 = vld [vmem:[%s293 + $0x48] sm:$0xff]
            %314 = vst [vmem:[%s294 + $0x48] sm:$0xff] %v313
            %v315 = vld [vmem:[%s293 + $0x50] sm:$0xff]
            %316 = vst [vmem:[%s294 + $0x50] sm:$0xff] %v315
            %v317 = vld [vmem:[%s293 + $0x58] sm:$0xff]
            %318 = vst [vmem:[%s294 + $0x58] sm:$0xff] %v317
            %v319 = vld [vmem:[%s293 + $0x60] sm:$0xff]
            %320 = vst [vmem:[%s294 + $0x60] sm:$0xff] %v319
            %v321 = vld [vmem:[%s293 + $0x68] sm:$0xff]
            %322 = vst [vmem:[%s294 + $0x68] sm:$0xff] %v321
            %v323 = vld [vmem:[%s293 + $0x70] sm:$0xff]
            %324 = vst [vmem:[%s294 + $0x70] sm:$0xff] %v323
            %v325 = vld [vmem:[%s293 + $0x78] sm:$0xff]
            %326 = vst [vmem:[%s294 + $0x78] sm:$0xff] %v325
            %v327 = vld [vmem:[%s293 + $0x80] sm:$0xff]
            %328 = vst [vmem:[%s294 + $0x80] sm:$0xff] %v327
            %v329 = vld [vmem:[%s293 + $0x88] sm:$0xff]
            %330 = vst [vmem:[%s294 + $0x88] sm:$0xff] %v329
            %v331 = vld [vmem:[%s293 + $0x90] sm:$0xff]
            %332 = vst [vmem:[%s294 + $0x90] sm:$0xff] %v331
            %v333 = vld [vmem:[%s293 + $0x98] sm:$0xff]
            %334 = vst [vmem:[%s294 + $0x98] sm:$0xff] %v333
            %v335 = vld [vmem:[%s293 + $0xa0] sm:$0xff]
            %336 = vst [vmem:[%s294 + $0xa0] sm:$0xff] %v335
            %v337 = vld [vmem:[%s293 + $0xa8] sm:$0xff]
            %338 = vst [vmem:[%s294 + $0xa8] sm:$0xff] %v337
            %v339 = vld [vmem:[%s293 + $0xb0] sm:$0xff]
            %340 = vst [vmem:[%s294 + $0xb0] sm:$0xff] %v339
            %v341 = vld [vmem:[%s293 + $0xb8] sm:$0xff]
            %342 = vst [vmem:[%s294 + $0xb8] sm:$0xff] %v341
            %v343 = vld [vmem:[%s293 + $0xc0] sm:$0xff]
            %344 = vst [vmem:[%s294 + $0xc0] sm:$0xff] %v343
            %v345 = vld [vmem:[%s293 + $0xc8] sm:$0xff]
            %346 = vst [vmem:[%s294 + $0xc8] sm:$0xff] %v345
            %v347 = vld [vmem:[%s293 + $0xd0] sm:$0xff]
            %348 = vst [vmem:[%s294 + $0xd0] sm:$0xff] %v347
          $region57: #{bottleneck_forward.1} parent=51 // loop_footer
            %s292 = sadd.s32 1, %s288
          $region58: #{bottleneck_forward.1} parent=51 // loop_footer_branch
            %287 = sbr.rel target = $region54
          $region59: #{bottleneck_forward.1} parent=51 // loop_exit
            _
        $region52: #{bottleneck_forward.1} parent=47 // pred_fallthru
          _
        // Predicated region
        $region60: #{bottleneck_forward.1} parent=47 // pred_check
          _
        $region61: #{bottleneck_forward.1} parent=47 // pred_check_branch
          %350 = sbr.rel target = $region63
        $region62: #{bottleneck_forward.1} parent=47 // pred_region
          _
        $region63: #{bottleneck_forward.1} parent=47 // pred_fallthru
          _
        // Predicated region
        $region64: #{bottleneck_forward.1} parent=47 // pred_check
          _
        $region65: #{bottleneck_forward.1} parent=47 // pred_check_branch
          %353 = sbr.rel (0) target = $region67
        $region66: #{bottleneck_forward.1} parent=47 // pred_region
          %354 = vsyncadd %s284, 3456
        $region67: #{bottleneck_forward.1} parent=47 // pred_fallthru
          _
      $region48: #{bottleneck_forward.1} parent=43 // pred_fallthru
        _
      %s355 = smul.u32 %s23, 16
      %s356 = smul.u32 %s270, 54
      %s357 = smul.addr %s356, 4
      %s358 = scalar_lea.vmem [#allocation2], %s357
      %s359 = scalar_lea.sflag [#allocation5], %s270
      %s360 = smul.u32 4, 18
      %s361 = smul.u32 %s360, 3
      %s362 = smul.u32 %s361, 1
      %s363 = sshll.u32 %s362, 4
      %364 = dma.done %s359, %s363
      %v365 = vld [vmem:[%s358] sm:$0xf]
      %v366 = vld [vmem:[%s358 + $0x4] sm:$0xf]
      %v367 = vld [vmem:[%s358 + $0x8] sm:$0xf]
      %v368 = vld [vmem:[%s358 + $0xc] sm:$0xf]
      %v369 = vld [vmem:[%s358 + $0x10] sm:$0xf]
      %v370 = vld [vmem:[%s358 + $0x14] sm:$0xf]
      %v371 = vld [vmem:[%s358 + $0x18] sm:$0xf]
      %v372 = vld [vmem:[%s358 + $0x1c] sm:$0xf]
      %v373 = vld [vmem:[%s358 + $0x20] sm:$0xf]
      %v374 = vld [vmem:[%s358 + $0x24] sm:$0xf]
      %v375 = vld [vmem:[%s358 + $0x28] sm:$0xf]
      %v376 = vld [vmem:[%s358 + $0x2c] sm:$0xf]
      %v377 = vld [vmem:[%s358 + $0x30] sm:$0xf]
      %v378 = vld [vmem:[%s358 + $0x34] sm:$0xf]
      %v379 = vld [vmem:[%s358 + $0x38] sm:$0xf]
      %v380 = vld [vmem:[%s358 + $0x3c] sm:$0xf]
      %v381 = vld [vmem:[%s358 + $0x40] sm:$0xf]
      %v382 = vld [vmem:[%s358 + $0x44] sm:$0xf]
      %v383 = vld [vmem:[%s358 + $0x48] sm:$0xf]
      %v384 = vld [vmem:[%s358 + $0x4c] sm:$0xf]
      %v385 = vld [vmem:[%s358 + $0x50] sm:$0xf]
      %v386 = vld [vmem:[%s358 + $0x54] sm:$0xf]
      %v387 = vld [vmem:[%s358 + $0x58] sm:$0xf]
      %v388 = vld [vmem:[%s358 + $0x5c] sm:$0xf]
      %v389 = vld [vmem:[%s358 + $0x60] sm:$0xf]
      %v390 = vld [vmem:[%s358 + $0x64] sm:$0xf]
      %v391 = vld [vmem:[%s358 + $0x68] sm:$0xf]
      %v392 = vld [vmem:[%s358 + $0x6c] sm:$0xf]
      %v393 = vld [vmem:[%s358 + $0x70] sm:$0xf]
      %v394 = vld [vmem:[%s358 + $0x74] sm:$0xf]
      %v395 = vld [vmem:[%s358 + $0x78] sm:$0xf]
      %v396 = vld [vmem:[%s358 + $0x7c] sm:$0xf]
      %v397 = vld [vmem:[%s358 + $0x80] sm:$0xf]
      %v398 = vld [vmem:[%s358 + $0x84] sm:$0xf]
      %v399 = vld [vmem:[%s358 + $0x88] sm:$0xf]
      %v400 = vld [vmem:[%s358 + $0x8c] sm:$0xf]
      %v401 = vld [vmem:[%s358 + $0x90] sm:$0xf]
      %v402 = vld [vmem:[%s358 + $0x94] sm:$0xf]
      %v403 = vld [vmem:[%s358 + $0x98] sm:$0xf]
      %v404 = vld [vmem:[%s358 + $0x9c] sm:$0xf]
      %v405 = vld [vmem:[%s358 + $0xa0] sm:$0xf]
      %v406 = vld [vmem:[%s358 + $0xa4] sm:$0xf]
      %v407 = vld [vmem:[%s358 + $0xa8] sm:$0xf]
      %v408 = vld [vmem:[%s358 + $0xac] sm:$0xf]
      %v409 = vld [vmem:[%s358 + $0xb0] sm:$0xf]
      %v410 = vld [vmem:[%s358 + $0xb4] sm:$0xf]
      %v411 = vld [vmem:[%s358 + $0xb8] sm:$0xf]
      %v412 = vld [vmem:[%s358 + $0xbc] sm:$0xf]
      %v413 = vld [vmem:[%s358 + $0xc0] sm:$0xf]
      %v414 = vld [vmem:[%s358 + $0xc4] sm:$0xf]
      %v415 = vld [vmem:[%s358 + $0xc8] sm:$0xf]
      %v416 = vld [vmem:[%s358 + $0xcc] sm:$0xf]
      %v417 = vld [vmem:[%s358 + $0xd0] sm:$0xf]
      %v418 = vld [vmem:[%s358 + $0xd4] sm:$0xf]
      %v419 = vld [vmem:[%s1] sm:$0xf]
      %v420 = vld [vmem:[%s1 + $0x4] sm:$0xf]
      %v421 = vld [vmem:[%s1 + $0x8] sm:$0xf]
      %v422 = vld [vmem:[%s1 + $0xc] sm:$0xf]
      %v423 = vld [vmem:[%s1 + $0x10] sm:$0xf]
      %v424 = vld [vmem:[%s1 + $0x14] sm:$0xf]
      %v425 = vld [vmem:[%s1 + $0x18] sm:$0xf]
      %v426 = vld [vmem:[%s1 + $0x1c] sm:$0xf]
      %v427 = vld [vmem:[%s1 + $0x20] sm:$0xf]
      %v428 = vld [vmem:[%s1 + $0x24] sm:$0xf]
      %v429 = vld [vmem:[%s1 + $0x28] sm:$0xf]
      %v430 = vld [vmem:[%s1 + $0x2c] sm:$0xf]
      %v431 = vld [vmem:[%s1 + $0x30] sm:$0xf]
      %v432 = vld [vmem:[%s1 + $0x34] sm:$0xf]
      %v433 = vld [vmem:[%s1 + $0x38] sm:$0xf]
      %v434 = vld [vmem:[%s1 + $0x3c] sm:$0xf]
      %v435 = vld [vmem:[%s2] sm:$0x1]
      %v437 = vperm.slane %v435, 0
      %v493 = vunpack.c.l.b16 %v365
      %v494 = vunpack.c.l.b16 %v366
      %v495 = vunpack.c.l.b16 %v367
      %v496 = vunpack.c.l.b16 %v368
      %v497 = vunpack.c.l.b16 %v369
      %v498 = vunpack.c.l.b16 %v370
      %v499 = vunpack.c.l.b16 %v371
      %v500 = vunpack.c.l.b16 %v372
      %v501 = vunpack.c.l.b16 %v373
      %v502 = vunpack.c.l.b16 %v374
      %v503 = vunpack.c.l.b16 %v375
      %v504 = vunpack.c.l.b16 %v376
      %v505 = vunpack.c.l.b16 %v377
      %v506 = vunpack.c.l.b16 %v378
      %v507 = vunpack.c.l.b16 %v379
      %v508 = vunpack.c.l.b16 %v380
      %v509 = vunpack.c.l.b16 %v381
      %v510 = vunpack.c.l.b16 %v382
      %v511 = vunpack.c.l.b16 %v383
      %v512 = vunpack.c.l.b16 %v384
      %v513 = vunpack.c.l.b16 %v385
      %v514 = vunpack.c.l.b16 %v386
      %v515 = vunpack.c.l.b16 %v387
      %v516 = vunpack.c.l.b16 %v388
      %v517 = vunpack.c.l.b16 %v389
      %v518 = vunpack.c.l.b16 %v390
      %v519 = vunpack.c.l.b16 %v391
      %v520 = vunpack.c.l.b16 %v392
      %v521 = vunpack.c.l.b16 %v393
      %v522 = vunpack.c.l.b16 %v394
      %v523 = vunpack.c.l.b16 %v395
      %v524 = vunpack.c.l.b16 %v396
      %v525 = vunpack.c.l.b16 %v397
      %v526 = vunpack.c.l.b16 %v398
      %v527 = vunpack.c.l.b16 %v399
      %v528 = vunpack.c.l.b16 %v400
      %v529 = vunpack.c.l.b16 %v401
      %v530 = vunpack.c.l.b16 %v402
      %v531 = vunpack.c.l.b16 %v403
      %v532 = vunpack.c.l.b16 %v404
      %v533 = vunpack.c.l.b16 %v405
      %v534 = vunpack.c.l.b16 %v406
      %v535 = vunpack.c.l.b16 %v407
      %v536 = vunpack.c.l.b16 %v408
      %v537 = vunpack.c.l.b16 %v409
      %v538 = vunpack.c.l.b16 %v410
      %v539 = vunpack.c.l.b16 %v411
      %v540 = vunpack.c.l.b16 %v412
      %v541 = vunpack.c.l.b16 %v413
      %v542 = vunpack.c.l.b16 %v414
      %v543 = vunpack.c.l.b16 %v415
      %v544 = vunpack.c.l.b16 %v416
      %v545 = vunpack.c.l.b16 %v417
      %v546 = vunpack.c.l.b16 %v418
      %v547 = vpack.c.b16 %v494, %v493
      %v548 = vpack.c.b16 %v496, %v495
      %v549 = vpack.c.b16 %v498, %v497
      %v550 = vpack.c.b16 %v500, %v499
      %v551 = vpack.c.b16 %v502, %v501
      %v552 = vpack.c.b16 %v504, %v503
      %v553 = vpack.c.b16 %v506, %v505
      %v554 = vpack.c.b16 %v508, %v507
      %v555 = vpack.c.b16 %v510, %v509
      %v556 = vpack.c.b16 %v512, %v511
      %v557 = vpack.c.b16 %v514, %v513
      %v558 = vpack.c.b16 %v516, %v515
      %v559 = vpack.c.b16 %v518, %v517
      %v560 = vpack.c.b16 %v520, %v519
      %v561 = vpack.c.b16 %v522, %v521
      %v562 = vpack.c.b16 %v524, %v523
      %v563 = vpack.c.b16 %v526, %v525
      %v564 = vpack.c.b16 %v528, %v527
      %v565 = vpack.c.b16 %v530, %v529
      %v566 = vpack.c.b16 %v532, %v531
      %v567 = vpack.c.b16 %v534, %v533
      %v568 = vpack.c.b16 %v536, %v535
      %v569 = vpack.c.b16 %v538, %v537
      %v570 = vpack.c.b16 %v540, %v539
      %v571 = vpack.c.b16 %v542, %v541
      %v572 = vpack.c.b16 %v544, %v543
      %v573 = vpack.c.b16 %v546, %v545
      %v617 = vunpack.c.l.b16 %v419
      %v618 = vunpack.c.l.b16 %v420
      %v619 = vunpack.c.l.b16 %v421
      %v620 = vunpack.c.l.b16 %v422
      %v621 = vunpack.c.l.b16 %v423
      %v622 = vunpack.c.l.b16 %v424
      %v623 = vunpack.c.l.b16 %v425
      %v624 = vunpack.c.l.b16 %v426
      %v625 = vunpack.c.l.b16 %v427
      %v626 = vunpack.c.l.b16 %v428
      %v627 = vunpack.c.l.b16 %v429
      %v628 = vunpack.c.l.b16 %v430
      %v629 = vunpack.c.l.b16 %v431
      %v630 = vunpack.c.l.b16 %v432
      %v631 = vunpack.c.l.b16 %v433
      %v632 = vunpack.c.l.b16 %v434
      %v633 = vpack.c.b16 %v618, %v617
      %v634 = vpack.c.b16 %v620, %v619
      %v635 = vpack.c.b16 %v622, %v621
      %v636 = vpack.c.b16 %v624, %v623
      %v637 = vpack.c.b16 %v626, %v625
      %v638 = vpack.c.b16 %v628, %v627
      %v639 = vpack.c.b16 %v630, %v629
      %v640 = vpack.c.b16 %v632, %v631
      %649 = vmatpush.bf16.msra.mxu0 %v640
      %650 = vmatpush.bf16.msra.mxu0 %v639
      %651 = vmatpush.bf16.msra.mxu0 %v638
      %652 = vmatpush.bf16.msra.mxu0 %v637
      %653 = vmatpush.bf16.msra.mxu0 %v636
      %654 = vmatpush.bf16.msra.mxu0 %v635
      %655 = vmatpush.bf16.msra.mxu0 %v634
      %656 = vmatpush.bf16.msra.mxu0 %v633
      %657 = vmatmul.bf16.gmra.mxu0 %v547
      %v658 = vpop.f32.mrf.mxu0
      %v659 = vadd.f32 %v437, %v658
      %v660 = vpop.f32.mrf.mxu0
      %v661 = vadd.f32 %v437, %v660
      %662 = vmatmul.bf16.gmra.mxu0 %v548
      %v663 = vpop.f32.mrf.mxu0
      %v664 = vadd.f32 %v437, %v663
      %v665 = vpop.f32.mrf.mxu0
      %v666 = vadd.f32 %v437, %v665
      %667 = vmatmul.bf16.gmra.mxu0 %v549
      %v668 = vpop.f32.mrf.mxu0
      %v669 = vadd.f32 %v437, %v668
      %v670 = vpop.f32.mrf.mxu0
      %v671 = vadd.f32 %v437, %v670
      %672 = vmatmul.bf16.gmra.mxu0 %v550
      %v673 = vpop.f32.mrf.mxu0
      %v674 = vadd.f32 %v437, %v673
      %v675 = vpop.f32.mrf.mxu0
      %v676 = vadd.f32 %v437, %v675
      %677 = vmatmul.bf16.gmra.mxu0 %v551
      %v678 = vpop.f32.mrf.mxu0
      %v679 = vadd.f32 %v437, %v678
      %v680 = vpop.f32.mrf.mxu0
      %v681 = vadd.f32 %v437, %v680
      %682 = vmatmul.bf16.gmra.mxu0 %v552
      %v683 = vpop.f32.mrf.mxu0
      %v684 = vadd.f32 %v437, %v683
      %v685 = vpop.f32.mrf.mxu0
      %v686 = vadd.f32 %v437, %v685
      %687 = vmatmul.bf16.gmra.mxu0 %v553
      %v688 = vpop.f32.mrf.mxu0
      %v689 = vadd.f32 %v437, %v688
      %v690 = vpop.f32.mrf.mxu0
      %v691 = vadd.f32 %v437, %v690
      %692 = vmatmul.bf16.gmra.mxu0 %v554
      %v693 = vpop.f32.mrf.mxu0
      %v694 = vadd.f32 %v437, %v693
      %v695 = vpop.f32.mrf.mxu0
      %v696 = vadd.f32 %v437, %v695
      %697 = vmatmul.bf16.gmra.mxu0 %v555
      %v698 = vpop.f32.mrf.mxu0
      %v699 = vadd.f32 %v437, %v698
      %v700 = vpop.f32.mrf.mxu0
      %v701 = vadd.f32 %v437, %v700
      %702 = vmatmul.bf16.gmra.mxu0 %v556
      %v703 = vpop.f32.mrf.mxu0
      %v704 = vadd.f32 %v437, %v703
      %v705 = vpop.f32.mrf.mxu0
      %v706 = vadd.f32 %v437, %v705
      %707 = vmatmul.bf16.gmra.mxu0 %v557
      %v708 = vpop.f32.mrf.mxu0
      %v709 = vadd.f32 %v437, %v708
      %v710 = vpop.f32.mrf.mxu0
      %v711 = vadd.f32 %v437, %v710
      %712 = vmatmul.bf16.gmra.mxu0 %v558
      %v713 = vpop.f32.mrf.mxu0
      %v714 = vadd.f32 %v437, %v713
      %v715 = vpop.f32.mrf.mxu0
      %v716 = vadd.f32 %v437, %v715
      %717 = vmatmul.bf16.gmra.mxu0 %v559
      %v718 = vpop.f32.mrf.mxu0
      %v719 = vadd.f32 %v437, %v718
      %v720 = vpop.f32.mrf.mxu0
      %v721 = vadd.f32 %v437, %v720
      %722 = vmatmul.bf16.gmra.mxu0 %v560
      %v723 = vpop.f32.mrf.mxu0
      %v724 = vadd.f32 %v437, %v723
      %v725 = vpop.f32.mrf.mxu0
      %v726 = vadd.f32 %v437, %v725
      %727 = vmatmul.bf16.gmra.mxu0 %v561
      %v728 = vpop.f32.mrf.mxu0
      %v729 = vadd.f32 %v437, %v728
      %v730 = vpop.f32.mrf.mxu0
      %v731 = vadd.f32 %v437, %v730
      %732 = vmatmul.bf16.gmra.mxu0 %v562
      %v733 = vpop.f32.mrf.mxu0
      %v734 = vadd.f32 %v437, %v733
      %v735 = vpop.f32.mrf.mxu0
      %v736 = vadd.f32 %v437, %v735
      %737 = vmatmul.bf16.gmra.mxu0 %v563
      %v738 = vpop.f32.mrf.mxu0
      %v739 = vadd.f32 %v437, %v738
      %v740 = vpop.f32.mrf.mxu0
      %v741 = vadd.f32 %v437, %v740
      %742 = vmatmul.bf16.gmra.mxu0 %v564
      %v743 = vpop.f32.mrf.mxu0
      %v744 = vadd.f32 %v437, %v743
      %v745 = vpop.f32.mrf.mxu0
      %v746 = vadd.f32 %v437, %v745
      %747 = vmatmul.bf16.gmra.mxu0 %v565
      %v748 = vpop.f32.mrf.mxu0
      %v749 = vadd.f32 %v437, %v748
      %v750 = vpop.f32.mrf.mxu0
      %v751 = vadd.f32 %v437, %v750
      %752 = vmatmul.bf16.gmra.mxu0 %v566
      %v753 = vpop.f32.mrf.mxu0
      %v754 = vadd.f32 %v437, %v753
      %v755 = vpop.f32.mrf.mxu0
      %v756 = vadd.f32 %v437, %v755
      %757 = vmatmul.bf16.gmra.mxu0 %v567
      %v758 = vpop.f32.mrf.mxu0
      %v759 = vadd.f32 %v437, %v758
      %v760 = vpop.f32.mrf.mxu0
      %v761 = vadd.f32 %v437, %v760
      %762 = vmatmul.bf16.gmra.mxu0 %v568
      %v763 = vpop.f32.mrf.mxu0
      %v764 = vadd.f32 %v437, %v763
      %v765 = vpop.f32.mrf.mxu0
      %v766 = vadd.f32 %v437, %v765
      %767 = vmatmul.bf16.gmra.mxu0 %v569
      %v768 = vpop.f32.mrf.mxu0
      %v769 = vadd.f32 %v437, %v768
      %v770 = vpop.f32.mrf.mxu0
      %v771 = vadd.f32 %v437, %v770
      %772 = vmatmul.bf16.gmra.mxu0 %v570
      %v773 = vpop.f32.mrf.mxu0
      %v774 = vadd.f32 %v437, %v773
      %v775 = vpop.f32.mrf.mxu0
      %v776 = vadd.f32 %v437, %v775
      %777 = vmatmul.bf16.gmra.mxu0 %v571
      %v778 = vpop.f32.mrf.mxu0
      %v779 = vadd.f32 %v437, %v778
      %v780 = vpop.f32.mrf.mxu0
      %v781 = vadd.f32 %v437, %v780
      %782 = vmatmul.bf16.gmra.mxu0 %v572
      %v783 = vpop.f32.mrf.mxu0
      %v784 = vadd.f32 %v437, %v783
      %v785 = vpop.f32.mrf.mxu0
      %v786 = vadd.f32 %v437, %v785
      %787 = vmatmul.bf16.gmra.mxu0 %v573
      %v788 = vpop.f32.mrf.mxu0
      %v789 = vadd.f32 %v437, %v788
      %v790 = vpop.f32.mrf.mxu0
      %v791 = vadd.f32 %v437, %v790
      %792 = vdwg.mxu0
      %v793 = vmax.f32 %v659, 0.0
      %v794 = vmax.f32 %v661, 0.0
      %v795 = vmax.f32 %v664, 0.0
      %v796 = vmax.f32 %v666, 0.0
      %v797 = vmax.f32 %v669, 0.0
      %v798 = vmax.f32 %v671, 0.0
      %v799 = vmax.f32 %v674, 0.0
      %v800 = vmax.f32 %v676, 0.0
      %v801 = vmax.f32 %v679, 0.0
      %v802 = vmax.f32 %v681, 0.0
      %v803 = vmax.f32 %v684, 0.0
      %v804 = vmax.f32 %v686, 0.0
      %v805 = vmax.f32 %v689, 0.0
      %v806 = vmax.f32 %v691, 0.0
      %v807 = vmax.f32 %v694, 0.0
      %v808 = vmax.f32 %v696, 0.0
      %v809 = vmax.f32 %v699, 0.0
      %v810 = vmax.f32 %v701, 0.0
      %v811 = vmax.f32 %v704, 0.0
      %v812 = vmax.f32 %v706, 0.0
      %v813 = vmax.f32 %v709, 0.0
      %v814 = vmax.f32 %v711, 0.0
      %v815 = vmax.f32 %v714, 0.0
      %v816 = vmax.f32 %v716, 0.0
      %v817 = vmax.f32 %v719, 0.0
      %v818 = vmax.f32 %v721, 0.0
      %v819 = vmax.f32 %v724, 0.0
      %v820 = vmax.f32 %v726, 0.0
      %v821 = vmax.f32 %v729, 0.0
      %v822 = vmax.f32 %v731, 0.0
      %v823 = vmax.f32 %v734, 0.0
      %v824 = vmax.f32 %v736, 0.0
      %v825 = vmax.f32 %v739, 0.0
      %v826 = vmax.f32 %v741, 0.0
      %v827 = vmax.f32 %v744, 0.0
      %v828 = vmax.f32 %v746, 0.0
      %v829 = vmax.f32 %v749, 0.0
      %v830 = vmax.f32 %v751, 0.0
      %v831 = vmax.f32 %v754, 0.0
      %v832 = vmax.f32 %v756, 0.0
      %v833 = vmax.f32 %v759, 0.0
      %v834 = vmax.f32 %v761, 0.0
      %v835 = vmax.f32 %v764, 0.0
      %v836 = vmax.f32 %v766, 0.0
      %v837 = vmax.f32 %v769, 0.0
      %v838 = vmax.f32 %v771, 0.0
      %v839 = vmax.f32 %v774, 0.0
      %v840 = vmax.f32 %v776, 0.0
      %v841 = vmax.f32 %v779, 0.0
      %v842 = vmax.f32 %v781, 0.0
      %v843 = vmax.f32 %v784, 0.0
      %v844 = vmax.f32 %v786, 0.0
      %v845 = vmax.f32 %v789, 0.0
      %v846 = vmax.f32 %v791, 0.0
      %v847 = vpack.c.bf16 %v793, %v793
      %v848 = vpack.c.bf16 %v794, %v794
      %v849 = vpack.c.bf16 %v795, %v795
      %v850 = vpack.c.bf16 %v796, %v796
      %v851 = vpack.c.bf16 %v797, %v797
      %v852 = vpack.c.bf16 %v798, %v798
      %v853 = vpack.c.bf16 %v799, %v799
      %v854 = vpack.c.bf16 %v800, %v800
      %v855 = vpack.c.bf16 %v801, %v801
      %v856 = vpack.c.bf16 %v802, %v802
      %v857 = vpack.c.bf16 %v803, %v803
      %v858 = vpack.c.bf16 %v804, %v804
      %v859 = vpack.c.bf16 %v805, %v805
      %v860 = vpack.c.bf16 %v806, %v806
      %v861 = vpack.c.bf16 %v807, %v807
      %v862 = vpack.c.bf16 %v808, %v808
      %v863 = vpack.c.bf16 %v809, %v809
      %v864 = vpack.c.bf16 %v810, %v810
      %v865 = vpack.c.bf16 %v811, %v811
      %v866 = vpack.c.bf16 %v812, %v812
      %v867 = vpack.c.bf16 %v813, %v813
      %v868 = vpack.c.bf16 %v814, %v814
      %v869 = vpack.c.bf16 %v815, %v815
      %v870 = vpack.c.bf16 %v816, %v816
      %v871 = vpack.c.bf16 %v817, %v817
      %v872 = vpack.c.bf16 %v818, %v818
      %v873 = vpack.c.bf16 %v819, %v819
      %v874 = vpack.c.bf16 %v820, %v820
      %v875 = vpack.c.bf16 %v821, %v821
      %v876 = vpack.c.bf16 %v822, %v822
      %v877 = vpack.c.bf16 %v823, %v823
      %v878 = vpack.c.bf16 %v824, %v824
      %v879 = vpack.c.bf16 %v825, %v825
      %v880 = vpack.c.bf16 %v826, %v826
      %v881 = vpack.c.bf16 %v827, %v827
      %v882 = vpack.c.bf16 %v828, %v828
      %v883 = vpack.c.bf16 %v829, %v829
      %v884 = vpack.c.bf16 %v830, %v830
      %v885 = vpack.c.bf16 %v831, %v831
      %v886 = vpack.c.bf16 %v832, %v832
      %v887 = vpack.c.bf16 %v833, %v833
      %v888 = vpack.c.bf16 %v834, %v834
      %v889 = vpack.c.bf16 %v835, %v835
      %v890 = vpack.c.bf16 %v836, %v836
      %v891 = vpack.c.bf16 %v837, %v837
      %v892 = vpack.c.bf16 %v838, %v838
      %v893 = vpack.c.bf16 %v839, %v839
      %v894 = vpack.c.bf16 %v840, %v840
      %v895 = vpack.c.bf16 %v841, %v841
      %v896 = vpack.c.bf16 %v842, %v842
      %v897 = vpack.c.bf16 %v843, %v843
      %v898 = vpack.c.bf16 %v844, %v844
      %v899 = vpack.c.bf16 %v845, %v845
      %v900 = vpack.c.bf16 %v846, %v846
      %901 = vst [vmem:[#allocation3] sm:$0xf] %v847
      %902 = vst [vmem:[#allocation3 + $0x4] sm:$0xf] %v848
      %903 = vst [vmem:[#allocation3 + $0x8] sm:$0xf] %v849
      %904 = vst [vmem:[#allocation3 + $0xc] sm:$0xf] %v850
      %905 = vst [vmem:[#allocation3 + $0x10] sm:$0xf] %v851
      %906 = vst [vmem:[#allocation3 + $0x14] sm:$0xf] %v852
      %907 = vst [vmem:[#allocation3 + $0x18] sm:$0xf] %v853
      %908 = vst [vmem:[#allocation3 + $0x1c] sm:$0xf] %v854
      %909 = vst [vmem:[#allocation3 + $0x20] sm:$0xf] %v855
      %910 = vst [vmem:[#allocation3 + $0x24] sm:$0xf] %v856
      %911 = vst [vmem:[#allocation3 + $0x28] sm:$0xf] %v857
      %912 = vst [vmem:[#allocation3 + $0x2c] sm:$0xf] %v858
      %913 = vst [vmem:[#allocation3 + $0x30] sm:$0xf] %v859
      %914 = vst [vmem:[#allocation3 + $0x34] sm:$0xf] %v860
      %915 = vst [vmem:[#allocation3 + $0x38] sm:$0xf] %v861
      %916 = vst [vmem:[#allocation3 + $0x3c] sm:$0xf] %v862
      %917 = vst [vmem:[#allocation3 + $0x40] sm:$0xf] %v863
      %918 = vst [vmem:[#allocation3 + $0x44] sm:$0xf] %v864
      %919 = vst [vmem:[#allocation3 + $0x48] sm:$0xf] %v865
      %920 = vst [vmem:[#allocation3 + $0x4c] sm:$0xf] %v866
      %921 = vst [vmem:[#allocation3 + $0x50] sm:$0xf] %v867
      %922 = vst [vmem:[#allocation3 + $0x54] sm:$0xf] %v868
      %923 = vst [vmem:[#allocation3 + $0x58] sm:$0xf] %v869
      %924 = vst [vmem:[#allocation3 + $0x5c] sm:$0xf] %v870
      %925 = vst [vmem:[#allocation3 + $0x60] sm:$0xf] %v871
      %926 = vst [vmem:[#allocation3 + $0x64] sm:$0xf] %v872
      %927 = vst [vmem:[#allocation3 + $0x68] sm:$0xf] %v873
      %928 = vst [vmem:[#allocation3 + $0x6c] sm:$0xf] %v874
      %929 = vst [vmem:[#allocation3 + $0x70] sm:$0xf] %v875
      %930 = vst [vmem:[#allocation3 + $0x74] sm:$0xf] %v876
      %931 = vst [vmem:[#allocation3 + $0x78] sm:$0xf] %v877
      %932 = vst [vmem:[#allocation3 + $0x7c] sm:$0xf] %v878
      %933 = vst [vmem:[#allocation3 + $0x80] sm:$0xf] %v879
      %934 = vst [vmem:[#allocation3 + $0x84] sm:$0xf] %v880
      %935 = vst [vmem:[#allocation3 + $0x88] sm:$0xf] %v881
      %936 = vst [vmem:[#allocation3 + $0x8c] sm:$0xf] %v882
      %937 = vst [vmem:[#allocation3 + $0x90] sm:$0xf] %v883
      %938 = vst [vmem:[#allocation3 + $0x94] sm:$0xf] %v884
      %939 = vst [vmem:[#allocation3 + $0x98] sm:$0xf] %v885
      %940 = vst [vmem:[#allocation3 + $0x9c] sm:$0xf] %v886
      %941 = vst [vmem:[#allocation3 + $0xa0] sm:$0xf] %v887
      %942 = vst [vmem:[#allocation3 + $0xa4] sm:$0xf] %v888
      %943 = vst [vmem:[#allocation3 + $0xa8] sm:$0xf] %v889
      %944 = vst [vmem:[#allocation3 + $0xac] sm:$0xf] %v890
      %945 = vst [vmem:[#allocation3 + $0xb0] sm:$0xf] %v891
      %946 = vst [vmem:[#allocation3 + $0xb4] sm:$0xf] %v892
      %947 = vst [vmem:[#allocation3 + $0xb8] sm:$0xf] %v893
      %948 = vst [vmem:[#allocation3 + $0xbc] sm:$0xf] %v894
      %949 = vst [vmem:[#allocation3 + $0xc0] sm:$0xf] %v895
      %950 = vst [vmem:[#allocation3 + $0xc4] sm:$0xf] %v896
      %951 = vst [vmem:[#allocation3 + $0xc8] sm:$0xf] %v897
      %952 = vst [vmem:[#allocation3 + $0xcc] sm:$0xf] %v898
      %953 = vst [vmem:[#allocation3 + $0xd0] sm:$0xf] %v899
      %954 = vst [vmem:[#allocation3 + $0xd4] sm:$0xf] %v900
      %vm955 = vcmask 1040384
      %vm956 = vsmask.f32 256
      %vm957 = vmand %vm955, %vm956
      %v958 = vld [vmem:[#allocation3] sm:$0x1]
      %v959 = vsel %vm957, 0, %v958
      %960 = vst [vmem:[#allocation3] sm:$0x1] %v959
      %v961 = vld [vmem:[#allocation3 + $0xc] sm:$0x1]
      %v962 = vsel %vm957, 0, %v961
      %963 = vst [vmem:[#allocation3 + $0xc] sm:$0x1] %v962
      %v964 = vld [vmem:[#allocation3 + $0x18] sm:$0x1]
      %v965 = vsel %vm957, 0, %v964
      %966 = vst [vmem:[#allocation3 + $0x18] sm:$0x1] %v965
      %v967 = vld [vmem:[#allocation3 + $0x24] sm:$0x1]
      %v968 = vsel %vm957, 0, %v967
      %969 = vst [vmem:[#allocation3 + $0x24] sm:$0x1] %v968
      %v970 = vld [vmem:[#allocation3 + $0x30] sm:$0x1]
      %v971 = vsel %vm957, 0, %v970
      %972 = vst [vmem:[#allocation3 + $0x30] sm:$0x1] %v971
      %v973 = vld [vmem:[#allocation3 + $0x3c] sm:$0x1]
      %v974 = vsel %vm957, 0, %v973
      %975 = vst [vmem:[#allocation3 + $0x3c] sm:$0x1] %v974
      %v976 = vld [vmem:[#allocation3 + $0x48] sm:$0x1]
      %v977 = vsel %vm957, 0, %v976
      %978 = vst [vmem:[#allocation3 + $0x48] sm:$0x1] %v977
      %v979 = vld [vmem:[#allocation3 + $0x54] sm:$0x1]
      %v980 = vsel %vm957, 0, %v979
      %981 = vst [vmem:[#allocation3 + $0x54] sm:$0x1] %v980
      %v982 = vld [vmem:[#allocation3 + $0x60] sm:$0x1]
      %v983 = vsel %vm957, 0, %v982
      %984 = vst [vmem:[#allocation3 + $0x60] sm:$0x1] %v983
      %v985 = vld [vmem:[#allocation3 + $0x6c] sm:$0x1]
      %v986 = vsel %vm957, 0, %v985
      %987 = vst [vmem:[#allocation3 + $0x6c] sm:$0x1] %v986
      %v988 = vld [vmem:[#allocation3 + $0x78] sm:$0x1]
      %v989 = vsel %vm957, 0, %v988
      %990 = vst [vmem:[#allocation3 + $0x78] sm:$0x1] %v989
      %v991 = vld [vmem:[#allocation3 + $0x84] sm:$0x1]
      %v992 = vsel %vm957, 0, %v991
      %993 = vst [vmem:[#allocation3 + $0x84] sm:$0x1] %v992
      %v994 = vld [vmem:[#allocation3 + $0x90] sm:$0x1]
      %v995 = vsel %vm957, 0, %v994
      %996 = vst [vmem:[#allocation3 + $0x90] sm:$0x1] %v995
      %v997 = vld [vmem:[#allocation3 + $0x9c] sm:$0x1]
      %v998 = vsel %vm957, 0, %v997
      %999 = vst [vmem:[#allocation3 + $0x9c] sm:$0x1] %v998
      %v1000 = vld [vmem:[#allocation3 + $0xa8] sm:$0x1]
      %v1001 = vsel %vm957, 0, %v1000
      %1002 = vst [vmem:[#allocation3 + $0xa8] sm:$0x1] %v1001
      %v1003 = vld [vmem:[#allocation3 + $0xb4] sm:$0x1]
      %v1004 = vsel %vm957, 0, %v1003
      %1005 = vst [vmem:[#allocation3 + $0xb4] sm:$0x1] %v1004
      %v1006 = vld [vmem:[#allocation3 + $0xc0] sm:$0x1]
      %v1007 = vsel %vm957, 0, %v1006
      %1008 = vst [vmem:[#allocation3 + $0xc0] sm:$0x1] %v1007
      %v1009 = vld [vmem:[#allocation3 + $0xcc] sm:$0x1]
      %v1010 = vsel %vm957, 0, %v1009
      %1011 = vst [vmem:[#allocation3 + $0xcc] sm:$0x1] %v1010
      %vm1012 = vcmask 1043456
      %vm1013 = vsmask.f32 7938
      %vm1014 = vmand %vm1012, %vm1013
      %v1015 = vld [vmem:[#allocation3 + $0x8] sm:$0xf]
      %v1016 = vsel %vm1014, 0, %v1015
      %1017 = vst [vmem:[#allocation3 + $0x8] sm:$0xf] %v1016
      %v1018 = vld [vmem:[#allocation3 + $0x14] sm:$0xf]
      %v1019 = vsel %vm1014, 0, %v1018
      %1020 = vst [vmem:[#allocation3 + $0x14] sm:$0xf] %v1019
      %v1021 = vld [vmem:[#allocation3 + $0x20] sm:$0xf]
      %v1022 = vsel %vm1014, 0, %v1021
      %1023 = vst [vmem:[#allocation3 + $0x20] sm:$0xf] %v1022
      %v1024 = vld [vmem:[#allocation3 + $0x2c] sm:$0xf]
      %v1025 = vsel %vm1014, 0, %v1024
      %1026 = vst [vmem:[#allocation3 + $0x2c] sm:$0xf] %v1025
      %v1027 = vld [vmem:[#allocation3 + $0x38] sm:$0xf]
      %v1028 = vsel %vm1014, 0, %v1027
      %1029 = vst [vmem:[#allocation3 + $0x38] sm:$0xf] %v1028
      %v1030 = vld [vmem:[#allocation3 + $0x44] sm:$0xf]
      %v1031 = vsel %vm1014, 0, %v1030
      %1032 = vst [vmem:[#allocation3 + $0x44] sm:$0xf] %v1031
      %v1033 = vld [vmem:[#allocation3 + $0x50] sm:$0xf]
      %v1034 = vsel %vm1014, 0, %v1033
      %1035 = vst [vmem:[#allocation3 + $0x50] sm:$0xf] %v1034
      %v1036 = vld [vmem:[#allocation3 + $0x5c] sm:$0xf]
      %v1037 = vsel %vm1014, 0, %v1036
      %1038 = vst [vmem:[#allocation3 + $0x5c] sm:$0xf] %v1037
      %v1039 = vld [vmem:[#allocation3 + $0x68] sm:$0xf]
      %v1040 = vsel %vm1014, 0, %v1039
      %1041 = vst [vmem:[#allocation3 + $0x68] sm:$0xf] %v1040
      %v1042 = vld [vmem:[#allocation3 + $0x74] sm:$0xf]
      %v1043 = vsel %vm1014, 0, %v1042
      %1044 = vst [vmem:[#allocation3 + $0x74] sm:$0xf] %v1043
      %v1045 = vld [vmem:[#allocation3 + $0x80] sm:$0xf]
      %v1046 = vsel %vm1014, 0, %v1045
      %1047 = vst [vmem:[#allocation3 + $0x80] sm:$0xf] %v1046
      %v1048 = vld [vmem:[#allocation3 + $0x8c] sm:$0xf]
      %v1049 = vsel %vm1014, 0, %v1048
      %1050 = vst [vmem:[#allocation3 + $0x8c] sm:$0xf] %v1049
      %v1051 = vld [vmem:[#allocation3 + $0x98] sm:$0xf]
      %v1052 = vsel %vm1014, 0, %v1051
      %1053 = vst [vmem:[#allocation3 + $0x98] sm:$0xf] %v1052
      %v1054 = vld [vmem:[#allocation3 + $0xa4] sm:$0xf]
      %v1055 = vsel %vm1014, 0, %v1054
      %1056 = vst [vmem:[#allocation3 + $0xa4] sm:$0xf] %v1055
      %v1057 = vld [vmem:[#allocation3 + $0xb0] sm:$0xf]
      %v1058 = vsel %vm1014, 0, %v1057
      %1059 = vst [vmem:[#allocation3 + $0xb0] sm:$0xf] %v1058
      %v1060 = vld [vmem:[#allocation3 + $0xbc] sm:$0xf]
      %v1061 = vsel %vm1014, 0, %v1060
      %1062 = vst [vmem:[#allocation3 + $0xbc] sm:$0xf] %v1061
      %v1063 = vld [vmem:[#allocation3 + $0xc8] sm:$0xf]
      %v1064 = vsel %vm1014, 0, %v1063
      %1065 = vst [vmem:[#allocation3 + $0xc8] sm:$0xf] %v1064
      %v1066 = vld [vmem:[#allocation3 + $0xd4] sm:$0xf]
      %v1067 = vsel %vm1014, 0, %v1066
      %1068 = vst [vmem:[#allocation3 + $0xd4] sm:$0xf] %v1067
      // Predicated region
      $region68: #{bottleneck_forward.1} parent=43 // pred_check
        %p1069 = pneg %p271
      $region69: #{bottleneck_forward.1} parent=43 // pred_check_branch
        %1071 = sbr.rel (%p1069) target = $region71
      $region70: #{bottleneck_forward.1} parent=43 // pred_region
        %1072 = vst [vmem:[#allocation3] sm:$0xf] 0
        %1073 = vst [vmem:[#allocation3 + $0x4] sm:$0xf] 0
        %1074 = vst [vmem:[#allocation3 + $0x8] sm:$0xf] 0
        %s1075 = scalar_lea.vmem [#allocation3], 204
        %1076 = vst [vmem:[%s1075] sm:$0xf] 0
        %1077 = vst [vmem:[%s1075 + $0x4] sm:$0xf] 0
        %1078 = vst [vmem:[%s1075 + $0x8] sm:$0xf] 0
      $region71: #{bottleneck_forward.1} parent=43 // pred_fallthru
        _
      %v1079 = vld [vmem:[#allocation3] sm:$0xf]
      %v1080 = vld [vmem:[#allocation3 + $0x4] sm:$0xf]
      %v1081 = vld [vmem:[#allocation3 + $0xc] sm:$0xf]
      %v1082 = vld [vmem:[#allocation3 + $0x10] sm:$0xf]
      %v1083 = vld [vmem:[#allocation3 + $0x18] sm:$0xf]
      %v1084 = vld [vmem:[#allocation3 + $0x1c] sm:$0xf]
      %v1085 = vld [vmem:[#allocation3 + $0x24] sm:$0xf]
      %v1086 = vld [vmem:[#allocation3 + $0x28] sm:$0xf]
      %v1087 = vld [vmem:[#allocation3 + $0x30] sm:$0xf]
      %v1088 = vld [vmem:[#allocation3 + $0x34] sm:$0xf]
      %v1089 = vld [vmem:[#allocation3 + $0x3c] sm:$0xf]
      %v1090 = vld [vmem:[#allocation3 + $0x40] sm:$0xf]
      %v1091 = vld [vmem:[#allocation3 + $0x48] sm:$0xf]
      %v1092 = vld [vmem:[#allocation3 + $0x4c] sm:$0xf]
      %v1093 = vld [vmem:[#allocation3 + $0x54] sm:$0xf]
      %v1094 = vld [vmem:[#allocation3 + $0x58] sm:$0xf]
      %v1095 = vld [vmem:[#allocation3 + $0x60] sm:$0xf]
      %v1096 = vld [vmem:[#allocation3 + $0x64] sm:$0xf]
      %v1097 = vld [vmem:[#allocation3 + $0x6c] sm:$0xf]
      %v1098 = vld [vmem:[#allocation3 + $0x70] sm:$0xf]
      %v1099 = vld [vmem:[#allocation3 + $0x78] sm:$0xf]
      %v1100 = vld [vmem:[#allocation3 + $0x7c] sm:$0xf]
      %v1101 = vld [vmem:[#allocation3 + $0x84] sm:$0xf]
      %v1102 = vld [vmem:[#allocation3 + $0x88] sm:$0xf]
      %v1103 = vld [vmem:[#allocation3 + $0x90] sm:$0xf]
      %v1104 = vld [vmem:[#allocation3 + $0x94] sm:$0xf]
      %v1105 = vld [vmem:[#allocation3 + $0x9c] sm:$0xf]
      %v1106 = vld [vmem:[#allocation3 + $0xa0] sm:$0xf]
      %v1107 = vld [vmem:[#allocation3 + $0xa8] sm:$0xf]
      %v1108 = vld [vmem:[#allocation3 + $0xac] sm:$0xf]
      %v1109 = vld [vmem:[#allocation3 + $0xb4] sm:$0xf]
      %v1110 = vld [vmem:[#allocation3 + $0xb8] sm:$0xf]
      %v1111 = vld [vmem:[#allocation3 + $0x8] sm:$0x1]
      %v1112 = vld [vmem:[#allocation3 + $0x14] sm:$0x1]
      %v1113 = vld [vmem:[#allocation3 + $0x20] sm:$0x1]
      %v1114 = vld [vmem:[#allocation3 + $0x2c] sm:$0x1]
      %v1115 = vld [vmem:[#allocation3 + $0x38] sm:$0x1]
      %v1116 = vld [vmem:[#allocation3 + $0x44] sm:$0x1]
      %v1117 = vld [vmem:[#allocation3 + $0x50] sm:$0x1]
      %v1118 = vld [vmem:[#allocation3 + $0x5c] sm:$0x1]
      %v1119 = vld [vmem:[#allocation3 + $0x68] sm:$0x1]
      %v1120 = vld [vmem:[#allocation3 + $0x74] sm:$0x1]
      %v1121 = vld [vmem:[#allocation3 + $0x80] sm:$0x1]
      %v1122 = vld [vmem:[#allocation3 + $0x8c] sm:$0x1]
      %v1123 = vld [vmem:[#allocation3 + $0x98] sm:$0x1]
      %v1124 = vld [vmem:[#allocation3 + $0xa4] sm:$0x1]
      %v1125 = vld [vmem:[#allocation3 + $0xb0] sm:$0x1]
      %v1126 = vld [vmem:[#allocation3 + $0xbc] sm:$0x1]
      %v1127 = vld [vmem:[#allocation3] sm:$0xe]
      %v1128 = vld [vmem:[#allocation3 + $0xc] sm:$0xe]
      %v1129 = vld [vmem:[#allocation3 + $0x18] sm:$0xe]
      %v1130 = vld [vmem:[#allocation3 + $0x24] sm:$0xe]
      %v1131 = vld [vmem:[#allocation3 + $0x30] sm:$0xe]
      %v1132 = vld [vmem:[#allocation3 + $0x3c] sm:$0xe]
      %v1133 = vld [vmem:[#allocation3 + $0x48] sm:$0xe]
      %v1134 = vld [vmem:[#allocation3 + $0x54] sm:$0xe]
      %v1135 = vld [vmem:[#allocation3 + $0x60] sm:$0xe]
      %v1136 = vld [vmem:[#allocation3 + $0x6c] sm:$0xe]
      %v1137 = vld [vmem:[#allocation3 + $0x78] sm:$0xe]
      %v1138 = vld [vmem:[#allocation3 + $0x84] sm:$0xe]
      %v1139 = vld [vmem:[#allocation3 + $0x90] sm:$0xe]
      %v1140 = vld [vmem:[#allocation3 + $0x9c] sm:$0xe]
      %v1141 = vld [vmem:[#allocation3 + $0xa8] sm:$0xe]
      %v1142 = vld [vmem:[#allocation3 + $0xb4] sm:$0xe]
      %v1175 = vunpack.c.l.b16 %v1079
      %v1176 = vunpack.c.l.b16 %v1080
      %v1177 = vunpack.c.l.b16 %v1081
      %v1178 = vunpack.c.l.b16 %v1082
      %v1179 = vunpack.c.l.b16 %v1083
      %v1180 = vunpack.c.l.b16 %v1084
      %v1181 = vunpack.c.l.b16 %v1085
      %v1182 = vunpack.c.l.b16 %v1086
      %v1183 = vunpack.c.l.b16 %v1087
      %v1184 = vunpack.c.l.b16 %v1088
      %v1185 = vunpack.c.l.b16 %v1089
      %v1186 = vunpack.c.l.b16 %v1090
      %v1187 = vunpack.c.l.b16 %v1091
      %v1188 = vunpack.c.l.b16 %v1092
      %v1189 = vunpack.c.l.b16 %v1093
      %v1190 = vunpack.c.l.b16 %v1094
      %v1191 = vunpack.c.l.b16 %v1095
      %v1192 = vunpack.c.l.b16 %v1096
      %v1193 = vunpack.c.l.b16 %v1097
      %v1194 = vunpack.c.l.b16 %v1098
      %v1195 = vunpack.c.l.b16 %v1099
      %v1196 = vunpack.c.l.b16 %v1100
      %v1197 = vunpack.c.l.b16 %v1101
      %v1198 = vunpack.c.l.b16 %v1102
      %v1199 = vunpack.c.l.b16 %v1103
      %v1200 = vunpack.c.l.b16 %v1104
      %v1201 = vunpack.c.l.b16 %v1105
      %v1202 = vunpack.c.l.b16 %v1106
      %v1203 = vunpack.c.l.b16 %v1107
      %v1204 = vunpack.c.l.b16 %v1108
      %v1205 = vunpack.c.l.b16 %v1109
      %v1206 = vunpack.c.l.b16 %v1110
      %v1207 = vpack.c.b16 %v1176, %v1175
      %v1208 = vpack.c.b16 %v1178, %v1177
      %v1209 = vpack.c.b16 %v1180, %v1179
      %v1210 = vpack.c.b16 %v1182, %v1181
      %v1211 = vpack.c.b16 %v1184, %v1183
      %v1212 = vpack.c.b16 %v1186, %v1185
      %v1213 = vpack.c.b16 %v1188, %v1187
      %v1214 = vpack.c.b16 %v1190, %v1189
      %v1215 = vpack.c.b16 %v1192, %v1191
      %v1216 = vpack.c.b16 %v1194, %v1193
      %v1217 = vpack.c.b16 %v1196, %v1195
      %v1218 = vpack.c.b16 %v1198, %v1197
      %v1219 = vpack.c.b16 %v1200, %v1199
      %v1220 = vpack.c.b16 %v1202, %v1201
      %v1221 = vpack.c.b16 %v1204, %v1203
      %v1222 = vpack.c.b16 %v1206, %v1205
      %v1255 = vunpack.c.l.b16 %v1111
      %v1256 = vunpack.c.l.b16 %v1112
      %v1257 = vunpack.c.l.b16 %v1113
      %v1258 = vunpack.c.l.b16 %v1114
      %v1259 = vunpack.c.l.b16 %v1115
      %v1260 = vunpack.c.l.b16 %v1116
      %v1261 = vunpack.c.l.b16 %v1117
      %v1262 = vunpack.c.l.b16 %v1118
      %v1263 = vunpack.c.l.b16 %v1119
      %v1264 = vunpack.c.l.b16 %v1120
      %v1265 = vunpack.c.l.b16 %v1121
      %v1266 = vunpack.c.l.b16 %v1122
      %v1267 = vunpack.c.l.b16 %v1123
      %v1268 = vunpack.c.l.b16 %v1124
      %v1269 = vunpack.c.l.b16 %v1125
      %v1270 = vunpack.c.l.b16 %v1126
      %v1271 = vpack.c.b16 %v1255, %v1255
      %v1272 = vpack.c.b16 %v1256, %v1256
      %v1273 = vpack.c.b16 %v1257, %v1257
      %v1274 = vpack.c.b16 %v1258, %v1258
      %v1275 = vpack.c.b16 %v1259, %v1259
      %v1276 = vpack.c.b16 %v1260, %v1260
      %v1277 = vpack.c.b16 %v1261, %v1261
      %v1278 = vpack.c.b16 %v1262, %v1262
      %v1279 = vpack.c.b16 %v1263, %v1263
      %v1280 = vpack.c.b16 %v1264, %v1264
      %v1281 = vpack.c.b16 %v1265, %v1265
      %v1282 = vpack.c.b16 %v1266, %v1266
      %v1283 = vpack.c.b16 %v1267, %v1267
      %v1284 = vpack.c.b16 %v1268, %v1268
      %v1285 = vpack.c.b16 %v1269, %v1269
      %v1286 = vpack.c.b16 %v1270, %v1270
      %vm1287 = vsmask.f32 7424
      %v1289 = vshrl.u32 %v1207, 16
      %v1291 = vshll.u32 %v1207, 16
      %v1293 = vrot.slane %v1291, 1
      %v1294 = vor.u32 %v1289, %v1293
      %v1296 = vshll.u32 %v1271, 16
      %v1298 = vrot.slane %v1296, 1
      %v1299 = vsel %vm1287, %v1294, %v1298
      %v1301 = vshrl.u32 %v1208, 16
      %v1303 = vshll.u32 %v1208, 16
      %v1305 = vrot.slane %v1303, 1
      %v1306 = vor.u32 %v1301, %v1305
      %v1308 = vshll.u32 %v1272, 16
      %v1310 = vrot.slane %v1308, 1
      %v1311 = vsel %vm1287, %v1306, %v1310
      %v1313 = vshrl.u32 %v1209, 16
      %v1315 = vshll.u32 %v1209, 16
      %v1317 = vrot.slane %v1315, 1
      %v1318 = vor.u32 %v1313, %v1317
      %v1320 = vshll.u32 %v1273, 16
      %v1322 = vrot.slane %v1320, 1
      %v1323 = vsel %vm1287, %v1318, %v1322
      %v1325 = vshrl.u32 %v1210, 16
      %v1327 = vshll.u32 %v1210, 16
      %v1329 = vrot.slane %v1327, 1
      %v1330 = vor.u32 %v1325, %v1329
      %v1332 = vshll.u32 %v1274, 16
      %v1334 = vrot.slane %v1332, 1
      %v1335 = vsel %vm1287, %v1330, %v1334
      %v1337 = vshrl.u32 %v1211, 16
      %v1339 = vshll.u32 %v1211, 16
      %v1341 = vrot.slane %v1339, 1
      %v1342 = vor.u32 %v1337, %v1341
      %v1344 = vshll.u32 %v1275, 16
      %v1346 = vrot.slane %v1344, 1
      %v1347 = vsel %vm1287, %v1342, %v1346
      %v1349 = vshrl.u32 %v1212, 16
      %v1351 = vshll.u32 %v1212, 16
      %v1353 = vrot.slane %v1351, 1
      %v1354 = vor.u32 %v1349, %v1353
      %v1356 = vshll.u32 %v1276, 16
      %v1358 = vrot.slane %v1356, 1
      %v1359 = vsel %vm1287, %v1354, %v1358
      %v1361 = vshrl.u32 %v1213, 16
      %v1363 = vshll.u32 %v1213, 16
      %v1365 = vrot.slane %v1363, 1
      %v1366 = vor.u32 %v1361, %v1365
      %v1368 = vshll.u32 %v1277, 16
      %v1370 = vrot.slane %v1368, 1
      %v1371 = vsel %vm1287, %v1366, %v1370
      %v1373 = vshrl.u32 %v1214, 16
      %v1375 = vshll.u32 %v1214, 16
      %v1377 = vrot.slane %v1375, 1
      %v1378 = vor.u32 %v1373, %v1377
      %v1380 = vshll.u32 %v1278, 16
      %v1382 = vrot.slane %v1380, 1
      %v1383 = vsel %vm1287, %v1378, %v1382
      %v1385 = vshrl.u32 %v1215, 16
      %v1387 = vshll.u32 %v1215, 16
      %v1389 = vrot.slane %v1387, 1
      %v1390 = vor.u32 %v1385, %v1389
      %v1392 = vshll.u32 %v1279, 16
      %v1394 = vrot.slane %v1392, 1
      %v1395 = vsel %vm1287, %v1390, %v1394
      %v1397 = vshrl.u32 %v1216, 16
      %v1399 = vshll.u32 %v1216, 16
      %v1401 = vrot.slane %v1399, 1
      %v1402 = vor.u32 %v1397, %v1401
      %v1404 = vshll.u32 %v1280, 16
      %v1406 = vrot.slane %v1404, 1
      %v1407 = vsel %vm1287, %v1402, %v1406
      %v1409 = vshrl.u32 %v1217, 16
      %v1411 = vshll.u32 %v1217, 16
      %v1413 = vrot.slane %v1411, 1
      %v1414 = vor.u32 %v1409, %v1413
      %v1416 = vshll.u32 %v1281, 16
      %v1418 = vrot.slane %v1416, 1
      %v1419 = vsel %vm1287, %v1414, %v1418
      %v1421 = vshrl.u32 %v1218, 16
      %v1423 = vshll.u32 %v1218, 16
      %v1425 = vrot.slane %v1423, 1
      %v1426 = vor.u32 %v1421, %v1425
      %v1428 = vshll.u32 %v1282, 16
      %v1430 = vrot.slane %v1428, 1
      %v1431 = vsel %vm1287, %v1426, %v1430
      %v1433 = vshrl.u32 %v1219, 16
      %v1435 = vshll.u32 %v1219, 16
      %v1437 = vrot.slane %v1435, 1
      %v1438 = vor.u32 %v1433, %v1437
      %v1440 = vshll.u32 %v1283, 16
      %v1442 = vrot.slane %v1440, 1
      %v1443 = vsel %vm1287, %v1438, %v1442
      %v1445 = vshrl.u32 %v1220, 16
      %v1447 = vshll.u32 %v1220, 16
      %v1449 = vrot.slane %v1447, 1
      %v1450 = vor.u32 %v1445, %v1449
      %v1452 = vshll.u32 %v1284, 16
      %v1454 = vrot.slane %v1452, 1
      %v1455 = vsel %vm1287, %v1450, %v1454
      %v1457 = vshrl.u32 %v1221, 16
      %v1459 = vshll.u32 %v1221, 16
      %v1461 = vrot.slane %v1459, 1
      %v1462 = vor.u32 %v1457, %v1461
      %v1464 = vshll.u32 %v1285, 16
      %v1466 = vrot.slane %v1464, 1
      %v1467 = vsel %vm1287, %v1462, %v1466
      %v1469 = vshrl.u32 %v1222, 16
      %v1471 = vshll.u32 %v1222, 16
      %v1473 = vrot.slane %v1471, 1
      %v1474 = vor.u32 %v1469, %v1473
      %v1476 = vshll.u32 %v1286, 16
      %v1478 = vrot.slane %v1476, 1
      %v1479 = vsel %vm1287, %v1474, %v1478
      %v1512 = vunpack.c.l.b16 %v1127
      %v1513 = vunpack.c.l.b16 %v1128
      %v1514 = vunpack.c.l.b16 %v1129
      %v1515 = vunpack.c.l.b16 %v1130
      %v1516 = vunpack.c.l.b16 %v1131
      %v1517 = vunpack.c.l.b16 %v1132
      %v1518 = vunpack.c.l.b16 %v1133
      %v1519 = vunpack.c.l.b16 %v1134
      %v1520 = vunpack.c.l.b16 %v1135
      %v1521 = vunpack.c.l.b16 %v1136
      %v1522 = vunpack.c.l.b16 %v1137
      %v1523 = vunpack.c.l.b16 %v1138
      %v1524 = vunpack.c.l.b16 %v1139
      %v1525 = vunpack.c.l.b16 %v1140
      %v1526 = vunpack.c.l.b16 %v1141
      %v1527 = vunpack.c.l.b16 %v1142
      %v1528 = vpack.c.b16 %v1176, %v1512
      %v1529 = vpack.c.b16 %v1178, %v1513
      %v1530 = vpack.c.b16 %v1180, %v1514
      %v1531 = vpack.c.b16 %v1182, %v1515
      %v1532 = vpack.c.b16 %v1184, %v1516
      %v1533 = vpack.c.b16 %v1186, %v1517
      %v1534 = vpack.c.b16 %v1188, %v1518
      %v1535 = vpack.c.b16 %v1190, %v1519
      %v1536 = vpack.c.b16 %v1192, %v1520
      %v1537 = vpack.c.b16 %v1194, %v1521
      %v1538 = vpack.c.b16 %v1196, %v1522
      %v1539 = vpack.c.b16 %v1198, %v1523
      %v1540 = vpack.c.b16 %v1200, %v1524
      %v1541 = vpack.c.b16 %v1202, %v1525
      %v1542 = vpack.c.b16 %v1204, %v1526
      %v1543 = vpack.c.b16 %v1206, %v1527
      %vm1544 = vcmask 1046528
      %v1545 = vrot.slane %v1528, 1
      %v1546 = vrot.slane %v1271, 1
      %v1547 = vsel %vm1544, %v1545, %v1546
      %v1548 = vrot.slane %v1529, 1
      %v1549 = vrot.slane %v1272, 1
      %v1550 = vsel %vm1544, %v1548, %v1549
      %v1551 = vrot.slane %v1530, 1
      %v1552 = vrot.slane %v1273, 1
      %v1553 = vsel %vm1544, %v1551, %v1552
      %v1554 = vrot.slane %v1531, 1
      %v1555 = vrot.slane %v1274, 1
      %v1556 = vsel %vm1544, %v1554, %v1555
      %v1557 = vrot.slane %v1532, 1
      %v1558 = vrot.slane %v1275, 1
      %v1559 = vsel %vm1544, %v1557, %v1558
      %v1560 = vrot.slane %v1533, 1
      %v1561 = vrot.slane %v1276, 1
      %v1562 = vsel %vm1544, %v1560, %v1561
      %v1563 = vrot.slane %v1534, 1
      %v1564 = vrot.slane %v1277, 1
      %v1565 = vsel %vm1544, %v1563, %v1564
      %v1566 = vrot.slane %v1535, 1
      %v1567 = vrot.slane %v1278, 1
      %v1568 = vsel %vm1544, %v1566, %v1567
      %v1569 = vrot.slane %v1536, 1
      %v1570 = vrot.slane %v1279, 1
      %v1571 = vsel %vm1544, %v1569, %v1570
      %v1572 = vrot.slane %v1537, 1
      %v1573 = vrot.slane %v1280, 1
      %v1574 = vsel %vm1544, %v1572, %v1573
      %v1575 = vrot.slane %v1538, 1
      %v1576 = vrot.slane %v1281, 1
      %v1577 = vsel %vm1544, %v1575, %v1576
      %v1578 = vrot.slane %v1539, 1
      %v1579 = vrot.slane %v1282, 1
      %v1580 = vsel %vm1544, %v1578, %v1579
      %v1581 = vrot.slane %v1540, 1
      %v1582 = vrot.slane %v1283, 1
      %v1583 = vsel %vm1544, %v1581, %v1582
      %v1584 = vrot.slane %v1541, 1
      %v1585 = vrot.slane %v1284, 1
      %v1586 = vsel %vm1544, %v1584, %v1585
      %v1587 = vrot.slane %v1542, 1
      %v1588 = vrot.slane %v1285, 1
      %v1589 = vsel %vm1544, %v1587, %v1588
      %v1590 = vrot.slane %v1543, 1
      %v1591 = vrot.slane %v1286, 1
      %v1592 = vsel %vm1544, %v1590, %v1591
      %v1609 = vld [vmem:[%s3] sm:$0xf]
      %v1610 = vld [vmem:[%s3 + $0x4] sm:$0xf]
      %v1611 = vld [vmem:[%s3 + $0x8] sm:$0xf]
      %v1612 = vld [vmem:[%s3 + $0xc] sm:$0xf]
      %v1613 = vld [vmem:[%s3 + $0x10] sm:$0xf]
      %v1614 = vld [vmem:[%s3 + $0x14] sm:$0xf]
      %v1615 = vld [vmem:[%s3 + $0x18] sm:$0xf]
      %v1616 = vld [vmem:[%s3 + $0x1c] sm:$0xf]
      %v1617 = vld [vmem:[%s3 + $0x20] sm:$0xf]
      %v1618 = vld [vmem:[%s3 + $0x24] sm:$0xf]
      %v1619 = vld [vmem:[%s3 + $0x28] sm:$0xf]
      %v1620 = vld [vmem:[%s3 + $0x2c] sm:$0xf]
      %v1621 = vld [vmem:[%s3 + $0x30] sm:$0xf]
      %v1622 = vld [vmem:[%s3 + $0x34] sm:$0xf]
      %v1623 = vld [vmem:[%s3 + $0x38] sm:$0xf]
      %v1624 = vld [vmem:[%s3 + $0x3c] sm:$0xf]
      %v1625 = vld [vmem:[%s3 + $0x40] sm:$0xf]
      %v1626 = vld [vmem:[%s3 + $0x44] sm:$0xf]
      %v1627 = vld [vmem:[%s3 + $0x48] sm:$0xf]
      %v1628 = vld [vmem:[%s3 + $0x4c] sm:$0xf]
      %v1629 = vld [vmem:[%s3 + $0x50] sm:$0xf]
      %v1630 = vld [vmem:[%s3 + $0x54] sm:$0xf]
      %v1631 = vld [vmem:[%s3 + $0x58] sm:$0xf]
      %v1632 = vld [vmem:[%s3 + $0x5c] sm:$0xf]
      %v1633 = vld [vmem:[%s3 + $0x60] sm:$0xf]
      %v1634 = vld [vmem:[%s3 + $0x64] sm:$0xf]
      %v1635 = vld [vmem:[%s3 + $0x68] sm:$0xf]
      %v1636 = vld [vmem:[%s3 + $0x6c] sm:$0xf]
      %v1637 = vld [vmem:[%s3 + $0x70] sm:$0xf]
      %v1638 = vld [vmem:[%s3 + $0x74] sm:$0xf]
      %v1639 = vld [vmem:[%s3 + $0x78] sm:$0xf]
      %v1640 = vld [vmem:[%s3 + $0x7c] sm:$0xf]
      %v1641 = vld [vmem:[%s3 + $0x80] sm:$0xf]
      %v1642 = vld [vmem:[%s3 + $0x84] sm:$0xf]
      %v1643 = vld [vmem:[%s3 + $0x88] sm:$0xf]
      %v1644 = vld [vmem:[%s3 + $0x8c] sm:$0xf]
      %v1645 = vld [vmem:[%s3 + $0x90] sm:$0xf]
      %v1646 = vld [vmem:[%s3 + $0x94] sm:$0xf]
      %v1647 = vld [vmem:[%s3 + $0x98] sm:$0xf]
      %v1648 = vld [vmem:[%s3 + $0x9c] sm:$0xf]
      %v1649 = vld [vmem:[%s3 + $0xa0] sm:$0xf]
      %v1650 = vld [vmem:[%s3 + $0xa4] sm:$0xf]
      %v1651 = vld [vmem:[%s3 + $0xa8] sm:$0xf]
      %v1652 = vld [vmem:[%s3 + $0xac] sm:$0xf]
      %v1653 = vld [vmem:[%s3 + $0xb0] sm:$0xf]
      %v1654 = vld [vmem:[%s3 + $0xb4] sm:$0xf]
      %v1655 = vld [vmem:[%s3 + $0xb8] sm:$0xf]
      %v1656 = vld [vmem:[%s3 + $0xbc] sm:$0xf]
      %v1705 = vunpack.c.l.b16 %v1609
      %v1706 = vunpack.c.l.b16 %v1610
      %v1707 = vunpack.c.l.b16 %v1611
      %v1708 = vunpack.c.l.b16 %v1612
      %v1709 = vunpack.c.l.b16 %v1613
      %v1710 = vunpack.c.l.b16 %v1614
      %v1711 = vunpack.c.l.b16 %v1615
      %v1712 = vunpack.c.l.b16 %v1616
      %v1713 = vunpack.c.l.b16 %v1617
      %v1714 = vunpack.c.l.b16 %v1618
      %v1715 = vunpack.c.l.b16 %v1619
      %v1716 = vunpack.c.l.b16 %v1620
      %v1717 = vunpack.c.l.b16 %v1621
      %v1718 = vunpack.c.l.b16 %v1622
      %v1719 = vunpack.c.l.b16 %v1623
      %v1720 = vunpack.c.l.b16 %v1624
      %v1721 = vunpack.c.l.b16 %v1625
      %v1722 = vunpack.c.l.b16 %v1626
      %v1723 = vunpack.c.l.b16 %v1627
      %v1724 = vunpack.c.l.b16 %v1628
      %v1725 = vunpack.c.l.b16 %v1629
      %v1726 = vunpack.c.l.b16 %v1630
      %v1727 = vunpack.c.l.b16 %v1631
      %v1728 = vunpack.c.l.b16 %v1632
      %v1729 = vunpack.c.l.b16 %v1633
      %v1730 = vunpack.c.l.b16 %v1634
      %v1731 = vunpack.c.l.b16 %v1635
      %v1732 = vunpack.c.l.b16 %v1636
      %v1733 = vunpack.c.l.b16 %v1637
      %v1734 = vunpack.c.l.b16 %v1638
      %v1735 = vunpack.c.l.b16 %v1639
      %v1736 = vunpack.c.l.b16 %v1640
      %v1737 = vunpack.c.l.b16 %v1641
      %v1738 = vunpack.c.l.b16 %v1642
      %v1739 = vunpack.c.l.b16 %v1643
      %v1740 = vunpack.c.l.b16 %v1644
      %v1741 = vunpack.c.l.b16 %v1645
      %v1742 = vunpack.c.l.b16 %v1646
      %v1743 = vunpack.c.l.b16 %v1647
      %v1744 = vunpack.c.l.b16 %v1648
      %v1745 = vunpack.c.l.b16 %v1649
      %v1746 = vunpack.c.l.b16 %v1650
      %v1747 = vunpack.c.l.b16 %v1651
      %v1748 = vunpack.c.l.b16 %v1652
      %v1749 = vunpack.c.l.b16 %v1653
      %v1750 = vunpack.c.l.b16 %v1654
      %v1751 = vunpack.c.l.b16 %v1655
      %v1752 = vunpack.c.l.b16 %v1656
      %v1753 = vpack.c.b16 %v1706, %v1705
      %v1754 = vpack.c.b16 %v1708, %v1707
      %v1755 = vpack.c.b16 %v1710, %v1709
      %v1756 = vpack.c.b16 %v1712, %v1711
      %v1757 = vpack.c.b16 %v1714, %v1713
      %v1758 = vpack.c.b16 %v1716, %v1715
      %v1759 = vpack.c.b16 %v1718, %v1717
      %v1760 = vpack.c.b16 %v1720, %v1719
      %v1761 = vpack.c.b16 %v1722, %v1721
      %v1762 = vpack.c.b16 %v1724, %v1723
      %v1763 = vpack.c.b16 %v1726, %v1725
      %v1764 = vpack.c.b16 %v1728, %v1727
      %v1765 = vpack.c.b16 %v1730, %v1729
      %v1766 = vpack.c.b16 %v1732, %v1731
      %v1767 = vpack.c.b16 %v1734, %v1733
      %v1768 = vpack.c.b16 %v1736, %v1735
      %v1769 = vpack.c.b16 %v1738, %v1737
      %v1770 = vpack.c.b16 %v1740, %v1739
      %v1771 = vpack.c.b16 %v1742, %v1741
      %v1772 = vpack.c.b16 %v1744, %v1743
      %v1773 = vpack.c.b16 %v1746, %v1745
      %v1774 = vpack.c.b16 %v1748, %v1747
      %v1775 = vpack.c.b16 %v1750, %v1749
      %v1776 = vpack.c.b16 %v1752, %v1751
      %1801 = vmatpush.bf16.msra.mxu0 %v1760
      %1802 = vmatpush.bf16.msra.mxu0 %v1759
      %1803 = vmatpush.bf16.msra.mxu0 %v1758
      %1804 = vmatpush.bf16.msra.mxu0 %v1757
      %1805 = vmatpush.bf16.msra.mxu0 %v1756
      %1806 = vmatpush.bf16.msra.mxu0 %v1755
      %1807 = vmatpush.bf16.msra.mxu0 %v1754
      %1808 = vmatpush.bf16.msra.mxu0 %v1753
      %1809 = vmatmul.bf16.gmra.mxu0 %v1207
      %v1810 = vpop.f32.mrf.mxu0
      %v1811 = vadd.f32 0.0, %v1810
      %v1812 = vpop.f32.mrf.mxu0
      %v1813 = vadd.f32 0.0, %v1812
      %1814 = vmatmul.bf16.gmra.mxu0 %v1208
      %v1815 = vpop.f32.mrf.mxu0
      %v1816 = vadd.f32 0.0, %v1815
      %v1817 = vpop.f32.mrf.mxu0
      %v1818 = vadd.f32 0.0, %v1817
      %1819 = vmatmul.bf16.gmra.mxu0 %v1209
      %v1820 = vpop.f32.mrf.mxu0
      %v1821 = vadd.f32 0.0, %v1820
      %v1822 = vpop.f32.mrf.mxu0
      %v1823 = vadd.f32 0.0, %v1822
      %1824 = vmatmul.bf16.gmra.mxu0 %v1210
      %v1825 = vpop.f32.mrf.mxu0
      %v1826 = vadd.f32 0.0, %v1825
      %v1827 = vpop.f32.mrf.mxu0
      %v1828 = vadd.f32 0.0, %v1827
      %1829 = vmatmul.bf16.gmra.mxu0 %v1211
      %v1830 = vpop.f32.mrf.mxu0
      %v1831 = vadd.f32 0.0, %v1830
      %v1832 = vpop.f32.mrf.mxu0
      %v1833 = vadd.f32 0.0, %v1832
      %1834 = vmatmul.bf16.gmra.mxu0 %v1212
      %v1835 = vpop.f32.mrf.mxu0
      %v1836 = vadd.f32 0.0, %v1835
      %v1837 = vpop.f32.mrf.mxu0
      %v1838 = vadd.f32 0.0, %v1837
      %1839 = vmatmul.bf16.gmra.mxu0 %v1213
      %v1840 = vpop.f32.mrf.mxu0
      %v1841 = vadd.f32 0.0, %v1840
      %v1842 = vpop.f32.mrf.mxu0
      %v1843 = vadd.f32 0.0, %v1842
      %1844 = vmatmul.bf16.gmra.mxu0 %v1214
      %v1845 = vpop.f32.mrf.mxu0
      %v1846 = vadd.f32 0.0, %v1845
      %v1847 = vpop.f32.mrf.mxu0
      %v1848 = vadd.f32 0.0, %v1847
      %1849 = vmatmul.bf16.gmra.mxu0 %v1215
      %v1850 = vpop.f32.mrf.mxu0
      %v1851 = vadd.f32 0.0, %v1850
      %v1852 = vpop.f32.mrf.mxu0
      %v1853 = vadd.f32 0.0, %v1852
      %1854 = vmatmul.bf16.gmra.mxu0 %v1216
      %v1855 = vpop.f32.mrf.mxu0
      %v1856 = vadd.f32 0.0, %v1855
      %v1857 = vpop.f32.mrf.mxu0
      %v1858 = vadd.f32 0.0, %v1857
      %1859 = vmatmul.bf16.gmra.mxu0 %v1217
      %v1860 = vpop.f32.mrf.mxu0
      %v1861 = vadd.f32 0.0, %v1860
      %v1862 = vpop.f32.mrf.mxu0
      %v1863 = vadd.f32 0.0, %v1862
      %1864 = vmatmul.bf16.gmra.mxu0 %v1218
      %v1865 = vpop.f32.mrf.mxu0
      %v1866 = vadd.f32 0.0, %v1865
      %v1867 = vpop.f32.mrf.mxu0
      %v1868 = vadd.f32 0.0, %v1867
      %1869 = vmatmul.bf16.gmra.mxu0 %v1219
      %v1870 = vpop.f32.mrf.mxu0
      %v1871 = vadd.f32 0.0, %v1870
      %v1872 = vpop.f32.mrf.mxu0
      %v1873 = vadd.f32 0.0, %v1872
      %1874 = vmatmul.bf16.gmra.mxu0 %v1220
      %v1875 = vpop.f32.mrf.mxu0
      %v1876 = vadd.f32 0.0, %v1875
      %v1877 = vpop.f32.mrf.mxu0
      %v1878 = vadd.f32 0.0, %v1877
      %1879 = vmatmul.bf16.gmra.mxu0 %v1221
      %v1880 = vpop.f32.mrf.mxu0
      %v1881 = vadd.f32 0.0, %v1880
      %v1882 = vpop.f32.mrf.mxu0
      %v1883 = vadd.f32 0.0, %v1882
      %1884 = vmatmul.bf16.gmra.mxu0 %v1222
      %v1885 = vpop.f32.mrf.mxu0
      %v1886 = vadd.f32 0.0, %v1885
      %v1887 = vpop.f32.mrf.mxu0
      %v1888 = vadd.f32 0.0, %v1887
      %1889 = vdwg.mxu0
      %1890 = vmatpush.bf16.msra.mxu0 %v1768
      %1891 = vmatpush.bf16.msra.mxu0 %v1767
      %1892 = vmatpush.bf16.msra.mxu0 %v1766
      %1893 = vmatpush.bf16.msra.mxu0 %v1765
      %1894 = vmatpush.bf16.msra.mxu0 %v1764
      %1895 = vmatpush.bf16.msra.mxu0 %v1763
      %1896 = vmatpush.bf16.msra.mxu0 %v1762
      %1897 = vmatpush.bf16.msra.mxu0 %v1761
      %1898 = vmatmul.bf16.gmra.mxu0 %v1299
      %v1899 = vpop.f32.mrf.mxu0
      %v1900 = vadd.f32 %v1811, %v1899
      %v1901 = vpop.f32.mrf.mxu0
      %v1902 = vadd.f32 %v1813, %v1901
      %1903 = vmatmul.bf16.gmra.mxu0 %v1311
      %v1904 = vpop.f32.mrf.mxu0
      %v1905 = vadd.f32 %v1816, %v1904
      %v1906 = vpop.f32.mrf.mxu0
      %v1907 = vadd.f32 %v1818, %v1906
      %1908 = vmatmul.bf16.gmra.mxu0 %v1323
      %v1909 = vpop.f32.mrf.mxu0
      %v1910 = vadd.f32 %v1821, %v1909
      %v1911 = vpop.f32.mrf.mxu0
      %v1912 = vadd.f32 %v1823, %v1911
      %1913 = vmatmul.bf16.gmra.mxu0 %v1335
      %v1914 = vpop.f32.mrf.mxu0
      %v1915 = vadd.f32 %v1826, %v1914
      %v1916 = vpop.f32.mrf.mxu0
      %v1917 = vadd.f32 %v1828, %v1916
      %1918 = vmatmul.bf16.gmra.mxu0 %v1347
      %v1919 = vpop.f32.mrf.mxu0
      %v1920 = vadd.f32 %v1831, %v1919
      %v1921 = vpop.f32.mrf.mxu0
      %v1922 = vadd.f32 %v1833, %v1921
      %1923 = vmatmul.bf16.gmra.mxu0 %v1359
      %v1924 = vpop.f32.mrf.mxu0
      %v1925 = vadd.f32 %v1836, %v1924
      %v1926 = vpop.f32.mrf.mxu0
      %v1927 = vadd.f32 %v1838, %v1926
      %1928 = vmatmul.bf16.gmra.mxu0 %v1371
      %v1929 = vpop.f32.mrf.mxu0
      %v1930 = vadd.f32 %v1841, %v1929
      %v1931 = vpop.f32.mrf.mxu0
      %v1932 = vadd.f32 %v1843, %v1931
      %1933 = vmatmul.bf16.gmra.mxu0 %v1383
      %v1934 = vpop.f32.mrf.mxu0
      %v1935 = vadd.f32 %v1846, %v1934
      %v1936 = vpop.f32.mrf.mxu0
      %v1937 = vadd.f32 %v1848, %v1936
      %1938 = vmatmul.bf16.gmra.mxu0 %v1395
      %v1939 = vpop.f32.mrf.mxu0
      %v1940 = vadd.f32 %v1851, %v1939
      %v1941 = vpop.f32.mrf.mxu0
      %v1942 = vadd.f32 %v1853, %v1941
      %1943 = vmatmul.bf16.gmra.mxu0 %v1407
      %v1944 = vpop.f32.mrf.mxu0
      %v1945 = vadd.f32 %v1856, %v1944
      %v1946 = vpop.f32.mrf.mxu0
      %v1947 = vadd.f32 %v1858, %v1946
      %1948 = vmatmul.bf16.gmra.mxu0 %v1419
      %v1949 = vpop.f32.mrf.mxu0
      %v1950 = vadd.f32 %v1861, %v1949
      %v1951 = vpop.f32.mrf.mxu0
      %v1952 = vadd.f32 %v1863, %v1951
      %1953 = vmatmul.bf16.gmra.mxu0 %v1431
      %v1954 = vpop.f32.mrf.mxu0
      %v1955 = vadd.f32 %v1866, %v1954
      %v1956 = vpop.f32.mrf.mxu0
      %v1957 = vadd.f32 %v1868, %v1956
      %1958 = vmatmul.bf16.gmra.mxu0 %v1443
      %v1959 = vpop.f32.mrf.mxu0
      %v1960 = vadd.f32 %v1871, %v1959
      %v1961 = vpop.f32.mrf.mxu0
      %v1962 = vadd.f32 %v1873, %v1961
      %1963 = vmatmul.bf16.gmra.mxu0 %v1455
      %v1964 = vpop.f32.mrf.mxu0
      %v1965 = vadd.f32 %v1876, %v1964
      %v1966 = vpop.f32.mrf.mxu0
      %v1967 = vadd.f32 %v1878, %v1966
      %1968 = vmatmul.bf16.gmra.mxu0 %v1467
      %v1969 = vpop.f32.mrf.mxu0
      %v1970 = vadd.f32 %v1881, %v1969
      %v1971 = vpop.f32.mrf.mxu0
      %v1972 = vadd.f32 %v1883, %v1971
      %1973 = vmatmul.bf16.gmra.mxu0 %v1479
      %v1974 = vpop.f32.mrf.mxu0
      %v1975 = vadd.f32 %v1886, %v1974
      %v1976 = vpop.f32.mrf.mxu0
      %v1977 = vadd.f32 %v1888, %v1976
      %1978 = vdwg.mxu0
      %1979 = vmatpush.bf16.msra.mxu0 %v1776
      %1980 = vmatpush.bf16.msra.mxu0 %v1775
      %1981 = vmatpush.bf16.msra.mxu0 %v1774
      %1982 = vmatpush.bf16.msra.mxu0 %v1773
      %1983 = vmatpush.bf16.msra.mxu0 %v1772
      %1984 = vmatpush.bf16.msra.mxu0 %v1771
      %1985 = vmatpush.bf16.msra.mxu0 %v1770
      %1986 = vmatpush.bf16.msra.mxu0 %v1769
      %1987 = vmatmul.bf16.gmra.mxu0 %v1547
      %v1988 = vpop.f32.mrf.mxu0
      %v1989 = vadd.f32 %v1900, %v1988
      %v1990 = vpop.f32.mrf.mxu0
      %v1991 = vadd.f32 %v1902, %v1990
      %1992 = vmatmul.bf16.gmra.mxu0 %v1550
      %v1993 = vpop.f32.mrf.mxu0
      %v1994 = vadd.f32 %v1905, %v1993
      %v1995 = vpop.f32.mrf.mxu0
      %v1996 = vadd.f32 %v1907, %v1995
      %1997 = vmatmul.bf16.gmra.mxu0 %v1553
      %v1998 = vpop.f32.mrf.mxu0
      %v1999 = vadd.f32 %v1910, %v1998
      %v2000 = vpop.f32.mrf.mxu0
      %v2001 = vadd.f32 %v1912, %v2000
      %2002 = vmatmul.bf16.gmra.mxu0 %v1556
      %v2003 = vpop.f32.mrf.mxu0
      %v2004 = vadd.f32 %v1915, %v2003
      %v2005 = vpop.f32.mrf.mxu0
      %v2006 = vadd.f32 %v1917, %v2005
      %2007 = vmatmul.bf16.gmra.mxu0 %v1559
      %v2008 = vpop.f32.mrf.mxu0
      %v2009 = vadd.f32 %v1920, %v2008
      %v2010 = vpop.f32.mrf.mxu0
      %v2011 = vadd.f32 %v1922, %v2010
      %2012 = vmatmul.bf16.gmra.mxu0 %v1562
      %v2013 = vpop.f32.mrf.mxu0
      %v2014 = vadd.f32 %v1925, %v2013
      %v2015 = vpop.f32.mrf.mxu0
      %v2016 = vadd.f32 %v1927, %v2015
      %2017 = vmatmul.bf16.gmra.mxu0 %v1565
      %v2018 = vpop.f32.mrf.mxu0
      %v2019 = vadd.f32 %v1930, %v2018
      %v2020 = vpop.f32.mrf.mxu0
      %v2021 = vadd.f32 %v1932, %v2020
      %2022 = vmatmul.bf16.gmra.mxu0 %v1568
      %v2023 = vpop.f32.mrf.mxu0
      %v2024 = vadd.f32 %v1935, %v2023
      %v2025 = vpop.f32.mrf.mxu0
      %v2026 = vadd.f32 %v1937, %v2025
      %2027 = vmatmul.bf16.gmra.mxu0 %v1571
      %v2028 = vpop.f32.mrf.mxu0
      %v2029 = vadd.f32 %v1940, %v2028
      %v2030 = vpop.f32.mrf.mxu0
      %v2031 = vadd.f32 %v1942, %v2030
      %2032 = vmatmul.bf16.gmra.mxu0 %v1574
      %v2033 = vpop.f32.mrf.mxu0
      %v2034 = vadd.f32 %v1945, %v2033
      %v2035 = vpop.f32.mrf.mxu0
      %v2036 = vadd.f32 %v1947, %v2035
      %2037 = vmatmul.bf16.gmra.mxu0 %v1577
      %v2038 = vpop.f32.mrf.mxu0
      %v2039 = vadd.f32 %v1950, %v2038
      %v2040 = vpop.f32.mrf.mxu0
      %v2041 = vadd.f32 %v1952, %v2040
      %2042 = vmatmul.bf16.gmra.mxu0 %v1580
      %v2043 = vpop.f32.mrf.mxu0
      %v2044 = vadd.f32 %v1955, %v2043
      %v2045 = vpop.f32.mrf.mxu0
      %v2046 = vadd.f32 %v1957, %v2045
      %2047 = vmatmul.bf16.gmra.mxu0 %v1583
      %v2048 = vpop.f32.mrf.mxu0
      %v2049 = vadd.f32 %v1960, %v2048
      %v2050 = vpop.f32.mrf.mxu0
      %v2051 = vadd.f32 %v1962, %v2050
      %2052 = vmatmul.bf16.gmra.mxu0 %v1586
      %v2053 = vpop.f32.mrf.mxu0
      %v2054 = vadd.f32 %v1965, %v2053
      %v2055 = vpop.f32.mrf.mxu0
      %v2056 = vadd.f32 %v1967, %v2055
      %2057 = vmatmul.bf16.gmra.mxu0 %v1589
      %v2058 = vpop.f32.mrf.mxu0
      %v2059 = vadd.f32 %v1970, %v2058
      %v2060 = vpop.f32.mrf.mxu0
      %v2061 = vadd.f32 %v1972, %v2060
      %2062 = vmatmul.bf16.gmra.mxu0 %v1592
      %v2063 = vpop.f32.mrf.mxu0
      %v2064 = vadd.f32 %v1975, %v2063
      %v2065 = vpop.f32.mrf.mxu0
      %v2066 = vadd.f32 %v1977, %v2065
      %2067 = vdwg.mxu0
      %2068 = vst [vmem:[#allocation4] sm:$0xff] %v1989
      %2069 = vst [vmem:[#allocation4 + $0x8] sm:$0xff] %v1991
      %2070 = vst [vmem:[#allocation4 + $0x10] sm:$0xff] %v1994
      %2071 = vst [vmem:[#allocation4 + $0x18] sm:$0xff] %v1996
      %2072 = vst [vmem:[#allocation4 + $0x20] sm:$0xff] %v1999
      %2073 = vst [vmem:[#allocation4 + $0x28] sm:$0xff] %v2001
      %2074 = vst [vmem:[#allocation4 + $0x30] sm:$0xff] %v2004
      %2075 = vst [vmem:[#allocation4 + $0x38] sm:$0xff] %v2006
      %2076 = vst [vmem:[#allocation4 + $0x40] sm:$0xff] %v2009
      %2077 = vst [vmem:[#allocation4 + $0x48] sm:$0xff] %v2011
      %2078 = vst [vmem:[#allocation4 + $0x50] sm:$0xff] %v2014
      %2079 = vst [vmem:[#allocation4 + $0x58] sm:$0xff] %v2016
      %2080 = vst [vmem:[#allocation4 + $0x60] sm:$0xff] %v2019
      %2081 = vst [vmem:[#allocation4 + $0x68] sm:$0xff] %v2021
      %2082 = vst [vmem:[#allocation4 + $0x70] sm:$0xff] %v2024
      %2083 = vst [vmem:[#allocation4 + $0x78] sm:$0xff] %v2026
      %2084 = vst [vmem:[#allocation4 + $0x80] sm:$0xff] %v2029
      %2085 = vst [vmem:[#allocation4 + $0x88] sm:$0xff] %v2031
      %2086 = vst [vmem:[#allocation4 + $0x90] sm:$0xff] %v2034
      %2087 = vst [vmem:[#allocation4 + $0x98] sm:$0xff] %v2036
      %2088 = vst [vmem:[#allocation4 + $0xa0] sm:$0xff] %v2039
      %2089 = vst [vmem:[#allocation4 + $0xa8] sm:$0xff] %v2041
      %2090 = vst [vmem:[#allocation4 + $0xb0] sm:$0xff] %v2044
      %2091 = vst [vmem:[#allocation4 + $0xb8] sm:$0xff] %v2046
      %2092 = vst [vmem:[#allocation4 + $0xc0] sm:$0xff] %v2049
      %2093 = vst [vmem:[#allocation4 + $0xc8] sm:$0xff] %v2051
      %2094 = vst [vmem:[#allocation4 + $0xd0] sm:$0xff] %v2054
      %2095 = vst [vmem:[#allocation4 + $0xd8] sm:$0xff] %v2056
      %2096 = vst [vmem:[#allocation4 + $0xe0] sm:$0xff] %v2059
      %2097 = vst [vmem:[#allocation4 + $0xe8] sm:$0xff] %v2061
      %2098 = vst [vmem:[#allocation4 + $0xf0] sm:$0xff] %v2064
      %2099 = vst [vmem:[#allocation4 + $0xf8] sm:$0xff] %v2066
      %v2100 = vld [vmem:[#allocation4] sm:$0xff]
      %v2101 = vld [vmem:[#allocation4 + $0x8] sm:$0xff]
      %v2102 = vld [vmem:[#allocation4 + $0x10] sm:$0xff]
      %v2103 = vld [vmem:[#allocation4 + $0x18] sm:$0xff]
      %v2104 = vld [vmem:[#allocation4 + $0x20] sm:$0xff]
      %v2105 = vld [vmem:[#allocation4 + $0x28] sm:$0xff]
      %v2106 = vld [vmem:[#allocation4 + $0x30] sm:$0xff]
      %v2107 = vld [vmem:[#allocation4 + $0x38] sm:$0xff]
      %v2108 = vld [vmem:[#allocation4 + $0x40] sm:$0xff]
      %v2109 = vld [vmem:[#allocation4 + $0x48] sm:$0xff]
      %v2110 = vld [vmem:[#allocation4 + $0x50] sm:$0xff]
      %v2111 = vld [vmem:[#allocation4 + $0x58] sm:$0xff]
      %v2112 = vld [vmem:[#allocation4 + $0x60] sm:$0xff]
      %v2113 = vld [vmem:[#allocation4 + $0x68] sm:$0xff]
      %v2114 = vld [vmem:[#allocation4 + $0x70] sm:$0xff]
      %v2115 = vld [vmem:[#allocation4 + $0x78] sm:$0xff]
      %v2116 = vld [vmem:[#allocation4 + $0x80] sm:$0xff]
      %v2117 = vld [vmem:[#allocation4 + $0x88] sm:$0xff]
      %v2118 = vld [vmem:[#allocation4 + $0x90] sm:$0xff]
      %v2119 = vld [vmem:[#allocation4 + $0x98] sm:$0xff]
      %v2120 = vld [vmem:[#allocation4 + $0xa0] sm:$0xff]
      %v2121 = vld [vmem:[#allocation4 + $0xa8] sm:$0xff]
      %v2122 = vld [vmem:[#allocation4 + $0xb0] sm:$0xff]
      %v2123 = vld [vmem:[#allocation4 + $0xb8] sm:$0xff]
      %v2124 = vld [vmem:[#allocation4 + $0xc0] sm:$0xff]
      %v2125 = vld [vmem:[#allocation4 + $0xc8] sm:$0xff]
      %v2126 = vld [vmem:[#allocation4 + $0xd0] sm:$0xff]
      %v2127 = vld [vmem:[#allocation4 + $0xd8] sm:$0xff]
      %v2128 = vld [vmem:[#allocation4 + $0xe0] sm:$0xff]
      %v2129 = vld [vmem:[#allocation4 + $0xe8] sm:$0xff]
      %v2130 = vld [vmem:[#allocation4 + $0xf0] sm:$0xff]
      %v2131 = vld [vmem:[#allocation4 + $0xf8] sm:$0xff]
      %s2132 = scalar_lea.vmem [#allocation3], 12
      %v2133 = vld [vmem:[%s2132] sm:$0xf]
      %v2134 = vld [vmem:[%s2132 + $0x4] sm:$0xf]
      %v2135 = vld [vmem:[%s2132 + $0xc] sm:$0xf]
      %v2136 = vld [vmem:[%s2132 + $0x10] sm:$0xf]
      %v2137 = vld [vmem:[%s2132 + $0x18] sm:$0xf]
      %v2138 = vld [vmem:[%s2132 + $0x1c] sm:$0xf]
      %v2139 = vld [vmem:[%s2132 + $0x24] sm:$0xf]
      %v2140 = vld [vmem:[%s2132 + $0x28] sm:$0xf]
      %v2141 = vld [vmem:[%s2132 + $0x30] sm:$0xf]
      %v2142 = vld [vmem:[%s2132 + $0x34] sm:$0xf]
      %v2143 = vld [vmem:[%s2132 + $0x3c] sm:$0xf]
      %v2144 = vld [vmem:[%s2132 + $0x40] sm:$0xf]
      %v2145 = vld [vmem:[%s2132 + $0x48] sm:$0xf]
      %v2146 = vld [vmem:[%s2132 + $0x4c] sm:$0xf]
      %v2147 = vld [vmem:[%s2132 + $0x54] sm:$0xf]
      %v2148 = vld [vmem:[%s2132 + $0x58] sm:$0xf]
      %v2149 = vld [vmem:[%s2132 + $0x60] sm:$0xf]
      %v2150 = vld [vmem:[%s2132 + $0x64] sm:$0xf]
      %v2151 = vld [vmem:[%s2132 + $0x6c] sm:$0xf]
      %v2152 = vld [vmem:[%s2132 + $0x70] sm:$0xf]
      %v2153 = vld [vmem:[%s2132 + $0x78] sm:$0xf]
      %v2154 = vld [vmem:[%s2132 + $0x7c] sm:$0xf]
      %v2155 = vld [vmem:[%s2132 + $0x84] sm:$0xf]
      %v2156 = vld [vmem:[%s2132 + $0x88] sm:$0xf]
      %v2157 = vld [vmem:[%s2132 + $0x90] sm:$0xf]
      %v2158 = vld [vmem:[%s2132 + $0x94] sm:$0xf]
      %v2159 = vld [vmem:[%s2132 + $0x9c] sm:$0xf]
      %v2160 = vld [vmem:[%s2132 + $0xa0] sm:$0xf]
      %v2161 = vld [vmem:[%s2132 + $0xa8] sm:$0xf]
      %v2162 = vld [vmem:[%s2132 + $0xac] sm:$0xf]
      %v2163 = vld [vmem:[%s2132 + $0xb4] sm:$0xf]
      %v2164 = vld [vmem:[%s2132 + $0xb8] sm:$0xf]
      %v2165 = vld [vmem:[%s2132 + $0x8] sm:$0x1]
      %v2166 = vld [vmem:[%s2132 + $0x14] sm:$0x1]
      %v2167 = vld [vmem:[%s2132 + $0x20] sm:$0x1]
      %v2168 = vld [vmem:[%s2132 + $0x2c] sm:$0x1]
      %v2169 = vld [vmem:[%s2132 + $0x38] sm:$0x1]
      %v2170 = vld [vmem:[%s2132 + $0x44] sm:$0x1]
      %v2171 = vld [vmem:[%s2132 + $0x50] sm:$0x1]
      %v2172 = vld [vmem:[%s2132 + $0x5c] sm:$0x1]
      %v2173 = vld [vmem:[%s2132 + $0x68] sm:$0x1]
      %v2174 = vld [vmem:[%s2132 + $0x74] sm:$0x1]
      %v2175 = vld [vmem:[%s2132 + $0x80] sm:$0x1]
      %v2176 = vld [vmem:[%s2132 + $0x8c] sm:$0x1]
      %v2177 = vld [vmem:[%s2132 + $0x98] sm:$0x1]
      %v2178 = vld [vmem:[%s2132 + $0xa4] sm:$0x1]
      %v2179 = vld [vmem:[%s2132 + $0xb0] sm:$0x1]
      %v2180 = vld [vmem:[%s2132 + $0xbc] sm:$0x1]
      %v2181 = vld [vmem:[%s2132] sm:$0xe]
      %v2182 = vld [vmem:[%s2132 + $0xc] sm:$0xe]
      %v2183 = vld [vmem:[%s2132 + $0x18] sm:$0xe]
      %v2184 = vld [vmem:[%s2132 + $0x24] sm:$0xe]
      %v2185 = vld [vmem:[%s2132 + $0x30] sm:$0xe]
      %v2186 = vld [vmem:[%s2132 + $0x3c] sm:$0xe]
      %v2187 = vld [vmem:[%s2132 + $0x48] sm:$0xe]
      %v2188 = vld [vmem:[%s2132 + $0x54] sm:$0xe]
      %v2189 = vld [vmem:[%s2132 + $0x60] sm:$0xe]
      %v2190 = vld [vmem:[%s2132 + $0x6c] sm:$0xe]
      %v2191 = vld [vmem:[%s2132 + $0x78] sm:$0xe]
      %v2192 = vld [vmem:[%s2132 + $0x84] sm:$0xe]
      %v2193 = vld [vmem:[%s2132 + $0x90] sm:$0xe]
      %v2194 = vld [vmem:[%s2132 + $0x9c] sm:$0xe]
      %v2195 = vld [vmem:[%s2132 + $0xa8] sm:$0xe]
      %v2196 = vld [vmem:[%s2132 + $0xb4] sm:$0xe]
      %v2229 = vunpack.c.l.b16 %v2133
      %v2230 = vunpack.c.l.b16 %v2134
      %v2231 = vunpack.c.l.b16 %v2135
      %v2232 = vunpack.c.l.b16 %v2136
      %v2233 = vunpack.c.l.b16 %v2137
      %v2234 = vunpack.c.l.b16 %v2138
      %v2235 = vunpack.c.l.b16 %v2139
      %v2236 = vunpack.c.l.b16 %v2140
      %v2237 = vunpack.c.l.b16 %v2141
      %v2238 = vunpack.c.l.b16 %v2142
      %v2239 = vunpack.c.l.b16 %v2143
      %v2240 = vunpack.c.l.b16 %v2144
      %v2241 = vunpack.c.l.b16 %v2145
      %v2242 = vunpack.c.l.b16 %v2146
      %v2243 = vunpack.c.l.b16 %v2147
      %v2244 = vunpack.c.l.b16 %v2148
      %v2245 = vunpack.c.l.b16 %v2149
      %v2246 = vunpack.c.l.b16 %v2150
      %v2247 = vunpack.c.l.b16 %v2151
      %v2248 = vunpack.c.l.b16 %v2152
      %v2249 = vunpack.c.l.b16 %v2153
      %v2250 = vunpack.c.l.b16 %v2154
      %v2251 = vunpack.c.l.b16 %v2155
      %v2252 = vunpack.c.l.b16 %v2156
      %v2253 = vunpack.c.l.b16 %v2157
      %v2254 = vunpack.c.l.b16 %v2158
      %v2255 = vunpack.c.l.b16 %v2159
      %v2256 = vunpack.c.l.b16 %v2160
      %v2257 = vunpack.c.l.b16 %v2161
      %v2258 = vunpack.c.l.b16 %v2162
      %v2259 = vunpack.c.l.b16 %v2163
      %v2260 = vunpack.c.l.b16 %v2164
      %v2261 = vpack.c.b16 %v2230, %v2229
      %v2262 = vpack.c.b16 %v2232, %v2231
      %v2263 = vpack.c.b16 %v2234, %v2233
      %v2264 = vpack.c.b16 %v2236, %v2235
      %v2265 = vpack.c.b16 %v2238, %v2237
      %v2266 = vpack.c.b16 %v2240, %v2239
      %v2267 = vpack.c.b16 %v2242, %v2241
      %v2268 = vpack.c.b16 %v2244, %v2243
      %v2269 = vpack.c.b16 %v2246, %v2245
      %v2270 = vpack.c.b16 %v2248, %v2247
      %v2271 = vpack.c.b16 %v2250, %v2249
      %v2272 = vpack.c.b16 %v2252, %v2251
      %v2273 = vpack.c.b16 %v2254, %v2253
      %v2274 = vpack.c.b16 %v2256, %v2255
      %v2275 = vpack.c.b16 %v2258, %v2257
      %v2276 = vpack.c.b16 %v2260, %v2259
      %v2309 = vunpack.c.l.b16 %v2165
      %v2310 = vunpack.c.l.b16 %v2166
      %v2311 = vunpack.c.l.b16 %v2167
      %v2312 = vunpack.c.l.b16 %v2168
      %v2313 = vunpack.c.l.b16 %v2169
      %v2314 = vunpack.c.l.b16 %v2170
      %v2315 = vunpack.c.l.b16 %v2171
      %v2316 = vunpack.c.l.b16 %v2172
      %v2317 = vunpack.c.l.b16 %v2173
      %v2318 = vunpack.c.l.b16 %v2174
      %v2319 = vunpack.c.l.b16 %v2175
      %v2320 = vunpack.c.l.b16 %v2176
      %v2321 = vunpack.c.l.b16 %v2177
      %v2322 = vunpack.c.l.b16 %v2178
      %v2323 = vunpack.c.l.b16 %v2179
      %v2324 = vunpack.c.l.b16 %v2180
      %v2325 = vpack.c.b16 %v2309, %v2309
      %v2326 = vpack.c.b16 %v2310, %v2310
      %v2327 = vpack.c.b16 %v2311, %v2311
      %v2328 = vpack.c.b16 %v2312, %v2312
      %v2329 = vpack.c.b16 %v2313, %v2313
      %v2330 = vpack.c.b16 %v2314, %v2314
      %v2331 = vpack.c.b16 %v2315, %v2315
      %v2332 = vpack.c.b16 %v2316, %v2316
      %v2333 = vpack.c.b16 %v2317, %v2317
      %v2334 = vpack.c.b16 %v2318, %v2318
      %v2335 = vpack.c.b16 %v2319, %v2319
      %v2336 = vpack.c.b16 %v2320, %v2320
      %v2337 = vpack.c.b16 %v2321, %v2321
      %v2338 = vpack.c.b16 %v2322, %v2322
      %v2339 = vpack.c.b16 %v2323, %v2323
      %v2340 = vpack.c.b16 %v2324, %v2324
      %v2342 = vshrl.u32 %v2261, 16
      %v2344 = vshll.u32 %v2261, 16
      %v2346 = vrot.slane %v2344, 1
      %v2347 = vor.u32 %v2342, %v2346
      %v2349 = vshll.u32 %v2325, 16
      %v2351 = vrot.slane %v2349, 1
      %v2352 = vsel %vm1287, %v2347, %v2351
      %v2354 = vshrl.u32 %v2262, 16
      %v2356 = vshll.u32 %v2262, 16
      %v2358 = vrot.slane %v2356, 1
      %v2359 = vor.u32 %v2354, %v2358
      %v2361 = vshll.u32 %v2326, 16
      %v2363 = vrot.slane %v2361, 1
      %v2364 = vsel %vm1287, %v2359, %v2363
      %v2366 = vshrl.u32 %v2263, 16
      %v2368 = vshll.u32 %v2263, 16
      %v2370 = vrot.slane %v2368, 1
      %v2371 = vor.u32 %v2366, %v2370
      %v2373 = vshll.u32 %v2327, 16
      %v2375 = vrot.slane %v2373, 1
      %v2376 = vsel %vm1287, %v2371, %v2375
      %v2378 = vshrl.u32 %v2264, 16
      %v2380 = vshll.u32 %v2264, 16
      %v2382 = vrot.slane %v2380, 1
      %v2383 = vor.u32 %v2378, %v2382
      %v2385 = vshll.u32 %v2328, 16
      %v2387 = vrot.slane %v2385, 1
      %v2388 = vsel %vm1287, %v2383, %v2387
      %v2390 = vshrl.u32 %v2265, 16
      %v2392 = vshll.u32 %v2265, 16
      %v2394 = vrot.slane %v2392, 1
      %v2395 = vor.u32 %v2390, %v2394
      %v2397 = vshll.u32 %v2329, 16
      %v2399 = vrot.slane %v2397, 1
      %v2400 = vsel %vm1287, %v2395, %v2399
      %v2402 = vshrl.u32 %v2266, 16
      %v2404 = vshll.u32 %v2266, 16
      %v2406 = vrot.slane %v2404, 1
      %v2407 = vor.u32 %v2402, %v2406
      %v2409 = vshll.u32 %v2330, 16
      %v2411 = vrot.slane %v2409, 1
      %v2412 = vsel %vm1287, %v2407, %v2411
      %v2414 = vshrl.u32 %v2267, 16
      %v2416 = vshll.u32 %v2267, 16
      %v2418 = vrot.slane %v2416, 1
      %v2419 = vor.u32 %v2414, %v2418
      %v2421 = vshll.u32 %v2331, 16
      %v2423 = vrot.slane %v2421, 1
      %v2424 = vsel %vm1287, %v2419, %v2423
      %v2426 = vshrl.u32 %v2268, 16
      %v2428 = vshll.u32 %v2268, 16
      %v2430 = vrot.slane %v2428, 1
      %v2431 = vor.u32 %v2426, %v2430
      %v2433 = vshll.u32 %v2332, 16
      %v2435 = vrot.slane %v2433, 1
      %v2436 = vsel %vm1287, %v2431, %v2435
      %v2438 = vshrl.u32 %v2269, 16
      %v2440 = vshll.u32 %v2269, 16
      %v2442 = vrot.slane %v2440, 1
      %v2443 = vor.u32 %v2438, %v2442
      %v2445 = vshll.u32 %v2333, 16
      %v2447 = vrot.slane %v2445, 1
      %v2448 = vsel %vm1287, %v2443, %v2447
      %v2450 = vshrl.u32 %v2270, 16
      %v2452 = vshll.u32 %v2270, 16
      %v2454 = vrot.slane %v2452, 1
      %v2455 = vor.u32 %v2450, %v2454
      %v2457 = vshll.u32 %v2334, 16
      %v2459 = vrot.slane %v2457, 1
      %v2460 = vsel %vm1287, %v2455, %v2459
      %v2462 = vshrl.u32 %v2271, 16
      %v2464 = vshll.u32 %v2271, 16
      %v2466 = vrot.slane %v2464, 1
      %v2467 = vor.u32 %v2462, %v2466
      %v2469 = vshll.u32 %v2335, 16
      %v2471 = vrot.slane %v2469, 1
      %v2472 = vsel %vm1287, %v2467, %v2471
      %v2474 = vshrl.u32 %v2272, 16
      %v2476 = vshll.u32 %v2272, 16
      %v2478 = vrot.slane %v2476, 1
      %v2479 = vor.u32 %v2474, %v2478
      %v2481 = vshll.u32 %v2336, 16
      %v2483 = vrot.slane %v2481, 1
      %v2484 = vsel %vm1287, %v2479, %v2483
      %v2486 = vshrl.u32 %v2273, 16
      %v2488 = vshll.u32 %v2273, 16
      %v2490 = vrot.slane %v2488, 1
      %v2491 = vor.u32 %v2486, %v2490
      %v2493 = vshll.u32 %v2337, 16
      %v2495 = vrot.slane %v2493, 1
      %v2496 = vsel %vm1287, %v2491, %v2495
      %v2498 = vshrl.u32 %v2274, 16
      %v2500 = vshll.u32 %v2274, 16
      %v2502 = vrot.slane %v2500, 1
      %v2503 = vor.u32 %v2498, %v2502
      %v2505 = vshll.u32 %v2338, 16
      %v2507 = vrot.slane %v2505, 1
      %v2508 = vsel %vm1287, %v2503, %v2507
      %v2510 = vshrl.u32 %v2275, 16
      %v2512 = vshll.u32 %v2275, 16
      %v2514 = vrot.slane %v2512, 1
      %v2515 = vor.u32 %v2510, %v2514
      %v2517 = vshll.u32 %v2339, 16
      %v2519 = vrot.slane %v2517, 1
      %v2520 = vsel %vm1287, %v2515, %v2519
      %v2522 = vshrl.u32 %v2276, 16
      %v2524 = vshll.u32 %v2276, 16
      %v2526 = vrot.slane %v2524, 1
      %v2527 = vor.u32 %v2522, %v2526
      %v2529 = vshll.u32 %v2340, 16
      %v2531 = vrot.slane %v2529, 1
      %v2532 = vsel %vm1287, %v2527, %v2531
      %v2565 = vunpack.c.l.b16 %v2181
      %v2566 = vunpack.c.l.b16 %v2182
      %v2567 = vunpack.c.l.b16 %v2183
      %v2568 = vunpack.c.l.b16 %v2184
      %v2569 = vunpack.c.l.b16 %v2185
      %v2570 = vunpack.c.l.b16 %v2186
      %v2571 = vunpack.c.l.b16 %v2187
      %v2572 = vunpack.c.l.b16 %v2188
      %v2573 = vunpack.c.l.b16 %v2189
      %v2574 = vunpack.c.l.b16 %v2190
      %v2575 = vunpack.c.l.b16 %v2191
      %v2576 = vunpack.c.l.b16 %v2192
      %v2577 = vunpack.c.l.b16 %v2193
      %v2578 = vunpack.c.l.b16 %v2194
      %v2579 = vunpack.c.l.b16 %v2195
      %v2580 = vunpack.c.l.b16 %v2196
      %v2581 = vpack.c.b16 %v2230, %v2565
      %v2582 = vpack.c.b16 %v2232, %v2566
      %v2583 = vpack.c.b16 %v2234, %v2567
      %v2584 = vpack.c.b16 %v2236, %v2568
      %v2585 = vpack.c.b16 %v2238, %v2569
      %v2586 = vpack.c.b16 %v2240, %v2570
      %v2587 = vpack.c.b16 %v2242, %v2571
      %v2588 = vpack.c.b16 %v2244, %v2572
      %v2589 = vpack.c.b16 %v2246, %v2573
      %v2590 = vpack.c.b16 %v2248, %v2574
      %v2591 = vpack.c.b16 %v2250, %v2575
      %v2592 = vpack.c.b16 %v2252, %v2576
      %v2593 = vpack.c.b16 %v2254, %v2577
      %v2594 = vpack.c.b16 %v2256, %v2578
      %v2595 = vpack.c.b16 %v2258, %v2579
      %v2596 = vpack.c.b16 %v2260, %v2580
      %v2597 = vrot.slane %v2581, 1
      %v2598 = vrot.slane %v2325, 1
      %v2599 = vsel %vm1544, %v2597, %v2598
      %v2600 = vrot.slane %v2582, 1
      %v2601 = vrot.slane %v2326, 1
      %v2602 = vsel %vm1544, %v2600, %v2601
      %v2603 = vrot.slane %v2583, 1
      %v2604 = vrot.slane %v2327, 1
      %v2605 = vsel %vm1544, %v2603, %v2604
      %v2606 = vrot.slane %v2584, 1
      %v2607 = vrot.slane %v2328, 1
      %v2608 = vsel %vm1544, %v2606, %v2607
      %v2609 = vrot.slane %v2585, 1
      %v2610 = vrot.slane %v2329, 1
      %v2611 = vsel %vm1544, %v2609, %v2610
      %v2612 = vrot.slane %v2586, 1
      %v2613 = vrot.slane %v2330, 1
      %v2614 = vsel %vm1544, %v2612, %v2613
      %v2615 = vrot.slane %v2587, 1
      %v2616 = vrot.slane %v2331, 1
      %v2617 = vsel %vm1544, %v2615, %v2616
      %v2618 = vrot.slane %v2588, 1
      %v2619 = vrot.slane %v2332, 1
      %v2620 = vsel %vm1544, %v2618, %v2619
      %v2621 = vrot.slane %v2589, 1
      %v2622 = vrot.slane %v2333, 1
      %v2623 = vsel %vm1544, %v2621, %v2622
      %v2624 = vrot.slane %v2590, 1
      %v2625 = vrot.slane %v2334, 1
      %v2626 = vsel %vm1544, %v2624, %v2625
      %v2627 = vrot.slane %v2591, 1
      %v2628 = vrot.slane %v2335, 1
      %v2629 = vsel %vm1544, %v2627, %v2628
      %v2630 = vrot.slane %v2592, 1
      %v2631 = vrot.slane %v2336, 1
      %v2632 = vsel %vm1544, %v2630, %v2631
      %v2633 = vrot.slane %v2593, 1
      %v2634 = vrot.slane %v2337, 1
      %v2635 = vsel %vm1544, %v2633, %v2634
      %v2636 = vrot.slane %v2594, 1
      %v2637 = vrot.slane %v2338, 1
      %v2638 = vsel %vm1544, %v2636, %v2637
      %v2639 = vrot.slane %v2595, 1
      %v2640 = vrot.slane %v2339, 1
      %v2641 = vsel %vm1544, %v2639, %v2640
      %v2642 = vrot.slane %v2596, 1
      %v2643 = vrot.slane %v2340, 1
      %v2644 = vsel %vm1544, %v2642, %v2643
      %s2661 = scalar_lea.vmem %s3, 192
      %v2662 = vld [vmem:[%s2661] sm:$0xf]
      %v2663 = vld [vmem:[%s2661 + $0x4] sm:$0xf]
      %v2664 = vld [vmem:[%s2661 + $0x8] sm:$0xf]
      %v2665 = vld [vmem:[%s2661 + $0xc] sm:$0xf]
      %v2666 = vld [vmem:[%s2661 + $0x10] sm:$0xf]
      %v2667 = vld [vmem:[%s2661 + $0x14] sm:$0xf]
      %v2668 = vld [vmem:[%s2661 + $0x18] sm:$0xf]
      %v2669 = vld [vmem:[%s2661 + $0x1c] sm:$0xf]
      %v2670 = vld [vmem:[%s2661 + $0x20] sm:$0xf]
      %v2671 = vld [vmem:[%s2661 + $0x24] sm:$0xf]
      %v2672 = vld [vmem:[%s2661 + $0x28] sm:$0xf]
      %v2673 = vld [vmem:[%s2661 + $0x2c] sm:$0xf]
      %v2674 = vld [vmem:[%s2661 + $0x30] sm:$0xf]
      %v2675 = vld [vmem:[%s2661 + $0x34] sm:$0xf]
      %v2676 = vld [vmem:[%s2661 + $0x38] sm:$0xf]
      %v2677 = vld [vmem:[%s2661 + $0x3c] sm:$0xf]
      %v2678 = vld [vmem:[%s2661 + $0x40] sm:$0xf]
      %v2679 = vld [vmem:[%s2661 + $0x44] sm:$0xf]
      %v2680 = vld [vmem:[%s2661 + $0x48] sm:$0xf]
      %v2681 = vld [vmem:[%s2661 + $0x4c] sm:$0xf]
      %v2682 = vld [vmem:[%s2661 + $0x50] sm:$0xf]
      %v2683 = vld [vmem:[%s2661 + $0x54] sm:$0xf]
      %v2684 = vld [vmem:[%s2661 + $0x58] sm:$0xf]
      %v2685 = vld [vmem:[%s2661 + $0x5c] sm:$0xf]
      %v2686 = vld [vmem:[%s2661 + $0x60] sm:$0xf]
      %v2687 = vld [vmem:[%s2661 + $0x64] sm:$0xf]
      %v2688 = vld [vmem:[%s2661 + $0x68] sm:$0xf]
      %v2689 = vld [vmem:[%s2661 + $0x6c] sm:$0xf]
      %v2690 = vld [vmem:[%s2661 + $0x70] sm:$0xf]
      %v2691 = vld [vmem:[%s2661 + $0x74] sm:$0xf]
      %v2692 = vld [vmem:[%s2661 + $0x78] sm:$0xf]
      %v2693 = vld [vmem:[%s2661 + $0x7c] sm:$0xf]
      %v2694 = vld [vmem:[%s2661 + $0x80] sm:$0xf]
      %v2695 = vld [vmem:[%s2661 + $0x84] sm:$0xf]
      %v2696 = vld [vmem:[%s2661 + $0x88] sm:$0xf]
      %v2697 = vld [vmem:[%s2661 + $0x8c] sm:$0xf]
      %v2698 = vld [vmem:[%s2661 + $0x90] sm:$0xf]
      %v2699 = vld [vmem:[%s2661 + $0x94] sm:$0xf]
      %v2700 = vld [vmem:[%s2661 + $0x98] sm:$0xf]
      %v2701 = vld [vmem:[%s2661 + $0x9c] sm:$0xf]
      %v2702 = vld [vmem:[%s2661 + $0xa0] sm:$0xf]
      %v2703 = vld [vmem:[%s2661 + $0xa4] sm:$0xf]
      %v2704 = vld [vmem:[%s2661 + $0xa8] sm:$0xf]
      %v2705 = vld [vmem:[%s2661 + $0xac] sm:$0xf]
      %v2706 = vld [vmem:[%s2661 + $0xb0] sm:$0xf]
      %v2707 = vld [vmem:[%s2661 + $0xb4] sm:$0xf]
      %v2708 = vld [vmem:[%s2661 + $0xb8] sm:$0xf]
      %v2709 = vld [vmem:[%s2661 + $0xbc] sm:$0xf]
      %v2758 = vunpack.c.l.b16 %v2662
      %v2759 = vunpack.c.l.b16 %v2663
      %v2760 = vunpack.c.l.b16 %v2664
      %v2761 = vunpack.c.l.b16 %v2665
      %v2762 = vunpack.c.l.b16 %v2666
      %v2763 = vunpack.c.l.b16 %v2667
      %v2764 = vunpack.c.l.b16 %v2668
      %v2765 = vunpack.c.l.b16 %v2669
      %v2766 = vunpack.c.l.b16 %v2670
      %v2767 = vunpack.c.l.b16 %v2671
      %v2768 = vunpack.c.l.b16 %v2672
      %v2769 = vunpack.c.l.b16 %v2673
      %v2770 = vunpack.c.l.b16 %v2674
      %v2771 = vunpack.c.l.b16 %v2675
      %v2772 = vunpack.c.l.b16 %v2676
      %v2773 = vunpack.c.l.b16 %v2677
      %v2774 = vunpack.c.l.b16 %v2678
      %v2775 = vunpack.c.l.b16 %v2679
      %v2776 = vunpack.c.l.b16 %v2680
      %v2777 = vunpack.c.l.b16 %v2681
      %v2778 = vunpack.c.l.b16 %v2682
      %v2779 = vunpack.c.l.b16 %v2683
      %v2780 = vunpack.c.l.b16 %v2684
      %v2781 = vunpack.c.l.b16 %v2685
      %v2782 = vunpack.c.l.b16 %v2686
      %v2783 = vunpack.c.l.b16 %v2687
      %v2784 = vunpack.c.l.b16 %v2688
      %v2785 = vunpack.c.l.b16 %v2689
      %v2786 = vunpack.c.l.b16 %v2690
      %v2787 = vunpack.c.l.b16 %v2691
      %v2788 = vunpack.c.l.b16 %v2692
      %v2789 = vunpack.c.l.b16 %v2693
      %v2790 = vunpack.c.l.b16 %v2694
      %v2791 = vunpack.c.l.b16 %v2695
      %v2792 = vunpack.c.l.b16 %v2696
      %v2793 = vunpack.c.l.b16 %v2697
      %v2794 = vunpack.c.l.b16 %v2698
      %v2795 = vunpack.c.l.b16 %v2699
      %v2796 = vunpack.c.l.b16 %v2700
      %v2797 = vunpack.c.l.b16 %v2701
      %v2798 = vunpack.c.l.b16 %v2702
      %v2799 = vunpack.c.l.b16 %v2703
      %v2800 = vunpack.c.l.b16 %v2704
      %v2801 = vunpack.c.l.b16 %v2705
      %v2802 = vunpack.c.l.b16 %v2706
      %v2803 = vunpack.c.l.b16 %v2707
      %v2804 = vunpack.c.l.b16 %v2708
      %v2805 = vunpack.c.l.b16 %v2709
      %v2806 = vpack.c.b16 %v2759, %v2758
      %v2807 = vpack.c.b16 %v2761, %v2760
      %v2808 = vpack.c.b16 %v2763, %v2762
      %v2809 = vpack.c.b16 %v2765, %v2764
      %v2810 = vpack.c.b16 %v2767, %v2766
      %v2811 = vpack.c.b16 %v2769, %v2768
      %v2812 = vpack.c.b16 %v2771, %v2770
      %v2813 = vpack.c.b16 %v2773, %v2772
      %v2814 = vpack.c.b16 %v2775, %v2774
      %v2815 = vpack.c.b16 %v2777, %v2776
      %v2816 = vpack.c.b16 %v2779, %v2778
      %v2817 = vpack.c.b16 %v2781, %v2780
      %v2818 = vpack.c.b16 %v2783, %v2782
      %v2819 = vpack.c.b16 %v2785, %v2784
      %v2820 = vpack.c.b16 %v2787, %v2786
      %v2821 = vpack.c.b16 %v2789, %v2788
      %v2822 = vpack.c.b16 %v2791, %v2790
      %v2823 = vpack.c.b16 %v2793, %v2792
      %v2824 = vpack.c.b16 %v2795, %v2794
      %v2825 = vpack.c.b16 %v2797, %v2796
      %v2826 = vpack.c.b16 %v2799, %v2798
      %v2827 = vpack.c.b16 %v2801, %v2800
      %v2828 = vpack.c.b16 %v2803, %v2802
      %v2829 = vpack.c.b16 %v2805, %v2804
      %2854 = vmatpush.bf16.msra.mxu0 %v2813
      %2855 = vmatpush.bf16.msra.mxu0 %v2812
      %2856 = vmatpush.bf16.msra.mxu0 %v2811
      %2857 = vmatpush.bf16.msra.mxu0 %v2810
      %2858 = vmatpush.bf16.msra.mxu0 %v2809
      %2859 = vmatpush.bf16.msra.mxu0 %v2808
      %2860 = vmatpush.bf16.msra.mxu0 %v2807
      %2861 = vmatpush.bf16.msra.mxu0 %v2806
      %2862 = vmatmul.bf16.gmra.mxu0 %v2261
      %v2863 = vpop.f32.mrf.mxu0
      %v2864 = vadd.f32 0.0, %v2863
      %v2865 = vpop.f32.mrf.mxu0
      %v2866 = vadd.f32 0.0, %v2865
      %2867 = vmatmul.bf16.gmra.mxu0 %v2262
      %v2868 = vpop.f32.mrf.mxu0
      %v2869 = vadd.f32 0.0, %v2868
      %v2870 = vpop.f32.mrf.mxu0
      %v2871 = vadd.f32 0.0, %v2870
      %2872 = vmatmul.bf16.gmra.mxu0 %v2263
      %v2873 = vpop.f32.mrf.mxu0
      %v2874 = vadd.f32 0.0, %v2873
      %v2875 = vpop.f32.mrf.mxu0
      %v2876 = vadd.f32 0.0, %v2875
      %2877 = vmatmul.bf16.gmra.mxu0 %v2264
      %v2878 = vpop.f32.mrf.mxu0
      %v2879 = vadd.f32 0.0, %v2878
      %v2880 = vpop.f32.mrf.mxu0
      %v2881 = vadd.f32 0.0, %v2880
      %2882 = vmatmul.bf16.gmra.mxu0 %v2265
      %v2883 = vpop.f32.mrf.mxu0
      %v2884 = vadd.f32 0.0, %v2883
      %v2885 = vpop.f32.mrf.mxu0
      %v2886 = vadd.f32 0.0, %v2885
      %2887 = vmatmul.bf16.gmra.mxu0 %v2266
      %v2888 = vpop.f32.mrf.mxu0
      %v2889 = vadd.f32 0.0, %v2888
      %v2890 = vpop.f32.mrf.mxu0
      %v2891 = vadd.f32 0.0, %v2890
      %2892 = vmatmul.bf16.gmra.mxu0 %v2267
      %v2893 = vpop.f32.mrf.mxu0
      %v2894 = vadd.f32 0.0, %v2893
      %v2895 = vpop.f32.mrf.mxu0
      %v2896 = vadd.f32 0.0, %v2895
      %2897 = vmatmul.bf16.gmra.mxu0 %v2268
      %v2898 = vpop.f32.mrf.mxu0
      %v2899 = vadd.f32 0.0, %v2898
      %v2900 = vpop.f32.mrf.mxu0
      %v2901 = vadd.f32 0.0, %v2900
      %2902 = vmatmul.bf16.gmra.mxu0 %v2269
      %v2903 = vpop.f32.mrf.mxu0
      %v2904 = vadd.f32 0.0, %v2903
      %v2905 = vpop.f32.mrf.mxu0
      %v2906 = vadd.f32 0.0, %v2905
      %2907 = vmatmul.bf16.gmra.mxu0 %v2270
      %v2908 = vpop.f32.mrf.mxu0
      %v2909 = vadd.f32 0.0, %v2908
      %v2910 = vpop.f32.mrf.mxu0
      %v2911 = vadd.f32 0.0, %v2910
      %2912 = vmatmul.bf16.gmra.mxu0 %v2271
      %v2913 = vpop.f32.mrf.mxu0
      %v2914 = vadd.f32 0.0, %v2913
      %v2915 = vpop.f32.mrf.mxu0
      %v2916 = vadd.f32 0.0, %v2915
      %2917 = vmatmul.bf16.gmra.mxu0 %v2272
      %v2918 = vpop.f32.mrf.mxu0
      %v2919 = vadd.f32 0.0, %v2918
      %v2920 = vpop.f32.mrf.mxu0
      %v2921 = vadd.f32 0.0, %v2920
      %2922 = vmatmul.bf16.gmra.mxu0 %v2273
      %v2923 = vpop.f32.mrf.mxu0
      %v2924 = vadd.f32 0.0, %v2923
      %v2925 = vpop.f32.mrf.mxu0
      %v2926 = vadd.f32 0.0, %v2925
      %2927 = vmatmul.bf16.gmra.mxu0 %v2274
      %v2928 = vpop.f32.mrf.mxu0
      %v2929 = vadd.f32 0.0, %v2928
      %v2930 = vpop.f32.mrf.mxu0
      %v2931 = vadd.f32 0.0, %v2930
      %2932 = vmatmul.bf16.gmra.mxu0 %v2275
      %v2933 = vpop.f32.mrf.mxu0
      %v2934 = vadd.f32 0.0, %v2933
      %v2935 = vpop.f32.mrf.mxu0
      %v2936 = vadd.f32 0.0, %v2935
      %2937 = vmatmul.bf16.gmra.mxu0 %v2276
      %v2938 = vpop.f32.mrf.mxu0
      %v2939 = vadd.f32 0.0, %v2938
      %v2940 = vpop.f32.mrf.mxu0
      %v2941 = vadd.f32 0.0, %v2940
      %2942 = vdwg.mxu0
      %2943 = vmatpush.bf16.msra.mxu0 %v2821
      %2944 = vmatpush.bf16.msra.mxu0 %v2820
      %2945 = vmatpush.bf16.msra.mxu0 %v2819
      %2946 = vmatpush.bf16.msra.mxu0 %v2818
      %2947 = vmatpush.bf16.msra.mxu0 %v2817
      %2948 = vmatpush.bf16.msra.mxu0 %v2816
      %2949 = vmatpush.bf16.msra.mxu0 %v2815
      %2950 = vmatpush.bf16.msra.mxu0 %v2814
      %2951 = vmatmul.bf16.gmra.mxu0 %v2352
      %v2952 = vpop.f32.mrf.mxu0
      %v2953 = vadd.f32 %v2864, %v2952
      %v2954 = vpop.f32.mrf.mxu0
      %v2955 = vadd.f32 %v2866, %v2954
      %2956 = vmatmul.bf16.gmra.mxu0 %v2364
      %v2957 = vpop.f32.mrf.mxu0
      %v2958 = vadd.f32 %v2869, %v2957
      %v2959 = vpop.f32.mrf.mxu0
      %v2960 = vadd.f32 %v2871, %v2959
      %2961 = vmatmul.bf16.gmra.mxu0 %v2376
      %v2962 = vpop.f32.mrf.mxu0
      %v2963 = vadd.f32 %v2874, %v2962
      %v2964 = vpop.f32.mrf.mxu0
      %v2965 = vadd.f32 %v2876, %v2964
      %2966 = vmatmul.bf16.gmra.mxu0 %v2388
      %v2967 = vpop.f32.mrf.mxu0
      %v2968 = vadd.f32 %v2879, %v2967
      %v2969 = vpop.f32.mrf.mxu0
      %v2970 = vadd.f32 %v2881, %v2969
      %2971 = vmatmul.bf16.gmra.mxu0 %v2400
      %v2972 = vpop.f32.mrf.mxu0
      %v2973 = vadd.f32 %v2884, %v2972
      %v2974 = vpop.f32.mrf.mxu0
      %v2975 = vadd.f32 %v2886, %v2974
      %2976 = vmatmul.bf16.gmra.mxu0 %v2412
      %v2977 = vpop.f32.mrf.mxu0
      %v2978 = vadd.f32 %v2889, %v2977
      %v2979 = vpop.f32.mrf.mxu0
      %v2980 = vadd.f32 %v2891, %v2979
      %2981 = vmatmul.bf16.gmra.mxu0 %v2424
      %v2982 = vpop.f32.mrf.mxu0
      %v2983 = vadd.f32 %v2894, %v2982
      %v2984 = vpop.f32.mrf.mxu0
      %v2985 = vadd.f32 %v2896, %v2984
      %2986 = vmatmul.bf16.gmra.mxu0 %v2436
      %v2987 = vpop.f32.mrf.mxu0
      %v2988 = vadd.f32 %v2899, %v2987
      %v2989 = vpop.f32.mrf.mxu0
      %v2990 = vadd.f32 %v2901, %v2989
      %2991 = vmatmul.bf16.gmra.mxu0 %v2448
      %v2992 = vpop.f32.mrf.mxu0
      %v2993 = vadd.f32 %v2904, %v2992
      %v2994 = vpop.f32.mrf.mxu0
      %v2995 = vadd.f32 %v2906, %v2994
      %2996 = vmatmul.bf16.gmra.mxu0 %v2460
      %v2997 = vpop.f32.mrf.mxu0
      %v2998 = vadd.f32 %v2909, %v2997
      %v2999 = vpop.f32.mrf.mxu0
      %v3000 = vadd.f32 %v2911, %v2999
      %3001 = vmatmul.bf16.gmra.mxu0 %v2472
      %v3002 = vpop.f32.mrf.mxu0
      %v3003 = vadd.f32 %v2914, %v3002
      %v3004 = vpop.f32.mrf.mxu0
      %v3005 = vadd.f32 %v2916, %v3004
      %3006 = vmatmul.bf16.gmra.mxu0 %v2484
      %v3007 = vpop.f32.mrf.mxu0
      %v3008 = vadd.f32 %v2919, %v3007
      %v3009 = vpop.f32.mrf.mxu0
      %v3010 = vadd.f32 %v2921, %v3009
      %3011 = vmatmul.bf16.gmra.mxu0 %v2496
      %v3012 = vpop.f32.mrf.mxu0
      %v3013 = vadd.f32 %v2924, %v3012
      %v3014 = vpop.f32.mrf.mxu0
      %v3015 = vadd.f32 %v2926, %v3014
      %3016 = vmatmul.bf16.gmra.mxu0 %v2508
      %v3017 = vpop.f32.mrf.mxu0
      %v3018 = vadd.f32 %v2929, %v3017
      %v3019 = vpop.f32.mrf.mxu0
      %v3020 = vadd.f32 %v2931, %v3019
      %3021 = vmatmul.bf16.gmra.mxu0 %v2520
      %v3022 = vpop.f32.mrf.mxu0
      %v3023 = vadd.f32 %v2934, %v3022
      %v3024 = vpop.f32.mrf.mxu0
      %v3025 = vadd.f32 %v2936, %v3024
      %3026 = vmatmul.bf16.gmra.mxu0 %v2532
      %v3027 = vpop.f32.mrf.mxu0
      %v3028 = vadd.f32 %v2939, %v3027
      %v3029 = vpop.f32.mrf.mxu0
      %v3030 = vadd.f32 %v2941, %v3029
      %3031 = vdwg.mxu0
      %3032 = vmatpush.bf16.msra.mxu0 %v2829
      %3033 = vmatpush.bf16.msra.mxu0 %v2828
      %3034 = vmatpush.bf16.msra.mxu0 %v2827
      %3035 = vmatpush.bf16.msra.mxu0 %v2826
      %3036 = vmatpush.bf16.msra.mxu0 %v2825
      %3037 = vmatpush.bf16.msra.mxu0 %v2824
      %3038 = vmatpush.bf16.msra.mxu0 %v2823
      %3039 = vmatpush.bf16.msra.mxu0 %v2822
      %3040 = vmatmul.bf16.gmra.mxu0 %v2599
      %v3041 = vpop.f32.mrf.mxu0
      %v3042 = vadd.f32 %v2953, %v3041
      %v3043 = vpop.f32.mrf.mxu0
      %v3044 = vadd.f32 %v2955, %v3043
      %3045 = vmatmul.bf16.gmra.mxu0 %v2602
      %v3046 = vpop.f32.mrf.mxu0
      %v3047 = vadd.f32 %v2958, %v3046
      %v3048 = vpop.f32.mrf.mxu0
      %v3049 = vadd.f32 %v2960, %v3048
      %3050 = vmatmul.bf16.gmra.mxu0 %v2605
      %v3051 = vpop.f32.mrf.mxu0
      %v3052 = vadd.f32 %v2963, %v3051
      %v3053 = vpop.f32.mrf.mxu0
      %v3054 = vadd.f32 %v2965, %v3053
      %3055 = vmatmul.bf16.gmra.mxu0 %v2608
      %v3056 = vpop.f32.mrf.mxu0
      %v3057 = vadd.f32 %v2968, %v3056
      %v3058 = vpop.f32.mrf.mxu0
      %v3059 = vadd.f32 %v2970, %v3058
      %3060 = vmatmul.bf16.gmra.mxu0 %v2611
      %v3061 = vpop.f32.mrf.mxu0
      %v3062 = vadd.f32 %v2973, %v3061
      %v3063 = vpop.f32.mrf.mxu0
      %v3064 = vadd.f32 %v2975, %v3063
      %3065 = vmatmul.bf16.gmra.mxu0 %v2614
      %v3066 = vpop.f32.mrf.mxu0
      %v3067 = vadd.f32 %v2978, %v3066
      %v3068 = vpop.f32.mrf.mxu0
      %v3069 = vadd.f32 %v2980, %v3068
      %3070 = vmatmul.bf16.gmra.mxu0 %v2617
      %v3071 = vpop.f32.mrf.mxu0
      %v3072 = vadd.f32 %v2983, %v3071
      %v3073 = vpop.f32.mrf.mxu0
      %v3074 = vadd.f32 %v2985, %v3073
      %3075 = vmatmul.bf16.gmra.mxu0 %v2620
      %v3076 = vpop.f32.mrf.mxu0
      %v3077 = vadd.f32 %v2988, %v3076
      %v3078 = vpop.f32.mrf.mxu0
      %v3079 = vadd.f32 %v2990, %v3078
      %3080 = vmatmul.bf16.gmra.mxu0 %v2623
      %v3081 = vpop.f32.mrf.mxu0
      %v3082 = vadd.f32 %v2993, %v3081
      %v3083 = vpop.f32.mrf.mxu0
      %v3084 = vadd.f32 %v2995, %v3083
      %3085 = vmatmul.bf16.gmra.mxu0 %v2626
      %v3086 = vpop.f32.mrf.mxu0
      %v3087 = vadd.f32 %v2998, %v3086
      %v3088 = vpop.f32.mrf.mxu0
      %v3089 = vadd.f32 %v3000, %v3088
      %3090 = vmatmul.bf16.gmra.mxu0 %v2629
      %v3091 = vpop.f32.mrf.mxu0
      %v3092 = vadd.f32 %v3003, %v3091
      %v3093 = vpop.f32.mrf.mxu0
      %v3094 = vadd.f32 %v3005, %v3093
      %3095 = vmatmul.bf16.gmra.mxu0 %v2632
      %v3096 = vpop.f32.mrf.mxu0
      %v3097 = vadd.f32 %v3008, %v3096
      %v3098 = vpop.f32.mrf.mxu0
      %v3099 = vadd.f32 %v3010, %v3098
      %3100 = vmatmul.bf16.gmra.mxu0 %v2635
      %v3101 = vpop.f32.mrf.mxu0
      %v3102 = vadd.f32 %v3013, %v3101
      %v3103 = vpop.f32.mrf.mxu0
      %v3104 = vadd.f32 %v3015, %v3103
      %3105 = vmatmul.bf16.gmra.mxu0 %v2638
      %v3106 = vpop.f32.mrf.mxu0
      %v3107 = vadd.f32 %v3018, %v3106
      %v3108 = vpop.f32.mrf.mxu0
      %v3109 = vadd.f32 %v3020, %v3108
      %3110 = vmatmul.bf16.gmra.mxu0 %v2641
      %v3111 = vpop.f32.mrf.mxu0
      %v3112 = vadd.f32 %v3023, %v3111
      %v3113 = vpop.f32.mrf.mxu0
      %v3114 = vadd.f32 %v3025, %v3113
      %3115 = vmatmul.bf16.gmra.mxu0 %v2644
      %v3116 = vpop.f32.mrf.mxu0
      %v3117 = vadd.f32 %v3028, %v3116
      %v3118 = vpop.f32.mrf.mxu0
      %v3119 = vadd.f32 %v3030, %v3118
      %3120 = vdwg.mxu0
      %v3121 = vadd.f32 %v2100, %v3042
      %v3122 = vadd.f32 %v2101, %v3044
      %v3123 = vadd.f32 %v2102, %v3047
      %v3124 = vadd.f32 %v2103, %v3049
      %v3125 = vadd.f32 %v2104, %v3052
      %v3126 = vadd.f32 %v2105, %v3054
      %v3127 = vadd.f32 %v2106, %v3057
      %v3128 = vadd.f32 %v2107, %v3059
      %v3129 = vadd.f32 %v2108, %v3062
      %v3130 = vadd.f32 %v2109, %v3064
      %v3131 = vadd.f32 %v2110, %v3067
      %v3132 = vadd.f32 %v2111, %v3069
      %v3133 = vadd.f32 %v2112, %v3072
      %v3134 = vadd.f32 %v2113, %v3074
      %v3135 = vadd.f32 %v2114, %v3077
      %v3136 = vadd.f32 %v2115, %v3079
      %v3137 = vadd.f32 %v2116, %v3082
      %v3138 = vadd.f32 %v2117, %v3084
      %v3139 = vadd.f32 %v2118, %v3087
      %v3140 = vadd.f32 %v2119, %v3089
      %v3141 = vadd.f32 %v2120, %v3092
      %v3142 = vadd.f32 %v2121, %v3094
      %v3143 = vadd.f32 %v2122, %v3097
      %v3144 = vadd.f32 %v2123, %v3099
      %v3145 = vadd.f32 %v2124, %v3102
      %v3146 = vadd.f32 %v2125, %v3104
      %v3147 = vadd.f32 %v2126, %v3107
      %v3148 = vadd.f32 %v2127, %v3109
      %v3149 = vadd.f32 %v2128, %v3112
      %v3150 = vadd.f32 %v2129, %v3114
      %v3151 = vadd.f32 %v2130, %v3117
      %v3152 = vadd.f32 %v2131, %v3119
      %3153 = vst [vmem:[#allocation4] sm:$0xff] %v3121
      %3154 = vst [vmem:[#allocation4 + $0x8] sm:$0xff] %v3122
      %3155 = vst [vmem:[#allocation4 + $0x10] sm:$0xff] %v3123
      %3156 = vst [vmem:[#allocation4 + $0x18] sm:$0xff] %v3124
      %3157 = vst [vmem:[#allocation4 + $0x20] sm:$0xff] %v3125
      %3158 = vst [vmem:[#allocation4 + $0x28] sm:$0xff] %v3126
      %3159 = vst [vmem:[#allocation4 + $0x30] sm:$0xff] %v3127
      %3160 = vst [vmem:[#allocation4 + $0x38] sm:$0xff] %v3128
      %3161 = vst [vmem:[#allocation4 + $0x40] sm:$0xff] %v3129
      %3162 = vst [vmem:[#allocation4 + $0x48] sm:$0xff] %v3130
      %3163 = vst [vmem:[#allocation4 + $0x50] sm:$0xff] %v3131
      %3164 = vst [vmem:[#allocation4 + $0x58] sm:$0xff] %v3132
      %3165 = vst [vmem:[#allocation4 + $0x60] sm:$0xff] %v3133
      %3166 = vst [vmem:[#allocation4 + $0x68] sm:$0xff] %v3134
      %3167 = vst [vmem:[#allocation4 + $0x70] sm:$0xff] %v3135
      %3168 = vst [vmem:[#allocation4 + $0x78] sm:$0xff] %v3136
      %3169 = vst [vmem:[#allocation4 + $0x80] sm:$0xff] %v3137
      %3170 = vst [vmem:[#allocation4 + $0x88] sm:$0xff] %v3138
      %3171 = vst [vmem:[#allocation4 + $0x90] sm:$0xff] %v3139
      %3172 = vst [vmem:[#allocation4 + $0x98] sm:$0xff] %v3140
      %3173 = vst [vmem:[#allocation4 + $0xa0] sm:$0xff] %v3141
      %3174 = vst [vmem:[#allocation4 + $0xa8] sm:$0xff] %v3142
      %3175 = vst [vmem:[#allocation4 + $0xb0] sm:$0xff] %v3143
      %3176 = vst [vmem:[#allocation4 + $0xb8] sm:$0xff] %v3144
      %3177 = vst [vmem:[#allocation4 + $0xc0] sm:$0xff] %v3145
      %3178 = vst [vmem:[#allocation4 + $0xc8] sm:$0xff] %v3146
      %3179 = vst [vmem:[#allocation4 + $0xd0] sm:$0xff] %v3147
      %3180 = vst [vmem:[#allocation4 + $0xd8] sm:$0xff] %v3148
      %3181 = vst [vmem:[#allocation4 + $0xe0] sm:$0xff] %v3149
      %3182 = vst [vmem:[#allocation4 + $0xe8] sm:$0xff] %v3150
      %3183 = vst [vmem:[#allocation4 + $0xf0] sm:$0xff] %v3151
      %3184 = vst [vmem:[#allocation4 + $0xf8] sm:$0xff] %v3152
      %v3185 = vld [vmem:[#allocation4] sm:$0xff]
      %v3186 = vld [vmem:[#allocation4 + $0x8] sm:$0xff]
      %v3187 = vld [vmem:[#allocation4 + $0x10] sm:$0xff]
      %v3188 = vld [vmem:[#allocation4 + $0x18] sm:$0xff]
      %v3189 = vld [vmem:[#allocation4 + $0x20] sm:$0xff]
      %v3190 = vld [vmem:[#allocation4 + $0x28] sm:$0xff]
      %v3191 = vld [vmem:[#allocation4 + $0x30] sm:$0xff]
      %v3192 = vld [vmem:[#allocation4 + $0x38] sm:$0xff]
      %v3193 = vld [vmem:[#allocation4 + $0x40] sm:$0xff]
      %v3194 = vld [vmem:[#allocation4 + $0x48] sm:$0xff]
      %v3195 = vld [vmem:[#allocation4 + $0x50] sm:$0xff]
      %v3196 = vld [vmem:[#allocation4 + $0x58] sm:$0xff]
      %v3197 = vld [vmem:[#allocation4 + $0x60] sm:$0xff]
      %v3198 = vld [vmem:[#allocation4 + $0x68] sm:$0xff]
      %v3199 = vld [vmem:[#allocation4 + $0x70] sm:$0xff]
      %v3200 = vld [vmem:[#allocation4 + $0x78] sm:$0xff]
      %v3201 = vld [vmem:[#allocation4 + $0x80] sm:$0xff]
      %v3202 = vld [vmem:[#allocation4 + $0x88] sm:$0xff]
      %v3203 = vld [vmem:[#allocation4 + $0x90] sm:$0xff]
      %v3204 = vld [vmem:[#allocation4 + $0x98] sm:$0xff]
      %v3205 = vld [vmem:[#allocation4 + $0xa0] sm:$0xff]
      %v3206 = vld [vmem:[#allocation4 + $0xa8] sm:$0xff]
      %v3207 = vld [vmem:[#allocation4 + $0xb0] sm:$0xff]
      %v3208 = vld [vmem:[#allocation4 + $0xb8] sm:$0xff]
      %v3209 = vld [vmem:[#allocation4 + $0xc0] sm:$0xff]
      %v3210 = vld [vmem:[#allocation4 + $0xc8] sm:$0xff]
      %v3211 = vld [vmem:[#allocation4 + $0xd0] sm:$0xff]
      %v3212 = vld [vmem:[#allocation4 + $0xd8] sm:$0xff]
      %v3213 = vld [vmem:[#allocation4 + $0xe0] sm:$0xff]
      %v3214 = vld [vmem:[#allocation4 + $0xe8] sm:$0xff]
      %v3215 = vld [vmem:[#allocation4 + $0xf0] sm:$0xff]
      %v3216 = vld [vmem:[#allocation4 + $0xf8] sm:$0xff]
      %s3217 = scalar_lea.vmem [#allocation3], 24
      %v3218 = vld [vmem:[%s3217] sm:$0xf]
      %v3219 = vld [vmem:[%s3217 + $0x4] sm:$0xf]
      %v3220 = vld [vmem:[%s3217 + $0xc] sm:$0xf]
      %v3221 = vld [vmem:[%s3217 + $0x10] sm:$0xf]
      %v3222 = vld [vmem:[%s3217 + $0x18] sm:$0xf]
      %v3223 = vld [vmem:[%s3217 + $0x1c] sm:$0xf]
      %v3224 = vld [vmem:[%s3217 + $0x24] sm:$0xf]
      %v3225 = vld [vmem:[%s3217 + $0x28] sm:$0xf]
      %v3226 = vld [vmem:[%s3217 + $0x30] sm:$0xf]
      %v3227 = vld [vmem:[%s3217 + $0x34] sm:$0xf]
      %v3228 = vld [vmem:[%s3217 + $0x3c] sm:$0xf]
      %v3229 = vld [vmem:[%s3217 + $0x40] sm:$0xf]
      %v3230 = vld [vmem:[%s3217 + $0x48] sm:$0xf]
      %v3231 = vld [vmem:[%s3217 + $0x4c] sm:$0xf]
      %v3232 = vld [vmem:[%s3217 + $0x54] sm:$0xf]
      %v3233 = vld [vmem:[%s3217 + $0x58] sm:$0xf]
      %v3234 = vld [vmem:[%s3217 + $0x60] sm:$0xf]
      %v3235 = vld [vmem:[%s3217 + $0x64] sm:$0xf]
      %v3236 = vld [vmem:[%s3217 + $0x6c] sm:$0xf]
      %v3237 = vld [vmem:[%s3217 + $0x70] sm:$0xf]
      %v3238 = vld [vmem:[%s3217 + $0x78] sm:$0xf]
      %v3239 = vld [vmem:[%s3217 + $0x7c] sm:$0xf]
      %v3240 = vld [vmem:[%s3217 + $0x84] sm:$0xf]
      %v3241 = vld [vmem:[%s3217 + $0x88] sm:$0xf]
      %v3242 = vld [vmem:[%s3217 + $0x90] sm:$0xf]
      %v3243 = vld [vmem:[%s3217 + $0x94] sm:$0xf]
      %v3244 = vld [vmem:[%s3217 + $0x9c] sm:$0xf]
      %v3245 = vld [vmem:[%s3217 + $0xa0] sm:$0xf]
      %v3246 = vld [vmem:[%s3217 + $0xa8] sm:$0xf]
      %v3247 = vld [vmem:[%s3217 + $0xac] sm:$0xf]
      %v3248 = vld [vmem:[%s3217 + $0xb4] sm:$0xf]
      %v3249 = vld [vmem:[%s3217 + $0xb8] sm:$0xf]
      %v3250 = vld [vmem:[%s3217 + $0x8] sm:$0x1]
      %v3251 = vld [vmem:[%s3217 + $0x14] sm:$0x1]
      %v3252 = vld [vmem:[%s3217 + $0x20] sm:$0x1]
      %v3253 = vld [vmem:[%s3217 + $0x2c] sm:$0x1]
      %v3254 = vld [vmem:[%s3217 + $0x38] sm:$0x1]
      %v3255 = vld [vmem:[%s3217 + $0x44] sm:$0x1]
      %v3256 = vld [vmem:[%s3217 + $0x50] sm:$0x1]
      %v3257 = vld [vmem:[%s3217 + $0x5c] sm:$0x1]
      %v3258 = vld [vmem:[%s3217 + $0x68] sm:$0x1]
      %v3259 = vld [vmem:[%s3217 + $0x74] sm:$0x1]
      %v3260 = vld [vmem:[%s3217 + $0x80] sm:$0x1]
      %v3261 = vld [vmem:[%s3217 + $0x8c] sm:$0x1]
      %v3262 = vld [vmem:[%s3217 + $0x98] sm:$0x1]
      %v3263 = vld [vmem:[%s3217 + $0xa4] sm:$0x1]
      %v3264 = vld [vmem:[%s3217 + $0xb0] sm:$0x1]
      %v3265 = vld [vmem:[%s3217 + $0xbc] sm:$0x1]
      %v3266 = vld [vmem:[%s3217] sm:$0xe]
      %v3267 = vld [vmem:[%s3217 + $0xc] sm:$0xe]
      %v3268 = vld [vmem:[%s3217 + $0x18] sm:$0xe]
      %v3269 = vld [vmem:[%s3217 + $0x24] sm:$0xe]
      %v3270 = vld [vmem:[%s3217 + $0x30] sm:$0xe]
      %v3271 = vld [vmem:[%s3217 + $0x3c] sm:$0xe]
      %v3272 = vld [vmem:[%s3217 + $0x48] sm:$0xe]
      %v3273 = vld [vmem:[%s3217 + $0x54] sm:$0xe]
      %v3274 = vld [vmem:[%s3217 + $0x60] sm:$0xe]
      %v3275 = vld [vmem:[%s3217 + $0x6c] sm:$0xe]
      %v3276 = vld [vmem:[%s3217 + $0x78] sm:$0xe]
      %v3277 = vld [vmem:[%s3217 + $0x84] sm:$0xe]
      %v3278 = vld [vmem:[%s3217 + $0x90] sm:$0xe]
      %v3279 = vld [vmem:[%s3217 + $0x9c] sm:$0xe]
      %v3280 = vld [vmem:[%s3217 + $0xa8] sm:$0xe]
      %v3281 = vld [vmem:[%s3217 + $0xb4] sm:$0xe]
      %v3314 = vunpack.c.l.b16 %v3218
      %v3315 = vunpack.c.l.b16 %v3219
      %v3316 = vunpack.c.l.b16 %v3220
      %v3317 = vunpack.c.l.b16 %v3221
      %v3318 = vunpack.c.l.b16 %v3222
      %v3319 = vunpack.c.l.b16 %v3223
      %v3320 = vunpack.c.l.b16 %v3224
      %v3321 = vunpack.c.l.b16 %v3225
      %v3322 = vunpack.c.l.b16 %v3226
      %v3323 = vunpack.c.l.b16 %v3227
      %v3324 = vunpack.c.l.b16 %v3228
      %v3325 = vunpack.c.l.b16 %v3229
      %v3326 = vunpack.c.l.b16 %v3230
      %v3327 = vunpack.c.l.b16 %v3231
      %v3328 = vunpack.c.l.b16 %v3232
      %v3329 = vunpack.c.l.b16 %v3233
      %v3330 = vunpack.c.l.b16 %v3234
      %v3331 = vunpack.c.l.b16 %v3235
      %v3332 = vunpack.c.l.b16 %v3236
      %v3333 = vunpack.c.l.b16 %v3237
      %v3334 = vunpack.c.l.b16 %v3238
      %v3335 = vunpack.c.l.b16 %v3239
      %v3336 = vunpack.c.l.b16 %v3240
      %v3337 = vunpack.c.l.b16 %v3241
      %v3338 = vunpack.c.l.b16 %v3242
      %v3339 = vunpack.c.l.b16 %v3243
      %v3340 = vunpack.c.l.b16 %v3244
      %v3341 = vunpack.c.l.b16 %v3245
      %v3342 = vunpack.c.l.b16 %v3246
      %v3343 = vunpack.c.l.b16 %v3247
      %v3344 = vunpack.c.l.b16 %v3248
      %v3345 = vunpack.c.l.b16 %v3249
      %v3346 = vpack.c.b16 %v3315, %v3314
      %v3347 = vpack.c.b16 %v3317, %v3316
      %v3348 = vpack.c.b16 %v3319, %v3318
      %v3349 = vpack.c.b16 %v3321, %v3320
      %v3350 = vpack.c.b16 %v3323, %v3322
      %v3351 = vpack.c.b16 %v3325, %v3324
      %v3352 = vpack.c.b16 %v3327, %v3326
      %v3353 = vpack.c.b16 %v3329, %v3328
      %v3354 = vpack.c.b16 %v3331, %v3330
      %v3355 = vpack.c.b16 %v3333, %v3332
      %v3356 = vpack.c.b16 %v3335, %v3334
      %v3357 = vpack.c.b16 %v3337, %v3336
      %v3358 = vpack.c.b16 %v3339, %v3338
      %v3359 = vpack.c.b16 %v3341, %v3340
      %v3360 = vpack.c.b16 %v3343, %v3342
      %v3361 = vpack.c.b16 %v3345, %v3344
      %v3394 = vunpack.c.l.b16 %v3250
      %v3395 = vunpack.c.l.b16 %v3251
      %v3396 = vunpack.c.l.b16 %v3252
      %v3397 = vunpack.c.l.b16 %v3253
      %v3398 = vunpack.c.l.b16 %v3254
      %v3399 = vunpack.c.l.b16 %v3255
      %v3400 = vunpack.c.l.b16 %v3256
      %v3401 = vunpack.c.l.b16 %v3257
      %v3402 = vunpack.c.l.b16 %v3258
      %v3403 = vunpack.c.l.b16 %v3259
      %v3404 = vunpack.c.l.b16 %v3260
      %v3405 = vunpack.c.l.b16 %v3261
      %v3406 = vunpack.c.l.b16 %v3262
      %v3407 = vunpack.c.l.b16 %v3263
      %v3408 = vunpack.c.l.b16 %v3264
      %v3409 = vunpack.c.l.b16 %v3265
      %v3410 = vpack.c.b16 %v3394, %v3394
      %v3411 = vpack.c.b16 %v3395, %v3395
      %v3412 = vpack.c.b16 %v3396, %v3396
      %v3413 = vpack.c.b16 %v3397, %v3397
      %v3414 = vpack.c.b16 %v3398, %v3398
      %v3415 = vpack.c.b16 %v3399, %v3399
      %v3416 = vpack.c.b16 %v3400, %v3400
      %v3417 = vpack.c.b16 %v3401, %v3401
      %v3418 = vpack.c.b16 %v3402, %v3402
      %v3419 = vpack.c.b16 %v3403, %v3403
      %v3420 = vpack.c.b16 %v3404, %v3404
      %v3421 = vpack.c.b16 %v3405, %v3405
      %v3422 = vpack.c.b16 %v3406, %v3406
      %v3423 = vpack.c.b16 %v3407, %v3407
      %v3424 = vpack.c.b16 %v3408, %v3408
      %v3425 = vpack.c.b16 %v3409, %v3409
      %v3427 = vshrl.u32 %v3346, 16
      %v3429 = vshll.u32 %v3346, 16
      %v3431 = vrot.slane %v3429, 1
      %v3432 = vor.u32 %v3427, %v3431
      %v3434 = vshll.u32 %v3410, 16
      %v3436 = vrot.slane %v3434, 1
      %v3437 = vsel %vm1287, %v3432, %v3436
      %v3439 = vshrl.u32 %v3347, 16
      %v3441 = vshll.u32 %v3347, 16
      %v3443 = vrot.slane %v3441, 1
      %v3444 = vor.u32 %v3439, %v3443
      %v3446 = vshll.u32 %v3411, 16
      %v3448 = vrot.slane %v3446, 1
      %v3449 = vsel %vm1287, %v3444, %v3448
      %v3451 = vshrl.u32 %v3348, 16
      %v3453 = vshll.u32 %v3348, 16
      %v3455 = vrot.slane %v3453, 1
      %v3456 = vor.u32 %v3451, %v3455
      %v3458 = vshll.u32 %v3412, 16
      %v3460 = vrot.slane %v3458, 1
      %v3461 = vsel %vm1287, %v3456, %v3460
      %v3463 = vshrl.u32 %v3349, 16
      %v3465 = vshll.u32 %v3349, 16
      %v3467 = vrot.slane %v3465, 1
      %v3468 = vor.u32 %v3463, %v3467
      %v3470 = vshll.u32 %v3413, 16
      %v3472 = vrot.slane %v3470, 1
      %v3473 = vsel %vm1287, %v3468, %v3472
      %v3475 = vshrl.u32 %v3350, 16
      %v3477 = vshll.u32 %v3350, 16
      %v3479 = vrot.slane %v3477, 1
      %v3480 = vor.u32 %v3475, %v3479
      %v3482 = vshll.u32 %v3414, 16
      %v3484 = vrot.slane %v3482, 1
      %v3485 = vsel %vm1287, %v3480, %v3484
      %v3487 = vshrl.u32 %v3351, 16
      %v3489 = vshll.u32 %v3351, 16
      %v3491 = vrot.slane %v3489, 1
      %v3492 = vor.u32 %v3487, %v3491
      %v3494 = vshll.u32 %v3415, 16
      %v3496 = vrot.slane %v3494, 1
      %v3497 = vsel %vm1287, %v3492, %v3496
      %v3499 = vshrl.u32 %v3352, 16
      %v3501 = vshll.u32 %v3352, 16
      %v3503 = vrot.slane %v3501, 1
      %v3504 = vor.u32 %v3499, %v3503
      %v3506 = vshll.u32 %v3416, 16
      %v3508 = vrot.slane %v3506, 1
      %v3509 = vsel %vm1287, %v3504, %v3508
      %v3511 = vshrl.u32 %v3353, 16
      %v3513 = vshll.u32 %v3353, 16
      %v3515 = vrot.slane %v3513, 1
      %v3516 = vor.u32 %v3511, %v3515
      %v3518 = vshll.u32 %v3417, 16
      %v3520 = vrot.slane %v3518, 1
      %v3521 = vsel %vm1287, %v3516, %v3520
      %v3523 = vshrl.u32 %v3354, 16
      %v3525 = vshll.u32 %v3354, 16
      %v3527 = vrot.slane %v3525, 1
      %v3528 = vor.u32 %v3523, %v3527
      %v3530 = vshll.u32 %v3418, 16
      %v3532 = vrot.slane %v3530, 1
      %v3533 = vsel %vm1287, %v3528, %v3532
      %v3535 = vshrl.u32 %v3355, 16
      %v3537 = vshll.u32 %v3355, 16
      %v3539 = vrot.slane %v3537, 1
      %v3540 = vor.u32 %v3535, %v3539
      %v3542 = vshll.u32 %v3419, 16
      %v3544 = vrot.slane %v3542, 1
      %v3545 = vsel %vm1287, %v3540, %v3544
      %v3547 = vshrl.u32 %v3356, 16
      %v3549 = vshll.u32 %v3356, 16
      %v3551 = vrot.slane %v3549, 1
      %v3552 = vor.u32 %v3547, %v3551
      %v3554 = vshll.u32 %v3420, 16
      %v3556 = vrot.slane %v3554, 1
      %v3557 = vsel %vm1287, %v3552, %v3556
      %v3559 = vshrl.u32 %v3357, 16
      %v3561 = vshll.u32 %v3357, 16
      %v3563 = vrot.slane %v3561, 1
      %v3564 = vor.u32 %v3559, %v3563
      %v3566 = vshll.u32 %v3421, 16
      %v3568 = vrot.slane %v3566, 1
      %v3569 = vsel %vm1287, %v3564, %v3568
      %v3571 = vshrl.u32 %v3358, 16
      %v3573 = vshll.u32 %v3358, 16
      %v3575 = vrot.slane %v3573, 1
      %v3576 = vor.u32 %v3571, %v3575
      %v3578 = vshll.u32 %v3422, 16
      %v3580 = vrot.slane %v3578, 1
      %v3581 = vsel %vm1287, %v3576, %v3580
      %v3583 = vshrl.u32 %v3359, 16
      %v3585 = vshll.u32 %v3359, 16
      %v3587 = vrot.slane %v3585, 1
      %v3588 = vor.u32 %v3583, %v3587
      %v3590 = vshll.u32 %v3423, 16
      %v3592 = vrot.slane %v3590, 1
      %v3593 = vsel %vm1287, %v3588, %v3592
      %v3595 = vshrl.u32 %v3360, 16
      %v3597 = vshll.u32 %v3360, 16
      %v3599 = vrot.slane %v3597, 1
      %v3600 = vor.u32 %v3595, %v3599
      %v3602 = vshll.u32 %v3424, 16
      %v3604 = vrot.slane %v3602, 1
      %v3605 = vsel %vm1287, %v3600, %v3604
      %v3607 = vshrl.u32 %v3361, 16
      %v3609 = vshll.u32 %v3361, 16
      %v3611 = vrot.slane %v3609, 1
      %v3612 = vor.u32 %v3607, %v3611
      %v3614 = vshll.u32 %v3425, 16
      %v3616 = vrot.slane %v3614, 1
      %v3617 = vsel %vm1287, %v3612, %v3616
      %v3650 = vunpack.c.l.b16 %v3266
      %v3651 = vunpack.c.l.b16 %v3267
      %v3652 = vunpack.c.l.b16 %v3268
      %v3653 = vunpack.c.l.b16 %v3269
      %v3654 = vunpack.c.l.b16 %v3270
      %v3655 = vunpack.c.l.b16 %v3271
      %v3656 = vunpack.c.l.b16 %v3272
      %v3657 = vunpack.c.l.b16 %v3273
      %v3658 = vunpack.c.l.b16 %v3274
      %v3659 = vunpack.c.l.b16 %v3275
      %v3660 = vunpack.c.l.b16 %v3276
      %v3661 = vunpack.c.l.b16 %v3277
      %v3662 = vunpack.c.l.b16 %v3278
      %v3663 = vunpack.c.l.b16 %v3279
      %v3664 = vunpack.c.l.b16 %v3280
      %v3665 = vunpack.c.l.b16 %v3281
      %v3666 = vpack.c.b16 %v3315, %v3650
      %v3667 = vpack.c.b16 %v3317, %v3651
      %v3668 = vpack.c.b16 %v3319, %v3652
      %v3669 = vpack.c.b16 %v3321, %v3653
      %v3670 = vpack.c.b16 %v3323, %v3654
      %v3671 = vpack.c.b16 %v3325, %v3655
      %v3672 = vpack.c.b16 %v3327, %v3656
      %v3673 = vpack.c.b16 %v3329, %v3657
      %v3674 = vpack.c.b16 %v3331, %v3658
      %v3675 = vpack.c.b16 %v3333, %v3659
      %v3676 = vpack.c.b16 %v3335, %v3660
      %v3677 = vpack.c.b16 %v3337, %v3661
      %v3678 = vpack.c.b16 %v3339, %v3662
      %v3679 = vpack.c.b16 %v3341, %v3663
      %v3680 = vpack.c.b16 %v3343, %v3664
      %v3681 = vpack.c.b16 %v3345, %v3665
      %v3682 = vrot.slane %v3666, 1
      %v3683 = vrot.slane %v3410, 1
      %v3684 = vsel %vm1544, %v3682, %v3683
      %v3685 = vrot.slane %v3667, 1
      %v3686 = vrot.slane %v3411, 1
      %v3687 = vsel %vm1544, %v3685, %v3686
      %v3688 = vrot.slane %v3668, 1
      %v3689 = vrot.slane %v3412, 1
      %v3690 = vsel %vm1544, %v3688, %v3689
      %v3691 = vrot.slane %v3669, 1
      %v3692 = vrot.slane %v3413, 1
      %v3693 = vsel %vm1544, %v3691, %v3692
      %v3694 = vrot.slane %v3670, 1
      %v3695 = vrot.slane %v3414, 1
      %v3696 = vsel %vm1544, %v3694, %v3695
      %v3697 = vrot.slane %v3671, 1
      %v3698 = vrot.slane %v3415, 1
      %v3699 = vsel %vm1544, %v3697, %v3698
      %v3700 = vrot.slane %v3672, 1
      %v3701 = vrot.slane %v3416, 1
      %v3702 = vsel %vm1544, %v3700, %v3701
      %v3703 = vrot.slane %v3673, 1
      %v3704 = vrot.slane %v3417, 1
      %v3705 = vsel %vm1544, %v3703, %v3704
      %v3706 = vrot.slane %v3674, 1
      %v3707 = vrot.slane %v3418, 1
      %v3708 = vsel %vm1544, %v3706, %v3707
      %v3709 = vrot.slane %v3675, 1
      %v3710 = vrot.slane %v3419, 1
      %v3711 = vsel %vm1544, %v3709, %v3710
      %v3712 = vrot.slane %v3676, 1
      %v3713 = vrot.slane %v3420, 1
      %v3714 = vsel %vm1544, %v3712, %v3713
      %v3715 = vrot.slane %v3677, 1
      %v3716 = vrot.slane %v3421, 1
      %v3717 = vsel %vm1544, %v3715, %v3716
      %v3718 = vrot.slane %v3678, 1
      %v3719 = vrot.slane %v3422, 1
      %v3720 = vsel %vm1544, %v3718, %v3719
      %v3721 = vrot.slane %v3679, 1
      %v3722 = vrot.slane %v3423, 1
      %v3723 = vsel %vm1544, %v3721, %v3722
      %v3724 = vrot.slane %v3680, 1
      %v3725 = vrot.slane %v3424, 1
      %v3726 = vsel %vm1544, %v3724, %v3725
      %v3727 = vrot.slane %v3681, 1
      %v3728 = vrot.slane %v3425, 1
      %v3729 = vsel %vm1544, %v3727, %v3728
      %s3746 = scalar_lea.vmem %s3, 384
      %v3747 = vld [vmem:[%s3746] sm:$0xf]
      %v3748 = vld [vmem:[%s3746 + $0x4] sm:$0xf]
      %v3749 = vld [vmem:[%s3746 + $0x8] sm:$0xf]
      %v3750 = vld [vmem:[%s3746 + $0xc] sm:$0xf]
      %v3751 = vld [vmem:[%s3746 + $0x10] sm:$0xf]
      %v3752 = vld [vmem:[%s3746 + $0x14] sm:$0xf]
      %v3753 = vld [vmem:[%s3746 + $0x18] sm:$0xf]
      %v3754 = vld [vmem:[%s3746 + $0x1c] sm:$0xf]
      %v3755 = vld [vmem:[%s3746 + $0x20] sm:$0xf]
      %v3756 = vld [vmem:[%s3746 + $0x24] sm:$0xf]
      %v3757 = vld [vmem:[%s3746 + $0x28] sm:$0xf]
      %v3758 = vld [vmem:[%s3746 + $0x2c] sm:$0xf]
      %v3759 = vld [vmem:[%s3746 + $0x30] sm:$0xf]
      %v3760 = vld [vmem:[%s3746 + $0x34] sm:$0xf]
      %v3761 = vld [vmem:[%s3746 + $0x38] sm:$0xf]
      %v3762 = vld [vmem:[%s3746 + $0x3c] sm:$0xf]
      %v3763 = vld [vmem:[%s3746 + $0x40] sm:$0xf]
      %v3764 = vld [vmem:[%s3746 + $0x44] sm:$0xf]
      %v3765 = vld [vmem:[%s3746 + $0x48] sm:$0xf]
      %v3766 = vld [vmem:[%s3746 + $0x4c] sm:$0xf]
      %v3767 = vld [vmem:[%s3746 + $0x50] sm:$0xf]
      %v3768 = vld [vmem:[%s3746 + $0x54] sm:$0xf]
      %v3769 = vld [vmem:[%s3746 + $0x58] sm:$0xf]
      %v3770 = vld [vmem:[%s3746 + $0x5c] sm:$0xf]
      %v3771 = vld [vmem:[%s3746 + $0x60] sm:$0xf]
      %v3772 = vld [vmem:[%s3746 + $0x64] sm:$0xf]
      %v3773 = vld [vmem:[%s3746 + $0x68] sm:$0xf]
      %v3774 = vld [vmem:[%s3746 + $0x6c] sm:$0xf]
      %v3775 = vld [vmem:[%s3746 + $0x70] sm:$0xf]
      %v3776 = vld [vmem:[%s3746 + $0x74] sm:$0xf]
      %v3777 = vld [vmem:[%s3746 + $0x78] sm:$0xf]
      %v3778 = vld [vmem:[%s3746 + $0x7c] sm:$0xf]
      %v3779 = vld [vmem:[%s3746 + $0x80] sm:$0xf]
      %v3780 = vld [vmem:[%s3746 + $0x84] sm:$0xf]
      %v3781 = vld [vmem:[%s3746 + $0x88] sm:$0xf]
      %v3782 = vld [vmem:[%s3746 + $0x8c] sm:$0xf]
      %v3783 = vld [vmem:[%s3746 + $0x90] sm:$0xf]
      %v3784 = vld [vmem:[%s3746 + $0x94] sm:$0xf]
      %v3785 = vld [vmem:[%s3746 + $0x98] sm:$0xf]
      %v3786 = vld [vmem:[%s3746 + $0x9c] sm:$0xf]
      %v3787 = vld [vmem:[%s3746 + $0xa0] sm:$0xf]
      %v3788 = vld [vmem:[%s3746 + $0xa4] sm:$0xf]
      %v3789 = vld [vmem:[%s3746 + $0xa8] sm:$0xf]
      %v3790 = vld [vmem:[%s3746 + $0xac] sm:$0xf]
      %v3791 = vld [vmem:[%s3746 + $0xb0] sm:$0xf]
      %v3792 = vld [vmem:[%s3746 + $0xb4] sm:$0xf]
      %v3793 = vld [vmem:[%s3746 + $0xb8] sm:$0xf]
      %v3794 = vld [vmem:[%s3746 + $0xbc] sm:$0xf]
      %v3843 = vunpack.c.l.b16 %v3747
      %v3844 = vunpack.c.l.b16 %v3748
      %v3845 = vunpack.c.l.b16 %v3749
      %v3846 = vunpack.c.l.b16 %v3750
      %v3847 = vunpack.c.l.b16 %v3751
      %v3848 = vunpack.c.l.b16 %v3752
      %v3849 = vunpack.c.l.b16 %v3753
      %v3850 = vunpack.c.l.b16 %v3754
      %v3851 = vunpack.c.l.b16 %v3755
      %v3852 = vunpack.c.l.b16 %v3756
      %v3853 = vunpack.c.l.b16 %v3757
      %v3854 = vunpack.c.l.b16 %v3758
      %v3855 = vunpack.c.l.b16 %v3759
      %v3856 = vunpack.c.l.b16 %v3760
      %v3857 = vunpack.c.l.b16 %v3761
      %v3858 = vunpack.c.l.b16 %v3762
      %v3859 = vunpack.c.l.b16 %v3763
      %v3860 = vunpack.c.l.b16 %v3764
      %v3861 = vunpack.c.l.b16 %v3765
      %v3862 = vunpack.c.l.b16 %v3766
      %v3863 = vunpack.c.l.b16 %v3767
      %v3864 = vunpack.c.l.b16 %v3768
      %v3865 = vunpack.c.l.b16 %v3769
      %v3866 = vunpack.c.l.b16 %v3770
      %v3867 = vunpack.c.l.b16 %v3771
      %v3868 = vunpack.c.l.b16 %v3772
      %v3869 = vunpack.c.l.b16 %v3773
      %v3870 = vunpack.c.l.b16 %v3774
      %v3871 = vunpack.c.l.b16 %v3775
      %v3872 = vunpack.c.l.b16 %v3776
      %v3873 = vunpack.c.l.b16 %v3777
      %v3874 = vunpack.c.l.b16 %v3778
      %v3875 = vunpack.c.l.b16 %v3779
      %v3876 = vunpack.c.l.b16 %v3780
      %v3877 = vunpack.c.l.b16 %v3781
      %v3878 = vunpack.c.l.b16 %v3782
      %v3879 = vunpack.c.l.b16 %v3783
      %v3880 = vunpack.c.l.b16 %v3784
      %v3881 = vunpack.c.l.b16 %v3785
      %v3882 = vunpack.c.l.b16 %v3786
      %v3883 = vunpack.c.l.b16 %v3787
      %v3884 = vunpack.c.l.b16 %v3788
      %v3885 = vunpack.c.l.b16 %v3789
      %v3886 = vunpack.c.l.b16 %v3790
      %v3887 = vunpack.c.l.b16 %v3791
      %v3888 = vunpack.c.l.b16 %v3792
      %v3889 = vunpack.c.l.b16 %v3793
      %v3890 = vunpack.c.l.b16 %v3794
      %v3891 = vpack.c.b16 %v3844, %v3843
      %v3892 = vpack.c.b16 %v3846, %v3845
      %v3893 = vpack.c.b16 %v3848, %v3847
      %v3894 = vpack.c.b16 %v3850, %v3849
      %v3895 = vpack.c.b16 %v3852, %v3851
      %v3896 = vpack.c.b16 %v3854, %v3853
      %v3897 = vpack.c.b16 %v3856, %v3855
      %v3898 = vpack.c.b16 %v3858, %v3857
      %v3899 = vpack.c.b16 %v3860, %v3859
      %v3900 = vpack.c.b16 %v3862, %v3861
      %v3901 = vpack.c.b16 %v3864, %v3863
      %v3902 = vpack.c.b16 %v3866, %v3865
      %v3903 = vpack.c.b16 %v3868, %v3867
      %v3904 = vpack.c.b16 %v3870, %v3869
      %v3905 = vpack.c.b16 %v3872, %v3871
      %v3906 = vpack.c.b16 %v3874, %v3873
      %v3907 = vpack.c.b16 %v3876, %v3875
      %v3908 = vpack.c.b16 %v3878, %v3877
      %v3909 = vpack.c.b16 %v3880, %v3879
      %v3910 = vpack.c.b16 %v3882, %v3881
      %v3911 = vpack.c.b16 %v3884, %v3883
      %v3912 = vpack.c.b16 %v3886, %v3885
      %v3913 = vpack.c.b16 %v3888, %v3887
      %v3914 = vpack.c.b16 %v3890, %v3889
      %3939 = vmatpush.bf16.msra.mxu0 %v3898
      %3940 = vmatpush.bf16.msra.mxu0 %v3897
      %3941 = vmatpush.bf16.msra.mxu0 %v3896
      %3942 = vmatpush.bf16.msra.mxu0 %v3895
      %3943 = vmatpush.bf16.msra.mxu0 %v3894
      %3944 = vmatpush.bf16.msra.mxu0 %v3893
      %3945 = vmatpush.bf16.msra.mxu0 %v3892
      %3946 = vmatpush.bf16.msra.mxu0 %v3891
      %3947 = vmatmul.bf16.gmra.mxu0 %v3346
      %v3948 = vpop.f32.mrf.mxu0
      %v3949 = vadd.f32 0.0, %v3948
      %v3950 = vpop.f32.mrf.mxu0
      %v3951 = vadd.f32 0.0, %v3950
      %3952 = vmatmul.bf16.gmra.mxu0 %v3347
      %v3953 = vpop.f32.mrf.mxu0
      %v3954 = vadd.f32 0.0, %v3953
      %v3955 = vpop.f32.mrf.mxu0
      %v3956 = vadd.f32 0.0, %v3955
      %3957 = vmatmul.bf16.gmra.mxu0 %v3348
      %v3958 = vpop.f32.mrf.mxu0
      %v3959 = vadd.f32 0.0, %v3958
      %v3960 = vpop.f32.mrf.mxu0
      %v3961 = vadd.f32 0.0, %v3960
      %3962 = vmatmul.bf16.gmra.mxu0 %v3349
      %v3963 = vpop.f32.mrf.mxu0
      %v3964 = vadd.f32 0.0, %v3963
      %v3965 = vpop.f32.mrf.mxu0
      %v3966 = vadd.f32 0.0, %v3965
      %3967 = vmatmul.bf16.gmra.mxu0 %v3350
      %v3968 = vpop.f32.mrf.mxu0
      %v3969 = vadd.f32 0.0, %v3968
      %v3970 = vpop.f32.mrf.mxu0
      %v3971 = vadd.f32 0.0, %v3970
      %3972 = vmatmul.bf16.gmra.mxu0 %v3351
      %v3973 = vpop.f32.mrf.mxu0
      %v3974 = vadd.f32 0.0, %v3973
      %v3975 = vpop.f32.mrf.mxu0
      %v3976 = vadd.f32 0.0, %v3975
      %3977 = vmatmul.bf16.gmra.mxu0 %v3352
      %v3978 = vpop.f32.mrf.mxu0
      %v3979 = vadd.f32 0.0, %v3978
      %v3980 = vpop.f32.mrf.mxu0
      %v3981 = vadd.f32 0.0, %v3980
      %3982 = vmatmul.bf16.gmra.mxu0 %v3353
      %v3983 = vpop.f32.mrf.mxu0
      %v3984 = vadd.f32 0.0, %v3983
      %v3985 = vpop.f32.mrf.mxu0
      %v3986 = vadd.f32 0.0, %v3985
      %3987 = vmatmul.bf16.gmra.mxu0 %v3354
      %v3988 = vpop.f32.mrf.mxu0
      %v3989 = vadd.f32 0.0, %v3988
      %v3990 = vpop.f32.mrf.mxu0
      %v3991 = vadd.f32 0.0, %v3990
      %3992 = vmatmul.bf16.gmra.mxu0 %v3355
      %v3993 = vpop.f32.mrf.mxu0
      %v3994 = vadd.f32 0.0, %v3993
      %v3995 = vpop.f32.mrf.mxu0
      %v3996 = vadd.f32 0.0, %v3995
      %3997 = vmatmul.bf16.gmra.mxu0 %v3356
      %v3998 = vpop.f32.mrf.mxu0
      %v3999 = vadd.f32 0.0, %v3998
      %v4000 = vpop.f32.mrf.mxu0
      %v4001 = vadd.f32 0.0, %v4000
      %4002 = vmatmul.bf16.gmra.mxu0 %v3357
      %v4003 = vpop.f32.mrf.mxu0
      %v4004 = vadd.f32 0.0, %v4003
      %v4005 = vpop.f32.mrf.mxu0
      %v4006 = vadd.f32 0.0, %v4005
      %4007 = vmatmul.bf16.gmra.mxu0 %v3358
      %v4008 = vpop.f32.mrf.mxu0
      %v4009 = vadd.f32 0.0, %v4008
      %v4010 = vpop.f32.mrf.mxu0
      %v4011 = vadd.f32 0.0, %v4010
      %4012 = vmatmul.bf16.gmra.mxu0 %v3359
      %v4013 = vpop.f32.mrf.mxu0
      %v4014 = vadd.f32 0.0, %v4013
      %v4015 = vpop.f32.mrf.mxu0
      %v4016 = vadd.f32 0.0, %v4015
      %4017 = vmatmul.bf16.gmra.mxu0 %v3360
      %v4018 = vpop.f32.mrf.mxu0
      %v4019 = vadd.f32 0.0, %v4018
      %v4020 = vpop.f32.mrf.mxu0
      %v4021 = vadd.f32 0.0, %v4020
      %4022 = vmatmul.bf16.gmra.mxu0 %v3361
      %v4023 = vpop.f32.mrf.mxu0
      %v4024 = vadd.f32 0.0, %v4023
      %v4025 = vpop.f32.mrf.mxu0
      %v4026 = vadd.f32 0.0, %v4025
      %4027 = vdwg.mxu0
      %4028 = vmatpush.bf16.msra.mxu0 %v3906
      %4029 = vmatpush.bf16.msra.mxu0 %v3905
      %4030 = vmatpush.bf16.msra.mxu0 %v3904
      %4031 = vmatpush.bf16.msra.mxu0 %v3903
      %4032 = vmatpush.bf16.msra.mxu0 %v3902
      %4033 = vmatpush.bf16.msra.mxu0 %v3901
      %4034 = vmatpush.bf16.msra.mxu0 %v3900
      %4035 = vmatpush.bf16.msra.mxu0 %v3899
      %4036 = vmatmul.bf16.gmra.mxu0 %v3437
      %v4037 = vpop.f32.mrf.mxu0
      %v4038 = vadd.f32 %v3949, %v4037
      %v4039 = vpop.f32.mrf.mxu0
      %v4040 = vadd.f32 %v3951, %v4039
      %4041 = vmatmul.bf16.gmra.mxu0 %v3449
      %v4042 = vpop.f32.mrf.mxu0
      %v4043 = vadd.f32 %v3954, %v4042
      %v4044 = vpop.f32.mrf.mxu0
      %v4045 = vadd.f32 %v3956, %v4044
      %4046 = vmatmul.bf16.gmra.mxu0 %v3461
      %v4047 = vpop.f32.mrf.mxu0
      %v4048 = vadd.f32 %v3959, %v4047
      %v4049 = vpop.f32.mrf.mxu0
      %v4050 = vadd.f32 %v3961, %v4049
      %4051 = vmatmul.bf16.gmra.mxu0 %v3473
      %v4052 = vpop.f32.mrf.mxu0
      %v4053 = vadd.f32 %v3964, %v4052
      %v4054 = vpop.f32.mrf.mxu0
      %v4055 = vadd.f32 %v3966, %v4054
      %4056 = vmatmul.bf16.gmra.mxu0 %v3485
      %v4057 = vpop.f32.mrf.mxu0
      %v4058 = vadd.f32 %v3969, %v4057
      %v4059 = vpop.f32.mrf.mxu0
      %v4060 = vadd.f32 %v3971, %v4059
      %4061 = vmatmul.bf16.gmra.mxu0 %v3497
      %v4062 = vpop.f32.mrf.mxu0
      %v4063 = vadd.f32 %v3974, %v4062
      %v4064 = vpop.f32.mrf.mxu0
      %v4065 = vadd.f32 %v3976, %v4064
      %4066 = vmatmul.bf16.gmra.mxu0 %v3509
      %v4067 = vpop.f32.mrf.mxu0
      %v4068 = vadd.f32 %v3979, %v4067
      %v4069 = vpop.f32.mrf.mxu0
      %v4070 = vadd.f32 %v3981, %v4069
      %4071 = vmatmul.bf16.gmra.mxu0 %v3521
      %v4072 = vpop.f32.mrf.mxu0
      %v4073 = vadd.f32 %v3984, %v4072
      %v4074 = vpop.f32.mrf.mxu0
      %v4075 = vadd.f32 %v3986, %v4074
      %4076 = vmatmul.bf16.gmra.mxu0 %v3533
      %v4077 = vpop.f32.mrf.mxu0
      %v4078 = vadd.f32 %v3989, %v4077
      %v4079 = vpop.f32.mrf.mxu0
      %v4080 = vadd.f32 %v3991, %v4079
      %4081 = vmatmul.bf16.gmra.mxu0 %v3545
      %v4082 = vpop.f32.mrf.mxu0
      %v4083 = vadd.f32 %v3994, %v4082
      %v4084 = vpop.f32.mrf.mxu0
      %v4085 = vadd.f32 %v3996, %v4084
      %4086 = vmatmul.bf16.gmra.mxu0 %v3557
      %v4087 = vpop.f32.mrf.mxu0
      %v4088 = vadd.f32 %v3999, %v4087
      %v4089 = vpop.f32.mrf.mxu0
      %v4090 = vadd.f32 %v4001, %v4089
      %4091 = vmatmul.bf16.gmra.mxu0 %v3569
      %v4092 = vpop.f32.mrf.mxu0
      %v4093 = vadd.f32 %v4004, %v4092
      %v4094 = vpop.f32.mrf.mxu0
      %v4095 = vadd.f32 %v4006, %v4094
      %4096 = vmatmul.bf16.gmra.mxu0 %v3581
      %v4097 = vpop.f32.mrf.mxu0
      %v4098 = vadd.f32 %v4009, %v4097
      %v4099 = vpop.f32.mrf.mxu0
      %v4100 = vadd.f32 %v4011, %v4099
      %4101 = vmatmul.bf16.gmra.mxu0 %v3593
      %v4102 = vpop.f32.mrf.mxu0
      %v4103 = vadd.f32 %v4014, %v4102
      %v4104 = vpop.f32.mrf.mxu0
      %v4105 = vadd.f32 %v4016, %v4104
      %4106 = vmatmul.bf16.gmra.mxu0 %v3605
      %v4107 = vpop.f32.mrf.mxu0
      %v4108 = vadd.f32 %v4019, %v4107
      %v4109 = vpop.f32.mrf.mxu0
      %v4110 = vadd.f32 %v4021, %v4109
      %4111 = vmatmul.bf16.gmra.mxu0 %v3617
      %v4112 = vpop.f32.mrf.mxu0
      %v4113 = vadd.f32 %v4024, %v4112
      %v4114 = vpop.f32.mrf.mxu0
      %v4115 = vadd.f32 %v4026, %v4114
      %4116 = vdwg.mxu0
      %4117 = vmatpush.bf16.msra.mxu0 %v3914
      %4118 = vmatpush.bf16.msra.mxu0 %v3913
      %4119 = vmatpush.bf16.msra.mxu0 %v3912
      %4120 = vmatpush.bf16.msra.mxu0 %v3911
      %4121 = vmatpush.bf16.msra.mxu0 %v3910
      %4122 = vmatpush.bf16.msra.mxu0 %v3909
      %4123 = vmatpush.bf16.msra.mxu0 %v3908
      %4124 = vmatpush.bf16.msra.mxu0 %v3907
      %4125 = vmatmul.bf16.gmra.mxu0 %v3684
      %v4126 = vpop.f32.mrf.mxu0
      %v4127 = vadd.f32 %v4038, %v4126
      %v4128 = vpop.f32.mrf.mxu0
      %v4129 = vadd.f32 %v4040, %v4128
      %4130 = vmatmul.bf16.gmra.mxu0 %v3687
      %v4131 = vpop.f32.mrf.mxu0
      %v4132 = vadd.f32 %v4043, %v4131
      %v4133 = vpop.f32.mrf.mxu0
      %v4134 = vadd.f32 %v4045, %v4133
      %4135 = vmatmul.bf16.gmra.mxu0 %v3690
      %v4136 = vpop.f32.mrf.mxu0
      %v4137 = vadd.f32 %v4048, %v4136
      %v4138 = vpop.f32.mrf.mxu0
      %v4139 = vadd.f32 %v4050, %v4138
      %4140 = vmatmul.bf16.gmra.mxu0 %v3693
      %v4141 = vpop.f32.mrf.mxu0
      %v4142 = vadd.f32 %v4053, %v4141
      %v4143 = vpop.f32.mrf.mxu0
      %v4144 = vadd.f32 %v4055, %v4143
      %4145 = vmatmul.bf16.gmra.mxu0 %v3696
      %v4146 = vpop.f32.mrf.mxu0
      %v4147 = vadd.f32 %v4058, %v4146
      %v4148 = vpop.f32.mrf.mxu0
      %v4149 = vadd.f32 %v4060, %v4148
      %4150 = vmatmul.bf16.gmra.mxu0 %v3699
      %v4151 = vpop.f32.mrf.mxu0
      %v4152 = vadd.f32 %v4063, %v4151
      %v4153 = vpop.f32.mrf.mxu0
      %v4154 = vadd.f32 %v4065, %v4153
      %4155 = vmatmul.bf16.gmra.mxu0 %v3702
      %v4156 = vpop.f32.mrf.mxu0
      %v4157 = vadd.f32 %v4068, %v4156
      %v4158 = vpop.f32.mrf.mxu0
      %v4159 = vadd.f32 %v4070, %v4158
      %4160 = vmatmul.bf16.gmra.mxu0 %v3705
      %v4161 = vpop.f32.mrf.mxu0
      %v4162 = vadd.f32 %v4073, %v4161
      %v4163 = vpop.f32.mrf.mxu0
      %v4164 = vadd.f32 %v4075, %v4163
      %4165 = vmatmul.bf16.gmra.mxu0 %v3708
      %v4166 = vpop.f32.mrf.mxu0
      %v4167 = vadd.f32 %v4078, %v4166
      %v4168 = vpop.f32.mrf.mxu0
      %v4169 = vadd.f32 %v4080, %v4168
      %4170 = vmatmul.bf16.gmra.mxu0 %v3711
      %v4171 = vpop.f32.mrf.mxu0
      %v4172 = vadd.f32 %v4083, %v4171
      %v4173 = vpop.f32.mrf.mxu0
      %v4174 = vadd.f32 %v4085, %v4173
      %4175 = vmatmul.bf16.gmra.mxu0 %v3714
      %v4176 = vpop.f32.mrf.mxu0
      %v4177 = vadd.f32 %v4088, %v4176
      %v4178 = vpop.f32.mrf.mxu0
      %v4179 = vadd.f32 %v4090, %v4178
      %4180 = vmatmul.bf16.gmra.mxu0 %v3717
      %v4181 = vpop.f32.mrf.mxu0
      %v4182 = vadd.f32 %v4093, %v4181
      %v4183 = vpop.f32.mrf.mxu0
      %v4184 = vadd.f32 %v4095, %v4183
      %4185 = vmatmul.bf16.gmra.mxu0 %v3720
      %v4186 = vpop.f32.mrf.mxu0
      %v4187 = vadd.f32 %v4098, %v4186
      %v4188 = vpop.f32.mrf.mxu0
      %v4189 = vadd.f32 %v4100, %v4188
      %4190 = vmatmul.bf16.gmra.mxu0 %v3723
      %v4191 = vpop.f32.mrf.mxu0
      %v4192 = vadd.f32 %v4103, %v4191
      %v4193 = vpop.f32.mrf.mxu0
      %v4194 = vadd.f32 %v4105, %v4193
      %4195 = vmatmul.bf16.gmra.mxu0 %v3726
      %v4196 = vpop.f32.mrf.mxu0
      %v4197 = vadd.f32 %v4108, %v4196
      %v4198 = vpop.f32.mrf.mxu0
      %v4199 = vadd.f32 %v4110, %v4198
      %4200 = vmatmul.bf16.gmra.mxu0 %v3729
      %v4201 = vpop.f32.mrf.mxu0
      %v4202 = vadd.f32 %v4113, %v4201
      %v4203 = vpop.f32.mrf.mxu0
      %v4204 = vadd.f32 %v4115, %v4203
      %4205 = vdwg.mxu0
      %v4206 = vadd.f32 %v3185, %v4127
      %v4207 = vadd.f32 %v3186, %v4129
      %v4208 = vadd.f32 %v3187, %v4132
      %v4209 = vadd.f32 %v3188, %v4134
      %v4210 = vadd.f32 %v3189, %v4137
      %v4211 = vadd.f32 %v3190, %v4139
      %v4212 = vadd.f32 %v3191, %v4142
      %v4213 = vadd.f32 %v3192, %v4144
      %v4214 = vadd.f32 %v3193, %v4147
      %v4215 = vadd.f32 %v3194, %v4149
      %v4216 = vadd.f32 %v3195, %v4152
      %v4217 = vadd.f32 %v3196, %v4154
      %v4218 = vadd.f32 %v3197, %v4157
      %v4219 = vadd.f32 %v3198, %v4159
      %v4220 = vadd.f32 %v3199, %v4162
      %v4221 = vadd.f32 %v3200, %v4164
      %v4222 = vadd.f32 %v3201, %v4167
      %v4223 = vadd.f32 %v3202, %v4169
      %v4224 = vadd.f32 %v3203, %v4172
      %v4225 = vadd.f32 %v3204, %v4174
      %v4226 = vadd.f32 %v3205, %v4177
      %v4227 = vadd.f32 %v3206, %v4179
      %v4228 = vadd.f32 %v3207, %v4182
      %v4229 = vadd.f32 %v3208, %v4184
      %v4230 = vadd.f32 %v3209, %v4187
      %v4231 = vadd.f32 %v3210, %v4189
      %v4232 = vadd.f32 %v3211, %v4192
      %v4233 = vadd.f32 %v3212, %v4194
      %v4234 = vadd.f32 %v3213, %v4197
      %v4235 = vadd.f32 %v3214, %v4199
      %v4236 = vadd.f32 %v3215, %v4202
      %v4237 = vadd.f32 %v3216, %v4204
      %4238 = vst [vmem:[#allocation4] sm:$0xff] %v4206
      %4239 = vst [vmem:[#allocation4 + $0x8] sm:$0xff] %v4207
      %4240 = vst [vmem:[#allocation4 + $0x10] sm:$0xff] %v4208
      %4241 = vst [vmem:[#allocation4 + $0x18] sm:$0xff] %v4209
      %4242 = vst [vmem:[#allocation4 + $0x20] sm:$0xff] %v4210
      %4243 = vst [vmem:[#allocation4 + $0x28] sm:$0xff] %v4211
      %4244 = vst [vmem:[#allocation4 + $0x30] sm:$0xff] %v4212
      %4245 = vst [vmem:[#allocation4 + $0x38] sm:$0xff] %v4213
      %4246 = vst [vmem:[#allocation4 + $0x40] sm:$0xff] %v4214
      %4247 = vst [vmem:[#allocation4 + $0x48] sm:$0xff] %v4215
      %4248 = vst [vmem:[#allocation4 + $0x50] sm:$0xff] %v4216
      %4249 = vst [vmem:[#allocation4 + $0x58] sm:$0xff] %v4217
      %4250 = vst [vmem:[#allocation4 + $0x60] sm:$0xff] %v4218
      %4251 = vst [vmem:[#allocation4 + $0x68] sm:$0xff] %v4219
      %4252 = vst [vmem:[#allocation4 + $0x70] sm:$0xff] %v4220
      %4253 = vst [vmem:[#allocation4 + $0x78] sm:$0xff] %v4221
      %4254 = vst [vmem:[#allocation4 + $0x80] sm:$0xff] %v4222
      %4255 = vst [vmem:[#allocation4 + $0x88] sm:$0xff] %v4223
      %4256 = vst [vmem:[#allocation4 + $0x90] sm:$0xff] %v4224
      %4257 = vst [vmem:[#allocation4 + $0x98] sm:$0xff] %v4225
      %4258 = vst [vmem:[#allocation4 + $0xa0] sm:$0xff] %v4226
      %4259 = vst [vmem:[#allocation4 + $0xa8] sm:$0xff] %v4227
      %4260 = vst [vmem:[#allocation4 + $0xb0] sm:$0xff] %v4228
      %4261 = vst [vmem:[#allocation4 + $0xb8] sm:$0xff] %v4229
      %4262 = vst [vmem:[#allocation4 + $0xc0] sm:$0xff] %v4230
      %4263 = vst [vmem:[#allocation4 + $0xc8] sm:$0xff] %v4231
      %4264 = vst [vmem:[#allocation4 + $0xd0] sm:$0xff] %v4232
      %4265 = vst [vmem:[#allocation4 + $0xd8] sm:$0xff] %v4233
      %4266 = vst [vmem:[#allocation4 + $0xe0] sm:$0xff] %v4234
      %4267 = vst [vmem:[#allocation4 + $0xe8] sm:$0xff] %v4235
      %4268 = vst [vmem:[#allocation4 + $0xf0] sm:$0xff] %v4236
      %4269 = vst [vmem:[#allocation4 + $0xf8] sm:$0xff] %v4237
      %v4270 = vld [vmem:[#allocation4] sm:$0xff]
      %v4271 = vld [vmem:[#allocation4 + $0x8] sm:$0xff]
      %v4272 = vld [vmem:[#allocation4 + $0x10] sm:$0xff]
      %v4273 = vld [vmem:[#allocation4 + $0x18] sm:$0xff]
      %v4274 = vld [vmem:[#allocation4 + $0x20] sm:$0xff]
      %v4275 = vld [vmem:[#allocation4 + $0x28] sm:$0xff]
      %v4276 = vld [vmem:[#allocation4 + $0x30] sm:$0xff]
      %v4277 = vld [vmem:[#allocation4 + $0x38] sm:$0xff]
      %v4278 = vld [vmem:[#allocation4 + $0x40] sm:$0xff]
      %v4279 = vld [vmem:[#allocation4 + $0x48] sm:$0xff]
      %v4280 = vld [vmem:[#allocation4 + $0x50] sm:$0xff]
      %v4281 = vld [vmem:[#allocation4 + $0x58] sm:$0xff]
      %v4282 = vld [vmem:[#allocation4 + $0x60] sm:$0xff]
      %v4283 = vld [vmem:[#allocation4 + $0x68] sm:$0xff]
      %v4284 = vld [vmem:[#allocation4 + $0x70] sm:$0xff]
      %v4285 = vld [vmem:[#allocation4 + $0x78] sm:$0xff]
      %v4286 = vld [vmem:[#allocation4 + $0x80] sm:$0xff]
      %v4287 = vld [vmem:[#allocation4 + $0x88] sm:$0xff]
      %v4288 = vld [vmem:[#allocation4 + $0x90] sm:$0xff]
      %v4289 = vld [vmem:[#allocation4 + $0x98] sm:$0xff]
      %v4290 = vld [vmem:[#allocation4 + $0xa0] sm:$0xff]
      %v4291 = vld [vmem:[#allocation4 + $0xa8] sm:$0xff]
      %v4292 = vld [vmem:[#allocation4 + $0xb0] sm:$0xff]
      %v4293 = vld [vmem:[#allocation4 + $0xb8] sm:$0xff]
      %v4294 = vld [vmem:[#allocation4 + $0xc0] sm:$0xff]
      %v4295 = vld [vmem:[#allocation4 + $0xc8] sm:$0xff]
      %v4296 = vld [vmem:[#allocation4 + $0xd0] sm:$0xff]
      %v4297 = vld [vmem:[#allocation4 + $0xd8] sm:$0xff]
      %v4298 = vld [vmem:[#allocation4 + $0xe0] sm:$0xff]
      %v4299 = vld [vmem:[#allocation4 + $0xe8] sm:$0xff]
      %v4300 = vld [vmem:[#allocation4 + $0xf0] sm:$0xff]
      %v4301 = vld [vmem:[#allocation4 + $0xf8] sm:$0xff]
      %v4302 = vld [vmem:[%s4] sm:$0x1]
      %v4304 = vperm.slane %v4302, 0
      %v4306 = vadd.f32 %v4270, %v4304
      %v4307 = vadd.f32 %v4271, %v4304
      %v4308 = vadd.f32 %v4272, %v4304
      %v4309 = vadd.f32 %v4273, %v4304
      %v4310 = vadd.f32 %v4274, %v4304
      %v4311 = vadd.f32 %v4275, %v4304
      %v4312 = vadd.f32 %v4276, %v4304
      %v4313 = vadd.f32 %v4277, %v4304
      %v4314 = vadd.f32 %v4278, %v4304
      %v4315 = vadd.f32 %v4279, %v4304
      %v4316 = vadd.f32 %v4280, %v4304
      %v4317 = vadd.f32 %v4281, %v4304
      %v4318 = vadd.f32 %v4282, %v4304
      %v4319 = vadd.f32 %v4283, %v4304
      %v4320 = vadd.f32 %v4284, %v4304
      %v4321 = vadd.f32 %v4285, %v4304
      %v4322 = vadd.f32 %v4286, %v4304
      %v4323 = vadd.f32 %v4287, %v4304
      %v4324 = vadd.f32 %v4288, %v4304
      %v4325 = vadd.f32 %v4289, %v4304
      %v4326 = vadd.f32 %v4290, %v4304
      %v4327 = vadd.f32 %v4291, %v4304
      %v4328 = vadd.f32 %v4292, %v4304
      %v4329 = vadd.f32 %v4293, %v4304
      %v4330 = vadd.f32 %v4294, %v4304
      %v4331 = vadd.f32 %v4295, %v4304
      %v4332 = vadd.f32 %v4296, %v4304
      %v4333 = vadd.f32 %v4297, %v4304
      %v4334 = vadd.f32 %v4298, %v4304
      %v4335 = vadd.f32 %v4299, %v4304
      %v4336 = vadd.f32 %v4300, %v4304
      %v4337 = vadd.f32 %v4301, %v4304
      %v4338 = vmax.f32 %v4306, 0.0
      %v4339 = vmax.f32 %v4307, 0.0
      %v4340 = vmax.f32 %v4308, 0.0
      %v4341 = vmax.f32 %v4309, 0.0
      %v4342 = vmax.f32 %v4310, 0.0
      %v4343 = vmax.f32 %v4311, 0.0
      %v4344 = vmax.f32 %v4312, 0.0
      %v4345 = vmax.f32 %v4313, 0.0
      %v4346 = vmax.f32 %v4314, 0.0
      %v4347 = vmax.f32 %v4315, 0.0
      %v4348 = vmax.f32 %v4316, 0.0
      %v4349 = vmax.f32 %v4317, 0.0
      %v4350 = vmax.f32 %v4318, 0.0
      %v4351 = vmax.f32 %v4319, 0.0
      %v4352 = vmax.f32 %v4320, 0.0
      %v4353 = vmax.f32 %v4321, 0.0
      %v4354 = vmax.f32 %v4322, 0.0
      %v4355 = vmax.f32 %v4323, 0.0
      %v4356 = vmax.f32 %v4324, 0.0
      %v4357 = vmax.f32 %v4325, 0.0
      %v4358 = vmax.f32 %v4326, 0.0
      %v4359 = vmax.f32 %v4327, 0.0
      %v4360 = vmax.f32 %v4328, 0.0
      %v4361 = vmax.f32 %v4329, 0.0
      %v4362 = vmax.f32 %v4330, 0.0
      %v4363 = vmax.f32 %v4331, 0.0
      %v4364 = vmax.f32 %v4332, 0.0
      %v4365 = vmax.f32 %v4333, 0.0
      %v4366 = vmax.f32 %v4334, 0.0
      %v4367 = vmax.f32 %v4335, 0.0
      %v4368 = vmax.f32 %v4336, 0.0
      %v4369 = vmax.f32 %v4337, 0.0
      %v4370 = vpack.c.bf16 %v4339, %v4338
      %v4371 = vpack.c.bf16 %v4341, %v4340
      %v4372 = vpack.c.bf16 %v4343, %v4342
      %v4373 = vpack.c.bf16 %v4345, %v4344
      %v4374 = vpack.c.bf16 %v4347, %v4346
      %v4375 = vpack.c.bf16 %v4349, %v4348
      %v4376 = vpack.c.bf16 %v4351, %v4350
      %v4377 = vpack.c.bf16 %v4353, %v4352
      %v4378 = vpack.c.bf16 %v4355, %v4354
      %v4379 = vpack.c.bf16 %v4357, %v4356
      %v4380 = vpack.c.bf16 %v4359, %v4358
      %v4381 = vpack.c.bf16 %v4361, %v4360
      %v4382 = vpack.c.bf16 %v4363, %v4362
      %v4383 = vpack.c.bf16 %v4365, %v4364
      %v4384 = vpack.c.bf16 %v4367, %v4366
      %v4385 = vpack.c.bf16 %v4369, %v4368
      %s4386 = sadd.s32 3, %s356
      %s4387 = smul.addr %s4386, 4
      %s4388 = scalar_lea.vmem [#allocation2], %s4387
      %v4389 = vld [vmem:[%s4388] sm:$0xf]
      %v4390 = vld [vmem:[%s4388 + $0x4] sm:$0xf]
      %v4391 = vld [vmem:[%s4388 + $0x8] sm:$0x1]
      %v4392 = vld [vmem:[%s4388 + $0xc] sm:$0xf]
      %v4393 = vld [vmem:[%s4388 + $0x10] sm:$0xf]
      %v4394 = vld [vmem:[%s4388 + $0x14] sm:$0x1]
      %v4395 = vld [vmem:[%s4388 + $0x18] sm:$0xf]
      %v4396 = vld [vmem:[%s4388 + $0x1c] sm:$0xf]
      %v4397 = vld [vmem:[%s4388 + $0x20] sm:$0x1]
      %v4398 = vld [vmem:[%s4388 + $0x24] sm:$0xf]
      %v4399 = vld [vmem:[%s4388 + $0x28] sm:$0xf]
      %v4400 = vld [vmem:[%s4388 + $0x2c] sm:$0x1]
      %v4401 = vld [vmem:[%s4388 + $0x30] sm:$0xf]
      %v4402 = vld [vmem:[%s4388 + $0x34] sm:$0xf]
      %v4403 = vld [vmem:[%s4388 + $0x38] sm:$0x1]
      %v4404 = vld [vmem:[%s4388 + $0x3c] sm:$0xf]
      %v4405 = vld [vmem:[%s4388 + $0x40] sm:$0xf]
      %v4406 = vld [vmem:[%s4388 + $0x44] sm:$0x1]
      %v4407 = vld [vmem:[%s4388 + $0x48] sm:$0xf]
      %v4408 = vld [vmem:[%s4388 + $0x4c] sm:$0xf]
      %v4409 = vld [vmem:[%s4388 + $0x50] sm:$0x1]
      %v4410 = vld [vmem:[%s4388 + $0x54] sm:$0xf]
      %v4411 = vld [vmem:[%s4388 + $0x58] sm:$0xf]
      %v4412 = vld [vmem:[%s4388 + $0x5c] sm:$0x1]
      %v4413 = vld [vmem:[%s4388 + $0x60] sm:$0xf]
      %v4414 = vld [vmem:[%s4388 + $0x64] sm:$0xf]
      %v4415 = vld [vmem:[%s4388 + $0x68] sm:$0x1]
      %v4416 = vld [vmem:[%s4388 + $0x6c] sm:$0xf]
      %v4417 = vld [vmem:[%s4388 + $0x70] sm:$0xf]
      %v4418 = vld [vmem:[%s4388 + $0x74] sm:$0x1]
      %v4419 = vld [vmem:[%s4388 + $0x78] sm:$0xf]
      %v4420 = vld [vmem:[%s4388 + $0x7c] sm:$0xf]
      %v4421 = vld [vmem:[%s4388 + $0x80] sm:$0x1]
      %v4422 = vld [vmem:[%s4388 + $0x84] sm:$0xf]
      %v4423 = vld [vmem:[%s4388 + $0x88] sm:$0xf]
      %v4424 = vld [vmem:[%s4388 + $0x8c] sm:$0x1]
      %v4425 = vld [vmem:[%s4388 + $0x90] sm:$0xf]
      %v4426 = vld [vmem:[%s4388 + $0x94] sm:$0xf]
      %v4427 = vld [vmem:[%s4388 + $0x98] sm:$0x1]
      %v4428 = vld [vmem:[%s4388 + $0x9c] sm:$0xf]
      %v4429 = vld [vmem:[%s4388 + $0xa0] sm:$0xf]
      %v4430 = vld [vmem:[%s4388 + $0xa4] sm:$0x1]
      %v4431 = vld [vmem:[%s4388 + $0xa8] sm:$0xf]
      %v4432 = vld [vmem:[%s4388 + $0xac] sm:$0xf]
      %v4433 = vld [vmem:[%s4388 + $0xb0] sm:$0x1]
      %v4434 = vld [vmem:[%s4388 + $0xb4] sm:$0xf]
      %v4435 = vld [vmem:[%s4388 + $0xb8] sm:$0xf]
      %v4436 = vld [vmem:[%s4388 + $0xbc] sm:$0x1]
      %vm4437 = vsmask.f32 3328
      %vm4438 = vsmask.f32 7440
      %vm4439 = vmor %vm4437, %vm4438
      %v4441 = vshrl.u32 %v4389, 16
      %v4443 = vrot.slane %v4441, 4
      %v4444 = vshll.u32 %v4389, 16
      %v4446 = vrot.slane %v4444, 5
      %v4447 = vor.u32 %v4443, %v4446
      %v4448 = vrot.slane %v4447, 4
      %v4450 = vshll.u32 %v4390, 16
      %v4452 = vrot.slane %v4450, 5
      %v4453 = vsel %vm4439, %v4448, %v4452
      %v4454 = vshrl.u32 %v4390, 16
      %v4456 = vrot.slane %v4454, 4
      %v4457 = vor.u32 %v4456, %v4452
      %v4458 = vrot.slane %v4457, 4
      %v4460 = vshll.u32 %v4391, 16
      %v4462 = vrot.slane %v4460, 5
      %v4463 = vsel %vm4439, %v4458, %v4462
      %v4465 = vshrl.u32 %v4392, 16
      %v4467 = vrot.slane %v4465, 4
      %v4468 = vshll.u32 %v4392, 16
      %v4470 = vrot.slane %v4468, 5
      %v4471 = vor.u32 %v4467, %v4470
      %v4472 = vrot.slane %v4471, 4
      %v4474 = vshll.u32 %v4393, 16
      %v4476 = vrot.slane %v4474, 5
      %v4477 = vsel %vm4439, %v4472, %v4476
      %v4478 = vshrl.u32 %v4393, 16
      %v4480 = vrot.slane %v4478, 4
      %v4481 = vor.u32 %v4480, %v4476
      %v4482 = vrot.slane %v4481, 4
      %v4484 = vshll.u32 %v4394, 16
      %v4486 = vrot.slane %v4484, 5
      %v4487 = vsel %vm4439, %v4482, %v4486
      %v4489 = vshrl.u32 %v4395, 16
      %v4491 = vrot.slane %v4489, 4
      %v4492 = vshll.u32 %v4395, 16
      %v4494 = vrot.slane %v4492, 5
      %v4495 = vor.u32 %v4491, %v4494
      %v4496 = vrot.slane %v4495, 4
      %v4498 = vshll.u32 %v4396, 16
      %v4500 = vrot.slane %v4498, 5
      %v4501 = vsel %vm4439, %v4496, %v4500
      %v4502 = vshrl.u32 %v4396, 16
      %v4504 = vrot.slane %v4502, 4
      %v4505 = vor.u32 %v4504, %v4500
      %v4506 = vrot.slane %v4505, 4
      %v4508 = vshll.u32 %v4397, 16
      %v4510 = vrot.slane %v4508, 5
      %v4511 = vsel %vm4439, %v4506, %v4510
      %v4513 = vshrl.u32 %v4398, 16
      %v4515 = vrot.slane %v4513, 4
      %v4516 = vshll.u32 %v4398, 16
      %v4518 = vrot.slane %v4516, 5
      %v4519 = vor.u32 %v4515, %v4518
      %v4520 = vrot.slane %v4519, 4
      %v4522 = vshll.u32 %v4399, 16
      %v4524 = vrot.slane %v4522, 5
      %v4525 = vsel %vm4439, %v4520, %v4524
      %v4526 = vshrl.u32 %v4399, 16
      %v4528 = vrot.slane %v4526, 4
      %v4529 = vor.u32 %v4528, %v4524
      %v4530 = vrot.slane %v4529, 4
      %v4532 = vshll.u32 %v4400, 16
      %v4534 = vrot.slane %v4532, 5
      %v4535 = vsel %vm4439, %v4530, %v4534
      %v4537 = vshrl.u32 %v4401, 16
      %v4539 = vrot.slane %v4537, 4
      %v4540 = vshll.u32 %v4401, 16
      %v4542 = vrot.slane %v4540, 5
      %v4543 = vor.u32 %v4539, %v4542
      %v4544 = vrot.slane %v4543, 4
      %v4546 = vshll.u32 %v4402, 16
      %v4548 = vrot.slane %v4546, 5
      %v4549 = vsel %vm4439, %v4544, %v4548
      %v4550 = vshrl.u32 %v4402, 16
      %v4552 = vrot.slane %v4550, 4
      %v4553 = vor.u32 %v4552, %v4548
      %v4554 = vrot.slane %v4553, 4
      %v4556 = vshll.u32 %v4403, 16
      %v4558 = vrot.slane %v4556, 5
      %v4559 = vsel %vm4439, %v4554, %v4558
      %v4561 = vshrl.u32 %v4404, 16
      %v4563 = vrot.slane %v4561, 4
      %v4564 = vshll.u32 %v4404, 16
      %v4566 = vrot.slane %v4564, 5
      %v4567 = vor.u32 %v4563, %v4566
      %v4568 = vrot.slane %v4567, 4
      %v4570 = vshll.u32 %v4405, 16
      %v4572 = vrot.slane %v4570, 5
      %v4573 = vsel %vm4439, %v4568, %v4572
      %v4574 = vshrl.u32 %v4405, 16
      %v4576 = vrot.slane %v4574, 4
      %v4577 = vor.u32 %v4576, %v4572
      %v4578 = vrot.slane %v4577, 4
      %v4580 = vshll.u32 %v4406, 16
      %v4582 = vrot.slane %v4580, 5
      %v4583 = vsel %vm4439, %v4578, %v4582
      %v4585 = vshrl.u32 %v4407, 16
      %v4587 = vrot.slane %v4585, 4
      %v4588 = vshll.u32 %v4407, 16
      %v4590 = vrot.slane %v4588, 5
      %v4591 = vor.u32 %v4587, %v4590
      %v4592 = vrot.slane %v4591, 4
      %v4594 = vshll.u32 %v4408, 16
      %v4596 = vrot.slane %v4594, 5
      %v4597 = vsel %vm4439, %v4592, %v4596
      %v4598 = vshrl.u32 %v4408, 16
      %v4600 = vrot.slane %v4598, 4
      %v4601 = vor.u32 %v4600, %v4596
      %v4602 = vrot.slane %v4601, 4
      %v4604 = vshll.u32 %v4409, 16
      %v4606 = vrot.slane %v4604, 5
      %v4607 = vsel %vm4439, %v4602, %v4606
      %v4609 = vshrl.u32 %v4410, 16
      %v4611 = vrot.slane %v4609, 4
      %v4612 = vshll.u32 %v4410, 16
      %v4614 = vrot.slane %v4612, 5
      %v4615 = vor.u32 %v4611, %v4614
      %v4616 = vrot.slane %v4615, 4
      %v4618 = vshll.u32 %v4411, 16
      %v4620 = vrot.slane %v4618, 5
      %v4621 = vsel %vm4439, %v4616, %v4620
      %v4622 = vshrl.u32 %v4411, 16
      %v4624 = vrot.slane %v4622, 4
      %v4625 = vor.u32 %v4624, %v4620
      %v4626 = vrot.slane %v4625, 4
      %v4628 = vshll.u32 %v4412, 16
      %v4630 = vrot.slane %v4628, 5
      %v4631 = vsel %vm4439, %v4626, %v4630
      %v4633 = vshrl.u32 %v4413, 16
      %v4635 = vrot.slane %v4633, 4
      %v4636 = vshll.u32 %v4413, 16
      %v4638 = vrot.slane %v4636, 5
      %v4639 = vor.u32 %v4635, %v4638
      %v4640 = vrot.slane %v4639, 4
      %v4642 = vshll.u32 %v4414, 16
      %v4644 = vrot.slane %v4642, 5
      %v4645 = vsel %vm4439, %v4640, %v4644
      %v4646 = vshrl.u32 %v4414, 16
      %v4648 = vrot.slane %v4646, 4
      %v4649 = vor.u32 %v4648, %v4644
      %v4650 = vrot.slane %v4649, 4
      %v4652 = vshll.u32 %v4415, 16
      %v4654 = vrot.slane %v4652, 5
      %v4655 = vsel %vm4439, %v4650, %v4654
      %v4657 = vshrl.u32 %v4416, 16
      %v4659 = vrot.slane %v4657, 4
      %v4660 = vshll.u32 %v4416, 16
      %v4662 = vrot.slane %v4660, 5
      %v4663 = vor.u32 %v4659, %v4662
      %v4664 = vrot.slane %v4663, 4
      %v4666 = vshll.u32 %v4417, 16
      %v4668 = vrot.slane %v4666, 5
      %v4669 = vsel %vm4439, %v4664, %v4668
      %v4670 = vshrl.u32 %v4417, 16
      %v4672 = vrot.slane %v4670, 4
      %v4673 = vor.u32 %v4672, %v4668
      %v4674 = vrot.slane %v4673, 4
      %v4676 = vshll.u32 %v4418, 16
      %v4678 = vrot.slane %v4676, 5
      %v4679 = vsel %vm4439, %v4674, %v4678
      %v4681 = vshrl.u32 %v4419, 16
      %v4683 = vrot.slane %v4681, 4
      %v4684 = vshll.u32 %v4419, 16
      %v4686 = vrot.slane %v4684, 5
      %v4687 = vor.u32 %v4683, %v4686
      %v4688 = vrot.slane %v4687, 4
      %v4690 = vshll.u32 %v4420, 16
      %v4692 = vrot.slane %v4690, 5
      %v4693 = vsel %vm4439, %v4688, %v4692
      %v4694 = vshrl.u32 %v4420, 16
      %v4696 = vrot.slane %v4694, 4
      %v4697 = vor.u32 %v4696, %v4692
      %v4698 = vrot.slane %v4697, 4
      %v4700 = vshll.u32 %v4421, 16
      %v4702 = vrot.slane %v4700, 5
      %v4703 = vsel %vm4439, %v4698, %v4702
      %v4705 = vshrl.u32 %v4422, 16
      %v4707 = vrot.slane %v4705, 4
      %v4708 = vshll.u32 %v4422, 16
      %v4710 = vrot.slane %v4708, 5
      %v4711 = vor.u32 %v4707, %v4710
      %v4712 = vrot.slane %v4711, 4
      %v4714 = vshll.u32 %v4423, 16
      %v4716 = vrot.slane %v4714, 5
      %v4717 = vsel %vm4439, %v4712, %v4716
      %v4718 = vshrl.u32 %v4423, 16
      %v4720 = vrot.slane %v4718, 4
      %v4721 = vor.u32 %v4720, %v4716
      %v4722 = vrot.slane %v4721, 4
      %v4724 = vshll.u32 %v4424, 16
      %v4726 = vrot.slane %v4724, 5
      %v4727 = vsel %vm4439, %v4722, %v4726
      %v4729 = vshrl.u32 %v4425, 16
      %v4731 = vrot.slane %v4729, 4
      %v4732 = vshll.u32 %v4425, 16
      %v4734 = vrot.slane %v4732, 5
      %v4735 = vor.u32 %v4731, %v4734
      %v4736 = vrot.slane %v4735, 4
      %v4738 = vshll.u32 %v4426, 16
      %v4740 = vrot.slane %v4738, 5
      %v4741 = vsel %vm4439, %v4736, %v4740
      %v4742 = vshrl.u32 %v4426, 16
      %v4744 = vrot.slane %v4742, 4
      %v4745 = vor.u32 %v4744, %v4740
      %v4746 = vrot.slane %v4745, 4
      %v4748 = vshll.u32 %v4427, 16
      %v4750 = vrot.slane %v4748, 5
      %v4751 = vsel %vm4439, %v4746, %v4750
      %v4753 = vshrl.u32 %v4428, 16
      %v4755 = vrot.slane %v4753, 4
      %v4756 = vshll.u32 %v4428, 16
      %v4758 = vrot.slane %v4756, 5
      %v4759 = vor.u32 %v4755, %v4758
      %v4760 = vrot.slane %v4759, 4
      %v4762 = vshll.u32 %v4429, 16
      %v4764 = vrot.slane %v4762, 5
      %v4765 = vsel %vm4439, %v4760, %v4764
      %v4766 = vshrl.u32 %v4429, 16
      %v4768 = vrot.slane %v4766, 4
      %v4769 = vor.u32 %v4768, %v4764
      %v4770 = vrot.slane %v4769, 4
      %v4772 = vshll.u32 %v4430, 16
      %v4774 = vrot.slane %v4772, 5
      %v4775 = vsel %vm4439, %v4770, %v4774
      %v4777 = vshrl.u32 %v4431, 16
      %v4779 = vrot.slane %v4777, 4
      %v4780 = vshll.u32 %v4431, 16
      %v4782 = vrot.slane %v4780, 5
      %v4783 = vor.u32 %v4779, %v4782
      %v4784 = vrot.slane %v4783, 4
      %v4786 = vshll.u32 %v4432, 16
      %v4788 = vrot.slane %v4786, 5
      %v4789 = vsel %vm4439, %v4784, %v4788
      %v4790 = vshrl.u32 %v4432, 16
      %v4792 = vrot.slane %v4790, 4
      %v4793 = vor.u32 %v4792, %v4788
      %v4794 = vrot.slane %v4793, 4
      %v4796 = vshll.u32 %v4433, 16
      %v4798 = vrot.slane %v4796, 5
      %v4799 = vsel %vm4439, %v4794, %v4798
      %v4801 = vshrl.u32 %v4434, 16
      %v4803 = vrot.slane %v4801, 4
      %v4804 = vshll.u32 %v4434, 16
      %v4806 = vrot.slane %v4804, 5
      %v4807 = vor.u32 %v4803, %v4806
      %v4808 = vrot.slane %v4807, 4
      %v4810 = vshll.u32 %v4435, 16
      %v4812 = vrot.slane %v4810, 5
      %v4813 = vsel %vm4439, %v4808, %v4812
      %v4814 = vshrl.u32 %v4435, 16
      %v4816 = vrot.slane %v4814, 4
      %v4817 = vor.u32 %v4816, %v4812
      %v4818 = vrot.slane %v4817, 4
      %v4820 = vshll.u32 %v4436, 16
      %v4822 = vrot.slane %v4820, 5
      %v4823 = vsel %vm4439, %v4818, %v4822
      %v4856 = vld [vmem:[%s5] sm:$0xf]
      %v4857 = vld [vmem:[%s5 + $0x4] sm:$0xf]
      %v4858 = vld [vmem:[%s5 + $0x8] sm:$0xf]
      %v4859 = vld [vmem:[%s5 + $0xc] sm:$0xf]
      %v4860 = vld [vmem:[%s5 + $0x10] sm:$0xf]
      %v4861 = vld [vmem:[%s5 + $0x14] sm:$0xf]
      %v4862 = vld [vmem:[%s5 + $0x18] sm:$0xf]
      %v4863 = vld [vmem:[%s5 + $0x1c] sm:$0xf]
      %v4864 = vld [vmem:[%s5 + $0x20] sm:$0xf]
      %v4865 = vld [vmem:[%s5 + $0x24] sm:$0xf]
      %v4866 = vld [vmem:[%s5 + $0x28] sm:$0xf]
      %v4867 = vld [vmem:[%s5 + $0x2c] sm:$0xf]
      %v4868 = vld [vmem:[%s5 + $0x30] sm:$0xf]
      %v4869 = vld [vmem:[%s5 + $0x34] sm:$0xf]
      %v4870 = vld [vmem:[%s5 + $0x38] sm:$0xf]
      %v4871 = vld [vmem:[%s5 + $0x3c] sm:$0xf]
      %v4872 = vld [vmem:[%s6] sm:$0x1]
      %v4874 = vperm.slane %v4872, 0
      %v4892 = vunpack.c.l.b16 %v4856
      %v4893 = vunpack.c.l.b16 %v4857
      %v4894 = vunpack.c.l.b16 %v4858
      %v4895 = vunpack.c.l.b16 %v4859
      %v4896 = vunpack.c.l.b16 %v4860
      %v4897 = vunpack.c.l.b16 %v4861
      %v4898 = vunpack.c.l.b16 %v4862
      %v4899 = vunpack.c.l.b16 %v4863
      %v4900 = vunpack.c.l.b16 %v4864
      %v4901 = vunpack.c.l.b16 %v4865
      %v4902 = vunpack.c.l.b16 %v4866
      %v4903 = vunpack.c.l.b16 %v4867
      %v4904 = vunpack.c.l.b16 %v4868
      %v4905 = vunpack.c.l.b16 %v4869
      %v4906 = vunpack.c.l.b16 %v4870
      %v4907 = vunpack.c.l.b16 %v4871
      %v4908 = vpack.c.b16 %v4893, %v4892
      %v4909 = vpack.c.b16 %v4895, %v4894
      %v4910 = vpack.c.b16 %v4897, %v4896
      %v4911 = vpack.c.b16 %v4899, %v4898
      %v4912 = vpack.c.b16 %v4901, %v4900
      %v4913 = vpack.c.b16 %v4903, %v4902
      %v4914 = vpack.c.b16 %v4905, %v4904
      %v4915 = vpack.c.b16 %v4907, %v4906
      %4924 = vmatpush.bf16.msra.mxu0 %v4915
      %4925 = vmatpush.bf16.msra.mxu0 %v4914
      %4926 = vmatpush.bf16.msra.mxu0 %v4913
      %4927 = vmatpush.bf16.msra.mxu0 %v4912
      %4928 = vmatpush.bf16.msra.mxu0 %v4911
      %4929 = vmatpush.bf16.msra.mxu0 %v4910
      %4930 = vmatpush.bf16.msra.mxu0 %v4909
      %4931 = vmatpush.bf16.msra.mxu0 %v4908
      %4932 = vmatmul.bf16.gmra.mxu0 %v4370
      %v4933 = vpop.f32.mrf.mxu0
      %v4934 = vadd.f32 %v4874, %v4933
      %v4935 = vpop.f32.mrf.mxu0
      %v4936 = vadd.f32 %v4874, %v4935
      %4937 = vmatmul.bf16.gmra.mxu0 %v4371
      %v4938 = vpop.f32.mrf.mxu0
      %v4939 = vadd.f32 %v4874, %v4938
      %v4940 = vpop.f32.mrf.mxu0
      %v4941 = vadd.f32 %v4874, %v4940
      %4942 = vmatmul.bf16.gmra.mxu0 %v4372
      %v4943 = vpop.f32.mrf.mxu0
      %v4944 = vadd.f32 %v4874, %v4943
      %v4945 = vpop.f32.mrf.mxu0
      %v4946 = vadd.f32 %v4874, %v4945
      %4947 = vmatmul.bf16.gmra.mxu0 %v4373
      %v4948 = vpop.f32.mrf.mxu0
      %v4949 = vadd.f32 %v4874, %v4948
      %v4950 = vpop.f32.mrf.mxu0
      %v4951 = vadd.f32 %v4874, %v4950
      %4952 = vmatmul.bf16.gmra.mxu0 %v4374
      %v4953 = vpop.f32.mrf.mxu0
      %v4954 = vadd.f32 %v4874, %v4953
      %v4955 = vpop.f32.mrf.mxu0
      %v4956 = vadd.f32 %v4874, %v4955
      %4957 = vmatmul.bf16.gmra.mxu0 %v4375
      %v4958 = vpop.f32.mrf.mxu0
      %v4959 = vadd.f32 %v4874, %v4958
      %v4960 = vpop.f32.mrf.mxu0
      %v4961 = vadd.f32 %v4874, %v4960
      %4962 = vmatmul.bf16.gmra.mxu0 %v4376
      %v4963 = vpop.f32.mrf.mxu0
      %v4964 = vadd.f32 %v4874, %v4963
      %v4965 = vpop.f32.mrf.mxu0
      %v4966 = vadd.f32 %v4874, %v4965
      %4967 = vmatmul.bf16.gmra.mxu0 %v4377
      %v4968 = vpop.f32.mrf.mxu0
      %v4969 = vadd.f32 %v4874, %v4968
      %v4970 = vpop.f32.mrf.mxu0
      %v4971 = vadd.f32 %v4874, %v4970
      %4972 = vmatmul.bf16.gmra.mxu0 %v4378
      %v4973 = vpop.f32.mrf.mxu0
      %v4974 = vadd.f32 %v4874, %v4973
      %v4975 = vpop.f32.mrf.mxu0
      %v4976 = vadd.f32 %v4874, %v4975
      %4977 = vmatmul.bf16.gmra.mxu0 %v4379
      %v4978 = vpop.f32.mrf.mxu0
      %v4979 = vadd.f32 %v4874, %v4978
      %v4980 = vpop.f32.mrf.mxu0
      %v4981 = vadd.f32 %v4874, %v4980
      %4982 = vmatmul.bf16.gmra.mxu0 %v4380
      %v4983 = vpop.f32.mrf.mxu0
      %v4984 = vadd.f32 %v4874, %v4983
      %v4985 = vpop.f32.mrf.mxu0
      %v4986 = vadd.f32 %v4874, %v4985
      %4987 = vmatmul.bf16.gmra.mxu0 %v4381
      %v4988 = vpop.f32.mrf.mxu0
      %v4989 = vadd.f32 %v4874, %v4988
      %v4990 = vpop.f32.mrf.mxu0
      %v4991 = vadd.f32 %v4874, %v4990
      %4992 = vmatmul.bf16.gmra.mxu0 %v4382
      %v4993 = vpop.f32.mrf.mxu0
      %v4994 = vadd.f32 %v4874, %v4993
      %v4995 = vpop.f32.mrf.mxu0
      %v4996 = vadd.f32 %v4874, %v4995
      %4997 = vmatmul.bf16.gmra.mxu0 %v4383
      %v4998 = vpop.f32.mrf.mxu0
      %v4999 = vadd.f32 %v4874, %v4998
      %v5000 = vpop.f32.mrf.mxu0
      %v5001 = vadd.f32 %v4874, %v5000
      %5002 = vmatmul.bf16.gmra.mxu0 %v4384
      %v5003 = vpop.f32.mrf.mxu0
      %v5004 = vadd.f32 %v4874, %v5003
      %v5005 = vpop.f32.mrf.mxu0
      %v5006 = vadd.f32 %v4874, %v5005
      %5007 = vmatmul.bf16.gmra.mxu0 %v4385
      %v5008 = vpop.f32.mrf.mxu0
      %v5009 = vadd.f32 %v4874, %v5008
      %v5010 = vpop.f32.mrf.mxu0
      %v5011 = vadd.f32 %v4874, %v5010
      %5012 = vdwg.mxu0
      %v5013 = vunpack.c.l.bf16 %v4453
      %v5014 = vunpack.c.l.bf16 %v4463
      %v5015 = vunpack.c.l.bf16 %v4477
      %v5016 = vunpack.c.l.bf16 %v4487
      %v5017 = vunpack.c.l.bf16 %v4501
      %v5018 = vunpack.c.l.bf16 %v4511
      %v5019 = vunpack.c.l.bf16 %v4525
      %v5020 = vunpack.c.l.bf16 %v4535
      %v5021 = vunpack.c.l.bf16 %v4549
      %v5022 = vunpack.c.l.bf16 %v4559
      %v5023 = vunpack.c.l.bf16 %v4573
      %v5024 = vunpack.c.l.bf16 %v4583
      %v5025 = vunpack.c.l.bf16 %v4597
      %v5026 = vunpack.c.l.bf16 %v4607
      %v5027 = vunpack.c.l.bf16 %v4621
      %v5028 = vunpack.c.l.bf16 %v4631
      %v5029 = vunpack.c.l.bf16 %v4645
      %v5030 = vunpack.c.l.bf16 %v4655
      %v5031 = vunpack.c.l.bf16 %v4669
      %v5032 = vunpack.c.l.bf16 %v4679
      %v5033 = vunpack.c.l.bf16 %v4693
      %v5034 = vunpack.c.l.bf16 %v4703
      %v5035 = vunpack.c.l.bf16 %v4717
      %v5036 = vunpack.c.l.bf16 %v4727
      %v5037 = vunpack.c.l.bf16 %v4741
      %v5038 = vunpack.c.l.bf16 %v4751
      %v5039 = vunpack.c.l.bf16 %v4765
      %v5040 = vunpack.c.l.bf16 %v4775
      %v5041 = vunpack.c.l.bf16 %v4789
      %v5042 = vunpack.c.l.bf16 %v4799
      %v5043 = vunpack.c.l.bf16 %v4813
      %v5044 = vunpack.c.l.bf16 %v4823
      %v5045 = vadd.f32 %v4934, %v5013
      %v5046 = vadd.f32 %v4936, %v5014
      %v5047 = vadd.f32 %v4939, %v5015
      %v5048 = vadd.f32 %v4941, %v5016
      %v5049 = vadd.f32 %v4944, %v5017
      %v5050 = vadd.f32 %v4946, %v5018
      %v5051 = vadd.f32 %v4949, %v5019
      %v5052 = vadd.f32 %v4951, %v5020
      %v5053 = vadd.f32 %v4954, %v5021
      %v5054 = vadd.f32 %v4956, %v5022
      %v5055 = vadd.f32 %v4959, %v5023
      %v5056 = vadd.f32 %v4961, %v5024
      %v5057 = vadd.f32 %v4964, %v5025
      %v5058 = vadd.f32 %v4966, %v5026
      %v5059 = vadd.f32 %v4969, %v5027
      %v5060 = vadd.f32 %v4971, %v5028
      %v5061 = vadd.f32 %v4974, %v5029
      %v5062 = vadd.f32 %v4976, %v5030
      %v5063 = vadd.f32 %v4979, %v5031
      %v5064 = vadd.f32 %v4981, %v5032
      %v5065 = vadd.f32 %v4984, %v5033
      %v5066 = vadd.f32 %v4986, %v5034
      %v5067 = vadd.f32 %v4989, %v5035
      %v5068 = vadd.f32 %v4991, %v5036
      %v5069 = vadd.f32 %v4994, %v5037
      %v5070 = vadd.f32 %v4996, %v5038
      %v5071 = vadd.f32 %v4999, %v5039
      %v5072 = vadd.f32 %v5001, %v5040
      %v5073 = vadd.f32 %v5004, %v5041
      %v5074 = vadd.f32 %v5006, %v5042
      %v5075 = vadd.f32 %v5009, %v5043
      %v5076 = vadd.f32 %v5011, %v5044
      %v5077 = vmax.f32 %v5045, 0.0
      %v5078 = vmax.f32 %v5046, 0.0
      %v5079 = vmax.f32 %v5047, 0.0
      %v5080 = vmax.f32 %v5048, 0.0
      %v5081 = vmax.f32 %v5049, 0.0
      %v5082 = vmax.f32 %v5050, 0.0
      %v5083 = vmax.f32 %v5051, 0.0
      %v5084 = vmax.f32 %v5052, 0.0
      %v5085 = vmax.f32 %v5053, 0.0
      %v5086 = vmax.f32 %v5054, 0.0
      %v5087 = vmax.f32 %v5055, 0.0
      %v5088 = vmax.f32 %v5056, 0.0
      %v5089 = vmax.f32 %v5057, 0.0
      %v5090 = vmax.f32 %v5058, 0.0
      %v5091 = vmax.f32 %v5059, 0.0
      %v5092 = vmax.f32 %v5060, 0.0
      %v5093 = vmax.f32 %v5061, 0.0
      %v5094 = vmax.f32 %v5062, 0.0
      %v5095 = vmax.f32 %v5063, 0.0
      %v5096 = vmax.f32 %v5064, 0.0
      %v5097 = vmax.f32 %v5065, 0.0
      %v5098 = vmax.f32 %v5066, 0.0
      %v5099 = vmax.f32 %v5067, 0.0
      %v5100 = vmax.f32 %v5068, 0.0
      %v5101 = vmax.f32 %v5069, 0.0
      %v5102 = vmax.f32 %v5070, 0.0
      %v5103 = vmax.f32 %v5071, 0.0
      %v5104 = vmax.f32 %v5072, 0.0
      %v5105 = vmax.f32 %v5073, 0.0
      %v5106 = vmax.f32 %v5074, 0.0
      %v5107 = vmax.f32 %v5075, 0.0
      %v5108 = vmax.f32 %v5076, 0.0
      %v5109 = vpack.c.bf16 %v5077, %v5077
      %v5110 = vpack.c.bf16 %v5078, %v5078
      %v5111 = vpack.c.bf16 %v5079, %v5079
      %v5112 = vpack.c.bf16 %v5080, %v5080
      %v5113 = vpack.c.bf16 %v5081, %v5081
      %v5114 = vpack.c.bf16 %v5082, %v5082
      %v5115 = vpack.c.bf16 %v5083, %v5083
      %v5116 = vpack.c.bf16 %v5084, %v5084
      %v5117 = vpack.c.bf16 %v5085, %v5085
      %v5118 = vpack.c.bf16 %v5086, %v5086
      %v5119 = vpack.c.bf16 %v5087, %v5087
      %v5120 = vpack.c.bf16 %v5088, %v5088
      %v5121 = vpack.c.bf16 %v5089, %v5089
      %v5122 = vpack.c.bf16 %v5090, %v5090
      %v5123 = vpack.c.bf16 %v5091, %v5091
      %v5124 = vpack.c.bf16 %v5092, %v5092
      %v5125 = vpack.c.bf16 %v5093, %v5093
      %v5126 = vpack.c.bf16 %v5094, %v5094
      %v5127 = vpack.c.bf16 %v5095, %v5095
      %v5128 = vpack.c.bf16 %v5096, %v5096
      %v5129 = vpack.c.bf16 %v5097, %v5097
      %v5130 = vpack.c.bf16 %v5098, %v5098
      %v5131 = vpack.c.bf16 %v5099, %v5099
      %v5132 = vpack.c.bf16 %v5100, %v5100
      %v5133 = vpack.c.bf16 %v5101, %v5101
      %v5134 = vpack.c.bf16 %v5102, %v5102
      %v5135 = vpack.c.bf16 %v5103, %v5103
      %v5136 = vpack.c.bf16 %v5104, %v5104
      %v5137 = vpack.c.bf16 %v5105, %v5105
      %v5138 = vpack.c.bf16 %v5106, %v5106
      %v5139 = vpack.c.bf16 %v5107, %v5107
      %v5140 = vpack.c.bf16 %v5108, %v5108
      %5141 = vst [vmem:[%s256] sm:$0xf] %v5109
      %5142 = vst [vmem:[%s256 + $0x4] sm:$0xf] %v5110
      %5143 = vst [vmem:[%s256 + $0x8] sm:$0xf] %v5111
      %5144 = vst [vmem:[%s256 + $0xc] sm:$0xf] %v5112
      %5145 = vst [vmem:[%s256 + $0x10] sm:$0xf] %v5113
      %5146 = vst [vmem:[%s256 + $0x14] sm:$0xf] %v5114
      %5147 = vst [vmem:[%s256 + $0x18] sm:$0xf] %v5115
      %5148 = vst [vmem:[%s256 + $0x1c] sm:$0xf] %v5116
      %5149 = vst [vmem:[%s256 + $0x20] sm:$0xf] %v5117
      %5150 = vst [vmem:[%s256 + $0x24] sm:$0xf] %v5118
      %5151 = vst [vmem:[%s256 + $0x28] sm:$0xf] %v5119
      %5152 = vst [vmem:[%s256 + $0x2c] sm:$0xf] %v5120
      %5153 = vst [vmem:[%s256 + $0x30] sm:$0xf] %v5121
      %5154 = vst [vmem:[%s256 + $0x34] sm:$0xf] %v5122
      %5155 = vst [vmem:[%s256 + $0x38] sm:$0xf] %v5123
      %5156 = vst [vmem:[%s256 + $0x3c] sm:$0xf] %v5124
      %5157 = vst [vmem:[%s256 + $0x40] sm:$0xf] %v5125
      %5158 = vst [vmem:[%s256 + $0x44] sm:$0xf] %v5126
      %5159 = vst [vmem:[%s256 + $0x48] sm:$0xf] %v5127
      %5160 = vst [vmem:[%s256 + $0x4c] sm:$0xf] %v5128
      %5161 = vst [vmem:[%s256 + $0x50] sm:$0xf] %v5129
      %5162 = vst [vmem:[%s256 + $0x54] sm:$0xf] %v5130
      %5163 = vst [vmem:[%s256 + $0x58] sm:$0xf] %v5131
      %5164 = vst [vmem:[%s256 + $0x5c] sm:$0xf] %v5132
      %5165 = vst [vmem:[%s256 + $0x60] sm:$0xf] %v5133
      %5166 = vst [vmem:[%s256 + $0x64] sm:$0xf] %v5134
      %5167 = vst [vmem:[%s256 + $0x68] sm:$0xf] %v5135
      %5168 = vst [vmem:[%s256 + $0x6c] sm:$0xf] %v5136
      %5169 = vst [vmem:[%s256 + $0x70] sm:$0xf] %v5137
      %5170 = vst [vmem:[%s256 + $0x74] sm:$0xf] %v5138
      %5171 = vst [vmem:[%s256 + $0x78] sm:$0xf] %v5139
      %5172 = vst [vmem:[%s256 + $0x7c] sm:$0xf] %v5140
      %s5173 = smul.u32 16, %s23
      %p5174 = scmp.lt.s32.totalorder %s22, 1
      %s5175 = scalar_select %p5174, %s22, 1
      %p5176 = scmp.lt.s32.totalorder %s5173, 15
      %s5177 = scalar_select %p5176, %s5173, 15
      %s5178 = smul.addr %s5177, 2
      %s5179 = smul.addr %s5175, 32
      %s5180 = sadd.s32 %s5178, %s5179
      %s5181 = smul.addr %s5180, 4
      %s5182 = scalar_lea.vmem %s7, %s5181
      // Predicated region
      $region72: #{bottleneck_forward.1} parent=43 // pred_check
        %p5183 = pneg %p176
      $region73: #{bottleneck_forward.1} parent=43 // pred_check_branch
        %5185 = sbr.rel (%p5183) target = $region75
      $region74: #{bottleneck_forward.1} parent=43 // pred_region
        %s5186 = smul.u32 16, %s23
      $region75: #{bottleneck_forward.1} parent=43 // pred_fallthru
        _
    $region44: #{bottleneck_forward.1} parent=5 // pred_fallthru
      _
    %p5187 = scmp.le.s32.totalorder 2, %s13
    // Predicated region
    $region76: #{bottleneck_forward.1} parent=5 // pred_check
      %p5188 = pneg %p5187
    $region77: #{bottleneck_forward.1} parent=5 // pred_check_branch
      %5190 = sbr.rel (%p5188) target = $region79
    $region78: #{bottleneck_forward.1} parent=5 // pred_region
      %s5191 = ssub.s32 %s13, 2
      // Predicated region
      $region80: #{bottleneck_forward.1} parent=78 // pred_check
        %p5192 = pneg %p182
      $region81: #{bottleneck_forward.1} parent=78 // pred_check_branch
        %5194 = sbr.rel (%p5192) target = $region83
      $region82: #{bottleneck_forward.1} parent=78 // pred_region
        %s5195 = smul.u32 16, %s25
        %p5196 = scmp.lt.s32.totalorder %s24, 1
        %s5197 = scalar_select %p5196, %s24, 1
        %p5198 = scmp.lt.s32.totalorder %s5195, 15
        %s5199 = scalar_select %p5198, %s5195, 15
        %s5200 = smul.addr %s5199, 2
        %s5201 = smul.addr %s5197, 32
        %s5202 = sadd.s32 %s5200, %s5201
        %s5203 = smul.addr %s5202, 4
        %s5204 = scalar_lea.vmem %s7, %s5203
      $region83: #{bottleneck_forward.1} parent=78 // pred_fallthru
        _
    $region79: #{bottleneck_forward.1} parent=5 // pred_fallthru
      _
  $region6: #{bottleneck_forward.1} parent=0 // loop_footer
    %s17 = sadd.s32 1, %s13
  $region7: #{bottleneck_forward.1} parent=0 // loop_footer_branch
    %12 = sbr.rel target = $region3
  $region8: #{bottleneck_forward.1} parent=0 // loop_exit
    _
  %5205 = vsyncmov [#allocation5]
  %s5206 = vpop.sfrf %5205
  %p5207 = scmp.eq.s32.totalorder %s5206, 0
  %p5208 = pneg %p5207
  %5210 = shalt.err (%p5208)
  %s5211 = scalar_lea.sflag [#allocation5], 1
  %5212 = vsyncmov %s5211
  %s5213 = vpop.sfrf %5212
  %p5214 = scmp.eq.s32.totalorder %s5213, 0
  %p5215 = pneg %p5214
  %5217 = shalt.err (%p5215)

// kernel: bottleneck_forward.1
$region0: #{bottleneck_forward.1}
  #allocation0 [shape = 'u32[]', space=smem, size = 0x4, offset = 0x4, fixed_abs, tag = 'smem constant byte address 0x4 - core index']
  #allocation1 [shape = 'u32[72,128]{1,0:T(1,128)}', space=vmem, size = 0x9000, scoped, tag = 'internal scratch']
  #allocation2 [shape = 'bf16[2,18,24,128]{3,2,1,0:T(8,128)(2,1)}', space=vmem, size = 0x36000, scoped, tag = 'scratch operand']
  #allocation3 [shape = 'bf16[18,24,128]{2,1,0:T(8,128)(2,1)}', space=vmem, size = 0x1b000, scoped, tag = 'scratch operand']
  #allocation4 [shape = 'f32[256,128]{1,0:T(8,128)}', space=vmem, size = 0x20000, scoped, tag = 'scratch operand']
  #allocation5 [shape = 's32[2]{0}', space=sflag, size = 0x8, scoped, tag = 'scratch operand']
  #allocation6 [shape = 's32[]', space=sflag, size = 0x4, offset = 0, fixed_abs, tag = 'sflag constant byte address 0x0 - dummy sync flag']
  %s0 = inlined_call_operand.vmem [shape: bf16[2,18,24,128], index: 0, kind: input, shape index: {}]
  %s1 = inlined_call_operand.vmem [shape: bf16[128,128], index: 1, kind: input, shape index: {}]
  %s2 = inlined_call_operand.vmem [shape: f32[1,128], index: 2, kind: input, shape index: {}]
  %s3 = inlined_call_operand.vmem [shape: bf16[3,384,128], index: 3, kind: input, shape index: {}]
  %s4 = inlined_call_operand.vmem [shape: f32[1,128], index: 4, kind: input, shape index: {}]
  %s5 = inlined_call_operand.vmem [shape: bf16[128,128], index: 5, kind: input, shape index: {}]
  %s6 = inlined_call_operand.vmem [shape: f32[1,128], index: 6, kind: input, shape index: {}]
  %s7 = inlined_call_operand.vmem [shape: bf16[2,16,16,128], index: 7, kind: output, shape index: {}]
  %s8 = sld [smem:[#allocation0]]
  $region84: #{bottleneck_forward.1} parent=0
    _
  %s10 = ssub.s32 1, %s8
  %s11 = scalar_select 0, %s10, %s8
  loop: start=0, step=1, limit=4
  $region2: #{bottleneck_forward.1} parent=0 // loop_pre_header
    _
  $region3: #{bottleneck_forward.1} parent=0 // loop_header
    %s13 = sphi 0, %s17
    %p14 = scmp.ge.s32.totalorder %s13, 4
    %s20 = sphi 0, %s32
    %s21 = sphi 0, %s28
    %s22 = sphi 0, %s20
    %s23 = sphi 0, %s21
    %s24 = sphi 0, %s22
    %s25 = sphi 0, %s23
    %s33 = sphi 0, %s33
    %s35 = sphi 0, %s33
    %s36 = sphi 0, %s35
    %s50 = sphi 0, %s36
    %s54 = sphi 0, %s54
    %s56 = sphi 0, %s54
    %s57 = sphi 0, %s56
    %s71 = sphi 0, %s57
    %s75 = sphi 0, %s75
    %s77 = sphi 0, %s75
    %s78 = sphi 0, %s77
    %s92 = sphi 0, %s78
    %s96 = sphi 0, %s96
    %s98 = sphi 0, %s96
    %s99 = sphi 0, %s98
    %s113 = sphi 0, %s99
    %s117 = sphi 0, %s117
    %s119 = sphi 0, %s117
    %s120 = sphi 0, %s119
    %s134 = sphi 0, %s120
    %s138 = sphi 0, %s138
    %s140 = sphi 0, %s138
    %s141 = sphi 0, %s140
    %s155 = sphi 0, %s141
    %s163 = sphi 0, %s165
    %s166 = sphi 0, %s163
    %s167 = sphi 0, %s166
    %s183 = sphi 0, %s167
  $region4: #{bottleneck_forward.1} parent=0 // loop_header_branch
    %16 = sbr.rel (%p14) target = $region8
  $region5: #{bottleneck_forward.1} parent=0 // loop_body
    %s18 = ssub.s32 %s13, 1
    %s19 = ssub.s32 %s13, 2
    %s26 = sadd.s32 1, %s21
    %p27 = scmp.ge.s32.totalorder %s26, 1
    %s28 = scalar_select %p27, 0, %s26
    %s29 = sadd.s32 1, %s20
    %s30 = scalar_select %p27, %s29, %s20
    %p31 = scmp.ge.s32.totalorder %s30, 2
    %s32 = scalar_select %p31, 0, %s30
    %s34 = sadd.s32 %s33, 1
    %p37 = scmp.eq.s32.totalorder %s13, 1
    %p38 = scmp.ne.s32.totalorder %s33, %s35
    %p39 = scmp.eq.s32.totalorder %s13, 0
    %p40 = por %p38, %p39
    %p41 = scmp.ne.s32.totalorder %s33, %s35
    %p42 = scmp.eq.s32.totalorder %s18, 1
    %p43 = por %p41, %p42
    %p44 = scmp.ne.s32.totalorder %s35, %s36
    %p45 = scmp.eq.s32.totalorder %s18, 0
    %p46 = por %p44, %p45
    %p47 = scmp.ne.s32.totalorder %s35, %s36
    %p48 = scmp.eq.s32.totalorder %s19, 1
    %p49 = por %p47, %p48
    %p51 = scmp.ne.s32.totalorder %s36, %s50
    %p52 = scmp.eq.s32.totalorder %s19, 0
    %p53 = por %p51, %p52
    %s55 = sadd.s32 %s54, 1
    %p58 = scmp.eq.s32.totalorder %s13, 1
    %p59 = scmp.ne.s32.totalorder %s54, %s56
    %p60 = scmp.eq.s32.totalorder %s13, 0
    %p61 = por %p59, %p60
    %p62 = scmp.ne.s32.totalorder %s54, %s56
    %p63 = scmp.eq.s32.totalorder %s18, 1
    %p64 = por %p62, %p63
    %p65 = scmp.ne.s32.totalorder %s56, %s57
    %p66 = scmp.eq.s32.totalorder %s18, 0
    %p67 = por %p65, %p66
    %p68 = scmp.ne.s32.totalorder %s56, %s57
    %p69 = scmp.eq.s32.totalorder %s19, 1
    %p70 = por %p68, %p69
    %p72 = scmp.ne.s32.totalorder %s57, %s71
    %p73 = scmp.eq.s32.totalorder %s19, 0
    %p74 = por %p72, %p73
    %s76 = sadd.s32 %s75, 1
    %p79 = scmp.eq.s32.totalorder %s13, 1
    %p80 = scmp.ne.s32.totalorder %s75, %s77
    %p81 = scmp.eq.s32.totalorder %s13, 0
    %p82 = por %p80, %p81
    %p83 = scmp.ne.s32.totalorder %s75, %s77
    %p84 = scmp.eq.s32.totalorder %s18, 1
    %p85 = por %p83, %p84
    %p86 = scmp.ne.s32.totalorder %s77, %s78
    %p87 = scmp.eq.s32.totalorder %s18, 0
    %p88 = por %p86, %p87
    %p89 = scmp.ne.s32.totalorder %s77, %s78
    %p90 = scmp.eq.s32.totalorder %s19, 1
    %p91 = por %p89, %p90
    %p93 = scmp.ne.s32.totalorder %s78, %s92
    %p94 = scmp.eq.s32.totalorder %s19, 0
    %p95 = por %p93, %p94
    %s97 = sadd.s32 %s96, 1
    %p100 = scmp.eq.s32.totalorder %s13, 1
    %p101 = scmp.ne.s32.totalorder %s96, %s98
    %p102 = scmp.eq.s32.totalorder %s13, 0
    %p103 = por %p101, %p102
    %p104 = scmp.ne.s32.totalorder %s96, %s98
    %p105 = scmp.eq.s32.totalorder %s18, 1
    %p106 = por %p104, %p105
    %p107 = scmp.ne.s32.totalorder %s98, %s99
    %p108 = scmp.eq.s32.totalorder %s18, 0
    %p109 = por %p107, %p108
    %p110 = scmp.ne.s32.totalorder %s98, %s99
    %p111 = scmp.eq.s32.totalorder %s19, 1
    %p112 = por %p110, %p111
    %p114 = scmp.ne.s32.totalorder %s99, %s113
    %p115 = scmp.eq.s32.totalorder %s19, 0
    %p116 = por %p114, %p115
    %s118 = sadd.s32 %s117, 1
    %p121 = scmp.eq.s32.totalorder %s13, 1
    %p122 = scmp.ne.s32.totalorder %s117, %s119
    %p123 = scmp.eq.s32.totalorder %s13, 0
    %p124 = por %p122, %p123
    %p125 = scmp.ne.s32.totalorder %s117, %s119
    %p126 = scmp.eq.s32.totalorder %s18, 1
    %p127 = por %p125, %p126
    %p128 = scmp.ne.s32.totalorder %s119, %s120
    %p129 = scmp.eq.s32.totalorder %s18, 0
    %p130 = por %p128, %p129
    %p131 = scmp.ne.s32.totalorder %s119, %s120
    %p132 = scmp.eq.s32.totalorder %s19, 1
    %p133 = por %p131, %p132
    %p135 = scmp.ne.s32.totalorder %s120, %s134
    %p136 = scmp.eq.s32.totalorder %s19, 0
    %p137 = por %p135, %p136
    %s139 = sadd.s32 %s138, 1
    %p142 = scmp.eq.s32.totalorder %s13, 1
    %p143 = scmp.ne.s32.totalorder %s138, %s140
    %p144 = scmp.eq.s32.totalorder %s13, 0
    %p145 = por %p143, %p144
    %p146 = scmp.ne.s32.totalorder %s138, %s140
    %p147 = scmp.eq.s32.totalorder %s18, 1
    %p148 = por %p146, %p147
    %p149 = scmp.ne.s32.totalorder %s140, %s141
    %p150 = scmp.eq.s32.totalorder %s18, 0
    %p151 = por %p149, %p150
    %p152 = scmp.ne.s32.totalorder %s140, %s141
    %p153 = scmp.eq.s32.totalorder %s19, 1
    %p154 = por %p152, %p153
    %p156 = scmp.ne.s32.totalorder %s141, %s155
    %p157 = scmp.eq.s32.totalorder %s19, 0
    %p158 = por %p156, %p157
    %s159 = ssub.s32 %s20, %s32
    %s160 = ssub.s32 %s21, %s28
    %s161 = sor.u32 %s159, %s160
    %p162 = scmp.eq.s32.totalorder %s161, 0
    %s164 = sadd.s32 %s163, 1
    %s165 = scalar_select %p162, %s163, %s164
    %p168 = pneg %p162
    %p169 = scmp.eq.s32.totalorder %s13, 1
    %p170 = por %p168, %p169
    %p171 = scmp.ne.s32.totalorder %s163, %s166
    %p172 = scmp.eq.s32.totalorder %s13, 0
    %p173 = por %p171, %p172
    %p174 = scmp.ne.s32.totalorder %s163, %s166
    %p175 = scmp.eq.s32.totalorder %s18, 1
    %p176 = por %p174, %p175
    %p177 = scmp.ne.s32.totalorder %s166, %s167
    %p178 = scmp.eq.s32.totalorder %s18, 0
    %p179 = por %p177, %p178
    %p180 = scmp.ne.s32.totalorder %s166, %s167
    %p181 = scmp.eq.s32.totalorder %s19, 1
    %p182 = por %p180, %p181
    %p184 = scmp.ne.s32.totalorder %s167, %s183
    %p185 = scmp.eq.s32.totalorder %s19, 0
    %p186 = por %p184, %p185
    %p187 = scmp.le.s32.totalorder 1, %s13
    %p188 = scmp.lt.s32.totalorder %s13, 3
    %p189 = pnand %p187, %p188
    %p190 = pneg %p189
    // Predicated region
    $region9: #{bottleneck_forward.1} parent=5 // pred_check
      _
    $region10: #{bottleneck_forward.1} parent=5 // pred_check_branch
      %192 = sbr.rel (%p189) target = $region12
    $region11: #{bottleneck_forward.1} parent=5 // pred_region
      %s193 = ssub.s32 %s13, 1
      // Predicated region
      $region13: #{bottleneck_forward.1} parent=11 // pred_check
        %p194 = pneg %p46
      $region14: #{bottleneck_forward.1} parent=11 // pred_check_branch
        %196 = sbr.rel (%p194) target = $region16
      $region15: #{bottleneck_forward.1} parent=11 // pred_region
        _
      $region16: #{bottleneck_forward.1} parent=11 // pred_fallthru
        _
      // Predicated region
      $region17: #{bottleneck_forward.1} parent=11 // pred_check
        %p197 = pneg %p67
      $region18: #{bottleneck_forward.1} parent=11 // pred_check_branch
        %199 = sbr.rel (%p197) target = $region20
      $region19: #{bottleneck_forward.1} parent=11 // pred_region
        _
      $region20: #{bottleneck_forward.1} parent=11 // pred_fallthru
        _
      // Predicated region
      $region21: #{bottleneck_forward.1} parent=11 // pred_check
        %p200 = pneg %p88
      $region22: #{bottleneck_forward.1} parent=11 // pred_check_branch
        %202 = sbr.rel (%p200) target = $region24
      $region23: #{bottleneck_forward.1} parent=11 // pred_region
        _
      $region24: #{bottleneck_forward.1} parent=11 // pred_fallthru
        _
      // Predicated region
      $region25: #{bottleneck_forward.1} parent=11 // pred_check
        %p203 = pneg %p109
      $region26: #{bottleneck_forward.1} parent=11 // pred_check_branch
        %205 = sbr.rel (%p203) target = $region28
      $region27: #{bottleneck_forward.1} parent=11 // pred_region
        _
      $region28: #{bottleneck_forward.1} parent=11 // pred_fallthru
        _
      // Predicated region
      $region29: #{bottleneck_forward.1} parent=11 // pred_check
        %p206 = pneg %p130
      $region30: #{bottleneck_forward.1} parent=11 // pred_check_branch
        %208 = sbr.rel (%p206) target = $region32
      $region31: #{bottleneck_forward.1} parent=11 // pred_region
        _
      $region32: #{bottleneck_forward.1} parent=11 // pred_fallthru
        _
      // Predicated region
      $region33: #{bottleneck_forward.1} parent=11 // pred_check
        %p209 = pneg %p151
      $region34: #{bottleneck_forward.1} parent=11 // pred_check_branch
        %211 = sbr.rel (%p209) target = $region36
      $region35: #{bottleneck_forward.1} parent=11 // pred_region
        _
      $region36: #{bottleneck_forward.1} parent=11 // pred_fallthru
        _
    $region12: #{bottleneck_forward.1} parent=5 // pred_fallthru
      _
    %p212 = scmp.lt.s32.totalorder %s13, 2
    // Predicated region
    $region37: #{bottleneck_forward.1} parent=5 // pred_check
      %p213 = pneg %p212
    $region38: #{bottleneck_forward.1} parent=5 // pred_check_branch
      %215 = sbr.rel (%p213) target = $region40
    $region39: #{bottleneck_forward.1} parent=5 // pred_region
      _
    $region40: #{bottleneck_forward.1} parent=5 // pred_fallthru
      _
    %p216 = scmp.le.s32.totalorder 1, %s13
    %p217 = scmp.lt.s32.totalorder %s13, 3
    %p218 = pnand %p216, %p217
    %p219 = pneg %p218
    // Predicated region
    $region41: #{bottleneck_forward.1} parent=5 // pred_check
      _
    $region42: #{bottleneck_forward.1} parent=5 // pred_check_branch
      %221 = sbr.rel (%p218) target = $region44
    $region43: #{bottleneck_forward.1} parent=5 // pred_region
      %s222 = ssub.s32 %s13, 1
      %p223 = pneg %p46
      %p224 = pneg %p43
      %p225 = pneg %p67
      %p226 = pneg %p64
      %p227 = pneg %p88
      %p228 = pneg %p85
      %p229 = pneg %p109
      %p230 = pneg %p106
      %p231 = pneg %p130
      %p232 = pneg %p127
      %p233 = pneg %p151
      %p234 = pneg %p148
      %p235 = pneg %p179
      %p236 = pneg %p176
      %s237 = smul.u32 16, %s23
      %p238 = scmp.lt.s32.totalorder %s22, 1
      %s239 = scalar_select %p238, %s22, 1
      %p240 = scmp.lt.s32.totalorder %s237, 15
      %s241 = scalar_select %p240, %s237, 15
      %s242 = smul.addr %s241, 2
      %s243 = smul.addr %s239, 32
      %s244 = sadd.s32 %s242, %s243
      %s245 = smul.addr %s244, 4
      %s246 = scalar_lea.vmem %s7, %s245
      %s247 = smul.u32 16, %s23
      %p248 = scmp.lt.s32.totalorder %s22, 1
      %s249 = scalar_select %p248, %s22, 1
      %p250 = scmp.lt.s32.totalorder %s247, 15
      %s251 = scalar_select %p250, %s247, 15
      %s252 = smul.addr %s251, 2
      %s253 = smul.addr %s249, 32
      %s254 = sadd.s32 %s252, %s253
      %s255 = smul.addr %s254, 4
      %s256 = scalar_lea.vmem %s7, %s255
      %s257 = smul.u32 16, %s23
      %p259 = scmp.lt.s32.totalorder %s23, 0
      %s260 = ssub.s32 0, %s23
      %s261 = scalar_select %p259, %s260, %s23
      %s262 = sand.u32 %s261, 1
      %s263 = ssub.s32 0, %s262
      %s264 = scalar_select %p259, %s263, %s262
      %p265 = scmp.ne.s32.totalorder %s264, 0
      %p266 = scmp.lt.s32.totalorder %s264, 0
      %p267 = pnand %p266, %p265
      %p268 = pneg %p267
      %s269 = sadd.s32 %s264, 2
      %s270 = scalar_select %p268, %s269, %s264
      %p271 = scmp.eq.s32.totalorder %s23, 0
      // Predicated region
      $region45: #{bottleneck_forward.1} parent=43 // pred_check
        %p272 = pneg %p271
      $region46: #{bottleneck_forward.1} parent=43 // pred_check_branch
        %274 = sbr.rel (%p272) target = $region48
      $region47: #{bottleneck_forward.1} parent=43 // pred_region
        %s275 = smul.u32 %s23, 16
        %s276 = smul.u32 %s275, 3
        %s277 = smul.u32 %s22, 54
        %s278 = sadd.s32 %s276, %s277
        %s279 = smul.addr %s278, 4
        %s280 = scalar_lea.vmem %s0, %s279
        %s281 = smul.u32 %s270, 54
        %s282 = smul.addr %s281, 4
        %s283 = scalar_lea.vmem [#allocation2], %s282
        %s284 = scalar_lea.sflag [#allocation5], %s270
        // Predicated region
        $region49: #{bottleneck_forward.1} parent=47 // pred_check
          _
        $region50: #{bottleneck_forward.1} parent=47 // pred_check_branch
          %286 = sbr.rel (0) target = $region52
        $region51: #{bottleneck_forward.1} parent=47 // pred_region
          loop: start=0, step=1, limit=1
          $region53: #{bottleneck_forward.1} parent=51 // loop_pre_header
            _
          $region54: #{bottleneck_forward.1} parent=51 // loop_header
            %s288 = sphi 0, %s292
            %p289 = scmp.ge.s32.totalorder %s288, 1
            %s293 = sphi %s280, %s280
            %s294 = sphi %s283, %s283
          $region55: #{bottleneck_forward.1} parent=51 // loop_header_branch
            %291 = sbr.rel (%p289) target = $region59
          $region56: #{bottleneck_forward.1} parent=51 // loop_body
            %v295 = vld [vmem:[%s293] sm:$0xff]
            %296 = vst [vmem:[%s294] sm:$0xff] %v295
            %v297 = vld [vmem:[%s293 + $0x8] sm:$0xff]
            %298 = vst [vmem:[%s294 + $0x8] sm:$0xff] %v297
            %v299 = vld [vmem:[%s293 + $0x10] sm:$0xff]
            %300 = vst [vmem:[%s294 + $0x10] sm:$0xff] %v299
            %v301 = vld [vmem:[%s293 + $0x18] sm:$0xff]
            %302 = vst [vmem:[%s294 + $0x18] sm:$0xff] %v301
            %v303 = vld [vmem:[%s293 + $0x20] sm:$0xff]
            %304 = vst [vmem:[%s294 + $0x20] sm:$0xff] %v303
            %v305 = vld [vmem:[%s293 + $0x28] sm:$0xff]
            %306 = vst [vmem:[%s294 + $0x28] sm:$0xff] %v305
            %v307 = vld [vmem:[%s293 + $0x30] sm:$0xff]
            %308 = vst [vmem:[%s294 + $0x30] sm:$0xff] %v307
            %v309 = vld [vmem:[%s293 + $0x38] sm:$0xff]
            %310 = vst [vmem:[%s294 + $0x38] sm:$0xff] %v309
            %v311 = vld [vmem:[%s293 + $0x40] sm:$0xff]
            %312 = vst [vmem:[%s294 + $0x40] sm:$0xff] %v311
            %v313 = vld [vmem:[%s293 + $0x48] sm:$0xff]
            %314 = vst [vmem:[%s294 + $0x48] sm:$0xff] %v313
            %v315 = vld [vmem:[%s293 + $0x50] sm:$0xff]
            %316 = vst [vmem:[%s294 + $0x50] sm:$0xff] %v315
            %v317 = vld [vmem:[%s293 + $0x58] sm:$0xff]
            %318 = vst [vmem:[%s294 + $0x58] sm:$0xff] %v317
            %v319 = vld [vmem:[%s293 + $0x60] sm:$0xff]
            %320 = vst [vmem:[%s294 + $0x60] sm:$0xff] %v319
            %v321 = vld [vmem:[%s293 + $0x68] sm:$0xff]
            %322 = vst [vmem:[%s294 + $0x68] sm:$0xff] %v321
            %v323 = vld [vmem:[%s293 + $0x70] sm:$0xff]
            %324 = vst [vmem:[%s294 + $0x70] sm:$0xff] %v323
            %v325 = vld [vmem:[%s293 + $0x78] sm:$0xff]
            %326 = vst [vmem:[%s294 + $0x78] sm:$0xff] %v325
            %v327 = vld [vmem:[%s293 + $0x80] sm:$0xff]
            %328 = vst [vmem:[%s294 + $0x80] sm:$0xff] %v327
            %v329 = vld [vmem:[%s293 + $0x88] sm:$0xff]
            %330 = vst [vmem:[%s294 + $0x88] sm:$0xff] %v329
            %v331 = vld [vmem:[%s293 + $0x90] sm:$0xff]
            %332 = vst [vmem:[%s294 + $0x90] sm:$0xff] %v331
            %v333 = vld [vmem:[%s293 + $0x98] sm:$0xff]
            %334 = vst [vmem:[%s294 + $0x98] sm:$0xff] %v333
            %v335 = vld [vmem:[%s293 + $0xa0] sm:$0xff]
            %336 = vst [vmem:[%s294 + $0xa0] sm:$0xff] %v335
            %v337 = vld [vmem:[%s293 + $0xa8] sm:$0xff]
            %338 = vst [vmem:[%s294 + $0xa8] sm:$0xff] %v337
            %v339 = vld [vmem:[%s293 + $0xb0] sm:$0xff]
            %340 = vst [vmem:[%s294 + $0xb0] sm:$0xff] %v339
            %v341 = vld [vmem:[%s293 + $0xb8] sm:$0xff]
            %342 = vst [vmem:[%s294 + $0xb8] sm:$0xff] %v341
            %v343 = vld [vmem:[%s293 + $0xc0] sm:$0xff]
            %344 = vst [vmem:[%s294 + $0xc0] sm:$0xff] %v343
            %v345 = vld [vmem:[%s293 + $0xc8] sm:$0xff]
            %346 = vst [vmem:[%s294 + $0xc8] sm:$0xff] %v345
            %v347 = vld [vmem:[%s293 + $0xd0] sm:$0xff]
            %348 = vst [vmem:[%s294 + $0xd0] sm:$0xff] %v347
          $region57: #{bottleneck_forward.1} parent=51 // loop_footer
            %s292 = sadd.s32 1, %s288
          $region58: #{bottleneck_forward.1} parent=51 // loop_footer_branch
            %287 = sbr.rel target = $region54
          $region59: #{bottleneck_forward.1} parent=51 // loop_exit
            _
        $region52: #{bottleneck_forward.1} parent=47 // pred_fallthru
          _
        // Predicated region
        $region60: #{bottleneck_forward.1} parent=47 // pred_check
          _
        $region61: #{bottleneck_forward.1} parent=47 // pred_check_branch
          %350 = sbr.rel target = $region63
        $region62: #{bottleneck_forward.1} parent=47 // pred_region
          _
        $region63: #{bottleneck_forward.1} parent=47 // pred_fallthru
          _
        // Predicated region
        $region64: #{bottleneck_forward.1} parent=47 // pred_check
          _
        $region65: #{bottleneck_forward.1} parent=47 // pred_check_branch
          %353 = sbr.rel (0) target = $region67
        $region66: #{bottleneck_forward.1} parent=47 // pred_region
          %354 = vsyncadd %s284, 3456
        $region67: #{bottleneck_forward.1} parent=47 // pred_fallthru
          _
      $region48: #{bottleneck_forward.1} parent=43 // pred_fallthru
        _
      %s355 = smul.u32 %s23, 16
      %s356 = smul.u32 %s270, 54
      %s357 = smul.addr %s356, 4
      %s358 = scalar_lea.vmem [#allocation2], %s357
      %s359 = scalar_lea.sflag [#allocation5], %s270
      %s360 = smul.u32 4, 18
      %s361 = smul.u32 %s360, 3
      %s362 = smul.u32 %s361, 1
      %s363 = sshll.u32 %s362, 4
      %364 = dma.done %s359, %s363
      %v365 = vld [vmem:[%s358] sm:$0xf]
      %v366 = vld [vmem:[%s358 + $0x4] sm:$0xf]
      %v367 = vld [vmem:[%s358 + $0x8] sm:$0xf]
      %v368 = vld [vmem:[%s358 + $0xc] sm:$0xf]
      %v369 = vld [vmem:[%s358 + $0x10] sm:$0xf]
      %v370 = vld [vmem:[%s358 + $0x14] sm:$0xf]
      %v371 = vld [vmem:[%s358 + $0x18] sm:$0xf]
      %v372 = vld [vmem:[%s358 + $0x1c] sm:$0xf]
      %v373 = vld [vmem:[%s358 + $0x20] sm:$0xf]
      %v374 = vld [vmem:[%s358 + $0x24] sm:$0xf]
      %v375 = vld [vmem:[%s358 + $0x28] sm:$0xf]
      %v376 = vld [vmem:[%s358 + $0x2c] sm:$0xf]
      %v377 = vld [vmem:[%s358 + $0x30] sm:$0xf]
      %v378 = vld [vmem:[%s358 + $0x34] sm:$0xf]
      %v379 = vld [vmem:[%s358 + $0x38] sm:$0xf]
      %v380 = vld [vmem:[%s358 + $0x3c] sm:$0xf]
      %v381 = vld [vmem:[%s358 + $0x40] sm:$0xf]
      %v382 = vld [vmem:[%s358 + $0x44] sm:$0xf]
      %v383 = vld [vmem:[%s358 + $0x48] sm:$0xf]
      %v384 = vld [vmem:[%s358 + $0x4c] sm:$0xf]
      %v385 = vld [vmem:[%s358 + $0x50] sm:$0xf]
      %v386 = vld [vmem:[%s358 + $0x54] sm:$0xf]
      %v387 = vld [vmem:[%s358 + $0x58] sm:$0xf]
      %v388 = vld [vmem:[%s358 + $0x5c] sm:$0xf]
      %v389 = vld [vmem:[%s358 + $0x60] sm:$0xf]
      %v390 = vld [vmem:[%s358 + $0x64] sm:$0xf]
      %v391 = vld [vmem:[%s358 + $0x68] sm:$0xf]
      %v392 = vld [vmem:[%s358 + $0x6c] sm:$0xf]
      %v393 = vld [vmem:[%s358 + $0x70] sm:$0xf]
      %v394 = vld [vmem:[%s358 + $0x74] sm:$0xf]
      %v395 = vld [vmem:[%s358 + $0x78] sm:$0xf]
      %v396 = vld [vmem:[%s358 + $0x7c] sm:$0xf]
      %v397 = vld [vmem:[%s358 + $0x80] sm:$0xf]
      %v398 = vld [vmem:[%s358 + $0x84] sm:$0xf]
      %v399 = vld [vmem:[%s358 + $0x88] sm:$0xf]
      %v400 = vld [vmem:[%s358 + $0x8c] sm:$0xf]
      %v401 = vld [vmem:[%s358 + $0x90] sm:$0xf]
      %v402 = vld [vmem:[%s358 + $0x94] sm:$0xf]
      %v403 = vld [vmem:[%s358 + $0x98] sm:$0xf]
      %v404 = vld [vmem:[%s358 + $0x9c] sm:$0xf]
      %v405 = vld [vmem:[%s358 + $0xa0] sm:$0xf]
      %v406 = vld [vmem:[%s358 + $0xa4] sm:$0xf]
      %v407 = vld [vmem:[%s358 + $0xa8] sm:$0xf]
      %v408 = vld [vmem:[%s358 + $0xac] sm:$0xf]
      %v409 = vld [vmem:[%s358 + $0xb0] sm:$0xf]
      %v410 = vld [vmem:[%s358 + $0xb4] sm:$0xf]
      %v411 = vld [vmem:[%s358 + $0xb8] sm:$0xf]
      %v412 = vld [vmem:[%s358 + $0xbc] sm:$0xf]
      %v413 = vld [vmem:[%s358 + $0xc0] sm:$0xf]
      %v414 = vld [vmem:[%s358 + $0xc4] sm:$0xf]
      %v415 = vld [vmem:[%s358 + $0xc8] sm:$0xf]
      %v416 = vld [vmem:[%s358 + $0xcc] sm:$0xf]
      %v417 = vld [vmem:[%s358 + $0xd0] sm:$0xf]
      %v418 = vld [vmem:[%s358 + $0xd4] sm:$0xf]
      %v419 = vld [vmem:[%s1] sm:$0xf]
      %v420 = vld [vmem:[%s1 + $0x4] sm:$0xf]
      %v421 = vld [vmem:[%s1 + $0x8] sm:$0xf]
      %v422 = vld [vmem:[%s1 + $0xc] sm:$0xf]
      %v423 = vld [vmem:[%s1 + $0x10] sm:$0xf]
      %v424 = vld [vmem:[%s1 + $0x14] sm:$0xf]
      %v425 = vld [vmem:[%s1 + $0x18] sm:$0xf]
      %v426 = vld [vmem:[%s1 + $0x1c] sm:$0xf]
      %v427 = vld [vmem:[%s1 + $0x20] sm:$0xf]
      %v428 = vld [vmem:[%s1 + $0x24] sm:$0xf]
      %v429 = vld [vmem:[%s1 + $0x28] sm:$0xf]
      %v430 = vld [vmem:[%s1 + $0x2c] sm:$0xf]
      %v431 = vld [vmem:[%s1 + $0x30] sm:$0xf]
      %v432 = vld [vmem:[%s1 + $0x34] sm:$0xf]
      %v433 = vld [vmem:[%s1 + $0x38] sm:$0xf]
      %v434 = vld [vmem:[%s1 + $0x3c] sm:$0xf]
      %v435 = vld [vmem:[%s2] sm:$0x1]
      %v437 = vperm.slane %v435, 0
      %v493 = vunpack.c.l.b16 %v365
      %v494 = vunpack.c.l.b16 %v366
      %v495 = vunpack.c.l.b16 %v367
      %v496 = vunpack.c.l.b16 %v368
      %v497 = vunpack.c.l.b16 %v369
      %v498 = vunpack.c.l.b16 %v370
      %v499 = vunpack.c.l.b16 %v371
      %v500 = vunpack.c.l.b16 %v372
      %v501 = vunpack.c.l.b16 %v373
      %v502 = vunpack.c.l.b16 %v374
      %v503 = vunpack.c.l.b16 %v375
      %v504 = vunpack.c.l.b16 %v376
      %v505 = vunpack.c.l.b16 %v377
      %v506 = vunpack.c.l.b16 %v378
      %v507 = vunpack.c.l.b16 %v379
      %v508 = vunpack.c.l.b16 %v380
      %v509 = vunpack.c.l.b16 %v381
      %v510 = vunpack.c.l.b16 %v382
      %v511 = vunpack.c.l.b16 %v383
      %v512 = vunpack.c.l.b16 %v384
      %v513 = vunpack.c.l.b16 %v385
      %v514 = vunpack.c.l.b16 %v386
      %v515 = vunpack.c.l.b16 %v387
      %v516 = vunpack.c.l.b16 %v388
      %v517 = vunpack.c.l.b16 %v389
      %v518 = vunpack.c.l.b16 %v390
      %v519 = vunpack.c.l.b16 %v391
      %v520 = vunpack.c.l.b16 %v392
      %v521 = vunpack.c.l.b16 %v393
      %v522 = vunpack.c.l.b16 %v394
      %v523 = vunpack.c.l.b16 %v395
      %v524 = vunpack.c.l.b16 %v396
      %v525 = vunpack.c.l.b16 %v397
      %v526 = vunpack.c.l.b16 %v398
      %v527 = vunpack.c.l.b16 %v399
      %v528 = vunpack.c.l.b16 %v400
      %v529 = vunpack.c.l.b16 %v401
      %v530 = vunpack.c.l.b16 %v402
      %v531 = vunpack.c.l.b16 %v403
      %v532 = vunpack.c.l.b16 %v404
      %v533 = vunpack.c.l.b16 %v405
      %v534 = vunpack.c.l.b16 %v406
      %v535 = vunpack.c.l.b16 %v407
      %v536 = vunpack.c.l.b16 %v408
      %v537 = vunpack.c.l.b16 %v409
      %v538 = vunpack.c.l.b16 %v410
      %v539 = vunpack.c.l.b16 %v411
      %v540 = vunpack.c.l.b16 %v412
      %v541 = vunpack.c.l.b16 %v413
      %v542 = vunpack.c.l.b16 %v414
      %v543 = vunpack.c.l.b16 %v415
      %v544 = vunpack.c.l.b16 %v416
      %v545 = vunpack.c.l.b16 %v417
      %v546 = vunpack.c.l.b16 %v418
      %v547 = vpack.c.b16 %v494, %v493
      %v548 = vpack.c.b16 %v496, %v495
      %v549 = vpack.c.b16 %v498, %v497
      %v550 = vpack.c.b16 %v500, %v499
      %v551 = vpack.c.b16 %v502, %v501
      %v552 = vpack.c.b16 %v504, %v503
      %v553 = vpack.c.b16 %v506, %v505
      %v554 = vpack.c.b16 %v508, %v507
      %v555 = vpack.c.b16 %v510, %v509
      %v556 = vpack.c.b16 %v512, %v511
      %v557 = vpack.c.b16 %v514, %v513
      %v558 = vpack.c.b16 %v516, %v515
      %v559 = vpack.c.b16 %v518, %v517
      %v560 = vpack.c.b16 %v520, %v519
      %v561 = vpack.c.b16 %v522, %v521
      %v562 = vpack.c.b16 %v524, %v523
      %v563 = vpack.c.b16 %v526, %v525
      %v564 = vpack.c.b16 %v528, %v527
      %v565 = vpack.c.b16 %v530, %v529
      %v566 = vpack.c.b16 %v532, %v531
      %v567 = vpack.c.b16 %v534, %v533
      %v568 = vpack.c.b16 %v536, %v535
      %v569 = vpack.c.b16 %v538, %v537
      %v570 = vpack.c.b16 %v540, %v539
      %v571 = vpack.c.b16 %v542, %v541
      %v572 = vpack.c.b16 %v544, %v543
      %v573 = vpack.c.b16 %v546, %v545
      %v617 = vunpack.c.l.b16 %v419
      %v618 = vunpack.c.l.b16 %v420
      %v619 = vunpack.c.l.b16 %v421
      %v620 = vunpack.c.l.b16 %v422
      %v621 = vunpack.c.l.b16 %v423
      %v622 = vunpack.c.l.b16 %v424
      %v623 = vunpack.c.l.b16 %v425
      %v624 = vunpack.c.l.b16 %v426
      %v625 = vunpack.c.l.b16 %v427
      %v626 = vunpack.c.l.b16 %v428
      %v627 = vunpack.c.l.b16 %v429
      %v628 = vunpack.c.l.b16 %v430
      %v629 = vunpack.c.l.b16 %v431
      %v630 = vunpack.c.l.b16 %v432
      %v631 = vunpack.c.l.b16 %v433
      %v632 = vunpack.c.l.b16 %v434
      %v633 = vpack.c.b16 %v618, %v617
      %v634 = vpack.c.b16 %v620, %v619
      %v635 = vpack.c.b16 %v622, %v621
      %v636 = vpack.c.b16 %v624, %v623
      %v637 = vpack.c.b16 %v626, %v625
      %v638 = vpack.c.b16 %v628, %v627
      %v639 = vpack.c.b16 %v630, %v629
      %v640 = vpack.c.b16 %v632, %v631
      %649 = vmatpush.bf16.msra.mxu0 %v640
      %650 = vmatpush.bf16.msra.mxu0 %v639
      %651 = vmatpush.bf16.msra.mxu0 %v638
      %652 = vmatpush.bf16.msra.mxu0 %v637
      %653 = vmatpush.bf16.msra.mxu0 %v636
      %654 = vmatpush.bf16.msra.mxu0 %v635
      %655 = vmatpush.bf16.msra.mxu0 %v634
      %656 = vmatpush.bf16.msra.mxu0 %v633
      %657 = vmatmul.bf16.gmra.mxu0 %v547
      %v658 = vpop.f32.mrf.mxu0
      %v659 = vadd.f32 %v437, %v658
      %v660 = vpop.f32.mrf.mxu0
      %v661 = vadd.f32 %v437, %v660
      %662 = vmatmul.bf16.gmra.mxu0 %v548
      %v663 = vpop.f32.mrf.mxu0
      %v664 = vadd.f32 %v437, %v663
      %v665 = vpop.f32.mrf.mxu0
      %v666 = vadd.f32 %v437, %v665
      %667 = vmatmul.bf16.gmra.mxu0 %v549
      %v668 = vpop.f32.mrf.mxu0
      %v669 = vadd.f32 %v437, %v668
      %v670 = vpop.f32.mrf.mxu0
      %v671 = vadd.f32 %v437, %v670
      %672 = vmatmul.bf16.gmra.mxu0 %v550
      %v673 = vpop.f32.mrf.mxu0
      %v674 = vadd.f32 %v437, %v673
      %v675 = vpop.f32.mrf.mxu0
      %v676 = vadd.f32 %v437, %v675
      %677 = vmatmul.bf16.gmra.mxu0 %v551
      %v678 = vpop.f32.mrf.mxu0
      %v679 = vadd.f32 %v437, %v678
      %v680 = vpop.f32.mrf.mxu0
      %v681 = vadd.f32 %v437, %v680
      %682 = vmatmul.bf16.gmra.mxu0 %v552
      %v683 = vpop.f32.mrf.mxu0
      %v684 = vadd.f32 %v437, %v683
      %v685 = vpop.f32.mrf.mxu0
      %v686 = vadd.f32 %v437, %v685
      %687 = vmatmul.bf16.gmra.mxu0 %v553
      %v688 = vpop.f32.mrf.mxu0
      %v689 = vadd.f32 %v437, %v688
      %v690 = vpop.f32.mrf.mxu0
      %v691 = vadd.f32 %v437, %v690
      %692 = vmatmul.bf16.gmra.mxu0 %v554
      %v693 = vpop.f32.mrf.mxu0
      %v694 = vadd.f32 %v437, %v693
      %v695 = vpop.f32.mrf.mxu0
      %v696 = vadd.f32 %v437, %v695
      %697 = vmatmul.bf16.gmra.mxu0 %v555
      %v698 = vpop.f32.mrf.mxu0
      %v699 = vadd.f32 %v437, %v698
      %v700 = vpop.f32.mrf.mxu0
      %v701 = vadd.f32 %v437, %v700
      %702 = vmatmul.bf16.gmra.mxu0 %v556
      %v703 = vpop.f32.mrf.mxu0
      %v704 = vadd.f32 %v437, %v703
      %v705 = vpop.f32.mrf.mxu0
      %v706 = vadd.f32 %v437, %v705
      %707 = vmatmul.bf16.gmra.mxu0 %v557
      %v708 = vpop.f32.mrf.mxu0
      %v709 = vadd.f32 %v437, %v708
      %v710 = vpop.f32.mrf.mxu0
      %v711 = vadd.f32 %v437, %v710
      %712 = vmatmul.bf16.gmra.mxu0 %v558
      %v713 = vpop.f32.mrf.mxu0
      %v714 = vadd.f32 %v437, %v713
      %v715 = vpop.f32.mrf.mxu0
      %v716 = vadd.f32 %v437, %v715
      %717 = vmatmul.bf16.gmra.mxu0 %v559
      %v718 = vpop.f32.mrf.mxu0
      %v719 = vadd.f32 %v437, %v718
      %v720 = vpop.f32.mrf.mxu0
      %v721 = vadd.f32 %v437, %v720
      %722 = vmatmul.bf16.gmra.mxu0 %v560
      %v723 = vpop.f32.mrf.mxu0
      %v724 = vadd.f32 %v437, %v723
      %v725 = vpop.f32.mrf.mxu0
      %v726 = vadd.f32 %v437, %v725
      %727 = vmatmul.bf16.gmra.mxu0 %v561
      %v728 = vpop.f32.mrf.mxu0
      %v729 = vadd.f32 %v437, %v728
      %v730 = vpop.f32.mrf.mxu0
      %v731 = vadd.f32 %v437, %v730
      %732 = vmatmul.bf16.gmra.mxu0 %v562
      %v733 = vpop.f32.mrf.mxu0
      %v734 = vadd.f32 %v437, %v733
      %v735 = vpop.f32.mrf.mxu0
      %v736 = vadd.f32 %v437, %v735
      %737 = vmatmul.bf16.gmra.mxu0 %v563
      %v738 = vpop.f32.mrf.mxu0
      %v739 = vadd.f32 %v437, %v738
      %v740 = vpop.f32.mrf.mxu0
      %v741 = vadd.f32 %v437, %v740
      %742 = vmatmul.bf16.gmra.mxu0 %v564
      %v743 = vpop.f32.mrf.mxu0
      %v744 = vadd.f32 %v437, %v743
      %v745 = vpop.f32.mrf.mxu0
      %v746 = vadd.f32 %v437, %v745
      %747 = vmatmul.bf16.gmra.mxu0 %v565
      %v748 = vpop.f32.mrf.mxu0
      %v749 = vadd.f32 %v437, %v748
      %v750 = vpop.f32.mrf.mxu0
      %v751 = vadd.f32 %v437, %v750
      %752 = vmatmul.bf16.gmra.mxu0 %v566
      %v753 = vpop.f32.mrf.mxu0
      %v754 = vadd.f32 %v437, %v753
      %v755 = vpop.f32.mrf.mxu0
      %v756 = vadd.f32 %v437, %v755
      %757 = vmatmul.bf16.gmra.mxu0 %v567
      %v758 = vpop.f32.mrf.mxu0
      %v759 = vadd.f32 %v437, %v758
      %v760 = vpop.f32.mrf.mxu0
      %v761 = vadd.f32 %v437, %v760
      %762 = vmatmul.bf16.gmra.mxu0 %v568
      %v763 = vpop.f32.mrf.mxu0
      %v764 = vadd.f32 %v437, %v763
      %v765 = vpop.f32.mrf.mxu0
      %v766 = vadd.f32 %v437, %v765
      %767 = vmatmul.bf16.gmra.mxu0 %v569
      %v768 = vpop.f32.mrf.mxu0
      %v769 = vadd.f32 %v437, %v768
      %v770 = vpop.f32.mrf.mxu0
      %v771 = vadd.f32 %v437, %v770
      %772 = vmatmul.bf16.gmra.mxu0 %v570
      %v773 = vpop.f32.mrf.mxu0
      %v774 = vadd.f32 %v437, %v773
      %v775 = vpop.f32.mrf.mxu0
      %v776 = vadd.f32 %v437, %v775
      %777 = vmatmul.bf16.gmra.mxu0 %v571
      %v778 = vpop.f32.mrf.mxu0
      %v779 = vadd.f32 %v437, %v778
      %v780 = vpop.f32.mrf.mxu0
      %v781 = vadd.f32 %v437, %v780
      %782 = vmatmul.bf16.gmra.mxu0 %v572
      %v783 = vpop.f32.mrf.mxu0
      %v784 = vadd.f32 %v437, %v783
      %v785 = vpop.f32.mrf.mxu0
      %v786 = vadd.f32 %v437, %v785
      %787 = vmatmul.bf16.gmra.mxu0 %v573
      %v788 = vpop.f32.mrf.mxu0
      %v789 = vadd.f32 %v437, %v788
      %v790 = vpop.f32.mrf.mxu0
      %v791 = vadd.f32 %v437, %v790
      %792 = vdwg.mxu0
      %v793 = vmax.f32 %v659, 0.0
      %v794 = vmax.f32 %v661, 0.0
      %v795 = vmax.f32 %v664, 0.0
      %v796 = vmax.f32 %v666, 0.0
      %v797 = vmax.f32 %v669, 0.0
      %v798 = vmax.f32 %v671, 0.0
      %v799 = vmax.f32 %v674, 0.0
      %v800 = vmax.f32 %v676, 0.0
      %v801 = vmax.f32 %v679, 0.0
      %v802 = vmax.f32 %v681, 0.0
      %v803 = vmax.f32 %v684, 0.0
      %v804 = vmax.f32 %v686, 0.0
      %v805 = vmax.f32 %v689, 0.0
      %v806 = vmax.f32 %v691, 0.0
      %v807 = vmax.f32 %v694, 0.0
      %v808 = vmax.f32 %v696, 0.0
      %v809 = vmax.f32 %v699, 0.0
      %v810 = vmax.f32 %v701, 0.0
      %v811 = vmax.f32 %v704, 0.0
      %v812 = vmax.f32 %v706, 0.0
      %v813 = vmax.f32 %v709, 0.0
      %v814 = vmax.f32 %v711, 0.0
      %v815 = vmax.f32 %v714, 0.0
      %v816 = vmax.f32 %v716, 0.0
      %v817 = vmax.f32 %v719, 0.0
      %v818 = vmax.f32 %v721, 0.0
      %v819 = vmax.f32 %v724, 0.0
      %v820 = vmax.f32 %v726, 0.0
      %v821 = vmax.f32 %v729, 0.0
      %v822 = vmax.f32 %v731, 0.0
      %v823 = vmax.f32 %v734, 0.0
      %v824 = vmax.f32 %v736, 0.0
      %v825 = vmax.f32 %v739, 0.0
      %v826 = vmax.f32 %v741, 0.0
      %v827 = vmax.f32 %v744, 0.0
      %v828 = vmax.f32 %v746, 0.0
      %v829 = vmax.f32 %v749, 0.0
      %v830 = vmax.f32 %v751, 0.0
      %v831 = vmax.f32 %v754, 0.0
      %v832 = vmax.f32 %v756, 0.0
      %v833 = vmax.f32 %v759, 0.0
      %v834 = vmax.f32 %v761, 0.0
      %v835 = vmax.f32 %v764, 0.0
      %v836 = vmax.f32 %v766, 0.0
      %v837 = vmax.f32 %v769, 0.0
      %v838 = vmax.f32 %v771, 0.0
      %v839 = vmax.f32 %v774, 0.0
      %v840 = vmax.f32 %v776, 0.0
      %v841 = vmax.f32 %v779, 0.0
      %v842 = vmax.f32 %v781, 0.0
      %v843 = vmax.f32 %v784, 0.0
      %v844 = vmax.f32 %v786, 0.0
      %v845 = vmax.f32 %v789, 0.0
      %v846 = vmax.f32 %v791, 0.0
      %v847 = vpack.c.bf16 %v793, %v793
      %v848 = vpack.c.bf16 %v794, %v794
      %v849 = vpack.c.bf16 %v795, %v795
      %v850 = vpack.c.bf16 %v796, %v796
      %v851 = vpack.c.bf16 %v797, %v797
      %v852 = vpack.c.bf16 %v798, %v798
      %v853 = vpack.c.bf16 %v799, %v799
      %v854 = vpack.c.bf16 %v800, %v800
      %v855 = vpack.c.bf16 %v801, %v801
      %v856 = vpack.c.bf16 %v802, %v802
      %v857 = vpack.c.bf16 %v803, %v803
      %v858 = vpack.c.bf16 %v804, %v804
      %v859 = vpack.c.bf16 %v805, %v805
      %v860 = vpack.c.bf16 %v806, %v806
      %v861 = vpack.c.bf16 %v807, %v807
      %v862 = vpack.c.bf16 %v808, %v808
      %v863 = vpack.c.bf16 %v809, %v809
      %v864 = vpack.c.bf16 %v810, %v810
      %v865 = vpack.c.bf16 %v811, %v811
      %v866 = vpack.c.bf16 %v812, %v812
      %v867 = vpack.c.bf16 %v813, %v813
      %v868 = vpack.c.bf16 %v814, %v814
      %v869 = vpack.c.bf16 %v815, %v815
      %v870 = vpack.c.bf16 %v816, %v816
      %v871 = vpack.c.bf16 %v817, %v817
      %v872 = vpack.c.bf16 %v818, %v818
      %v873 = vpack.c.bf16 %v819, %v819
      %v874 = vpack.c.bf16 %v820, %v820
      %v875 = vpack.c.bf16 %v821, %v821
      %v876 = vpack.c.bf16 %v822, %v822
      %v877 = vpack.c.bf16 %v823, %v823
      %v878 = vpack.c.bf16 %v824, %v824
      %v879 = vpack.c.bf16 %v825, %v825
      %v880 = vpack.c.bf16 %v826, %v826
      %v881 = vpack.c.bf16 %v827, %v827
      %v882 = vpack.c.bf16 %v828, %v828
      %v883 = vpack.c.bf16 %v829, %v829
      %v884 = vpack.c.bf16 %v830, %v830
      %v885 = vpack.c.bf16 %v831, %v831
      %v886 = vpack.c.bf16 %v832, %v832
      %v887 = vpack.c.bf16 %v833, %v833
      %v888 = vpack.c.bf16 %v834, %v834
      %v889 = vpack.c.bf16 %v835, %v835
      %v890 = vpack.c.bf16 %v836, %v836
      %v891 = vpack.c.bf16 %v837, %v837
      %v892 = vpack.c.bf16 %v838, %v838
      %v893 = vpack.c.bf16 %v839, %v839
      %v894 = vpack.c.bf16 %v840, %v840
      %v895 = vpack.c.bf16 %v841, %v841
      %v896 = vpack.c.bf16 %v842, %v842
      %v897 = vpack.c.bf16 %v843, %v843
      %v898 = vpack.c.bf16 %v844, %v844
      %v899 = vpack.c.bf16 %v845, %v845
      %v900 = vpack.c.bf16 %v846, %v846
      %901 = vst [vmem:[#allocation3] sm:$0xf] %v847
      %902 = vst [vmem:[#allocation3 + $0x4] sm:$0xf] %v848
      %903 = vst [vmem:[#allocation3 + $0x8] sm:$0xf] %v849
      %904 = vst [vmem:[#allocation3 + $0xc] sm:$0xf] %v850
      %905 = vst [vmem:[#allocation3 + $0x10] sm:$0xf] %v851
      %906 = vst [vmem:[#allocation3 + $0x14] sm:$0xf] %v852
      %907 = vst [vmem:[#allocation3 + $0x18] sm:$0xf] %v853
      %908 = vst [vmem:[#allocation3 + $0x1c] sm:$0xf] %v854
      %909 = vst [vmem:[#allocation3 + $0x20] sm:$0xf] %v855
      %910 = vst [vmem:[#allocation3 + $0x24] sm:$0xf] %v856
      %911 = vst [vmem:[#allocation3 + $0x28] sm:$0xf] %v857
      %912 = vst [vmem:[#allocation3 + $0x2c] sm:$0xf] %v858
      %913 = vst [vmem:[#allocation3 + $0x30] sm:$0xf] %v859
      %914 = vst [vmem:[#allocation3 + $0x34] sm:$0xf] %v860
      %915 = vst [vmem:[#allocation3 + $0x38] sm:$0xf] %v861
      %916 = vst [vmem:[#allocation3 + $0x3c] sm:$0xf] %v862
      %917 = vst [vmem:[#allocation3 + $0x40] sm:$0xf] %v863
      %918 = vst [vmem:[#allocation3 + $0x44] sm:$0xf] %v864
      %919 = vst [vmem:[#allocation3 + $0x48] sm:$0xf] %v865
      %920 = vst [vmem:[#allocation3 + $0x4c] sm:$0xf] %v866
      %921 = vst [vmem:[#allocation3 + $0x50] sm:$0xf] %v867
      %922 = vst [vmem:[#allocation3 + $0x54] sm:$0xf] %v868
      %923 = vst [vmem:[#allocation3 + $0x58] sm:$0xf] %v869
      %924 = vst [vmem:[#allocation3 + $0x5c] sm:$0xf] %v870
      %925 = vst [vmem:[#allocation3 + $0x60] sm:$0xf] %v871
      %926 = vst [vmem:[#allocation3 + $0x64] sm:$0xf] %v872
      %927 = vst [vmem:[#allocation3 + $0x68] sm:$0xf] %v873
      %928 = vst [vmem:[#allocation3 + $0x6c] sm:$0xf] %v874
      %929 = vst [vmem:[#allocation3 + $0x70] sm:$0xf] %v875
      %930 = vst [vmem:[#allocation3 + $0x74] sm:$0xf] %v876
      %931 = vst [vmem:[#allocation3 + $0x78] sm:$0xf] %v877
      %932 = vst [vmem:[#allocation3 + $0x7c] sm:$0xf] %v878
      %933 = vst [vmem:[#allocation3 + $0x80] sm:$0xf] %v879
      %934 = vst [vmem:[#allocation3 + $0x84] sm:$0xf] %v880
      %935 = vst [vmem:[#allocation3 + $0x88] sm:$0xf] %v881
      %936 = vst [vmem:[#allocation3 + $0x8c] sm:$0xf] %v882
      %937 = vst [vmem:[#allocation3 + $0x90] sm:$0xf] %v883
      %938 = vst [vmem:[#allocation3 + $0x94] sm:$0xf] %v884
      %939 = vst [vmem:[#allocation3 + $0x98] sm:$0xf] %v885
      %940 = vst [vmem:[#allocation3 + $0x9c] sm:$0xf] %v886
      %941 = vst [vmem:[#allocation3 + $0xa0] sm:$0xf] %v887
      %942 = vst [vmem:[#allocation3 + $0xa4] sm:$0xf] %v888
      %943 = vst [vmem:[#allocation3 + $0xa8] sm:$0xf] %v889
      %944 = vst [vmem:[#allocation3 + $0xac] sm:$0xf] %v890
      %945 = vst [vmem:[#allocation3 + $0xb0] sm:$0xf] %v891
      %946 = vst [vmem:[#allocation3 + $0xb4] sm:$0xf] %v892
      %947 = vst [vmem:[#allocation3 + $0xb8] sm:$0xf] %v893
      %948 = vst [vmem:[#allocation3 + $0xbc] sm:$0xf] %v894
      %949 = vst [vmem:[#allocation3 + $0xc0] sm:$0xf] %v895
      %950 = vst [vmem:[#allocation3 + $0xc4] sm:$0xf] %v896
      %951 = vst [vmem:[#allocation3 + $0xc8] sm:$0xf] %v897
      %952 = vst [vmem:[#allocation3 + $0xcc] sm:$0xf] %v898
      %953 = vst [vmem:[#allocation3 + $0xd0] sm:$0xf] %v899
      %954 = vst [vmem:[#allocation3 + $0xd4] sm:$0xf] %v900
      %vm955 = vcmask 1040384
      %vm956 = vsmask.f32 256
      %vm957 = vmand %vm955, %vm956
      %v958 = vld [vmem:[#allocation3] sm:$0x1]
      %v959 = vsel %vm957, 0, %v958
      %960 = vst [vmem:[#allocation3] sm:$0x1] %v959
      %v961 = vld [vmem:[#allocation3 + $0xc] sm:$0x1]
      %v962 = vsel %vm957, 0, %v961
      %963 = vst [vmem:[#allocation3 + $0xc] sm:$0x1] %v962
      %v964 = vld [vmem:[#allocation3 + $0x18] sm:$0x1]
      %v965 = vsel %vm957, 0, %v964
      %966 = vst [vmem:[#allocation3 + $0x18] sm:$0x1] %v965
      %v967 = vld [vmem:[#allocation3 + $0x24] sm:$0x1]
      %v968 = vsel %vm957, 0, %v967
      %969 = vst [vmem:[#allocation3 + $0x24] sm:$0x1] %v968
      %v970 = vld [vmem:[#allocation3 + $0x30] sm:$0x1]
      %v971 = vsel %vm957, 0, %v970
      %972 = vst [vmem:[#allocation3 + $0x30] sm:$0x1] %v971
      %v973 = vld [vmem:[#allocation3 + $0x3c] sm:$0x1]
      %v974 = vsel %vm957, 0, %v973
      %975 = vst [vmem:[#allocation3 + $0x3c] sm:$0x1] %v974
      %v976 = vld [vmem:[#allocation3 + $0x48] sm:$0x1]
      %v977 = vsel %vm957, 0, %v976
      %978 = vst [vmem:[#allocation3 + $0x48] sm:$0x1] %v977
      %v979 = vld [vmem:[#allocation3 + $0x54] sm:$0x1]
      %v980 = vsel %vm957, 0, %v979
      %981 = vst [vmem:[#allocation3 + $0x54] sm:$0x1] %v980
      %v982 = vld [vmem:[#allocation3 + $0x60] sm:$0x1]
      %v983 = vsel %vm957, 0, %v982
      %984 = vst [vmem:[#allocation3 + $0x60] sm:$0x1] %v983
      %v985 = vld [vmem:[#allocation3 + $0x6c] sm:$0x1]
      %v986 = vsel %vm957, 0, %v985
      %987 = vst [vmem:[#allocation3 + $0x6c] sm:$0x1] %v986
      %v988 = vld [vmem:[#allocation3 + $0x78] sm:$0x1]
      %v989 = vsel %vm957, 0, %v988
      %990 = vst [vmem:[#allocation3 + $0x78] sm:$0x1] %v989
      %v991 = vld [vmem:[#allocation3 + $0x84] sm:$0x1]
      %v992 = vsel %vm957, 0, %v991
      %993 = vst [vmem:[#allocation3 + $0x84] sm:$0x1] %v992
      %v994 = vld [vmem:[#allocation3 + $0x90] sm:$0x1]
      %v995 = vsel %vm957, 0, %v994
      %996 = vst [vmem:[#allocation3 + $0x90] sm:$0x1] %v995
      %v997 = vld [vmem:[#allocation3 + $0x9c] sm:$0x1]
      %v998 = vsel %vm957, 0, %v997
      %999 = vst [vmem:[#allocation3 + $0x9c] sm:$0x1] %v998
      %v1000 = vld [vmem:[#allocation3 + $0xa8] sm:$0x1]
      %v1001 = vsel %vm957, 0, %v1000
      %1002 = vst [vmem:[#allocation3 + $0xa8] sm:$0x1] %v1001
      %v1003 = vld [vmem:[#allocation3 + $0xb4] sm:$0x1]
      %v1004 = vsel %vm957, 0, %v1003
      %1005 = vst [vmem:[#allocation3 + $0xb4] sm:$0x1] %v1004
      %v1006 = vld [vmem:[#allocation3 + $0xc0] sm:$0x1]
      %v1007 = vsel %vm957, 0, %v1006
      %1008 = vst [vmem:[#allocation3 + $0xc0] sm:$0x1] %v1007
      %v1009 = vld [vmem:[#allocation3 + $0xcc] sm:$0x1]
      %v1010 = vsel %vm957, 0, %v1009
      %1011 = vst [vmem:[#allocation3 + $0xcc] sm:$0x1] %v1010
      %vm1012 = vcmask 1043456
      %vm1013 = vsmask.f32 7938
      %vm1014 = vmand %vm1012, %vm1013
      %v1015 = vld [vmem:[#allocation3 + $0x8] sm:$0xf]
      %v1016 = vsel %vm1014, 0, %v1015
      %1017 = vst [vmem:[#allocation3 + $0x8] sm:$0xf] %v1016
      %v1018 = vld [vmem:[#allocation3 + $0x14] sm:$0xf]
      %v1019 = vsel %vm1014, 0, %v1018
      %1020 = vst [vmem:[#allocation3 + $0x14] sm:$0xf] %v1019
      %v1021 = vld [vmem:[#allocation3 + $0x20] sm:$0xf]
      %v1022 = vsel %vm1014, 0, %v1021
      %1023 = vst [vmem:[#allocation3 + $0x20] sm:$0xf] %v1022
      %v1024 = vld [vmem:[#allocation3 + $0x2c] sm:$0xf]
      %v1025 = vsel %vm1014, 0, %v1024
      %1026 = vst [vmem:[#allocation3 + $0x2c] sm:$0xf] %v1025
      %v1027 = vld [vmem:[#allocation3 + $0x38] sm:$0xf]
      %v1028 = vsel %vm1014, 0, %v1027
      %1029 = vst [vmem:[#allocation3 + $0x38] sm:$0xf] %v1028
      %v1030 = vld [vmem:[#allocation3 + $0x44] sm:$0xf]
      %v1031 = vsel %vm1014, 0, %v1030
      %1032 = vst [vmem:[#allocation3 + $0x44] sm:$0xf] %v1031
      %v1033 = vld [vmem:[#allocation3 + $0x50] sm:$0xf]
      %v1034 = vsel %vm1014, 0, %v1033
      %1035 = vst [vmem:[#allocation3 + $0x50] sm:$0xf] %v1034
      %v1036 = vld [vmem:[#allocation3 + $0x5c] sm:$0xf]
      %v1037 = vsel %vm1014, 0, %v1036
      %1038 = vst [vmem:[#allocation3 + $0x5c] sm:$0xf] %v1037
      %v1039 = vld [vmem:[#allocation3 + $0x68] sm:$0xf]
      %v1040 = vsel %vm1014, 0, %v1039
      %1041 = vst [vmem:[#allocation3 + $0x68] sm:$0xf] %v1040
      %v1042 = vld [vmem:[#allocation3 + $0x74] sm:$0xf]
      %v1043 = vsel %vm1014, 0, %v1042
      %1044 = vst [vmem:[#allocation3 + $0x74] sm:$0xf] %v1043
      %v1045 = vld [vmem:[#allocation3 + $0x80] sm:$0xf]
      %v1046 = vsel %vm1014, 0, %v1045
      %1047 = vst [vmem:[#allocation3 + $0x80] sm:$0xf] %v1046
      %v1048 = vld [vmem:[#allocation3 + $0x8c] sm:$0xf]
      %v1049 = vsel %vm1014, 0, %v1048
      %1050 = vst [vmem:[#allocation3 + $0x8c] sm:$0xf] %v1049
      %v1051 = vld [vmem:[#allocation3 + $0x98] sm:$0xf]
      %v1052 = vsel %vm1014, 0, %v1051
      %1053 = vst [vmem:[#allocation3 + $0x98] sm:$0xf] %v1052
      %v1054 = vld [vmem:[#allocation3 + $0xa4] sm:$0xf]
      %v1055 = vsel %vm1014, 0, %v1054
      %1056 = vst [vmem:[#allocation3 + $0xa4] sm:$0xf] %v1055
      %v1057 = vld [vmem:[#allocation3 + $0xb0] sm:$0xf]
      %v1058 = vsel %vm1014, 0, %v1057
      %1059 = vst [vmem:[#allocation3 + $0xb0] sm:$0xf] %v1058
      %v1060 = vld [vmem:[#allocation3 + $0xbc] sm:$0xf]
      %v1061 = vsel %vm1014, 0, %v1060
      %1062 = vst [vmem:[#allocation3 + $0xbc] sm:$0xf] %v1061
      %v1063 = vld [vmem:[#allocation3 + $0xc8] sm:$0xf]
      %v1064 = vsel %vm1014, 0, %v1063
      %1065 = vst [vmem:[#allocation3 + $0xc8] sm:$0xf] %v1064
      %v1066 = vld [vmem:[#allocation3 + $0xd4] sm:$0xf]
      %v1067 = vsel %vm1014, 0, %v1066
      %1068 = vst [vmem:[#allocation3 + $0xd4] sm:$0xf] %v1067
      // Predicated region
      $region68: #{bottleneck_forward.1} parent=43 // pred_check
        %p1069 = pneg %p271
      $region69: #{bottleneck_forward.1} parent=43 // pred_check_branch
        %1071 = sbr.rel (%p1069) target = $region71
      $region70: #{bottleneck_forward.1} parent=43 // pred_region
        %1072 = vst [vmem:[#allocation3] sm:$0xf] 0
        %1073 = vst [vmem:[#allocation3 + $0x4] sm:$0xf] 0
        %1074 = vst [vmem:[#allocation3 + $0x8] sm:$0xf] 0
        %s1075 = scalar_lea.vmem [#allocation3], 204
        %1076 = vst [vmem:[%s1075] sm:$0xf] 0
        %1077 = vst [vmem:[%s1075 + $0x4] sm:$0xf] 0
        %1078 = vst [vmem:[%s1075 + $0x8] sm:$0xf] 0
      $region71: #{bottleneck_forward.1} parent=43 // pred_fallthru
        _
      %v1079 = vld [vmem:[#allocation3] sm:$0xf]
      %v1080 = vld [vmem:[#allocation3 + $0x4] sm:$0xf]
      %v1081 = vld [vmem:[#allocation3 + $0xc] sm:$0xf]
      %v1082 = vld [vmem:[#allocation3 + $0x10] sm:$0xf]
      %v1083 = vld [vmem:[#allocation3 + $0x18] sm:$0xf]
      %v1084 = vld [vmem:[#allocation3 + $0x1c] sm:$0xf]
      %v1085 = vld [vmem:[#allocation3 + $0x24] sm:$0xf]
      %v1086 = vld [vmem:[#allocation3 + $0x28] sm:$0xf]
      %v1087 = vld [vmem:[#allocation3 + $0x30] sm:$0xf]
      %v1088 = vld [vmem:[#allocation3 + $0x34] sm:$0xf]
      %v1089 = vld [vmem:[#allocation3 + $0x3c] sm:$0xf]
      %v1090 = vld [vmem:[#allocation3 + $0x40] sm:$0xf]
      %v1091 = vld [vmem:[#allocation3 + $0x48] sm:$0xf]
      %v1092 = vld [vmem:[#allocation3 + $0x4c] sm:$0xf]
      %v1093 = vld [vmem:[#allocation3 + $0x54] sm:$0xf]
      %v1094 = vld [vmem:[#allocation3 + $0x58] sm:$0xf]
      %v1095 = vld [vmem:[#allocation3 + $0x60] sm:$0xf]
      %v1096 = vld [vmem:[#allocation3 + $0x64] sm:$0xf]
      %v1097 = vld [vmem:[#allocation3 + $0x6c] sm:$0xf]
      %v1098 = vld [vmem:[#allocation3 + $0x70] sm:$0xf]
      %v1099 = vld [vmem:[#allocation3 + $0x78] sm:$0xf]
      %v1100 = vld [vmem:[#allocation3 + $0x7c] sm:$0xf]
      %v1101 = vld [vmem:[#allocation3 + $0x84] sm:$0xf]
      %v1102 = vld [vmem:[#allocation3 + $0x88] sm:$0xf]
      %v1103 = vld [vmem:[#allocation3 + $0x90] sm:$0xf]
      %v1104 = vld [vmem:[#allocation3 + $0x94] sm:$0xf]
      %v1105 = vld [vmem:[#allocation3 + $0x9c] sm:$0xf]
      %v1106 = vld [vmem:[#allocation3 + $0xa0] sm:$0xf]
      %v1107 = vld [vmem:[#allocation3 + $0xa8] sm:$0xf]
      %v1108 = vld [vmem:[#allocation3 + $0xac] sm:$0xf]
      %v1109 = vld [vmem:[#allocation3 + $0xb4] sm:$0xf]
      %v1110 = vld [vmem:[#allocation3 + $0xb8] sm:$0xf]
      %v1111 = vld [vmem:[#allocation3 + $0x8] sm:$0x1]
      %v1112 = vld [vmem:[#allocation3 + $0x14] sm:$0x1]
      %v1113 = vld [vmem:[#allocation3 + $0x20] sm:$0x1]
      %v1114 = vld [vmem:[#allocation3 + $0x2c] sm:$0x1]
      %v1115 = vld [vmem:[#allocation3 + $0x38] sm:$0x1]
      %v1116 = vld [vmem:[#allocation3 + $0x44] sm:$0x1]
      %v1117 = vld [vmem:[#allocation3 + $0x50] sm:$0x1]
      %v1118 = vld [vmem:[#allocation3 + $0x5c] sm:$0x1]
      %v1119 = vld [vmem:[#allocation3 + $0x68] sm:$0x1]
      %v1120 = vld [vmem:[#allocation3 + $0x74] sm:$0x1]
      %v1121 = vld [vmem:[#allocation3 + $0x80] sm:$0x1]
      %v1122 = vld [vmem:[#allocation3 + $0x8c] sm:$0x1]
      %v1123 = vld [vmem:[#allocation3 + $0x98] sm:$0x1]
      %v1124 = vld [vmem:[#allocation3 + $0xa4] sm:$0x1]
      %v1125 = vld [vmem:[#allocation3 + $0xb0] sm:$0x1]
      %v1126 = vld [vmem:[#allocation3 + $0xbc] sm:$0x1]
      %v1127 = vld [vmem:[#allocation3] sm:$0xe]
      %v1128 = vld [vmem:[#allocation3 + $0xc] sm:$0xe]
      %v1129 = vld [vmem:[#allocation3 + $0x18] sm:$0xe]
      %v1130 = vld [vmem:[#allocation3 + $0x24] sm:$0xe]
      %v1131 = vld [vmem:[#allocation3 + $0x30] sm:$0xe]
      %v1132 = vld [vmem:[#allocation3 + $0x3c] sm:$0xe]
      %v1133 = vld [vmem:[#allocation3 + $0x48] sm:$0xe]
      %v1134 = vld [vmem:[#allocation3 + $0x54] sm:$0xe]
      %v1135 = vld [vmem:[#allocation3 + $0x60] sm:$0xe]
      %v1136 = vld [vmem:[#allocation3 + $0x6c] sm:$0xe]
      %v1137 = vld [vmem:[#allocation3 + $0x78] sm:$0xe]
      %v1138 = vld [vmem:[#allocation3 + $0x84] sm:$0xe]
      %v1139 = vld [vmem:[#allocation3 + $0x90] sm:$0xe]
      %v1140 = vld [vmem:[#allocation3 + $0x9c] sm:$0xe]
      %v1141 = vld [vmem:[#allocation3 + $0xa8] sm:$0xe]
      %v1142 = vld [vmem:[#allocation3 + $0xb4] sm:$0xe]
      %v1175 = vunpack.c.l.b16 %v1079
      %v1176 = vunpack.c.l.b16 %v1080
      %v1177 = vunpack.c.l.b16 %v1081
      %v1178 = vunpack.c.l.b16 %v1082
      %v1179 = vunpack.c.l.b16 %v1083
      %v1180 = vunpack.c.l.b16 %v1084
      %v1181 = vunpack.c.l.b16 %v1085
      %v1182 = vunpack.c.l.b16 %v1086
      %v1183 = vunpack.c.l.b16 %v1087
      %v1184 = vunpack.c.l.b16 %v1088
      %v1185 = vunpack.c.l.b16 %v1089
      %v1186 = vunpack.c.l.b16 %v1090
      %v1187 = vunpack.c.l.b16 %v1091
      %v1188 = vunpack.c.l.b16 %v1092
      %v1189 = vunpack.c.l.b16 %v1093
      %v1190 = vunpack.c.l.b16 %v1094
      %v1191 = vunpack.c.l.b16 %v1095
      %v1192 = vunpack.c.l.b16 %v1096
      %v1193 = vunpack.c.l.b16 %v1097
      %v1194 = vunpack.c.l.b16 %v1098
      %v1195 = vunpack.c.l.b16 %v1099
      %v1196 = vunpack.c.l.b16 %v1100
      %v1197 = vunpack.c.l.b16 %v1101
      %v1198 = vunpack.c.l.b16 %v1102
      %v1199 = vunpack.c.l.b16 %v1103
      %v1200 = vunpack.c.l.b16 %v1104
      %v1201 = vunpack.c.l.b16 %v1105
      %v1202 = vunpack.c.l.b16 %v1106
      %v1203 = vunpack.c.l.b16 %v1107
      %v1204 = vunpack.c.l.b16 %v1108
      %v1205 = vunpack.c.l.b16 %v1109
      %v1206 = vunpack.c.l.b16 %v1110
      %v1207 = vpack.c.b16 %v1176, %v1175
      %v1208 = vpack.c.b16 %v1178, %v1177
      %v1209 = vpack.c.b16 %v1180, %v1179
      %v1210 = vpack.c.b16 %v1182, %v1181
      %v1211 = vpack.c.b16 %v1184, %v1183
      %v1212 = vpack.c.b16 %v1186, %v1185
      %v1213 = vpack.c.b16 %v1188, %v1187
      %v1214 = vpack.c.b16 %v1190, %v1189
      %v1215 = vpack.c.b16 %v1192, %v1191
      %v1216 = vpack.c.b16 %v1194, %v1193
      %v1217 = vpack.c.b16 %v1196, %v1195
      %v1218 = vpack.c.b16 %v1198, %v1197
      %v1219 = vpack.c.b16 %v1200, %v1199
      %v1220 = vpack.c.b16 %v1202, %v1201
      %v1221 = vpack.c.b16 %v1204, %v1203
      %v1222 = vpack.c.b16 %v1206, %v1205
      %v1255 = vunpack.c.l.b16 %v1111
      %v1256 = vunpack.c.l.b16 %v1112
      %v1257 = vunpack.c.l.b16 %v1113
      %v1258 = vunpack.c.l.b16 %v1114
      %v1259 = vunpack.c.l.b16 %v1115
      %v1260 = vunpack.c.l.b16 %v1116
      %v1261 = vunpack.c.l.b16 %v1117
      %v1262 = vunpack.c.l.b16 %v1118
      %v1263 = vunpack.c.l.b16 %v1119
      %v1264 = vunpack.c.l.b16 %v1120
      %v1265 = vunpack.c.l.b16 %v1121
      %v1266 = vunpack.c.l.b16 %v1122
      %v1267 = vunpack.c.l.b16 %v1123
      %v1268 = vunpack.c.l.b16 %v1124
      %v1269 = vunpack.c.l.b16 %v1125
      %v1270 = vunpack.c.l.b16 %v1126
      %v1271 = vpack.c.b16 %v1255, %v1255
      %v1272 = vpack.c.b16 %v1256, %v1256
      %v1273 = vpack.c.b16 %v1257, %v1257
      %v1274 = vpack.c.b16 %v1258, %v1258
      %v1275 = vpack.c.b16 %v1259, %v1259
      %v1276 = vpack.c.b16 %v1260, %v1260
      %v1277 = vpack.c.b16 %v1261, %v1261
      %v1278 = vpack.c.b16 %v1262, %v1262
      %v1279 = vpack.c.b16 %v1263, %v1263
      %v1280 = vpack.c.b16 %v1264, %v1264
      %v1281 = vpack.c.b16 %v1265, %v1265
      %v1282 = vpack.c.b16 %v1266, %v1266
      %v1283 = vpack.c.b16 %v1267, %v1267
      %v1284 = vpack.c.b16 %v1268, %v1268
      %v1285 = vpack.c.b16 %v1269, %v1269
      %v1286 = vpack.c.b16 %v1270, %v1270
      %vm1287 = vsmask.f32 7424
      %v1289 = vshrl.u32 %v1207, 16
      %v1291 = vshll.u32 %v1207, 16
      %v1293 = vrot.slane %v1291, 1
      %v1294 = vor.u32 %v1289, %v1293
      %v1296 = vshll.u32 %v1271, 16
      %v1298 = vrot.slane %v1296, 1
      %v1299 = vsel %vm1287, %v1294, %v1298
      %v1301 = vshrl.u32 %v1208, 16
      %v1303 = vshll.u32 %v1208, 16
      %v1305 = vrot.slane %v1303, 1
      %v1306 = vor.u32 %v1301, %v1305
      %v1308 = vshll.u32 %v1272, 16
      %v1310 = vrot.slane %v1308, 1
      %v1311 = vsel %vm1287, %v1306, %v1310
      %v1313 = vshrl.u32 %v1209, 16
      %v1315 = vshll.u32 %v1209, 16
      %v1317 = vrot.slane %v1315, 1
      %v1318 = vor.u32 %v1313, %v1317
      %v1320 = vshll.u32 %v1273, 16
      %v1322 = vrot.slane %v1320, 1
      %v1323 = vsel %vm1287, %v1318, %v1322
      %v1325 = vshrl.u32 %v1210, 16
      %v1327 = vshll.u32 %v1210, 16
      %v1329 = vrot.slane %v1327, 1
      %v1330 = vor.u32 %v1325, %v1329
      %v1332 = vshll.u32 %v1274, 16
      %v1334 = vrot.slane %v1332, 1
      %v1335 = vsel %vm1287, %v1330, %v1334
      %v1337 = vshrl.u32 %v1211, 16
      %v1339 = vshll.u32 %v1211, 16
      %v1341 = vrot.slane %v1339, 1
      %v1342 = vor.u32 %v1337, %v1341
      %v1344 = vshll.u32 %v1275, 16
      %v1346 = vrot.slane %v1344, 1
      %v1347 = vsel %vm1287, %v1342, %v1346
      %v1349 = vshrl.u32 %v1212, 16
      %v1351 = vshll.u32 %v1212, 16
      %v1353 = vrot.slane %v1351, 1
      %v1354 = vor.u32 %v1349, %v1353
      %v1356 = vshll.u32 %v1276, 16
      %v1358 = vrot.slane %v1356, 1
      %v1359 = vsel %vm1287, %v1354, %v1358
      %v1361 = vshrl.u32 %v1213, 16
      %v1363 = vshll.u32 %v1213, 16
      %v1365 = vrot.slane %v1363, 1
      %v1366 = vor.u32 %v1361, %v1365
      %v1368 = vshll.u32 %v1277, 16
      %v1370 = vrot.slane %v1368, 1
      %v1371 = vsel %vm1287, %v1366, %v1370
      %v1373 = vshrl.u32 %v1214, 16
      %v1375 = vshll.u32 %v1214, 16
      %v1377 = vrot.slane %v1375, 1
      %v1378 = vor.u32 %v1373, %v1377
      %v1380 = vshll.u32 %v1278, 16
      %v1382 = vrot.slane %v1380, 1
      %v1383 = vsel %vm1287, %v1378, %v1382
      %v1385 = vshrl.u32 %v1215, 16
      %v1387 = vshll.u32 %v1215, 16
      %v1389 = vrot.slane %v1387, 1
      %v1390 = vor.u32 %v1385, %v1389
      %v1392 = vshll.u32 %v1279, 16
      %v1394 = vrot.slane %v1392, 1
      %v1395 = vsel %vm1287, %v1390, %v1394
      %v1397 = vshrl.u32 %v1216, 16
      %v1399 = vshll.u32 %v1216, 16
      %v1401 = vrot.slane %v1399, 1
      %v1402 = vor.u32 %v1397, %v1401
      %v1404 = vshll.u32 %v1280, 16
      %v1406 = vrot.slane %v1404, 1
      %v1407 = vsel %vm1287, %v1402, %v1406
      %v1409 = vshrl.u32 %v1217, 16
      %v1411 = vshll.u32 %v1217, 16
      %v1413 = vrot.slane %v1411, 1
      %v1414 = vor.u32 %v1409, %v1413
      %v1416 = vshll.u32 %v1281, 16
      %v1418 = vrot.slane %v1416, 1
      %v1419 = vsel %vm1287, %v1414, %v1418
      %v1421 = vshrl.u32 %v1218, 16
      %v1423 = vshll.u32 %v1218, 16
      %v1425 = vrot.slane %v1423, 1
      %v1426 = vor.u32 %v1421, %v1425
      %v1428 = vshll.u32 %v1282, 16
      %v1430 = vrot.slane %v1428, 1
      %v1431 = vsel %vm1287, %v1426, %v1430
      %v1433 = vshrl.u32 %v1219, 16
      %v1435 = vshll.u32 %v1219, 16
      %v1437 = vrot.slane %v1435, 1
      %v1438 = vor.u32 %v1433, %v1437
      %v1440 = vshll.u32 %v1283, 16
      %v1442 = vrot.slane %v1440, 1
      %v1443 = vsel %vm1287, %v1438, %v1442
      %v1445 = vshrl.u32 %v1220, 16
      %v1447 = vshll.u32 %v1220, 16
      %v1449 = vrot.slane %v1447, 1
      %v1450 = vor.u32 %v1445, %v1449
      %v1452 = vshll.u32 %v1284, 16
      %v1454 = vrot.slane %v1452, 1
      %v1455 = vsel %vm1287, %v1450, %v1454
      %v1457 = vshrl.u32 %v1221, 16
      %v1459 = vshll.u32 %v1221, 16
      %v1461 = vrot.slane %v1459, 1
      %v1462 = vor.u32 %v1457, %v1461
      %v1464 = vshll.u32 %v1285, 16
      %v1466 = vrot.slane %v1464, 1
      %v1467 = vsel %vm1287, %v1462, %v1466
      %v1469 = vshrl.u32 %v1222, 16
      %v1471 = vshll.u32 %v1222, 16
      %v1473 = vrot.slane %v1471, 1
      %v1474 = vor.u32 %v1469, %v1473
      %v1476 = vshll.u32 %v1286, 16
      %v1478 = vrot.slane %v1476, 1
      %v1479 = vsel %vm1287, %v1474, %v1478
      %v1512 = vunpack.c.l.b16 %v1127
      %v1513 = vunpack.c.l.b16 %v1128
      %v1514 = vunpack.c.l.b16 %v1129
      %v1515 = vunpack.c.l.b16 %v1130
      %v1516 = vunpack.c.l.b16 %v1131
      %v1517 = vunpack.c.l.b16 %v1132
      %v1518 = vunpack.c.l.b16 %v1133
      %v1519 = vunpack.c.l.b16 %v1134
      %v1520 = vunpack.c.l.b16 %v1135
      %v1521 = vunpack.c.l.b16 %v1136
      %v1522 = vunpack.c.l.b16 %v1137
      %v1523 = vunpack.c.l.b16 %v1138
      %v1524 = vunpack.c.l.b16 %v1139
      %v1525 = vunpack.c.l.b16 %v1140
      %v1526 = vunpack.c.l.b16 %v1141
      %v1527 = vunpack.c.l.b16 %v1142
      %v1528 = vpack.c.b16 %v1176, %v1512
      %v1529 = vpack.c.b16 %v1178, %v1513
      %v1530 = vpack.c.b16 %v1180, %v1514
      %v1531 = vpack.c.b16 %v1182, %v1515
      %v1532 = vpack.c.b16 %v1184, %v1516
      %v1533 = vpack.c.b16 %v1186, %v1517
      %v1534 = vpack.c.b16 %v1188, %v1518
      %v1535 = vpack.c.b16 %v1190, %v1519
      %v1536 = vpack.c.b16 %v1192, %v1520
      %v1537 = vpack.c.b16 %v1194, %v1521
      %v1538 = vpack.c.b16 %v1196, %v1522
      %v1539 = vpack.c.b16 %v1198, %v1523
      %v1540 = vpack.c.b16 %v1200, %v1524
      %v1541 = vpack.c.b16 %v1202, %v1525
      %v1542 = vpack.c.b16 %v1204, %v1526
      %v1543 = vpack.c.b16 %v1206, %v1527
      %vm1544 = vcmask 1046528
      %v1545 = vrot.slane %v1528, 1
      %v1546 = vrot.slane %v1271, 1
      %v1547 = vsel %vm1544, %v1545, %v1546
      %v1548 = vrot.slane %v1529, 1
      %v1549 = vrot.slane %v1272, 1
      %v1550 = vsel %vm1544, %v1548, %v1549
      %v1551 = vrot.slane %v1530, 1
      %v1552 = vrot.slane %v1273, 1
      %v1553 = vsel %vm1544, %v1551, %v1552
      %v1554 = vrot.slane %v1531, 1
      %v1555 = vrot.slane %v1274, 1
      %v1556 = vsel %vm1544, %v1554, %v1555
      %v1557 = vrot.slane %v1532, 1
      %v1558 = vrot.slane %v1275, 1
      %v1559 = vsel %vm1544, %v1557, %v1558
      %v1560 = vrot.slane %v1533, 1
      %v1561 = vrot.slane %v1276, 1
      %v1562 = vsel %vm1544, %v1560, %v1561
      %v1563 = vrot.slane %v1534, 1
      %v1564 = vrot.slane %v1277, 1
      %v1565 = vsel %vm1544, %v1563, %v1564
      %v1566 = vrot.slane %v1535, 1
      %v1567 = vrot.slane %v1278, 1
      %v1568 = vsel %vm1544, %v1566, %v1567
      %v1569 = vrot.slane %v1536, 1
      %v1570 = vrot.slane %v1279, 1
      %v1571 = vsel %vm1544, %v1569, %v1570
      %v1572 = vrot.slane %v1537, 1
      %v1573 = vrot.slane %v1280, 1
      %v1574 = vsel %vm1544, %v1572, %v1573
      %v1575 = vrot.slane %v1538, 1
      %v1576 = vrot.slane %v1281, 1
      %v1577 = vsel %vm1544, %v1575, %v1576
      %v1578 = vrot.slane %v1539, 1
      %v1579 = vrot.slane %v1282, 1
      %v1580 = vsel %vm1544, %v1578, %v1579
      %v1581 = vrot.slane %v1540, 1
      %v1582 = vrot.slane %v1283, 1
      %v1583 = vsel %vm1544, %v1581, %v1582
      %v1584 = vrot.slane %v1541, 1
      %v1585 = vrot.slane %v1284, 1
      %v1586 = vsel %vm1544, %v1584, %v1585
      %v1587 = vrot.slane %v1542, 1
      %v1588 = vrot.slane %v1285, 1
      %v1589 = vsel %vm1544, %v1587, %v1588
      %v1590 = vrot.slane %v1543, 1
      %v1591 = vrot.slane %v1286, 1
      %v1592 = vsel %vm1544, %v1590, %v1591
      %v1609 = vld [vmem:[%s3] sm:$0xf]
      %v1610 = vld [vmem:[%s3 + $0x4] sm:$0xf]
      %v1611 = vld [vmem:[%s3 + $0x8] sm:$0xf]
      %v1612 = vld [vmem:[%s3 + $0xc] sm:$0xf]
      %v1613 = vld [vmem:[%s3 + $0x10] sm:$0xf]
      %v1614 = vld [vmem:[%s3 + $0x14] sm:$0xf]
      %v1615 = vld [vmem:[%s3 + $0x18] sm:$0xf]
      %v1616 = vld [vmem:[%s3 + $0x1c] sm:$0xf]
      %v1617 = vld [vmem:[%s3 + $0x20] sm:$0xf]
      %v1618 = vld [vmem:[%s3 + $0x24] sm:$0xf]
      %v1619 = vld [vmem:[%s3 + $0x28] sm:$0xf]
      %v1620 = vld [vmem:[%s3 + $0x2c] sm:$0xf]
      %v1621 = vld [vmem:[%s3 + $0x30] sm:$0xf]
      %v1622 = vld [vmem:[%s3 + $0x34] sm:$0xf]
      %v1623 = vld [vmem:[%s3 + $0x38] sm:$0xf]
      %v1624 = vld [vmem:[%s3 + $0x3c] sm:$0xf]
      %v1625 = vld [vmem:[%s3 + $0x40] sm:$0xf]
      %v1626 = vld [vmem:[%s3 + $0x44] sm:$0xf]
      %v1627 = vld [vmem:[%s3 + $0x48] sm:$0xf]
      %v1628 = vld [vmem:[%s3 + $0x4c] sm:$0xf]
      %v1629 = vld [vmem:[%s3 + $0x50] sm:$0xf]
      %v1630 = vld [vmem:[%s3 + $0x54] sm:$0xf]
      %v1631 = vld [vmem:[%s3 + $0x58] sm:$0xf]
      %v1632 = vld [vmem:[%s3 + $0x5c] sm:$0xf]
      %v1633 = vld [vmem:[%s3 + $0x60] sm:$0xf]
      %v1634 = vld [vmem:[%s3 + $0x64] sm:$0xf]
      %v1635 = vld [vmem:[%s3 + $0x68] sm:$0xf]
      %v1636 = vld [vmem:[%s3 + $0x6c] sm:$0xf]
      %v1637 = vld [vmem:[%s3 + $0x70] sm:$0xf]
      %v1638 = vld [vmem:[%s3 + $0x74] sm:$0xf]
      %v1639 = vld [vmem:[%s3 + $0x78] sm:$0xf]
      %v1640 = vld [vmem:[%s3 + $0x7c] sm:$0xf]
      %v1641 = vld [vmem:[%s3 + $0x80] sm:$0xf]
      %v1642 = vld [vmem:[%s3 + $0x84] sm:$0xf]
      %v1643 = vld [vmem:[%s3 + $0x88] sm:$0xf]
      %v1644 = vld [vmem:[%s3 + $0x8c] sm:$0xf]
      %v1645 = vld [vmem:[%s3 + $0x90] sm:$0xf]
      %v1646 = vld [vmem:[%s3 + $0x94] sm:$0xf]
      %v1647 = vld [vmem:[%s3 + $0x98] sm:$0xf]
      %v1648 = vld [vmem:[%s3 + $0x9c] sm:$0xf]
      %v1649 = vld [vmem:[%s3 + $0xa0] sm:$0xf]
      %v1650 = vld [vmem:[%s3 + $0xa4] sm:$0xf]
      %v1651 = vld [vmem:[%s3 + $0xa8] sm:$0xf]
      %v1652 = vld [vmem:[%s3 + $0xac] sm:$0xf]
      %v1653 = vld [vmem:[%s3 + $0xb0] sm:$0xf]
      %v1654 = vld [vmem:[%s3 + $0xb4] sm:$0xf]
      %v1655 = vld [vmem:[%s3 + $0xb8] sm:$0xf]
      %v1656 = vld [vmem:[%s3 + $0xbc] sm:$0xf]
      %v1705 = vunpack.c.l.b16 %v1609
      %v1706 = vunpack.c.l.b16 %v1610
      %v1707 = vunpack.c.l.b16 %v1611
      %v1708 = vunpack.c.l.b16 %v1612
      %v1709 = vunpack.c.l.b16 %v1613
      %v1710 = vunpack.c.l.b16 %v1614
      %v1711 = vunpack.c.l.b16 %v1615
      %v1712 = vunpack.c.l.b16 %v1616
      %v1713 = vunpack.c.l.b16 %v1617
      %v1714 = vunpack.c.l.b16 %v1618
      %v1715 = vunpack.c.l.b16 %v1619
      %v1716 = vunpack.c.l.b16 %v1620
      %v1717 = vunpack.c.l.b16 %v1621
      %v1718 = vunpack.c.l.b16 %v1622
      %v1719 = vunpack.c.l.b16 %v1623
      %v1720 = vunpack.c.l.b16 %v1624
      %v1721 = vunpack.c.l.b16 %v1625
      %v1722 = vunpack.c.l.b16 %v1626
      %v1723 = vunpack.c.l.b16 %v1627
      %v1724 = vunpack.c.l.b16 %v1628
      %v1725 = vunpack.c.l.b16 %v1629
      %v1726 = vunpack.c.l.b16 %v1630
      %v1727 = vunpack.c.l.b16 %v1631
      %v1728 = vunpack.c.l.b16 %v1632
      %v1729 = vunpack.c.l.b16 %v1633
      %v1730 = vunpack.c.l.b16 %v1634
      %v1731 = vunpack.c.l.b16 %v1635
      %v1732 = vunpack.c.l.b16 %v1636
      %v1733 = vunpack.c.l.b16 %v1637
      %v1734 = vunpack.c.l.b16 %v1638
      %v1735 = vunpack.c.l.b16 %v1639
      %v1736 = vunpack.c.l.b16 %v1640
      %v1737 = vunpack.c.l.b16 %v1641
      %v1738 = vunpack.c.l.b16 %v1642
      %v1739 = vunpack.c.l.b16 %v1643
      %v1740 = vunpack.c.l.b16 %v1644
      %v1741 = vunpack.c.l.b16 %v1645
      %v1742 = vunpack.c.l.b16 %v1646
      %v1743 = vunpack.c.l.b16 %v1647
      %v1744 = vunpack.c.l.b16 %v1648
      %v1745 = vunpack.c.l.b16 %v1649
      %v1746 = vunpack.c.l.b16 %v1650
      %v1747 = vunpack.c.l.b16 %v1651
      %v1748 = vunpack.c.l.b16 %v1652
      %v1749 = vunpack.c.l.b16 %v1653
      %v1750 = vunpack.c.l.b16 %v1654
      %v1751 = vunpack.c.l.b16 %v1655
      %v1752 = vunpack.c.l.b16 %v1656
      %v1753 = vpack.c.b16 %v1706, %v1705
      %v1754 = vpack.c.b16 %v1708, %v1707
      %v1755 = vpack.c.b16 %v1710, %v1709
      %v1756 = vpack.c.b16 %v1712, %v1711
      %v1757 = vpack.c.b16 %v1714, %v1713
      %v1758 = vpack.c.b16 %v1716, %v1715
      %v1759 = vpack.c.b16 %v1718, %v1717
      %v1760 = vpack.c.b16 %v1720, %v1719
      %v1761 = vpack.c.b16 %v1722, %v1721
      %v1762 = vpack.c.b16 %v1724, %v1723
      %v1763 = vpack.c.b16 %v1726, %v1725
      %v1764 = vpack.c.b16 %v1728, %v1727
      %v1765 = vpack.c.b16 %v1730, %v1729
      %v1766 = vpack.c.b16 %v1732, %v1731
      %v1767 = vpack.c.b16 %v1734, %v1733
      %v1768 = vpack.c.b16 %v1736, %v1735
      %v1769 = vpack.c.b16 %v1738, %v1737
      %v1770 = vpack.c.b16 %v1740, %v1739
      %v1771 = vpack.c.b16 %v1742, %v1741
      %v1772 = vpack.c.b16 %v1744, %v1743
      %v1773 = vpack.c.b16 %v1746, %v1745
      %v1774 = vpack.c.b16 %v1748, %v1747
      %v1775 = vpack.c.b16 %v1750, %v1749
      %v1776 = vpack.c.b16 %v1752, %v1751
      %1801 = vmatpush.bf16.msra.mxu0 %v1760
      %1802 = vmatpush.bf16.msra.mxu0 %v1759
      %1803 = vmatpush.bf16.msra.mxu0 %v1758
      %1804 = vmatpush.bf16.msra.mxu0 %v1757
      %1805 = vmatpush.bf16.msra.mxu0 %v1756
      %1806 = vmatpush.bf16.msra.mxu0 %v1755
      %1807 = vmatpush.bf16.msra.mxu0 %v1754
      %1808 = vmatpush.bf16.msra.mxu0 %v1753
      %1809 = vmatmul.bf16.gmra.mxu0 %v1207
      %v1810 = vpop.f32.mrf.mxu0
      %v1811 = vadd.f32 0.0, %v1810
      %v1812 = vpop.f32.mrf.mxu0
      %v1813 = vadd.f32 0.0, %v1812
      %1814 = vmatmul.bf16.gmra.mxu0 %v1208
      %v1815 = vpop.f32.mrf.mxu0
      %v1816 = vadd.f32 0.0, %v1815
      %v1817 = vpop.f32.mrf.mxu0
      %v1818 = vadd.f32 0.0, %v1817
      %1819 = vmatmul.bf16.gmra.mxu0 %v1209
      %v1820 = vpop.f32.mrf.mxu0
      %v1821 = vadd.f32 0.0, %v1820
      %v1822 = vpop.f32.mrf.mxu0
      %v1823 = vadd.f32 0.0, %v1822
      %1824 = vmatmul.bf16.gmra.mxu0 %v1210
      %v1825 = vpop.f32.mrf.mxu0
      %v1826 = vadd.f32 0.0, %v1825
      %v1827 = vpop.f32.mrf.mxu0
      %v1828 = vadd.f32 0.0, %v1827
      %1829 = vmatmul.bf16.gmra.mxu0 %v1211
      %v1830 = vpop.f32.mrf.mxu0
      %v1831 = vadd.f32 0.0, %v1830
      %v1832 = vpop.f32.mrf.mxu0
      %v1833 = vadd.f32 0.0, %v1832
      %1834 = vmatmul.bf16.gmra.mxu0 %v1212
      %v1835 = vpop.f32.mrf.mxu0
      %v1836 = vadd.f32 0.0, %v1835
      %v1837 = vpop.f32.mrf.mxu0
      %v1838 = vadd.f32 0.0, %v1837
      %1839 = vmatmul.bf16.gmra.mxu0 %v1213
      %v1840 = vpop.f32.mrf.mxu0
      %v1841 = vadd.f32 0.0, %v1840
      %v1842 = vpop.f32.mrf.mxu0
      %v1843 = vadd.f32 0.0, %v1842
      %1844 = vmatmul.bf16.gmra.mxu0 %v1214
      %v1845 = vpop.f32.mrf.mxu0
      %v1846 = vadd.f32 0.0, %v1845
      %v1847 = vpop.f32.mrf.mxu0
      %v1848 = vadd.f32 0.0, %v1847
      %1849 = vmatmul.bf16.gmra.mxu0 %v1215
      %v1850 = vpop.f32.mrf.mxu0
      %v1851 = vadd.f32 0.0, %v1850
      %v1852 = vpop.f32.mrf.mxu0
      %v1853 = vadd.f32 0.0, %v1852
      %1854 = vmatmul.bf16.gmra.mxu0 %v1216
      %v1855 = vpop.f32.mrf.mxu0
      %v1856 = vadd.f32 0.0, %v1855
      %v1857 = vpop.f32.mrf.mxu0
      %v1858 = vadd.f32 0.0, %v1857
      %1859 = vmatmul.bf16.gmra.mxu0 %v1217
      %v1860 = vpop.f32.mrf.mxu0
      %v1861 = vadd.f32 0.0, %v1860
      %v1862 = vpop.f32.mrf.mxu0
      %v1863 = vadd.f32 0.0, %v1862
      %1864 = vmatmul.bf16.gmra.mxu0 %v1218
      %v1865 = vpop.f32.mrf.mxu0
      %v1866 = vadd.f32 0.0, %v1865
      %v1867 = vpop.f32.mrf.mxu0
      %v1868 = vadd.f32 0.0, %v1867
      %1869 = vmatmul.bf16.gmra.mxu0 %v1219
      %v1870 = vpop.f32.mrf.mxu0
      %v1871 = vadd.f32 0.0, %v1870
      %v1872 = vpop.f32.mrf.mxu0
      %v1873 = vadd.f32 0.0, %v1872
      %1874 = vmatmul.bf16.gmra.mxu0 %v1220
      %v1875 = vpop.f32.mrf.mxu0
      %v1876 = vadd.f32 0.0, %v1875
      %v1877 = vpop.f32.mrf.mxu0
      %v1878 = vadd.f32 0.0, %v1877
      %1879 = vmatmul.bf16.gmra.mxu0 %v1221
      %v1880 = vpop.f32.mrf.mxu0
      %v1881 = vadd.f32 0.0, %v1880
      %v1882 = vpop.f32.mrf.mxu0
      %v1883 = vadd.f32 0.0, %v1882
      %1884 = vmatmul.bf16.gmra.mxu0 %v1222
      %v1885 = vpop.f32.mrf.mxu0
      %v1886 = vadd.f32 0.0, %v1885
      %v1887 = vpop.f32.mrf.mxu0
      %v1888 = vadd.f32 0.0, %v1887
      %1889 = vdwg.mxu0
      %1890 = vmatpush.bf16.msra.mxu0 %v1768
      %1891 = vmatpush.bf16.msra.mxu0 %v1767
      %1892 = vmatpush.bf16.msra.mxu0 %v1766
      %1893 = vmatpush.bf16.msra.mxu0 %v1765
      %1894 = vmatpush.bf16.msra.mxu0 %v1764
      %1895 = vmatpush.bf16.msra.mxu0 %v1763
      %1896 = vmatpush.bf16.msra.mxu0 %v1762
      %1897 = vmatpush.bf16.msra.mxu0 %v1761
      %1898 = vmatmul.bf16.gmra.mxu0 %v1299
      %v1899 = vpop.f32.mrf.mxu0
      %v1900 = vadd.f32 %v1811, %v1899
      %v1901 = vpop.f32.mrf.mxu0
      %v1902 = vadd.f32 %v1813, %v1901
      %1903 = vmatmul.bf16.gmra.mxu0 %v1311
      %v1904 = vpop.f32.mrf.mxu0
      %v1905 = vadd.f32 %v1816, %v1904
      %v1906 = vpop.f32.mrf.mxu0
      %v1907 = vadd.f32 %v1818, %v1906
      %1908 = vmatmul.bf16.gmra.mxu0 %v1323
      %v1909 = vpop.f32.mrf.mxu0
      %v1910 = vadd.f32 %v1821, %v1909
      %v1911 = vpop.f32.mrf.mxu0
      %v1912 = vadd.f32 %v1823, %v1911
      %1913 = vmatmul.bf16.gmra.mxu0 %v1335
      %v1914 = vpop.f32.mrf.mxu0
      %v1915 = vadd.f32 %v1826, %v1914
      %v1916 = vpop.f32.mrf.mxu0
      %v1917 = vadd.f32 %v1828, %v1916
      %1918 = vmatmul.bf16.gmra.mxu0 %v1347
      %v1919 = vpop.f32.mrf.mxu0
      %v1920 = vadd.f32 %v1831, %v1919
      %v1921 = vpop.f32.mrf.mxu0
      %v1922 = vadd.f32 %v1833, %v1921
      %1923 = vmatmul.bf16.gmra.mxu0 %v1359
      %v1924 = vpop.f32.mrf.mxu0
      %v1925 = vadd.f32 %v1836, %v1924
      %v1926 = vpop.f32.mrf.mxu0
      %v1927 = vadd.f32 %v1838, %v1926
      %1928 = vmatmul.bf16.gmra.mxu0 %v1371
      %v1929 = vpop.f32.mrf.mxu0
      %v1930 = vadd.f32 %v1841, %v1929
      %v1931 = vpop.f32.mrf.mxu0
      %v1932 = vadd.f32 %v1843, %v1931
      %1933 = vmatmul.bf16.gmra.mxu0 %v1383
      %v1934 = vpop.f32.mrf.mxu0
      %v1935 = vadd.f32 %v1846, %v1934
      %v1936 = vpop.f32.mrf.mxu0
      %v1937 = vadd.f32 %v1848, %v1936
      %1938 = vmatmul.bf16.gmra.mxu0 %v1395
      %v1939 = vpop.f32.mrf.mxu0
      %v1940 = vadd.f32 %v1851, %v1939
      %v1941 = vpop.f32.mrf.mxu0
      %v1942 = vadd.f32 %v1853, %v1941
      %1943 = vmatmul.bf16.gmra.mxu0 %v1407
      %v1944 = vpop.f32.mrf.mxu0
      %v1945 = vadd.f32 %v1856, %v1944
      %v1946 = vpop.f32.mrf.mxu0
      %v1947 = vadd.f32 %v1858, %v1946
      %1948 = vmatmul.bf16.gmra.mxu0 %v1419
      %v1949 = vpop.f32.mrf.mxu0
      %v1950 = vadd.f32 %v1861, %v1949
      %v1951 = vpop.f32.mrf.mxu0
      %v1952 = vadd.f32 %v1863, %v1951
      %1953 = vmatmul.bf16.gmra.mxu0 %v1431
      %v1954 = vpop.f32.mrf.mxu0
      %v1955 = vadd.f32 %v1866, %v1954
      %v1956 = vpop.f32.mrf.mxu0
      %v1957 = vadd.f32 %v1868, %v1956
      %1958 = vmatmul.bf16.gmra.mxu0 %v1443
      %v1959 = vpop.f32.mrf.mxu0
      %v1960 = vadd.f32 %v1871, %v1959
      %v1961 = vpop.f32.mrf.mxu0
      %v1962 = vadd.f32 %v1873, %v1961
      %1963 = vmatmul.bf16.gmra.mxu0 %v1455
      %v1964 = vpop.f32.mrf.mxu0
      %v1965 = vadd.f32 %v1876, %v1964
      %v1966 = vpop.f32.mrf.mxu0
      %v1967 = vadd.f32 %v1878, %v1966
      %1968 = vmatmul.bf16.gmra.mxu0 %v1467
      %v1969 = vpop.f32.mrf.mxu0
      %v1970 = vadd.f32 %v1881, %v1969
      %v1971 = vpop.f32.mrf.mxu0
      %v1972 = vadd.f32 %v1883, %v1971
      %1973 = vmatmul.bf16.gmra.mxu0 %v1479
      %v1974 = vpop.f32.mrf.mxu0
      %v1975 = vadd.f32 %v1886, %v1974
      %v1976 = vpop.f32.mrf.mxu0
      %v1977 = vadd.f32 %v1888, %v1976
      %1978 = vdwg.mxu0
      %1979 = vmatpush.bf16.msra.mxu0 %v1776
      %1980 = vmatpush.bf16.msra.mxu0 %v1775
      %1981 = vmatpush.bf16.msra.mxu0 %v1774
      %1982 = vmatpush.bf16.msra.mxu0 %v1773
      %1983 = vmatpush.bf16.msra.mxu0 %v1772
      %1984 = vmatpush.bf16.msra.mxu0 %v1771
      %1985 = vmatpush.bf16.msra.mxu0 %v1770
      %1986 = vmatpush.bf16.msra.mxu0 %v1769
      %1987 = vmatmul.bf16.gmra.mxu0 %v1547
      %v1988 = vpop.f32.mrf.mxu0
      %v1989 = vadd.f32 %v1900, %v1988
      %v1990 = vpop.f32.mrf.mxu0
      %v1991 = vadd.f32 %v1902, %v1990
      %1992 = vmatmul.bf16.gmra.mxu0 %v1550
      %v1993 = vpop.f32.mrf.mxu0
      %v1994 = vadd.f32 %v1905, %v1993
      %v1995 = vpop.f32.mrf.mxu0
      %v1996 = vadd.f32 %v1907, %v1995
      %1997 = vmatmul.bf16.gmra.mxu0 %v1553
      %v1998 = vpop.f32.mrf.mxu0
      %v1999 = vadd.f32 %v1910, %v1998
      %v2000 = vpop.f32.mrf.mxu0
      %v2001 = vadd.f32 %v1912, %v2000
      %2002 = vmatmul.bf16.gmra.mxu0 %v1556
      %v2003 = vpop.f32.mrf.mxu0
      %v2004 = vadd.f32 %v1915, %v2003
      %v2005 = vpop.f32.mrf.mxu0
      %v2006 = vadd.f32 %v1917, %v2005
      %2007 = vmatmul.bf16.gmra.mxu0 %v1559
      %v2008 = vpop.f32.mrf.mxu0
      %v2009 = vadd.f32 %v1920, %v2008
      %v2010 = vpop.f32.mrf.mxu0
      %v2011 = vadd.f32 %v1922, %v2010
      %2012 = vmatmul.bf16.gmra.mxu0 %v1562
      %v2013 = vpop.f32.mrf.mxu0
      %v2014 = vadd.f32 %v1925, %v2013
      %v2015 = vpop.f32.mrf.mxu0
      %v2016 = vadd.f32 %v1927, %v2015
      %2017 = vmatmul.bf16.gmra.mxu0 %v1565
      %v2018 = vpop.f32.mrf.mxu0
      %v2019 = vadd.f32 %v1930, %v2018
      %v2020 = vpop.f32.mrf.mxu0
      %v2021 = vadd.f32 %v1932, %v2020
      %2022 = vmatmul.bf16.gmra.mxu0 %v1568
      %v2023 = vpop.f32.mrf.mxu0
      %v2024 = vadd.f32 %v1935, %v2023
      %v2025 = vpop.f32.mrf.mxu0
      %v2026 = vadd.f32 %v1937, %v2025
      %2027 = vmatmul.bf16.gmra.mxu0 %v1571
      %v2028 = vpop.f32.mrf.mxu0
      %v2029 = vadd.f32 %v1940, %v2028
      %v2030 = vpop.f32.mrf.mxu0
      %v2031 = vadd.f32 %v1942, %v2030
      %2032 = vmatmul.bf16.gmra.mxu0 %v1574
      %v2033 = vpop.f32.mrf.mxu0
      %v2034 = vadd.f32 %v1945, %v2033
      %v2035 = vpop.f32.mrf.mxu0
      %v2036 = vadd.f32 %v1947, %v2035
      %2037 = vmatmul.bf16.gmra.mxu0 %v1577
      %v2038 = vpop.f32.mrf.mxu0
      %v2039 = vadd.f32 %v1950, %v2038
      %v2040 = vpop.f32.mrf.mxu0
      %v2041 = vadd.f32 %v1952, %v2040
      %2042 = vmatmul.bf16.gmra.mxu0 %v1580
      %v2043 = vpop.f32.mrf.mxu0
      %v2044 = vadd.f32 %v1955, %v2043
      %v2045 = vpop.f32.mrf.mxu0
      %v2046 = vadd.f32 %v1957, %v2045
      %2047 = vmatmul.bf16.gmra.mxu0 %v1583
      %v2048 = vpop.f32.mrf.mxu0
      %v2049 = vadd.f32 %v1960, %v2048
      %v2050 = vpop.f32.mrf.mxu0
      %v2051 = vadd.f32 %v1962, %v2050
      %2052 = vmatmul.bf16.gmra.mxu0 %v1586
      %v2053 = vpop.f32.mrf.mxu0
      %v2054 = vadd.f32 %v1965, %v2053
      %v2055 = vpop.f32.mrf.mxu0
      %v2056 = vadd.f32 %v1967, %v2055
      %2057 = vmatmul.bf16.gmra.mxu0 %v1589
      %v2058 = vpop.f32.mrf.mxu0
      %v2059 = vadd.f32 %v1970, %v2058
      %v2060 = vpop.f32.mrf.mxu0
      %v2061 = vadd.f32 %v1972, %v2060
      %2062 = vmatmul.bf16.gmra.mxu0 %v1592
      %v2063 = vpop.f32.mrf.mxu0
      %v2064 = vadd.f32 %v1975, %v2063
      %v2065 = vpop.f32.mrf.mxu0
      %v2066 = vadd.f32 %v1977, %v2065
      %2067 = vdwg.mxu0
      %2068 = vst [vmem:[#allocation4] sm:$0xff] %v1989
      %2069 = vst [vmem:[#allocation4 + $0x8] sm:$0xff] %v1991
      %2070 = vst [vmem:[#allocation4 + $0x10] sm:$0xff] %v1994
      %2071 = vst [vmem:[#allocation4 + $0x18] sm:$0xff] %v1996
      %2072 = vst [vmem:[#allocation4 + $0x20] sm:$0xff] %v1999
      %2073 = vst [vmem:[#allocation4 + $0x28] sm:$0xff] %v2001
      %2074 = vst [vmem:[#allocation4 + $0x30] sm:$0xff] %v2004
      %2075 = vst [vmem:[#allocation4 + $0x38] sm:$0xff] %v2006
      %2076 = vst [vmem:[#allocation4 + $0x40] sm:$0xff] %v2009
      %2077 = vst [vmem:[#allocation4 + $0x48] sm:$0xff] %v2011
      %2078 = vst [vmem:[#allocation4 + $0x50] sm:$0xff] %v2014
      %2079 = vst [vmem:[#allocation4 + $0x58] sm:$0xff] %v2016
      %2080 = vst [vmem:[#allocation4 + $0x60] sm:$0xff] %v2019
      %2081 = vst [vmem:[#allocation4 + $0x68] sm:$0xff] %v2021
      %2082 = vst [vmem:[#allocation4 + $0x70] sm:$0xff] %v2024
      %2083 = vst [vmem:[#allocation4 + $0x78] sm:$0xff] %v2026
      %2084 = vst [vmem:[#allocation4 + $0x80] sm:$0xff] %v2029
      %2085 = vst [vmem:[#allocation4 + $0x88] sm:$0xff] %v2031
      %2086 = vst [vmem:[#allocation4 + $0x90] sm:$0xff] %v2034
      %2087 = vst [vmem:[#allocation4 + $0x98] sm:$0xff] %v2036
      %2088 = vst [vmem:[#allocation4 + $0xa0] sm:$0xff] %v2039
      %2089 = vst [vmem:[#allocation4 + $0xa8] sm:$0xff] %v2041
      %2090 = vst [vmem:[#allocation4 + $0xb0] sm:$0xff] %v2044
      %2091 = vst [vmem:[#allocation4 + $0xb8] sm:$0xff] %v2046
      %2092 = vst [vmem:[#allocation4 + $0xc0] sm:$0xff] %v2049
      %2093 = vst [vmem:[#allocation4 + $0xc8] sm:$0xff] %v2051
      %2094 = vst [vmem:[#allocation4 + $0xd0] sm:$0xff] %v2054
      %2095 = vst [vmem:[#allocation4 + $0xd8] sm:$0xff] %v2056
      %2096 = vst [vmem:[#allocation4 + $0xe0] sm:$0xff] %v2059
      %2097 = vst [vmem:[#allocation4 + $0xe8] sm:$0xff] %v2061
      %2098 = vst [vmem:[#allocation4 + $0xf0] sm:$0xff] %v2064
      %2099 = vst [vmem:[#allocation4 + $0xf8] sm:$0xff] %v2066
      %v2100 = vld [vmem:[#allocation4] sm:$0xff]
      %v2101 = vld [vmem:[#allocation4 + $0x8] sm:$0xff]
      %v2102 = vld [vmem:[#allocation4 + $0x10] sm:$0xff]
      %v2103 = vld [vmem:[#allocation4 + $0x18] sm:$0xff]
      %v2104 = vld [vmem:[#allocation4 + $0x20] sm:$0xff]
      %v2105 = vld [vmem:[#allocation4 + $0x28] sm:$0xff]
      %v2106 = vld [vmem:[#allocation4 + $0x30] sm:$0xff]
      %v2107 = vld [vmem:[#allocation4 + $0x38] sm:$0xff]
      %v2108 = vld [vmem:[#allocation4 + $0x40] sm:$0xff]
      %v2109 = vld [vmem:[#allocation4 + $0x48] sm:$0xff]
      %v2110 = vld [vmem:[#allocation4 + $0x50] sm:$0xff]
      %v2111 = vld [vmem:[#allocation4 + $0x58] sm:$0xff]
      %v2112 = vld [vmem:[#allocation4 + $0x60] sm:$0xff]
      %v2113 = vld [vmem:[#allocation4 + $0x68] sm:$0xff]
      %v2114 = vld [vmem:[#allocation4 + $0x70] sm:$0xff]
      %v2115 = vld [vmem:[#allocation4 + $0x78] sm:$0xff]
      %v2116 = vld [vmem:[#allocation4 + $0x80] sm:$0xff]
      %v2117 = vld [vmem:[#allocation4 + $0x88] sm:$0xff]
      %v2118 = vld [vmem:[#allocation4 + $0x90] sm:$0xff]
      %v2119 = vld [vmem:[#allocation4 + $0x98] sm:$0xff]
      %v2120 = vld [vmem:[#allocation4 + $0xa0] sm:$0xff]
      %v2121 = vld [vmem:[#allocation4 + $0xa8] sm:$0xff]
      %v2122 = vld [vmem:[#allocation4 + $0xb0] sm:$0xff]
      %v2123 = vld [vmem:[#allocation4 + $0xb8] sm:$0xff]
      %v2124 = vld [vmem:[#allocation4 + $0xc0] sm:$0xff]
      %v2125 = vld [vmem:[#allocation4 + $0xc8] sm:$0xff]
      %v2126 = vld [vmem:[#allocation4 + $0xd0] sm:$0xff]
      %v2127 = vld [vmem:[#allocation4 + $0xd8] sm:$0xff]
      %v2128 = vld [vmem:[#allocation4 + $0xe0] sm:$0xff]
      %v2129 = vld [vmem:[#allocation4 + $0xe8] sm:$0xff]
      %v2130 = vld [vmem:[#allocation4 + $0xf0] sm:$0xff]
      %v2131 = vld [vmem:[#allocation4 + $0xf8] sm:$0xff]
      %s2132 = scalar_lea.vmem [#allocation3], 12
      %v2133 = vld [vmem:[%s2132] sm:$0xf]
      %v2134 = vld [vmem:[%s2132 + $0x4] sm:$0xf]
      %v2135 = vld [vmem:[%s2132 + $0xc] sm:$0xf]
      %v2136 = vld [vmem:[%s2132 + $0x10] sm:$0xf]
      %v2137 = vld [vmem:[%s2132 + $0x18] sm:$0xf]
      %v2138 = vld [vmem:[%s2132 + $0x1c] sm:$0xf]
      %v2139 = vld [vmem:[%s2132 + $0x24] sm:$0xf]
      %v2140 = vld [vmem:[%s2132 + $0x28] sm:$0xf]
      %v2141 = vld [vmem:[%s2132 + $0x30] sm:$0xf]
      %v2142 = vld [vmem:[%s2132 + $0x34] sm:$0xf]
      %v2143 = vld [vmem:[%s2132 + $0x3c] sm:$0xf]
      %v2144 = vld [vmem:[%s2132 + $0x40] sm:$0xf]
      %v2145 = vld [vmem:[%s2132 + $0x48] sm:$0xf]
      %v2146 = vld [vmem:[%s2132 + $0x4c] sm:$0xf]
      %v2147 = vld [vmem:[%s2132 + $0x54] sm:$0xf]
      %v2148 = vld [vmem:[%s2132 + $0x58] sm:$0xf]
      %v2149 = vld [vmem:[%s2132 + $0x60] sm:$0xf]
      %v2150 = vld [vmem:[%s2132 + $0x64] sm:$0xf]
      %v2151 = vld [vmem:[%s2132 + $0x6c] sm:$0xf]
      %v2152 = vld [vmem:[%s2132 + $0x70] sm:$0xf]
      %v2153 = vld [vmem:[%s2132 + $0x78] sm:$0xf]
      %v2154 = vld [vmem:[%s2132 + $0x7c] sm:$0xf]
      %v2155 = vld [vmem:[%s2132 + $0x84] sm:$0xf]
      %v2156 = vld [vmem:[%s2132 + $0x88] sm:$0xf]
      %v2157 = vld [vmem:[%s2132 + $0x90] sm:$0xf]
      %v2158 = vld [vmem:[%s2132 + $0x94] sm:$0xf]
      %v2159 = vld [vmem:[%s2132 + $0x9c] sm:$0xf]
      %v2160 = vld [vmem:[%s2132 + $0xa0] sm:$0xf]
      %v2161 = vld [vmem:[%s2132 + $0xa8] sm:$0xf]
      %v2162 = vld [vmem:[%s2132 + $0xac] sm:$0xf]
      %v2163 = vld [vmem:[%s2132 + $0xb4] sm:$0xf]
      %v2164 = vld [vmem:[%s2132 + $0xb8] sm:$0xf]
      %v2165 = vld [vmem:[%s2132 + $0x8] sm:$0x1]
      %v2166 = vld [vmem:[%s2132 + $0x14] sm:$0x1]
      %v2167 = vld [vmem:[%s2132 + $0x20] sm:$0x1]
      %v2168 = vld [vmem:[%s2132 + $0x2c] sm:$0x1]
      %v2169 = vld [vmem:[%s2132 + $0x38] sm:$0x1]
      %v2170 = vld [vmem:[%s2132 + $0x44] sm:$0x1]
      %v2171 = vld [vmem:[%s2132 + $0x50] sm:$0x1]
      %v2172 = vld [vmem:[%s2132 + $0x5c] sm:$0x1]
      %v2173 = vld [vmem:[%s2132 + $0x68] sm:$0x1]
      %v2174 = vld [vmem:[%s2132 + $0x74] sm:$0x1]
      %v2175 = vld [vmem:[%s2132 + $0x80] sm:$0x1]
      %v2176 = vld [vmem:[%s2132 + $0x8c] sm:$0x1]
      %v2177 = vld [vmem:[%s2132 + $0x98] sm:$0x1]
      %v2178 = vld [vmem:[%s2132 + $0xa4] sm:$0x1]
      %v2179 = vld [vmem:[%s2132 + $0xb0] sm:$0x1]
      %v2180 = vld [vmem:[%s2132 + $0xbc] sm:$0x1]
      %v2181 = vld [vmem:[%s2132] sm:$0xe]
      %v2182 = vld [vmem:[%s2132 + $0xc] sm:$0xe]
      %v2183 = vld [vmem:[%s2132 + $0x18] sm:$0xe]
      %v2184 = vld [vmem:[%s2132 + $0x24] sm:$0xe]
      %v2185 = vld [vmem:[%s2132 + $0x30] sm:$0xe]
      %v2186 = vld [vmem:[%s2132 + $0x3c] sm:$0xe]
      %v2187 = vld [vmem:[%s2132 + $0x48] sm:$0xe]
      %v2188 = vld [vmem:[%s2132 + $0x54] sm:$0xe]
      %v2189 = vld [vmem:[%s2132 + $0x60] sm:$0xe]
      %v2190 = vld [vmem:[%s2132 + $0x6c] sm:$0xe]
      %v2191 = vld [vmem:[%s2132 + $0x78] sm:$0xe]
      %v2192 = vld [vmem:[%s2132 + $0x84] sm:$0xe]
      %v2193 = vld [vmem:[%s2132 + $0x90] sm:$0xe]
      %v2194 = vld [vmem:[%s2132 + $0x9c] sm:$0xe]
      %v2195 = vld [vmem:[%s2132 + $0xa8] sm:$0xe]
      %v2196 = vld [vmem:[%s2132 + $0xb4] sm:$0xe]
      %v2229 = vunpack.c.l.b16 %v2133
      %v2230 = vunpack.c.l.b16 %v2134
      %v2231 = vunpack.c.l.b16 %v2135
      %v2232 = vunpack.c.l.b16 %v2136
      %v2233 = vunpack.c.l.b16 %v2137
      %v2234 = vunpack.c.l.b16 %v2138
      %v2235 = vunpack.c.l.b16 %v2139
      %v2236 = vunpack.c.l.b16 %v2140
      %v2237 = vunpack.c.l.b16 %v2141
      %v2238 = vunpack.c.l.b16 %v2142
      %v2239 = vunpack.c.l.b16 %v2143
      %v2240 = vunpack.c.l.b16 %v2144
      %v2241 = vunpack.c.l.b16 %v2145
      %v2242 = vunpack.c.l.b16 %v2146
      %v2243 = vunpack.c.l.b16 %v2147
      %v2244 = vunpack.c.l.b16 %v2148
      %v2245 = vunpack.c.l.b16 %v2149
      %v2246 = vunpack.c.l.b16 %v2150
      %v2247 = vunpack.c.l.b16 %v2151
      %v2248 = vunpack.c.l.b16 %v2152
      %v2249 = vunpack.c.l.b16 %v2153
      %v2250 = vunpack.c.l.b16 %v2154
      %v2251 = vunpack.c.l.b16 %v2155
      %v2252 = vunpack.c.l.b16 %v2156
      %v2253 = vunpack.c.l.b16 %v2157
      %v2254 = vunpack.c.l.b16 %v2158
      %v2255 = vunpack.c.l.b16 %v2159
      %v2256 = vunpack.c.l.b16 %v2160
      %v2257 = vunpack.c.l.b16 %v2161
      %v2258 = vunpack.c.l.b16 %v2162
      %v2259 = vunpack.c.l.b16 %v2163
      %v2260 = vunpack.c.l.b16 %v2164
      %v2261 = vpack.c.b16 %v2230, %v2229
      %v2262 = vpack.c.b16 %v2232, %v2231
      %v2263 = vpack.c.b16 %v2234, %v2233
      %v2264 = vpack.c.b16 %v2236, %v2235
      %v2265 = vpack.c.b16 %v2238, %v2237
      %v2266 = vpack.c.b16 %v2240, %v2239
      %v2267 = vpack.c.b16 %v2242, %v2241
      %v2268 = vpack.c.b16 %v2244, %v2243
      %v2269 = vpack.c.b16 %v2246, %v2245
      %v2270 = vpack.c.b16 %v2248, %v2247
      %v2271 = vpack.c.b16 %v2250, %v2249
      %v2272 = vpack.c.b16 %v2252, %v2251
      %v2273 = vpack.c.b16 %v2254, %v2253
      %v2274 = vpack.c.b16 %v2256, %v2255
      %v2275 = vpack.c.b16 %v2258, %v2257
      %v2276 = vpack.c.b16 %v2260, %v2259
      %v2309 = vunpack.c.l.b16 %v2165
      %v2310 = vunpack.c.l.b16 %v2166
      %v2311 = vunpack.c.l.b16 %v2167
      %v2312 = vunpack.c.l.b16 %v2168
      %v2313 = vunpack.c.l.b16 %v2169
      %v2314 = vunpack.c.l.b16 %v2170
      %v2315 = vunpack.c.l.b16 %v2171
      %v2316 = vunpack.c.l.b16 %v2172
      %v2317 = vunpack.c.l.b16 %v2173
      %v2318 = vunpack.c.l.b16 %v2174
      %v2319 = vunpack.c.l.b16 %v2175
      %v2320 = vunpack.c.l.b16 %v2176
      %v2321 = vunpack.c.l.b16 %v2177
      %v2322 = vunpack.c.l.b16 %v2178
      %v2323 = vunpack.c.l.b16 %v2179
      %v2324 = vunpack.c.l.b16 %v2180
      %v2325 = vpack.c.b16 %v2309, %v2309
      %v2326 = vpack.c.b16 %v2310, %v2310
      %v2327 = vpack.c.b16 %v2311, %v2311
      %v2328 = vpack.c.b16 %v2312, %v2312
      %v2329 = vpack.c.b16 %v2313, %v2313
      %v2330 = vpack.c.b16 %v2314, %v2314
      %v2331 = vpack.c.b16 %v2315, %v2315
      %v2332 = vpack.c.b16 %v2316, %v2316
      %v2333 = vpack.c.b16 %v2317, %v2317
      %v2334 = vpack.c.b16 %v2318, %v2318
      %v2335 = vpack.c.b16 %v2319, %v2319
      %v2336 = vpack.c.b16 %v2320, %v2320
      %v2337 = vpack.c.b16 %v2321, %v2321
      %v2338 = vpack.c.b16 %v2322, %v2322
      %v2339 = vpack.c.b16 %v2323, %v2323
      %v2340 = vpack.c.b16 %v2324, %v2324
      %v2342 = vshrl.u32 %v2261, 16
      %v2344 = vshll.u32 %v2261, 16
      %v2346 = vrot.slane %v2344, 1
      %v2347 = vor.u32 %v2342, %v2346
      %v2349 = vshll.u32 %v2325, 16
      %v2351 = vrot.slane %v2349, 1
      %v2352 = vsel %vm1287, %v2347, %v2351
      %v2354 = vshrl.u32 %v2262, 16
      %v2356 = vshll.u32 %v2262, 16
      %v2358 = vrot.slane %v2356, 1
      %v2359 = vor.u32 %v2354, %v2358
      %v2361 = vshll.u32 %v2326, 16
      %v2363 = vrot.slane %v2361, 1
      %v2364 = vsel %vm1287, %v2359, %v2363
      %v2366 = vshrl.u32 %v2263, 16
      %v2368 = vshll.u32 %v2263, 16
      %v2370 = vrot.slane %v2368, 1
      %v2371 = vor.u32 %v2366, %v2370
      %v2373 = vshll.u32 %v2327, 16
      %v2375 = vrot.slane %v2373, 1
      %v2376 = vsel %vm1287, %v2371, %v2375
      %v2378 = vshrl.u32 %v2264, 16
      %v2380 = vshll.u32 %v2264, 16
      %v2382 = vrot.slane %v2380, 1
      %v2383 = vor.u32 %v2378, %v2382
      %v2385 = vshll.u32 %v2328, 16
      %v2387 = vrot.slane %v2385, 1
      %v2388 = vsel %vm1287, %v2383, %v2387
      %v2390 = vshrl.u32 %v2265, 16
      %v2392 = vshll.u32 %v2265, 16
      %v2394 = vrot.slane %v2392, 1
      %v2395 = vor.u32 %v2390, %v2394
      %v2397 = vshll.u32 %v2329, 16
      %v2399 = vrot.slane %v2397, 1
      %v2400 = vsel %vm1287, %v2395, %v2399
      %v2402 = vshrl.u32 %v2266, 16
      %v2404 = vshll.u32 %v2266, 16
      %v2406 = vrot.slane %v2404, 1
      %v2407 = vor.u32 %v2402, %v2406
      %v2409 = vshll.u32 %v2330, 16
      %v2411 = vrot.slane %v2409, 1
      %v2412 = vsel %vm1287, %v2407, %v2411
      %v2414 = vshrl.u32 %v2267, 16
      %v2416 = vshll.u32 %v2267, 16
      %v2418 = vrot.slane %v2416, 1
      %v2419 = vor.u32 %v2414, %v2418
      %v2421 = vshll.u32 %v2331, 16
      %v2423 = vrot.slane %v2421, 1
      %v2424 = vsel %vm1287, %v2419, %v2423
      %v2426 = vshrl.u32 %v2268, 16
      %v2428 = vshll.u32 %v2268, 16
      %v2430 = vrot.slane %v2428, 1
      %v2431 = vor.u32 %v2426, %v2430
      %v2433 = vshll.u32 %v2332, 16
      %v2435 = vrot.slane %v2433, 1
      %v2436 = vsel %vm1287, %v2431, %v2435
      %v2438 = vshrl.u32 %v2269, 16
      %v2440 = vshll.u32 %v2269, 16
      %v2442 = vrot.slane %v2440, 1
      %v2443 = vor.u32 %v2438, %v2442
      %v2445 = vshll.u32 %v2333, 16
      %v2447 = vrot.slane %v2445, 1
      %v2448 = vsel %vm1287, %v2443, %v2447
      %v2450 = vshrl.u32 %v2270, 16
      %v2452 = vshll.u32 %v2270, 16
      %v2454 = vrot.slane %v2452, 1
      %v2455 = vor.u32 %v2450, %v2454
      %v2457 = vshll.u32 %v2334, 16
      %v2459 = vrot.slane %v2457, 1
      %v2460 = vsel %vm1287, %v2455, %v2459
      %v2462 = vshrl.u32 %v2271, 16
      %v2464 = vshll.u32 %v2271, 16
      %v2466 = vrot.slane %v2464, 1
      %v2467 = vor.u32 %v2462, %v2466
      %v2469 = vshll.u32 %v2335, 16
      %v2471 = vrot.slane %v2469, 1
      %v2472 = vsel %vm1287, %v2467, %v2471
      %v2474 = vshrl.u32 %v2272, 16
      %v2476 = vshll.u32 %v2272, 16
      %v2478 = vrot.slane %v2476, 1
      %v2479 = vor.u32 %v2474, %v2478
      %v2481 = vshll.u32 %v2336, 16
      %v2483 = vrot.slane %v2481, 1
      %v2484 = vsel %vm1287, %v2479, %v2483
      %v2486 = vshrl.u32 %v2273, 16
      %v2488 = vshll.u32 %v2273, 16
      %v2490 = vrot.slane %v2488, 1
      %v2491 = vor.u32 %v2486, %v2490
      %v2493 = vshll.u32 %v2337, 16
      %v2495 = vrot.slane %v2493, 1
      %v2496 = vsel %vm1287, %v2491, %v2495
      %v2498 = vshrl.u32 %v2274, 16
      %v2500 = vshll.u32 %v2274, 16
      %v2502 = vrot.slane %v2500, 1
      %v2503 = vor.u32 %v2498, %v2502
      %v2505 = vshll.u32 %v2338, 16
      %v2507 = vrot.slane %v2505, 1
      %v2508 = vsel %vm1287, %v2503, %v2507
      %v2510 = vshrl.u32 %v2275, 16
      %v2512 = vshll.u32 %v2275, 16
      %v2514 = vrot.slane %v2512, 1
      %v2515 = vor.u32 %v2510, %v2514
      %v2517 = vshll.u32 %v2339, 16
      %v2519 = vrot.slane %v2517, 1
      %v2520 = vsel %vm1287, %v2515, %v2519
      %v2522 = vshrl.u32 %v2276, 16
      %v2524 = vshll.u32 %v2276, 16
      %v2526 = vrot.slane %v2524, 1
      %v2527 = vor.u32 %v2522, %v2526
      %v2529 = vshll.u32 %v2340, 16
      %v2531 = vrot.slane %v2529, 1
      %v2532 = vsel %vm1287, %v2527, %v2531
      %v2565 = vunpack.c.l.b16 %v2181
      %v2566 = vunpack.c.l.b16 %v2182
      %v2567 = vunpack.c.l.b16 %v2183
      %v2568 = vunpack.c.l.b16 %v2184
      %v2569 = vunpack.c.l.b16 %v2185
      %v2570 = vunpack.c.l.b16 %v2186
      %v2571 = vunpack.c.l.b16 %v2187
      %v2572 = vunpack.c.l.b16 %v2188
      %v2573 = vunpack.c.l.b16 %v2189
      %v2574 = vunpack.c.l.b16 %v2190
      %v2575 = vunpack.c.l.b16 %v2191
      %v2576 = vunpack.c.l.b16 %v2192
      %v2577 = vunpack.c.l.b16 %v2193
      %v2578 = vunpack.c.l.b16 %v2194
      %v2579 = vunpack.c.l.b16 %v2195
      %v2580 = vunpack.c.l.b16 %v2196
      %v2581 = vpack.c.b16 %v2230, %v2565
      %v2582 = vpack.c.b16 %v2232, %v2566
      %v2583 = vpack.c.b16 %v2234, %v2567
      %v2584 = vpack.c.b16 %v2236, %v2568
      %v2585 = vpack.c.b16 %v2238, %v2569
      %v2586 = vpack.c.b16 %v2240, %v2570
      %v2587 = vpack.c.b16 %v2242, %v2571
      %v2588 = vpack.c.b16 %v2244, %v2572
      %v2589 = vpack.c.b16 %v2246, %v2573
      %v2590 = vpack.c.b16 %v2248, %v2574
      %v2591 = vpack.c.b16 %v2250, %v2575
      %v2592 = vpack.c.b16 %v2252, %v2576
      %v2593 = vpack.c.b16 %v2254, %v2577
      %v2594 = vpack.c.b16 %v2256, %v2578
      %v2595 = vpack.c.b16 %v2258, %v2579
      %v2596 = vpack.c.b16 %v2260, %v2580
      %v2597 = vrot.slane %v2581, 1
      %v2598 = vrot.slane %v2325, 1
      %v2599 = vsel %vm1544, %v2597, %v2598
      %v2600 = vrot.slane %v2582, 1
      %v2601 = vrot.slane %v2326, 1
      %v2602 = vsel %vm1544, %v2600, %v2601
      %v2603 = vrot.slane %v2583, 1
      %v2604 = vrot.slane %v2327, 1
      %v2605 = vsel %vm1544, %v2603, %v2604
      %v2606 = vrot.slane %v2584, 1
      %v2607 = vrot.slane %v2328, 1
      %v2608 = vsel %vm1544, %v2606, %v2607
      %v2609 = vrot.slane %v2585, 1
      %v2610 = vrot.slane %v2329, 1
      %v2611 = vsel %vm1544, %v2609, %v2610
      %v2612 = vrot.slane %v2586, 1
      %v2613 = vrot.slane %v2330, 1
      %v2614 = vsel %vm1544, %v2612, %v2613
      %v2615 = vrot.slane %v2587, 1
      %v2616 = vrot.slane %v2331, 1
      %v2617 = vsel %vm1544, %v2615, %v2616
      %v2618 = vrot.slane %v2588, 1
      %v2619 = vrot.slane %v2332, 1
      %v2620 = vsel %vm1544, %v2618, %v2619
      %v2621 = vrot.slane %v2589, 1
      %v2622 = vrot.slane %v2333, 1
      %v2623 = vsel %vm1544, %v2621, %v2622
      %v2624 = vrot.slane %v2590, 1
      %v2625 = vrot.slane %v2334, 1
      %v2626 = vsel %vm1544, %v2624, %v2625
      %v2627 = vrot.slane %v2591, 1
      %v2628 = vrot.slane %v2335, 1
      %v2629 = vsel %vm1544, %v2627, %v2628
      %v2630 = vrot.slane %v2592, 1
      %v2631 = vrot.slane %v2336, 1
      %v2632 = vsel %vm1544, %v2630, %v2631
      %v2633 = vrot.slane %v2593, 1
      %v2634 = vrot.slane %v2337, 1
      %v2635 = vsel %vm1544, %v2633, %v2634
      %v2636 = vrot.slane %v2594, 1
      %v2637 = vrot.slane %v2338, 1
      %v2638 = vsel %vm1544, %v2636, %v2637
      %v2639 = vrot.slane %v2595, 1
      %v2640 = vrot.slane %v2339, 1
      %v2641 = vsel %vm1544, %v2639, %v2640
      %v2642 = vrot.slane %v2596, 1
      %v2643 = vrot.slane %v2340, 1
      %v2644 = vsel %vm1544, %v2642, %v2643
      %s2661 = scalar_lea.vmem %s3, 192
      %v2662 = vld [vmem:[%s2661] sm:$0xf]
      %v2663 = vld [vmem:[%s2661 + $0x4] sm:$0xf]
      %v2664 = vld [vmem:[%s2661 + $0x8] sm:$0xf]
      %v2665 = vld [vmem:[%s2661 + $0xc] sm:$0xf]
      %v2666 = vld [vmem:[%s2661 + $0x10] sm:$0xf]
      %v2667 = vld [vmem:[%s2661 + $0x14] sm:$0xf]
      %v2668 = vld [vmem:[%s2661 + $0x18] sm:$0xf]
      %v2669 = vld [vmem:[%s2661 + $0x1c] sm:$0xf]
      %v2670 = vld [vmem:[%s2661 + $0x20] sm:$0xf]
      %v2671 = vld [vmem:[%s2661 + $0x24] sm:$0xf]
      %v2672 = vld [vmem:[%s2661 + $0x28] sm:$0xf]
      %v2673 = vld [vmem:[%s2661 + $0x2c] sm:$0xf]
      %v2674 = vld [vmem:[%s2661 + $0x30] sm:$0xf]
      %v2675 = vld [vmem:[%s2661 + $0x34] sm:$0xf]
      %v2676 = vld [vmem:[%s2661 + $0x38] sm:$0xf]
      %v2677 = vld [vmem:[%s2661 + $0x3c] sm:$0xf]
      %v2678 = vld [vmem:[%s2661 + $0x40] sm:$0xf]
      %v2679 = vld [vmem:[%s2661 + $0x44] sm:$0xf]
      %v2680 = vld [vmem:[%s2661 + $0x48] sm:$0xf]
      %v2681 = vld [vmem:[%s2661 + $0x4c] sm:$0xf]
      %v2682 = vld [vmem:[%s2661 + $0x50] sm:$0xf]
      %v2683 = vld [vmem:[%s2661 + $0x54] sm:$0xf]
      %v2684 = vld [vmem:[%s2661 + $0x58] sm:$0xf]
      %v2685 = vld [vmem:[%s2661 + $0x5c] sm:$0xf]
      %v2686 = vld [vmem:[%s2661 + $0x60] sm:$0xf]
      %v2687 = vld [vmem:[%s2661 + $0x64] sm:$0xf]
      %v2688 = vld [vmem:[%s2661 + $0x68] sm:$0xf]
      %v2689 = vld [vmem:[%s2661 + $0x6c] sm:$0xf]
      %v2690 = vld [vmem:[%s2661 + $0x70] sm:$0xf]
      %v2691 = vld [vmem:[%s2661 + $0x74] sm:$0xf]
      %v2692 = vld [vmem:[%s2661 + $0x78] sm:$0xf]
      %v2693 = vld [vmem:[%s2661 + $0x7c] sm:$0xf]
      %v2694 = vld [vmem:[%s2661 + $0x80] sm:$0xf]
      %v2695 = vld [vmem:[%s2661 + $0x84] sm:$0xf]
      %v2696 = vld [vmem:[%s2661 + $0x88] sm:$0xf]
      %v2697 = vld [vmem:[%s2661 + $0x8c] sm:$0xf]
      %v2698 = vld [vmem:[%s2661 + $0x90] sm:$0xf]
      %v2699 = vld [vmem:[%s2661 + $0x94] sm:$0xf]
      %v2700 = vld [vmem:[%s2661 + $0x98] sm:$0xf]
      %v2701 = vld [vmem:[%s2661 + $0x9c] sm:$0xf]
      %v2702 = vld [vmem:[%s2661 + $0xa0] sm:$0xf]
      %v2703 = vld [vmem:[%s2661 + $0xa4] sm:$0xf]
      %v2704 = vld [vmem:[%s2661 + $0xa8] sm:$0xf]
      %v2705 = vld [vmem:[%s2661 + $0xac] sm:$0xf]
      %v2706 = vld [vmem:[%s2661 + $0xb0] sm:$0xf]
      %v2707 = vld [vmem:[%s2661 + $0xb4] sm:$0xf]
      %v2708 = vld [vmem:[%s2661 + $0xb8] sm:$0xf]
      %v2709 = vld [vmem:[%s2661 + $0xbc] sm:$0xf]
      %v2758 = vunpack.c.l.b16 %v2662
      %v2759 = vunpack.c.l.b16 %v2663
      %v2760 = vunpack.c.l.b16 %v2664
      %v2761 = vunpack.c.l.b16 %v2665
      %v2762 = vunpack.c.l.b16 %v2666
      %v2763 = vunpack.c.l.b16 %v2667
      %v2764 = vunpack.c.l.b16 %v2668
      %v2765 = vunpack.c.l.b16 %v2669
      %v2766 = vunpack.c.l.b16 %v2670
      %v2767 = vunpack.c.l.b16 %v2671
      %v2768 = vunpack.c.l.b16 %v2672
      %v2769 = vunpack.c.l.b16 %v2673
      %v2770 = vunpack.c.l.b16 %v2674
      %v2771 = vunpack.c.l.b16 %v2675
      %v2772 = vunpack.c.l.b16 %v2676
      %v2773 = vunpack.c.l.b16 %v2677
      %v2774 = vunpack.c.l.b16 %v2678
      %v2775 = vunpack.c.l.b16 %v2679
      %v2776 = vunpack.c.l.b16 %v2680
      %v2777 = vunpack.c.l.b16 %v2681
      %v2778 = vunpack.c.l.b16 %v2682
      %v2779 = vunpack.c.l.b16 %v2683
      %v2780 = vunpack.c.l.b16 %v2684
      %v2781 = vunpack.c.l.b16 %v2685
      %v2782 = vunpack.c.l.b16 %v2686
      %v2783 = vunpack.c.l.b16 %v2687
      %v2784 = vunpack.c.l.b16 %v2688
      %v2785 = vunpack.c.l.b16 %v2689
      %v2786 = vunpack.c.l.b16 %v2690
      %v2787 = vunpack.c.l.b16 %v2691
      %v2788 = vunpack.c.l.b16 %v2692
      %v2789 = vunpack.c.l.b16 %v2693
      %v2790 = vunpack.c.l.b16 %v2694
      %v2791 = vunpack.c.l.b16 %v2695
      %v2792 = vunpack.c.l.b16 %v2696
      %v2793 = vunpack.c.l.b16 %v2697
      %v2794 = vunpack.c.l.b16 %v2698
      %v2795 = vunpack.c.l.b16 %v2699
      %v2796 = vunpack.c.l.b16 %v2700
      %v2797 = vunpack.c.l.b16 %v2701
      %v2798 = vunpack.c.l.b16 %v2702
      %v2799 = vunpack.c.l.b16 %v2703
      %v2800 = vunpack.c.l.b16 %v2704
      %v2801 = vunpack.c.l.b16 %v2705
      %v2802 = vunpack.c.l.b16 %v2706
      %v2803 = vunpack.c.l.b16 %v2707
      %v2804 = vunpack.c.l.b16 %v2708
      %v2805 = vunpack.c.l.b16 %v2709
      %v2806 = vpack.c.b16 %v2759, %v2758
      %v2807 = vpack.c.b16 %v2761, %v2760
      %v2808 = vpack.c.b16 %v2763, %v2762
      %v2809 = vpack.c.b16 %v2765, %v2764
      %v2810 = vpack.c.b16 %v2767, %v2766
      %v2811 = vpack.c.b16 %v2769, %v2768
      %v2812 = vpack.c.b16 %v2771, %v2770
      %v2813 = vpack.c.b16 %v2773, %v2772
      %v2814 = vpack.c.b16 %v2775, %v2774
      %v2815 = vpack.c.b16 %v2777, %v2776
      %v2816 = vpack.c.b16 %v2779, %v2778
      %v2817 = vpack.c.b16 %v2781, %v2780
      %v2818 = vpack.c.b16 %v2783, %v2782
      %v2819 = vpack.c.b16 %v2785, %v2784
      %v2820 = vpack.c.b16 %v2787, %v2786
      %v2821 = vpack.c.b16 %v2789, %v2788
      %v2822 = vpack.c.b16 %v2791, %v2790
      %v2823 = vpack.c.b16 %v2793, %v2792
      %v2824 = vpack.c.b16 %v2795, %v2794
      %v2825 = vpack.c.b16 %v2797, %v2796
      %v2826 = vpack.c.b16 %v2799, %v2798
      %v2827 = vpack.c.b16 %v2801, %v2800
      %v2828 = vpack.c.b16 %v2803, %v2802
      %v2829 = vpack.c.b16 %v2805, %v2804
      %2854 = vmatpush.bf16.msra.mxu0 %v2813
      %2855 = vmatpush.bf16.msra.mxu0 %v2812
      %2856 = vmatpush.bf16.msra.mxu0 %v2811
      %2857 = vmatpush.bf16.msra.mxu0 %v2810
      %2858 = vmatpush.bf16.msra.mxu0 %v2809
      %2859 = vmatpush.bf16.msra.mxu0 %v2808
      %2860 = vmatpush.bf16.msra.mxu0 %v2807
      %2861 = vmatpush.bf16.msra.mxu0 %v2806
      %2862 = vmatmul.bf16.gmra.mxu0 %v2261
      %v2863 = vpop.f32.mrf.mxu0
      %v2864 = vadd.f32 0.0, %v2863
      %v2865 = vpop.f32.mrf.mxu0
      %v2866 = vadd.f32 0.0, %v2865
      %2867 = vmatmul.bf16.gmra.mxu0 %v2262
      %v2868 = vpop.f32.mrf.mxu0
      %v2869 = vadd.f32 0.0, %v2868
      %v2870 = vpop.f32.mrf.mxu0
      %v2871 = vadd.f32 0.0, %v2870
      %2872 = vmatmul.bf16.gmra.mxu0 %v2263
      %v2873 = vpop.f32.mrf.mxu0
      %v2874 = vadd.f32 0.0, %v2873
      %v2875 = vpop.f32.mrf.mxu0
      %v2876 = vadd.f32 0.0, %v2875
      %2877 = vmatmul.bf16.gmra.mxu0 %v2264
      %v2878 = vpop.f32.mrf.mxu0
      %v2879 = vadd.f32 0.0, %v2878
      %v2880 = vpop.f32.mrf.mxu0
      %v2881 = vadd.f32 0.0, %v2880
      %2882 = vmatmul.bf16.gmra.mxu0 %v2265
      %v2883 = vpop.f32.mrf.mxu0
      %v2884 = vadd.f32 0.0, %v2883
      %v2885 = vpop.f32.mrf.mxu0
      %v2886 = vadd.f32 0.0, %v2885
      %2887 = vmatmul.bf16.gmra.mxu0 %v2266
      %v2888 = vpop.f32.mrf.mxu0
      %v2889 = vadd.f32 0.0, %v2888
      %v2890 = vpop.f32.mrf.mxu0
      %v2891 = vadd.f32 0.0, %v2890
      %2892 = vmatmul.bf16.gmra.mxu0 %v2267
      %v2893 = vpop.f32.mrf.mxu0
      %v2894 = vadd.f32 0.0, %v2893
      %v2895 = vpop.f32.mrf.mxu0
      %v2896 = vadd.f32 0.0, %v2895
      %2897 = vmatmul.bf16.gmra.mxu0 %v2268
      %v2898 = vpop.f32.mrf.mxu0
      %v2899 = vadd.f32 0.0, %v2898
      %v2900 = vpop.f32.mrf.mxu0
      %v2901 = vadd.f32 0.0, %v2900
      %2902 = vmatmul.bf16.gmra.mxu0 %v2269
      %v2903 = vpop.f32.mrf.mxu0
      %v2904 = vadd.f32 0.0, %v2903
      %v2905 = vpop.f32.mrf.mxu0
      %v2906 = vadd.f32 0.0, %v2905
      %2907 = vmatmul.bf16.gmra.mxu0 %v2270
      %v2908 = vpop.f32.mrf.mxu0
      %v2909 = vadd.f32 0.0, %v2908
      %v2910 = vpop.f32.mrf.mxu0
      %v2911 = vadd.f32 0.0, %v2910
      %2912 = vmatmul.bf16.gmra.mxu0 %v2271
      %v2913 = vpop.f32.mrf.mxu0
      %v2914 = vadd.f32 0.0, %v2913
      %v2915 = vpop.f32.mrf.mxu0
      %v2916 = vadd.f32 0.0, %v2915
      %2917 = vmatmul.bf16.gmra.mxu0 %v2272
      %v2918 = vpop.f32.mrf.mxu0
      %v2919 = vadd.f32 0.0, %v2918
      %v2920 = vpop.f32.mrf.mxu0
      %v2921 = vadd.f32 0.0, %v2920
      %2922 = vmatmul.bf16.gmra.mxu0 %v2273
      %v2923 = vpop.f32.mrf.mxu0
      %v2924 = vadd.f32 0.0, %v2923
      %v2925 = vpop.f32.mrf.mxu0
      %v2926 = vadd.f32 0.0, %v2925
      %2927 = vmatmul.bf16.gmra.mxu0 %v2274
      %v2928 = vpop.f32.mrf.mxu0
      %v2929 = vadd.f32 0.0, %v2928
      %v2930 = vpop.f32.mrf.mxu0
      %v2931 = vadd.f32 0.0, %v2930
      %2932 = vmatmul.bf16.gmra.mxu0 %v2275
      %v2933 = vpop.f32.mrf.mxu0
      %v2934 = vadd.f32 0.0, %v2933
      %v2935 = vpop.f32.mrf.mxu0
      %v2936 = vadd.f32 0.0, %v2935
      %2937 = vmatmul.bf16.gmra.mxu0 %v2276
      %v2938 = vpop.f32.mrf.mxu0
      %v2939 = vadd.f32 0.0, %v2938
      %v2940 = vpop.f32.mrf.mxu0
      %v2941 = vadd.f32 0.0, %v2940
      %2942 = vdwg.mxu0
      %2943 = vmatpush.bf16.msra.mxu0 %v2821
      %2944 = vmatpush.bf16.msra.mxu0 %v2820
      %2945 = vmatpush.bf16.msra.mxu0 %v2819
      %2946 = vmatpush.bf16.msra.mxu0 %v2818
      %2947 = vmatpush.bf16.msra.mxu0 %v2817
      %2948 = vmatpush.bf16.msra.mxu0 %v2816
      %2949 = vmatpush.bf16.msra.mxu0 %v2815
      %2950 = vmatpush.bf16.msra.mxu0 %v2814
      %2951 = vmatmul.bf16.gmra.mxu0 %v2352
      %v2952 = vpop.f32.mrf.mxu0
      %v2953 = vadd.f32 %v2864, %v2952
      %v2954 = vpop.f32.mrf.mxu0
      %v2955 = vadd.f32 %v2866, %v2954
      %2956 = vmatmul.bf16.gmra.mxu0 %v2364
      %v2957 = vpop.f32.mrf.mxu0
      %v2958 = vadd.f32 %v2869, %v2957
      %v2959 = vpop.f32.mrf.mxu0
      %v2960 = vadd.f32 %v2871, %v2959
      %2961 = vmatmul.bf16.gmra.mxu0 %v2376
      %v2962 = vpop.f32.mrf.mxu0
      %v2963 = vadd.f32 %v2874, %v2962
      %v2964 = vpop.f32.mrf.mxu0
      %v2965 = vadd.f32 %v2876, %v2964
      %2966 = vmatmul.bf16.gmra.mxu0 %v2388
      %v2967 = vpop.f32.mrf.mxu0
      %v2968 = vadd.f32 %v2879, %v2967
      %v2969 = vpop.f32.mrf.mxu0
      %v2970 = vadd.f32 %v2881, %v2969
      %2971 = vmatmul.bf16.gmra.mxu0 %v2400
      %v2972 = vpop.f32.mrf.mxu0
      %v2973 = vadd.f32 %v2884, %v2972
      %v2974 = vpop.f32.mrf.mxu0
      %v2975 = vadd.f32 %v2886, %v2974
      %2976 = vmatmul.bf16.gmra.mxu0 %v2412
      %v2977 = vpop.f32.mrf.mxu0
      %v2978 = vadd.f32 %v2889, %v2977
      %v2979 = vpop.f32.mrf.mxu0
      %v2980 = vadd.f32 %v2891, %v2979
      %2981 = vmatmul.bf16.gmra.mxu0 %v2424
      %v2982 = vpop.f32.mrf.mxu0
      %v2983 = vadd.f32 %v2894, %v2982
      %v2984 = vpop.f32.mrf.mxu0
      %v2985 = vadd.f32 %v2896, %v2984
      %2986 = vmatmul.bf16.gmra.mxu0 %v2436
      %v2987 = vpop.f32.mrf.mxu0
      %v2988 = vadd.f32 %v2899, %v2987
      %v2989 = vpop.f32.mrf.mxu0
      %v2990 = vadd.f32 %v2901, %v2989
      %2991 = vmatmul.bf16.gmra.mxu0 %v2448
      %v2992 = vpop.f32.mrf.mxu0
      %v2993 = vadd.f32 %v2904, %v2992
      %v2994 = vpop.f32.mrf.mxu0
      %v2995 = vadd.f32 %v2906, %v2994
      %2996 = vmatmul.bf16.gmra.mxu0 %v2460
      %v2997 = vpop.f32.mrf.mxu0
      %v2998 = vadd.f32 %v2909, %v2997
      %v2999 = vpop.f32.mrf.mxu0
      %v3000 = vadd.f32 %v2911, %v2999
      %3001 = vmatmul.bf16.gmra.mxu0 %v2472
      %v3002 = vpop.f32.mrf.mxu0
      %v3003 = vadd.f32 %v2914, %v3002
      %v3004 = vpop.f32.mrf.mxu0
      %v3005 = vadd.f32 %v2916, %v3004
      %3006 = vmatmul.bf16.gmra.mxu0 %v2484
      %v3007 = vpop.f32.mrf.mxu0
      %v3008 = vadd.f32 %v2919, %v3007
      %v3009 = vpop.f32.mrf.mxu0
      %v3010 = vadd.f32 %v2921, %v3009
      %3011 = vmatmul.bf16.gmra.mxu0 %v2496
      %v3012 = vpop.f32.mrf.mxu0
      %v3013 = vadd.f32 %v2924, %v3012
      %v3014 = vpop.f32.mrf.mxu0
      %v3015 = vadd.f32 %v2926, %v3014
      %3016 = vmatmul.bf16.gmra.mxu0 %v2508
      %v3017 = vpop.f32.mrf.mxu0
      %v3018 = vadd.f32 %v2929, %v3017
      %v3019 = vpop.f32.mrf.mxu0
      %v3020 = vadd.f32 %v2931, %v3019
      %3021 = vmatmul.bf16.gmra.mxu0 %v2520
      %v3022 = vpop.f32.mrf.mxu0
      %v3023 = vadd.f32 %v2934, %v3022
      %v3024 = vpop.f32.mrf.mxu0
      %v3025 = vadd.f32 %v2936, %v3024
      %3026 = vmatmul.bf16.gmra.mxu0 %v2532
      %v3027 = vpop.f32.mrf.mxu0
      %v3028 = vadd.f32 %v2939, %v3027
      %v3029 = vpop.f32.mrf.mxu0
      %v3030 = vadd.f32 %v2941, %v3029
      %3031 = vdwg.mxu0
      %3032 = vmatpush.bf16.msra.mxu0 %v2829
      %3033 = vmatpush.bf16.msra.mxu0 %v2828
      %3034 = vmatpush.bf16.msra.mxu0 %v2827
      %3035 = vmatpush.bf16.msra.mxu0 %v2826
      %3036 = vmatpush.bf16.msra.mxu0 %v2825
      %3037 = vmatpush.bf16.msra.mxu0 %v2824
      %3038 = vmatpush.bf16.msra.mxu0 %v2823
      %3039 = vmatpush.bf16.msra.mxu0 %v2822
      %3040 = vmatmul.bf16.gmra.mxu0 %v2599
      %v3041 = vpop.f32.mrf.mxu0
      %v3042 = vadd.f32 %v2953, %v3041
      %v3043 = vpop.f32.mrf.mxu0
      %v3044 = vadd.f32 %v2955, %v3043
      %3045 = vmatmul.bf16.gmra.mxu0 %v2602
      %v3046 = vpop.f32.mrf.mxu0
      %v3047 = vadd.f32 %v2958, %v3046
      %v3048 = vpop.f32.mrf.mxu0
      %v3049 = vadd.f32 %v2960, %v3048
      %3050 = vmatmul.bf16.gmra.mxu0 %v2605
      %v3051 = vpop.f32.mrf.mxu0
      %v3052 = vadd.f32 %v2963, %v3051
      %v3053 = vpop.f32.mrf.mxu0
      %v3054 = vadd.f32 %v2965, %v3053
      %3055 = vmatmul.bf16.gmra.mxu0 %v2608
      %v3056 = vpop.f32.mrf.mxu0
      %v3057 = vadd.f32 %v2968, %v3056
      %v3058 = vpop.f32.mrf.mxu0
      %v3059 = vadd.f32 %v2970, %v3058
      %3060 = vmatmul.bf16.gmra.mxu0 %v2611
      %v3061 = vpop.f32.mrf.mxu0
      %v3062 = vadd.f32 %v2973, %v3061
      %v3063 = vpop.f32.mrf.mxu0
      %v3064 = vadd.f32 %v2975, %v3063
      %3065 = vmatmul.bf16.gmra.mxu0 %v2614
      %v3066 = vpop.f32.mrf.mxu0
      %v3067 = vadd.f32 %v2978, %v3066
      %v3068 = vpop.f32.mrf.mxu0
      %v3069 = vadd.f32 %v2980, %v3068
      %3070 = vmatmul.bf16.gmra.mxu0 %v2617
      %v3071 = vpop.f32.mrf.mxu0
      %v3072 = vadd.f32 %v2983, %v3071
      %v3073 = vpop.f32.mrf.mxu0
      %v3074 = vadd.f32 %v2985, %v3073
      %3075 = vmatmul.bf16.gmra.mxu0 %v2620
      %v3076 = vpop.f32.mrf.mxu0
      %v3077 = vadd.f32 %v2988, %v3076
      %v3078 = vpop.f32.mrf.mxu0
      %v3079 = vadd.f32 %v2990, %v3078
      %3080 = vmatmul.bf16.gmra.mxu0 %v2623
      %v3081 = vpop.f32.mrf.mxu0
      %v3082 = vadd.f32 %v2993, %v3081
      %v3083 = vpop.f32.mrf.mxu0
      %v3084 = vadd.f32 %v2995, %v3083
      %3085 = vmatmul.bf16.gmra.mxu0 %v2626
      %v3086 = vpop.f32.mrf.mxu0
      %v3087 = vadd.f32 %v2998, %v3086
      %v3088 = vpop.f32.mrf.mxu0
      %v3089 = vadd.f32 %v3000, %v3088
      %3090 = vmatmul.bf16.gmra.mxu0 %v2629
      %v3091 = vpop.f32.mrf.mxu0
      %v3092 = vadd.f32 %v3003, %v3091
      %v3093 = vpop.f32.mrf.mxu0
      %v3094 = vadd.f32 %v3005, %v3093
      %3095 = vmatmul.bf16.gmra.mxu0 %v2632
      %v3096 = vpop.f32.mrf.mxu0
      %v3097 = vadd.f32 %v3008, %v3096
      %v3098 = vpop.f32.mrf.mxu0
      %v3099 = vadd.f32 %v3010, %v3098
      %3100 = vmatmul.bf16.gmra.mxu0 %v2635
      %v3101 = vpop.f32.mrf.mxu0
      %v3102 = vadd.f32 %v3013, %v3101
      %v3103 = vpop.f32.mrf.mxu0
      %v3104 = vadd.f32 %v3015, %v3103
      %3105 = vmatmul.bf16.gmra.mxu0 %v2638
      %v3106 = vpop.f32.mrf.mxu0
      %v3107 = vadd.f32 %v3018, %v3106
      %v3108 = vpop.f32.mrf.mxu0
      %v3109 = vadd.f32 %v3020, %v3108
      %3110 = vmatmul.bf16.gmra.mxu0 %v2641
      %v3111 = vpop.f32.mrf.mxu0
      %v3112 = vadd.f32 %v3023, %v3111
      %v3113 = vpop.f32.mrf.mxu0
      %v3114 = vadd.f32 %v3025, %v3113
      %3115 = vmatmul.bf16.gmra.mxu0 %v2644
      %v3116 = vpop.f32.mrf.mxu0
      %v3117 = vadd.f32 %v3028, %v3116
      %v3118 = vpop.f32.mrf.mxu0
      %v3119 = vadd.f32 %v3030, %v3118
      %3120 = vdwg.mxu0
      %v3121 = vadd.f32 %v2100, %v3042
      %v3122 = vadd.f32 %v2101, %v3044
      %v3123 = vadd.f32 %v2102, %v3047
      %v3124 = vadd.f32 %v2103, %v3049
      %v3125 = vadd.f32 %v2104, %v3052
      %v3126 = vadd.f32 %v2105, %v3054
      %v3127 = vadd.f32 %v2106, %v3057
      %v3128 = vadd.f32 %v2107, %v3059
      %v3129 = vadd.f32 %v2108, %v3062
      %v3130 = vadd.f32 %v2109, %v3064
      %v3131 = vadd.f32 %v2110, %v3067
      %v3132 = vadd.f32 %v2111, %v3069
      %v3133 = vadd.f32 %v2112, %v3072
      %v3134 = vadd.f32 %v2113, %v3074
      %v3135 = vadd.f32 %v2114, %v3077
      %v3136 = vadd.f32 %v2115, %v3079
      %v3137 = vadd.f32 %v2116, %v3082
      %v3138 = vadd.f32 %v2117, %v3084
      %v3139 = vadd.f32 %v2118, %v3087
      %v3140 = vadd.f32 %v2119, %v3089
      %v3141 = vadd.f32 %v2120, %v3092
      %v3142 = vadd.f32 %v2121, %v3094
      %v3143 = vadd.f32 %v2122, %v3097
      %v3144 = vadd.f32 %v2123, %v3099
      %v3145 = vadd.f32 %v2124, %v3102
      %v3146 = vadd.f32 %v2125, %v3104
      %v3147 = vadd.f32 %v2126, %v3107
      %v3148 = vadd.f32 %v2127, %v3109
      %v3149 = vadd.f32 %v2128, %v3112
      %v3150 = vadd.f32 %v2129, %v3114
      %v3151 = vadd.f32 %v2130, %v3117
      %v3152 = vadd.f32 %v2131, %v3119
      %3153 = vst [vmem:[#allocation4] sm:$0xff] %v3121
      %3154 = vst [vmem:[#allocation4 + $0x8] sm:$0xff] %v3122
      %3155 = vst [vmem:[#allocation4 + $0x10] sm:$0xff] %v3123
      %3156 = vst [vmem:[#allocation4 + $0x18] sm:$0xff] %v3124
      %3157 = vst [vmem:[#allocation4 + $0x20] sm:$0xff] %v3125
      %3158 = vst [vmem:[#allocation4 + $0x28] sm:$0xff] %v3126
      %3159 = vst [vmem:[#allocation4 + $0x30] sm:$0xff] %v3127
      %3160 = vst [vmem:[#allocation4 + $0x38] sm:$0xff] %v3128
      %3161 = vst [vmem:[#allocation4 + $0x40] sm:$0xff] %v3129
      %3162 = vst [vmem:[#allocation4 + $0x48] sm:$0xff] %v3130
      %3163 = vst [vmem:[#allocation4 + $0x50] sm:$0xff] %v3131
      %3164 = vst [vmem:[#allocation4 + $0x58] sm:$0xff] %v3132
      %3165 = vst [vmem:[#allocation4 + $0x60] sm:$0xff] %v3133
      %3166 = vst [vmem:[#allocation4 + $0x68] sm:$0xff] %v3134
      %3167 = vst [vmem:[#allocation4 + $0x70] sm:$0xff] %v3135
      %3168 = vst [vmem:[#allocation4 + $0x78] sm:$0xff] %v3136
      %3169 = vst [vmem:[#allocation4 + $0x80] sm:$0xff] %v3137
      %3170 = vst [vmem:[#allocation4 + $0x88] sm:$0xff] %v3138
      %3171 = vst [vmem:[#allocation4 + $0x90] sm:$0xff] %v3139
      %3172 = vst [vmem:[#allocation4 + $0x98] sm:$0xff] %v3140
      %3173 = vst [vmem:[#allocation4 + $0xa0] sm:$0xff] %v3141
      %3174 = vst [vmem:[#allocation4 + $0xa8] sm:$0xff] %v3142
      %3175 = vst [vmem:[#allocation4 + $0xb0] sm:$0xff] %v3143
      %3176 = vst [vmem:[#allocation4 + $0xb8] sm:$0xff] %v3144
      %3177 = vst [vmem:[#allocation4 + $0xc0] sm:$0xff] %v3145
      %3178 = vst [vmem:[#allocation4 + $0xc8] sm:$0xff] %v3146
      %3179 = vst [vmem:[#allocation4 + $0xd0] sm:$0xff] %v3147
      %3180 = vst [vmem:[#allocation4 + $0xd8] sm:$0xff] %v3148
      %3181 = vst [vmem:[#allocation4 + $0xe0] sm:$0xff] %v3149
      %3182 = vst [vmem:[#allocation4 + $0xe8] sm:$0xff] %v3150
      %3183 = vst [vmem:[#allocation4 + $0xf0] sm:$0xff] %v3151
      %3184 = vst [vmem:[#allocation4 + $0xf8] sm:$0xff] %v3152
      %v3185 = vld [vmem:[#allocation4] sm:$0xff]
      %v3186 = vld [vmem:[#allocation4 + $0x8] sm:$0xff]
      %v3187 = vld [vmem:[#allocation4 + $0x10] sm:$0xff]
      %v3188 = vld [vmem:[#allocation4 + $0x18] sm:$0xff]
      %v3189 = vld [vmem:[#allocation4 + $0x20] sm:$0xff]
      %v3190 = vld [vmem:[#allocation4 + $0x28] sm:$0xff]
      %v3191 = vld [vmem:[#allocation4 + $0x30] sm:$0xff]
      %v3192 = vld [vmem:[#allocation4 + $0x38] sm:$0xff]
      %v3193 = vld [vmem:[#allocation4 + $0x40] sm:$0xff]
      %v3194 = vld [vmem:[#allocation4 + $0x48] sm:$0xff]
      %v3195 = vld [vmem:[#allocation4 + $0x50] sm:$0xff]
      %v3196 = vld [vmem:[#allocation4 + $0x58] sm:$0xff]
      %v3197 = vld [vmem:[#allocation4 + $0x60] sm:$0xff]
      %v3198 = vld [vmem:[#allocation4 + $0x68] sm:$0xff]
      %v3199 = vld [vmem:[#allocation4 + $0x70] sm:$0xff]
      %v3200 = vld [vmem:[#allocation4 + $0x78] sm:$0xff]
      %v3201 = vld [vmem:[#allocation4 + $0x80] sm:$0xff]
      %v3202 = vld [vmem:[#allocation4 + $0x88] sm:$0xff]
      %v3203 = vld [vmem:[#allocation4 + $0x90] sm:$0xff]
      %v3204 = vld [vmem:[#allocation4 + $0x98] sm:$0xff]
      %v3205 = vld [vmem:[#allocation4 + $0xa0] sm:$0xff]
      %v3206 = vld [vmem:[#allocation4 + $0xa8] sm:$0xff]
      %v3207 = vld [vmem:[#allocation4 + $0xb0] sm:$0xff]
      %v3208 = vld [vmem:[#allocation4 + $0xb8] sm:$0xff]
      %v3209 = vld [vmem:[#allocation4 + $0xc0] sm:$0xff]
      %v3210 = vld [vmem:[#allocation4 + $0xc8] sm:$0xff]
      %v3211 = vld [vmem:[#allocation4 + $0xd0] sm:$0xff]
      %v3212 = vld [vmem:[#allocation4 + $0xd8] sm:$0xff]
      %v3213 = vld [vmem:[#allocation4 + $0xe0] sm:$0xff]
      %v3214 = vld [vmem:[#allocation4 + $0xe8] sm:$0xff]
      %v3215 = vld [vmem:[#allocation4 + $0xf0] sm:$0xff]
      %v3216 = vld [vmem:[#allocation4 + $0xf8] sm:$0xff]
      %s3217 = scalar_lea.vmem [#allocation3], 24
      %v3218 = vld [vmem:[%s3217] sm:$0xf]
      %v3219 = vld [vmem:[%s3217 + $0x4] sm:$0xf]
      %v3220 = vld [vmem:[%s3217 + $0xc] sm:$0xf]
      %v3221 = vld [vmem:[%s3217 + $0x10] sm:$0xf]
      %v3222 = vld [vmem:[%s3217 + $0x18] sm:$0xf]
      %v3223 = vld [vmem:[%s3217 + $0x1c] sm:$0xf]
      %v3224 = vld [vmem:[%s3217 + $0x24] sm:$0xf]
      %v3225 = vld [vmem:[%s3217 + $0x28] sm:$0xf]
      %v3226 = vld [vmem:[%s3217 + $0x30] sm:$0xf]
      %v3227 = vld [vmem:[%s3217 + $0x34] sm:$0xf]
      %v3228 = vld [vmem:[%s3217 + $0x3c] sm:$0xf]
      %v3229 = vld [vmem:[%s3217 + $0x40] sm:$0xf]
      %v3230 = vld [vmem:[%s3217 + $0x48] sm:$0xf]
      %v3231 = vld [vmem:[%s3217 + $0x4c] sm:$0xf]
      %v3232 = vld [vmem:[%s3217 + $0x54] sm:$0xf]
      %v3233 = vld [vmem:[%s3217 + $0x58] sm:$0xf]
      %v3234 = vld [vmem:[%s3217 + $0x60] sm:$0xf]
      %v3235 = vld [vmem:[%s3217 + $0x64] sm:$0xf]
      %v3236 = vld [vmem:[%s3217 + $0x6c] sm:$0xf]
      %v3237 = vld [vmem:[%s3217 + $0x70] sm:$0xf]
      %v3238 = vld [vmem:[%s3217 + $0x78] sm:$0xf]
      %v3239 = vld [vmem:[%s3217 + $0x7c] sm:$0xf]
      %v3240 = vld [vmem:[%s3217 + $0x84] sm:$0xf]
      %v3241 = vld [vmem:[%s3217 + $0x88] sm:$0xf]
      %v3242 = vld [vmem:[%s3217 + $0x90] sm:$0xf]
      %v3243 = vld [vmem:[%s3217 + $0x94] sm:$0xf]
      %v3244 = vld [vmem:[%s3217 + $0x9c] sm:$0xf]
      %v3245 = vld [vmem:[%s3217 + $0xa0] sm:$0xf]
      %v3246 = vld [vmem:[%s3217 + $0xa8] sm:$0xf]
      %v3247 = vld [vmem:[%s3217 + $0xac] sm:$0xf]
      %v3248 = vld [vmem:[%s3217 + $0xb4] sm:$0xf]
      %v3249 = vld [vmem:[%s3217 + $0xb8] sm:$0xf]
      %v3250 = vld [vmem:[%s3217 + $0x8] sm:$0x1]
      %v3251 = vld [vmem:[%s3217 + $0x14] sm:$0x1]
      %v3252 = vld [vmem:[%s3217 + $0x20] sm:$0x1]
      %v3253 = vld [vmem:[%s3217 + $0x2c] sm:$0x1]
      %v3254 = vld [vmem:[%s3217 + $0x38] sm:$0x1]
      %v3255 = vld [vmem:[%s3217 + $0x44] sm:$0x1]
      %v3256 = vld [vmem:[%s3217 + $0x50] sm:$0x1]
      %v3257 = vld [vmem:[%s3217 + $0x5c] sm:$0x1]
      %v3258 = vld [vmem:[%s3217 + $0x68] sm:$0x1]
      %v3259 = vld [vmem:[%s3217 + $0x74] sm:$0x1]
      %v3260 = vld [vmem:[%s3217 + $0x80] sm:$0x1]
      %v3261 = vld [vmem:[%s3217 + $0x8c] sm:$0x1]
      %v3262 = vld [vmem:[%s3217 + $0x98] sm:$0x1]
      %v3263 = vld [vmem:[%s3217 + $0xa4] sm:$0x1]
      %v3264 = vld [vmem:[%s3217 + $0xb0] sm:$0x1]
      %v3265 = vld [vmem:[%s3217 + $0xbc] sm:$0x1]
      %v3266 = vld [vmem:[%s3217] sm:$0xe]
      %v3267 = vld [vmem:[%s3217 + $0xc] sm:$0xe]
      %v3268 = vld [vmem:[%s3217 + $0x18] sm:$0xe]
      %v3269 = vld [vmem:[%s3217 + $0x24] sm:$0xe]
      %v3270 = vld [vmem:[%s3217 + $0x30] sm:$0xe]
      %v3271 = vld [vmem:[%s3217 + $0x3c] sm:$0xe]
      %v3272 = vld [vmem:[%s3217 + $0x48] sm:$0xe]
      %v3273 = vld [vmem:[%s3217 + $0x54] sm:$0xe]
      %v3274 = vld [vmem:[%s3217 + $0x60] sm:$0xe]
      %v3275 = vld [vmem:[%s3217 + $0x6c] sm:$0xe]
      %v3276 = vld [vmem:[%s3217 + $0x78] sm:$0xe]
      %v3277 = vld [vmem:[%s3217 + $0x84] sm:$0xe]
      %v3278 = vld [vmem:[%s3217 + $0x90] sm:$0xe]
      %v3279 = vld [vmem:[%s3217 + $0x9c] sm:$0xe]
      %v3280 = vld [vmem:[%s3217 + $0xa8] sm:$0xe]
      %v3281 = vld [vmem:[%s3217 + $0xb4] sm:$0xe]
      %v3314 = vunpack.c.l.b16 %v3218
      %v3315 = vunpack.c.l.b16 %v3219
      %v3316 = vunpack.c.l.b16 %v3220
      %v3317 = vunpack.c.l.b16 %v3221
      %v3318 = vunpack.c.l.b16 %v3222
      %v3319 = vunpack.c.l.b16 %v3223
      %v3320 = vunpack.c.l.b16 %v3224
      %v3321 = vunpack.c.l.b16 %v3225
      %v3322 = vunpack.c.l.b16 %v3226
      %v3323 = vunpack.c.l.b16 %v3227
      %v3324 = vunpack.c.l.b16 %v3228
      %v3325 = vunpack.c.l.b16 %v3229
      %v3326 = vunpack.c.l.b16 %v3230
      %v3327 = vunpack.c.l.b16 %v3231
      %v3328 = vunpack.c.l.b16 %v3232
      %v3329 = vunpack.c.l.b16 %v3233
      %v3330 = vunpack.c.l.b16 %v3234
      %v3331 = vunpack.c.l.b16 %v3235
      %v3332 = vunpack.c.l.b16 %v3236
      %v3333 = vunpack.c.l.b16 %v3237
      %v3334 = vunpack.c.l.b16 %v3238
      %v3335 = vunpack.c.l.b16 %v3239
      %v3336 = vunpack.c.l.b16 %v3240
      %v3337 = vunpack.c.l.b16 %v3241
      %v3338 = vunpack.c.l.b16 %v3242
      %v3339 = vunpack.c.l.b16 %v3243
      %v3340 = vunpack.c.l.b16 %v3244
      %v3341 = vunpack.c.l.b16 %v3245
      %v3342 = vunpack.c.l.b16 %v3246
      %v3343 = vunpack.c.l.b16 %v3247
      %v3344 = vunpack.c.l.b16 %v3248
      %v3345 = vunpack.c.l.b16 %v3249
      %v3346 = vpack.c.b16 %v3315, %v3314
      %v3347 = vpack.c.b16 %v3317, %v3316
      %v3348 = vpack.c.b16 %v3319, %v3318
      %v3349 = vpack.c.b16 %v3321, %v3320
      %v3350 = vpack.c.b16 %v3323, %v3322
      %v3351 = vpack.c.b16 %v3325, %v3324
      %v3352 = vpack.c.b16 %v3327, %v3326
      %v3353 = vpack.c.b16 %v3329, %v3328
      %v3354 = vpack.c.b16 %v3331, %v3330
      %v3355 = vpack.c.b16 %v3333, %v3332
      %v3356 = vpack.c.b16 %v3335, %v3334
      %v3357 = vpack.c.b16 %v3337, %v3336
      %v3358 = vpack.c.b16 %v3339, %v3338
      %v3359 = vpack.c.b16 %v3341, %v3340
      %v3360 = vpack.c.b16 %v3343, %v3342
      %v3361 = vpack.c.b16 %v3345, %v3344
      %v3394 = vunpack.c.l.b16 %v3250
      %v3395 = vunpack.c.l.b16 %v3251
      %v3396 = vunpack.c.l.b16 %v3252
      %v3397 = vunpack.c.l.b16 %v3253
      %v3398 = vunpack.c.l.b16 %v3254
      %v3399 = vunpack.c.l.b16 %v3255
      %v3400 = vunpack.c.l.b16 %v3256
      %v3401 = vunpack.c.l.b16 %v3257
      %v3402 = vunpack.c.l.b16 %v3258
      %v3403 = vunpack.c.l.b16 %v3259
      %v3404 = vunpack.c.l.b16 %v3260
      %v3405 = vunpack.c.l.b16 %v3261
      %v3406 = vunpack.c.l.b16 %v3262
      %v3407 = vunpack.c.l.b16 %v3263
      %v3408 = vunpack.c.l.b16 %v3264
      %v3409 = vunpack.c.l.b16 %v3265
      %v3410 = vpack.c.b16 %v3394, %v3394
      %v3411 = vpack.c.b16 %v3395, %v3395
      %v3412 = vpack.c.b16 %v3396, %v3396
      %v3413 = vpack.c.b16 %v3397, %v3397
      %v3414 = vpack.c.b16 %v3398, %v3398
      %v3415 = vpack.c.b16 %v3399, %v3399
      %v3416 = vpack.c.b16 %v3400, %v3400
      %v3417 = vpack.c.b16 %v3401, %v3401
      %v3418 = vpack.c.b16 %v3402, %v3402
      %v3419 = vpack.c.b16 %v3403, %v3403
      %v3420 = vpack.c.b16 %v3404, %v3404
      %v3421 = vpack.c.b16 %v3405, %v3405
      %v3422 = vpack.c.b16 %v3406, %v3406
      %v3423 = vpack.c.b16 %v3407, %v3407
      %v3424 = vpack.c.b16 %v3408, %v3408
      %v3425 = vpack.c.b16 %v3409, %v3409
      %v3427 = vshrl.u32 %v3346, 16
      %v3429 = vshll.u32 %v3346, 16
      %v3431 = vrot.slane %v3429, 1
      %v3432 = vor.u32 %v3427, %v3431
      %v3434 = vshll.u32 %v3410, 16
      %v3436 = vrot.slane %v3434, 1
      %v3437 = vsel %vm1287, %v3432, %v3436
      %v3439 = vshrl.u32 %v3347, 16
      %v3441 = vshll.u32 %v3347, 16
      %v3443 = vrot.slane %v3441, 1
      %v3444 = vor.u32 %v3439, %v3443
      %v3446 = vshll.u32 %v3411, 16
      %v3448 = vrot.slane %v3446, 1
      %v3449 = vsel %vm1287, %v3444, %v3448
      %v3451 = vshrl.u32 %v3348, 16
      %v3453 = vshll.u32 %v3348, 16
      %v3455 = vrot.slane %v3453, 1
      %v3456 = vor.u32 %v3451, %v3455
      %v3458 = vshll.u32 %v3412, 16
      %v3460 = vrot.slane %v3458, 1
      %v3461 = vsel %vm1287, %v3456, %v3460
      %v3463 = vshrl.u32 %v3349, 16
      %v3465 = vshll.u32 %v3349, 16
      %v3467 = vrot.slane %v3465, 1
      %v3468 = vor.u32 %v3463, %v3467
      %v3470 = vshll.u32 %v3413, 16
      %v3472 = vrot.slane %v3470, 1
      %v3473 = vsel %vm1287, %v3468, %v3472
      %v3475 = vshrl.u32 %v3350, 16
      %v3477 = vshll.u32 %v3350, 16
      %v3479 = vrot.slane %v3477, 1
      %v3480 = vor.u32 %v3475, %v3479
      %v3482 = vshll.u32 %v3414, 16
      %v3484 = vrot.slane %v3482, 1
      %v3485 = vsel %vm1287, %v3480, %v3484
      %v3487 = vshrl.u32 %v3351, 16
      %v3489 = vshll.u32 %v3351, 16
      %v3491 = vrot.slane %v3489, 1
      %v3492 = vor.u32 %v3487, %v3491
      %v3494 = vshll.u32 %v3415, 16
      %v3496 = vrot.slane %v3494, 1
      %v3497 = vsel %vm1287, %v3492, %v3496
      %v3499 = vshrl.u32 %v3352, 16
      %v3501 = vshll.u32 %v3352, 16
      %v3503 = vrot.slane %v3501, 1
      %v3504 = vor.u32 %v3499, %v3503
      %v3506 = vshll.u32 %v3416, 16
      %v3508 = vrot.slane %v3506, 1
      %v3509 = vsel %vm1287, %v3504, %v3508
      %v3511 = vshrl.u32 %v3353, 16
      %v3513 = vshll.u32 %v3353, 16
      %v3515 = vrot.slane %v3513, 1
      %v3516 = vor.u32 %v3511, %v3515
      %v3518 = vshll.u32 %v3417, 16
      %v3520 = vrot.slane %v3518, 1
      %v3521 = vsel %vm1287, %v3516, %v3520
      %v3523 = vshrl.u32 %v3354, 16
      %v3525 = vshll.u32 %v3354, 16
      %v3527 = vrot.slane %v3525, 1
      %v3528 = vor.u32 %v3523, %v3527
      %v3530 = vshll.u32 %v3418, 16
      %v3532 = vrot.slane %v3530, 1
      %v3533 = vsel %vm1287, %v3528, %v3532
      %v3535 = vshrl.u32 %v3355, 16
      %v3537 = vshll.u32 %v3355, 16
      %v3539 = vrot.slane %v3537, 1
      %v3540 = vor.u32 %v3535, %v3539
      %v3542 = vshll.u32 %v3419, 16
      %v3544 = vrot.slane %v3542, 1
      %v3545 = vsel %vm1287, %v3540, %v3544
      %v3547 = vshrl.u32 %v3356, 16
      %v3549 = vshll.u32 %v3356, 16
      %v3551 = vrot.slane %v3549, 1
      %v3552 = vor.u32 %v3547, %v3551
      %v3554 = vshll.u32 %v3420, 16
      %v3556 = vrot.slane %v3554, 1
      %v3557 = vsel %vm1287, %v3552, %v3556
      %v3559 = vshrl.u32 %v3357, 16
      %v3561 = vshll.u32 %v3357, 16
      %v3563 = vrot.slane %v3561, 1
      %v3564 = vor.u32 %v3559, %v3563
      %v3566 = vshll.u32 %v3421, 16
      %v3568 = vrot.slane %v3566, 1
      %v3569 = vsel %vm1287, %v3564, %v3568
      %v3571 = vshrl.u32 %v3358, 16
      %v3573 = vshll.u32 %v3358, 16
      %v3575 = vrot.slane %v3573, 1
      %v3576 = vor.u32 %v3571, %v3575
      %v3578 = vshll.u32 %v3422, 16
      %v3580 = vrot.slane %v3578, 1
      %v3581 = vsel %vm1287, %v3576, %v3580
      %v3583 = vshrl.u32 %v3359, 16
      %v3585 = vshll.u32 %v3359, 16
      %v3587 = vrot.slane %v3585, 1
      %v3588 = vor.u32 %v3583, %v3587
      %v3590 = vshll.u32 %v3423, 16
      %v3592 = vrot.slane %v3590, 1
      %v3593 = vsel %vm1287, %v3588, %v3592
      %v3595 = vshrl.u32 %v3360, 16
      %v3597 = vshll.u32 %v3360, 16
      %v3599 = vrot.slane %v3597, 1
      %v3600 = vor.u32 %v3595, %v3599
      %v3602 = vshll.u32 %v3424, 16
      %v3604 = vrot.slane %v3602, 1
      %v3605 = vsel %vm1287, %v3600, %v3604
      %v3607 = vshrl.u32 %v3361, 16
      %v3609 = vshll.u32 %v3361, 16
      %v3611 = vrot.slane %v3609, 1
      %v3612 = vor.u32 %v3607, %v3611
      %v3614 = vshll.u32 %v3425, 16
      %v3616 = vrot.slane %v3614, 1
      %v3617 = vsel %vm1287, %v3612, %v3616
      %v3650 = vunpack.c.l.b16 %v3266
      %v3651 = vunpack.c.l.b16 %v3267
      %v3652 = vunpack.c.l.b16 %v3268
      %v3653 = vunpack.c.l.b16 %v3269
      %v3654 = vunpack.c.l.b16 %v3270
      %v3655 = vunpack.c.l.b16 %v3271
      %v3656 = vunpack.c.l.b16 %v3272
      %v3657 = vunpack.c.l.b16 %v3273
      %v3658 = vunpack.c.l.b16 %v3274
      %v3659 = vunpack.c.l.b16 %v3275
      %v3660 = vunpack.c.l.b16 %v3276
      %v3661 = vunpack.c.l.b16 %v3277
      %v3662 = vunpack.c.l.b16 %v3278
      %v3663 = vunpack.c.l.b16 %v3279
      %v3664 = vunpack.c.l.b16 %v3280
      %v3665 = vunpack.c.l.b16 %v3281
      %v3666 = vpack.c.b16 %v3315, %v3650
      %v3667 = vpack.c.b16 %v3317, %v3651
      %v3668 = vpack.c.b16 %v3319, %v3652
      %v3669 = vpack.c.b16 %v3321, %v3653
      %v3670 = vpack.c.b16 %v3323, %v3654
      %v3671 = vpack.c.b16 %v3325, %v3655
      %v3672 = vpack.c.b16 %v3327, %v3656
      %v3673 = vpack.c.b16 %v3329, %v3657
      %v3674 = vpack.c.b16 %v3331, %v3658
      %v3675 = vpack.c.b16 %v3333, %v3659
      %v3676 = vpack.c.b16 %v3335, %v3660
      %v3677 = vpack.c.b16 %v3337, %v3661
      %v3678 = vpack.c.b16 %v3339, %v3662
      %v3679 = vpack.c.b16 %v3341, %v3663
      %v3680 = vpack.c.b16 %v3343, %v3664
      %v3681 = vpack.c.b16 %v3345, %v3665
      %v3682 = vrot.slane %v3666, 1
      %v3683 = vrot.slane %v3410, 1
      %v3684 = vsel %vm1544, %v3682, %v3683
      %v3685 = vrot.slane %v3667, 1
      %v3686 = vrot.slane %v3411, 1
      %v3687 = vsel %vm1544, %v3685, %v3686
      %v3688 = vrot.slane %v3668, 1
      %v3689 = vrot.slane %v3412, 1
      %v3690 = vsel %vm1544, %v3688, %v3689
      %v3691 = vrot.slane %v3669, 1
      %v3692 = vrot.slane %v3413, 1
      %v3693 = vsel %vm1544, %v3691, %v3692
      %v3694 = vrot.slane %v3670, 1
      %v3695 = vrot.slane %v3414, 1
      %v3696 = vsel %vm1544, %v3694, %v3695
      %v3697 = vrot.slane %v3671, 1
      %v3698 = vrot.slane %v3415, 1
      %v3699 = vsel %vm1544, %v3697, %v3698
      %v3700 = vrot.slane %v3672, 1
      %v3701 = vrot.slane %v3416, 1
      %v3702 = vsel %vm1544, %v3700, %v3701
      %v3703 = vrot.slane %v3673, 1
      %v3704 = vrot.slane %v3417, 1
      %v3705 = vsel %vm1544, %v3703, %v3704
      %v3706 = vrot.slane %v3674, 1
      %v3707 = vrot.slane %v3418, 1
      %v3708 = vsel %vm1544, %v3706, %v3707
      %v3709 = vrot.slane %v3675, 1
      %v3710 = vrot.slane %v3419, 1
      %v3711 = vsel %vm1544, %v3709, %v3710
      %v3712 = vrot.slane %v3676, 1
      %v3713 = vrot.slane %v3420, 1
      %v3714 = vsel %vm1544, %v3712, %v3713
      %v3715 = vrot.slane %v3677, 1
      %v3716 = vrot.slane %v3421, 1
      %v3717 = vsel %vm1544, %v3715, %v3716
      %v3718 = vrot.slane %v3678, 1
      %v3719 = vrot.slane %v3422, 1
      %v3720 = vsel %vm1544, %v3718, %v3719
      %v3721 = vrot.slane %v3679, 1
      %v3722 = vrot.slane %v3423, 1
      %v3723 = vsel %vm1544, %v3721, %v3722
      %v3724 = vrot.slane %v3680, 1
      %v3725 = vrot.slane %v3424, 1
      %v3726 = vsel %vm1544, %v3724, %v3725
      %v3727 = vrot.slane %v3681, 1
      %v3728 = vrot.slane %v3425, 1
      %v3729 = vsel %vm1544, %v3727, %v3728
      %s3746 = scalar_lea.vmem %s3, 384
      %v3747 = vld [vmem:[%s3746] sm:$0xf]
      %v3748 = vld [vmem:[%s3746 + $0x4] sm:$0xf]
      %v3749 = vld [vmem:[%s3746 + $0x8] sm:$0xf]
      %v3750 = vld [vmem:[%s3746 + $0xc] sm:$0xf]
      %v3751 = vld [vmem:[%s3746 + $0x10] sm:$0xf]
      %v3752 = vld [vmem:[%s3746 + $0x14] sm:$0xf]
      %v3753 = vld [vmem:[%s3746 + $0x18] sm:$0xf]
      %v3754 = vld [vmem:[%s3746 + $0x1c] sm:$0xf]
      %v3755 = vld [vmem:[%s3746 + $0x20] sm:$0xf]
      %v3756 = vld [vmem:[%s3746 + $0x24] sm:$0xf]
      %v3757 = vld [vmem:[%s3746 + $0x28] sm:$0xf]
      %v3758 = vld [vmem:[%s3746 + $0x2c] sm:$0xf]
      %v3759 = vld [vmem:[%s3746 + $0x30] sm:$0xf]
      %v3760 = vld [vmem:[%s3746 + $0x34] sm:$0xf]
      %v3761 = vld [vmem:[%s3746 + $0x38] sm:$0xf]
      %v3762 = vld [vmem:[%s3746 + $0x3c] sm:$0xf]
      %v3763 = vld [vmem:[%s3746 + $0x40] sm:$0xf]
      %v3764 = vld [vmem:[%s3746 + $0x44] sm:$0xf]
      %v3765 = vld [vmem:[%s3746 + $0x48] sm:$0xf]
      %v3766 = vld [vmem:[%s3746 + $0x4c] sm:$0xf]
      %v3767 = vld [vmem:[%s3746 + $0x50] sm:$0xf]
      %v3768 = vld [vmem:[%s3746 + $0x54] sm:$0xf]
      %v3769 = vld [vmem:[%s3746 + $0x58] sm:$0xf]
      %v3770 = vld [vmem:[%s3746 + $0x5c] sm:$0xf]
      %v3771 = vld [vmem:[%s3746 + $0x60] sm:$0xf]
      %v3772 = vld [vmem:[%s3746 + $0x64] sm:$0xf]
      %v3773 = vld [vmem:[%s3746 + $0x68] sm:$0xf]
      %v3774 = vld [vmem:[%s3746 + $0x6c] sm:$0xf]
      %v3775 = vld [vmem:[%s3746 + $0x70] sm:$0xf]
      %v3776 = vld [vmem:[%s3746 + $0x74] sm:$0xf]
      %v3777 = vld [vmem:[%s3746 + $0x78] sm:$0xf]
      %v3778 = vld [vmem:[%s3746 + $0x7c] sm:$0xf]
      %v3779 = vld [vmem:[%s3746 + $0x80] sm:$0xf]
      %v3780 = vld [vmem:[%s3746 + $0x84] sm:$0xf]
      %v3781 = vld [vmem:[%s3746 + $0x88] sm:$0xf]
      %v3782 = vld [vmem:[%s3746 + $0x8c] sm:$0xf]
      %v3783 = vld [vmem:[%s3746 + $0x90] sm:$0xf]
      %v3784 = vld [vmem:[%s3746 + $0x94] sm:$0xf]
      %v3785 = vld [vmem:[%s3746 + $0x98] sm:$0xf]
      %v3786 = vld [vmem:[%s3746 + $0x9c] sm:$0xf]
      %v3787 = vld [vmem:[%s3746 + $0xa0] sm:$0xf]
      %v3788 = vld [vmem:[%s3746 + $0xa4] sm:$0xf]
      %v3789 = vld [vmem:[%s3746 + $0xa8] sm:$0xf]
      %v3790 = vld [vmem:[%s3746 + $0xac] sm:$0xf]
      %v3791 = vld [vmem:[%s3746 + $0xb0] sm:$0xf]
      %v3792 = vld [vmem:[%s3746 + $0xb4] sm:$0xf]
      %v3793 = vld [vmem:[%s3746 + $0xb8] sm:$0xf]
      %v3794 = vld [vmem:[%s3746 + $0xbc] sm:$0xf]
      %v3843 = vunpack.c.l.b16 %v3747
      %v3844 = vunpack.c.l.b16 %v3748
      %v3845 = vunpack.c.l.b16 %v3749
      %v3846 = vunpack.c.l.b16 %v3750
      %v3847 = vunpack.c.l.b16 %v3751
      %v3848 = vunpack.c.l.b16 %v3752
      %v3849 = vunpack.c.l.b16 %v3753
      %v3850 = vunpack.c.l.b16 %v3754
      %v3851 = vunpack.c.l.b16 %v3755
      %v3852 = vunpack.c.l.b16 %v3756
      %v3853 = vunpack.c.l.b16 %v3757
      %v3854 = vunpack.c.l.b16 %v3758
      %v3855 = vunpack.c.l.b16 %v3759
      %v3856 = vunpack.c.l.b16 %v3760
      %v3857 = vunpack.c.l.b16 %v3761
      %v3858 = vunpack.c.l.b16 %v3762
      %v3859 = vunpack.c.l.b16 %v3763
      %v3860 = vunpack.c.l.b16 %v3764
      %v3861 = vunpack.c.l.b16 %v3765
      %v3862 = vunpack.c.l.b16 %v3766
      %v3863 = vunpack.c.l.b16 %v3767
      %v3864 = vunpack.c.l.b16 %v3768
      %v3865 = vunpack.c.l.b16 %v3769
      %v3866 = vunpack.c.l.b16 %v3770
      %v3867 = vunpack.c.l.b16 %v3771
      %v3868 = vunpack.c.l.b16 %v3772
      %v3869 = vunpack.c.l.b16 %v3773
      %v3870 = vunpack.c.l.b16 %v3774
      %v3871 = vunpack.c.l.b16 %v3775
      %v3872 = vunpack.c.l.b16 %v3776
      %v3873 = vunpack.c.l.b16 %v3777
      %v3874 = vunpack.c.l.b16 %v3778
      %v3875 = vunpack.c.l.b16 %v3779
      %v3876 = vunpack.c.l.b16 %v3780
      %v3877 = vunpack.c.l.b16 %v3781
      %v3878 = vunpack.c.l.b16 %v3782
      %v3879 = vunpack.c.l.b16 %v3783
      %v3880 = vunpack.c.l.b16 %v3784
      %v3881 = vunpack.c.l.b16 %v3785
      %v3882 = vunpack.c.l.b16 %v3786
      %v3883 = vunpack.c.l.b16 %v3787
      %v3884 = vunpack.c.l.b16 %v3788
      %v3885 = vunpack.c.l.b16 %v3789
      %v3886 = vunpack.c.l.b16 %v3790
      %v3887 = vunpack.c.l.b16 %v3791
      %v3888 = vunpack.c.l.b16 %v3792
      %v3889 = vunpack.c.l.b16 %v3793
      %v3890 = vunpack.c.l.b16 %v3794
      %v3891 = vpack.c.b16 %v3844, %v3843
      %v3892 = vpack.c.b16 %v3846, %v3845
      %v3893 = vpack.c.b16 %v3848, %v3847
      %v3894 = vpack.c.b16 %v3850, %v3849
      %v3895 = vpack.c.b16 %v3852, %v3851
      %v3896 = vpack.c.b16 %v3854, %v3853
      %v3897 = vpack.c.b16 %v3856, %v3855
      %v3898 = vpack.c.b16 %v3858, %v3857
      %v3899 = vpack.c.b16 %v3860, %v3859
      %v3900 = vpack.c.b16 %v3862, %v3861
      %v3901 = vpack.c.b16 %v3864, %v3863
      %v3902 = vpack.c.b16 %v3866, %v3865
      %v3903 = vpack.c.b16 %v3868, %v3867
      %v3904 = vpack.c.b16 %v3870, %v3869
      %v3905 = vpack.c.b16 %v3872, %v3871
      %v3906 = vpack.c.b16 %v3874, %v3873
      %v3907 = vpack.c.b16 %v3876, %v3875
      %v3908 = vpack.c.b16 %v3878, %v3877
      %v3909 = vpack.c.b16 %v3880, %v3879
      %v3910 = vpack.c.b16 %v3882, %v3881
      %v3911 = vpack.c.b16 %v3884, %v3883
      %v3912 = vpack.c.b16 %v3886, %v3885
      %v3913 = vpack.c.b16 %v3888, %v3887
      %v3914 = vpack.c.b16 %v3890, %v3889
      %3939 = vmatpush.bf16.msra.mxu0 %v3898
      %3940 = vmatpush.bf16.msra.mxu0 %v3897
      %3941 = vmatpush.bf16.msra.mxu0 %v3896
      %3942 = vmatpush.bf16.msra.mxu0 %v3895
      %3943 = vmatpush.bf16.msra.mxu0 %v3894
      %3944 = vmatpush.bf16.msra.mxu0 %v3893
      %3945 = vmatpush.bf16.msra.mxu0 %v3892
      %3946 = vmatpush.bf16.msra.mxu0 %v3891
      %3947 = vmatmul.bf16.gmra.mxu0 %v3346
      %v3948 = vpop.f32.mrf.mxu0
      %v3949 = vadd.f32 0.0, %v3948
      %v3950 = vpop.f32.mrf.mxu0
      %v3951 = vadd.f32 0.0, %v3950
      %3952 = vmatmul.bf16.gmra.mxu0 %v3347
      %v3953 = vpop.f32.mrf.mxu0
      %v3954 = vadd.f32 0.0, %v3953
      %v3955 = vpop.f32.mrf.mxu0
      %v3956 = vadd.f32 0.0, %v3955
      %3957 = vmatmul.bf16.gmra.mxu0 %v3348
      %v3958 = vpop.f32.mrf.mxu0
      %v3959 = vadd.f32 0.0, %v3958
      %v3960 = vpop.f32.mrf.mxu0
      %v3961 = vadd.f32 0.0, %v3960
      %3962 = vmatmul.bf16.gmra.mxu0 %v3349
      %v3963 = vpop.f32.mrf.mxu0
      %v3964 = vadd.f32 0.0, %v3963
      %v3965 = vpop.f32.mrf.mxu0
      %v3966 = vadd.f32 0.0, %v3965
      %3967 = vmatmul.bf16.gmra.mxu0 %v3350
      %v3968 = vpop.f32.mrf.mxu0
      %v3969 = vadd.f32 0.0, %v3968
      %v3970 = vpop.f32.mrf.mxu0
      %v3971 = vadd.f32 0.0, %v3970
      %3972 = vmatmul.bf16.gmra.mxu0 %v3351
      %v3973 = vpop.f32.mrf.mxu0
      %v3974 = vadd.f32 0.0, %v3973
      %v3975 = vpop.f32.mrf.mxu0
      %v3976 = vadd.f32 0.0, %v3975
      %3977 = vmatmul.bf16.gmra.mxu0 %v3352
      %v3978 = vpop.f32.mrf.mxu0
      %v3979 = vadd.f32 0.0, %v3978
      %v3980 = vpop.f32.mrf.mxu0
      %v3981 = vadd.f32 0.0, %v3980
      %3982 = vmatmul.bf16.gmra.mxu0 %v3353
      %v3983 = vpop.f32.mrf.mxu0
      %v3984 = vadd.f32 0.0, %v3983
      %v3985 = vpop.f32.mrf.mxu0
      %v3986 = vadd.f32 0.0, %v3985
      %3987 = vmatmul.bf16.gmra.mxu0 %v3354
      %v3988 = vpop.f32.mrf.mxu0
      %v3989 = vadd.f32 0.0, %v3988
      %v3990 = vpop.f32.mrf.mxu0
      %v3991 = vadd.f32 0.0, %v3990
      %3992 = vmatmul.bf16.gmra.mxu0 %v3355
      %v3993 = vpop.f32.mrf.mxu0
      %v3994 = vadd.f32 0.0, %v3993
      %v3995 = vpop.f32.mrf.mxu0
      %v3996 = vadd.f32 0.0, %v3995
      %3997 = vmatmul.bf16.gmra.mxu0 %v3356
      %v3998 = vpop.f32.mrf.mxu0
      %v3999 = vadd.f32 0.0, %v3998
      %v4000 = vpop.f32.mrf.mxu0
      %v4001 = vadd.f32 0.0, %v4000
      %4002 = vmatmul.bf16.gmra.mxu0 %v3357
      %v4003 = vpop.f32.mrf.mxu0
      %v4004 = vadd.f32 0.0, %v4003
      %v4005 = vpop.f32.mrf.mxu0
      %v4006 = vadd.f32 0.0, %v4005
      %4007 = vmatmul.bf16.gmra.mxu0 %v3358
      %v4008 = vpop.f32.mrf.mxu0
      %v4009 = vadd.f32 0.0, %v4008
      %v4010 = vpop.f32.mrf.mxu0
      %v4011 = vadd.f32 0.0, %v4010
      %4012 = vmatmul.bf16.gmra.mxu0 %v3359
      %v4013 = vpop.f32.mrf.mxu0
      %v4014 = vadd.f32 0.0, %v4013
      %v4015 = vpop.f32.mrf.mxu0
      %v4016 = vadd.f32 0.0, %v4015
      %4017 = vmatmul.bf16.gmra.mxu0 %v3360
      %v4018 = vpop.f32.mrf.mxu0
      %v4019 = vadd.f32 0.0, %v4018
      %v4020 = vpop.f32.mrf.mxu0
      %v4021 = vadd.f32 0.0, %v4020
      %4022 = vmatmul.bf16.gmra.mxu0 %v3361
      %v4023 = vpop.f32.mrf.mxu0
      %v4024 = vadd.f32 0.0, %v4023
      %v4025 = vpop.f32.mrf.mxu0
      %v4026 = vadd.f32 0.0, %v4025
      %4027 = vdwg.mxu0
      %4028 = vmatpush.bf16.msra.mxu0 %v3906
      %4029 = vmatpush.bf16.msra.mxu0 %v3905
      %4030 = vmatpush.bf16.msra.mxu0 %v3904
      %4031 = vmatpush.bf16.msra.mxu0 %v3903
      %4032 = vmatpush.bf16.msra.mxu0 %v3902
      %4033 = vmatpush.bf16.msra.mxu0 %v3901
      %4034 = vmatpush.bf16.msra.mxu0 %v3900
      %4035 = vmatpush.bf16.msra.mxu0 %v3899
      %4036 = vmatmul.bf16.gmra.mxu0 %v3437
      %v4037 = vpop.f32.mrf.mxu0
      %v4038 = vadd.f32 %v3949, %v4037
      %v4039 = vpop.f32.mrf.mxu0
      %v4040 = vadd.f32 %v3951, %v4039
      %4041 = vmatmul.bf16.gmra.mxu0 %v3449
      %v4042 = vpop.f32.mrf.mxu0
      %v4043 = vadd.f32 %v3954, %v4042
      %v4044 = vpop.f32.mrf.mxu0
      %v4045 = vadd.f32 %v3956, %v4044
      %4046 = vmatmul.bf16.gmra.mxu0 %v3461
      %v4047 = vpop.f32.mrf.mxu0
      %v4048 = vadd.f32 %v3959, %v4047
      %v4049 = vpop.f32.mrf.mxu0
      %v4050 = vadd.f32 %v3961, %v4049
      %4051 = vmatmul.bf16.gmra.mxu0 %v3473
      %v4052 = vpop.f32.mrf.mxu0
      %v4053 = vadd.f32 %v3964, %v4052
      %v4054 = vpop.f32.mrf.mxu0
      %v4055 = vadd.f32 %v3966, %v4054
      %4056 = vmatmul.bf16.gmra.mxu0 %v3485
      %v4057 = vpop.f32.mrf.mxu0
      %v4058 = vadd.f32 %v3969, %v4057
      %v4059 = vpop.f32.mrf.mxu0
      %v4060 = vadd.f32 %v3971, %v4059
      %4061 = vmatmul.bf16.gmra.mxu0 %v3497
      %v4062 = vpop.f32.mrf.mxu0
      %v4063 = vadd.f32 %v3974, %v4062
      %v4064 = vpop.f32.mrf.mxu0
      %v4065 = vadd.f32 %v3976, %v4064
      %4066 = vmatmul.bf16.gmra.mxu0 %v3509
      %v4067 = vpop.f32.mrf.mxu0
      %v4068 = vadd.f32 %v3979, %v4067
      %v4069 = vpop.f32.mrf.mxu0
      %v4070 = vadd.f32 %v3981, %v4069
      %4071 = vmatmul.bf16.gmra.mxu0 %v3521
      %v4072 = vpop.f32.mrf.mxu0
      %v4073 = vadd.f32 %v3984, %v4072
      %v4074 = vpop.f32.mrf.mxu0
      %v4075 = vadd.f32 %v3986, %v4074
      %4076 = vmatmul.bf16.gmra.mxu0 %v3533
      %v4077 = vpop.f32.mrf.mxu0
      %v4078 = vadd.f32 %v3989, %v4077
      %v4079 = vpop.f32.mrf.mxu0
      %v4080 = vadd.f32 %v3991, %v4079
      %4081 = vmatmul.bf16.gmra.mxu0 %v3545
      %v4082 = vpop.f32.mrf.mxu0
      %v4083 = vadd.f32 %v3994, %v4082
      %v4084 = vpop.f32.mrf.mxu0
      %v4085 = vadd.f32 %v3996, %v4084
      %4086 = vmatmul.bf16.gmra.mxu0 %v3557
      %v4087 = vpop.f32.mrf.mxu0
      %v4088 = vadd.f32 %v3999, %v4087
      %v4089 = vpop.f32.mrf.mxu0
      %v4090 = vadd.f32 %v4001, %v4089
      %4091 = vmatmul.bf16.gmra.mxu0 %v3569
      %v4092 = vpop.f32.mrf.mxu0
      %v4093 = vadd.f32 %v4004, %v4092
      %v4094 = vpop.f32.mrf.mxu0
      %v4095 = vadd.f32 %v4006, %v4094
      %4096 = vmatmul.bf16.gmra.mxu0 %v3581
      %v4097 = vpop.f32.mrf.mxu0
      %v4098 = vadd.f32 %v4009, %v4097
      %v4099 = vpop.f32.mrf.mxu0
      %v4100 = vadd.f32 %v4011, %v4099
      %4101 = vmatmul.bf16.gmra.mxu0 %v3593
      %v4102 = vpop.f32.mrf.mxu0
      %v4103 = vadd.f32 %v4014, %v4102
      %v4104 = vpop.f32.mrf.mxu0
      %v4105 = vadd.f32 %v4016, %v4104
      %4106 = vmatmul.bf16.gmra.mxu0 %v3605
      %v4107 = vpop.f32.mrf.mxu0
      %v4108 = vadd.f32 %v4019, %v4107
      %v4109 = vpop.f32.mrf.mxu0
      %v4110 = vadd.f32 %v4021, %v4109
      %4111 = vmatmul.bf16.gmra.mxu0 %v3617
      %v4112 = vpop.f32.mrf.mxu0
      %v4113 = vadd.f32 %v4024, %v4112
      %v4114 = vpop.f32.mrf.mxu0
      %v4115 = vadd.f32 %v4026, %v4114
      %4116 = vdwg.mxu0
      %4117 = vmatpush.bf16.msra.mxu0 %v3914
      %4118 = vmatpush.bf16.msra.mxu0 %v3913
      %4119 = vmatpush.bf16.msra.mxu0 %v3912
      %4120 = vmatpush.bf16.msra.mxu0 %v3911
      %4121 = vmatpush.bf16.msra.mxu0 %v3910
      %4122 = vmatpush.bf16.msra.mxu0 %v3909
      %4123 = vmatpush.bf16.msra.mxu0 %v3908
      %4124 = vmatpush.bf16.msra.mxu0 %v3907
      %4125 = vmatmul.bf16.gmra.mxu0 %v3684
      %v4126 = vpop.f32.mrf.mxu0
      %v4127 = vadd.f32 %v4038, %v4126
      %v4128 = vpop.f32.mrf.mxu0
      %v4129 = vadd.f32 %v4040, %v4128
      %4130 = vmatmul.bf16.gmra.mxu0 %v3687
      %v4131 = vpop.f32.mrf.mxu0
      %v4132 = vadd.f32 %v4043, %v4131
      %v4133 = vpop.f32.mrf.mxu0
      %v4134 = vadd.f32 %v4045, %v4133
      %4135 = vmatmul.bf16.gmra.mxu0 %v3690
      %v4136 = vpop.f32.mrf.mxu0
      %v4137 = vadd.f32 %v4048, %v4136
      %v4138 = vpop.f32.mrf.mxu0
      %v4139 = vadd.f32 %v4050, %v4138
      %4140 = vmatmul.bf16.gmra.mxu0 %v3693
      %v4141 = vpop.f32.mrf.mxu0
      %v4142 = vadd.f32 %v4053, %v4141
      %v4143 = vpop.f32.mrf.mxu0
      %v4144 = vadd.f32 %v4055, %v4143
      %4145 = vmatmul.bf16.gmra.mxu0 %v3696
      %v4146 = vpop.f32.mrf.mxu0
      %v4147 = vadd.f32 %v4058, %v4146
      %v4148 = vpop.f32.mrf.mxu0
      %v4149 = vadd.f32 %v4060, %v4148
      %4150 = vmatmul.bf16.gmra.mxu0 %v3699
      %v4151 = vpop.f32.mrf.mxu0
      %v4152 = vadd.f32 %v4063, %v4151
      %v4153 = vpop.f32.mrf.mxu0
      %v4154 = vadd.f32 %v4065, %v4153
      %4155 = vmatmul.bf16.gmra.mxu0 %v3702
      %v4156 = vpop.f32.mrf.mxu0
      %v4157 = vadd.f32 %v4068, %v4156
      %v4158 = vpop.f32.mrf.mxu0
      %v4159 = vadd.f32 %v4070, %v4158
      %4160 = vmatmul.bf16.gmra.mxu0 %v3705
      %v4161 = vpop.f32.mrf.mxu0
      %v4162 = vadd.f32 %v4073, %v4161
      %v4163 = vpop.f32.mrf.mxu0
      %v4164 = vadd.f32 %v4075, %v4163
      %4165 = vmatmul.bf16.gmra.mxu0 %v3708
      %v4166 = vpop.f32.mrf.mxu0
      %v4167 = vadd.f32 %v4078, %v4166
      %v4168 = vpop.f32.mrf.mxu0
      %v4169 = vadd.f32 %v4080, %v4168
      %4170 = vmatmul.bf16.gmra.mxu0 %v3711
      %v4171 = vpop.f32.mrf.mxu0
      %v4172 = vadd.f32 %v4083, %v4171
      %v4173 = vpop.f32.mrf.mxu0
      %v4174 = vadd.f32 %v4085, %v4173
      %4175 = vmatmul.bf16.gmra.mxu0 %v3714
      %v4176 = vpop.f32.mrf.mxu0
      %v4177 = vadd.f32 %v4088, %v4176
      %v4178 = vpop.f32.mrf.mxu0
      %v4179 = vadd.f32 %v4090, %v4178
      %4180 = vmatmul.bf16.gmra.mxu0 %v3717
      %v4181 = vpop.f32.mrf.mxu0
      %v4182 = vadd.f32 %v4093, %v4181
      %v4183 = vpop.f32.mrf.mxu0
      %v4184 = vadd.f32 %v4095, %v4183
      %4185 = vmatmul.bf16.gmra.mxu0 %v3720
      %v4186 = vpop.f32.mrf.mxu0
      %v4187 = vadd.f32 %v4098, %v4186
      %v4188 = vpop.f32.mrf.mxu0
      %v4189 = vadd.f32 %v4100, %v4188
      %4190 = vmatmul.bf16.gmra.mxu0 %v3723
      %v4191 = vpop.f32.mrf.mxu0
      %v4192 = vadd.f32 %v4103, %v4191
      %v4193 = vpop.f32.mrf.mxu0
      %v4194 = vadd.f32 %v4105, %v4193
      %4195 = vmatmul.bf16.gmra.mxu0 %v3726
      %v4196 = vpop.f32.mrf.mxu0
      %v4197 = vadd.f32 %v4108, %v4196
      %v4198 = vpop.f32.mrf.mxu0
      %v4199 = vadd.f32 %v4110, %v4198
      %4200 = vmatmul.bf16.gmra.mxu0 %v3729
      %v4201 = vpop.f32.mrf.mxu0
      %v4202 = vadd.f32 %v4113, %v4201
      %v4203 = vpop.f32.mrf.mxu0
      %v4204 = vadd.f32 %v4115, %v4203
      %4205 = vdwg.mxu0
      %v4206 = vadd.f32 %v3185, %v4127
      %v4207 = vadd.f32 %v3186, %v4129
      %v4208 = vadd.f32 %v3187, %v4132
      %v4209 = vadd.f32 %v3188, %v4134
      %v4210 = vadd.f32 %v3189, %v4137
      %v4211 = vadd.f32 %v3190, %v4139
      %v4212 = vadd.f32 %v3191, %v4142
      %v4213 = vadd.f32 %v3192, %v4144
      %v4214 = vadd.f32 %v3193, %v4147
      %v4215 = vadd.f32 %v3194, %v4149
      %v4216 = vadd.f32 %v3195, %v4152
      %v4217 = vadd.f32 %v3196, %v4154
      %v4218 = vadd.f32 %v3197, %v4157
      %v4219 = vadd.f32 %v3198, %v4159
      %v4220 = vadd.f32 %v3199, %v4162
      %v4221 = vadd.f32 %v3200, %v4164
      %v4222 = vadd.f32 %v3201, %v4167
      %v4223 = vadd.f32 %v3202, %v4169
      %v4224 = vadd.f32 %v3203, %v4172
      %v4225 = vadd.f32 %v3204, %v4174
      %v4226 = vadd.f32 %v3205, %v4177
      %v4227 = vadd.f32 %v3206, %v4179
      %v4228 = vadd.f32 %v3207, %v4182
      %v4229 = vadd.f32 %v3208, %v4184
      %v4230 = vadd.f32 %v3209, %v4187
      %v4231 = vadd.f32 %v3210, %v4189
      %v4232 = vadd.f32 %v3211, %v4192
      %v4233 = vadd.f32 %v3212, %v4194
      %v4234 = vadd.f32 %v3213, %v4197
      %v4235 = vadd.f32 %v3214, %v4199
      %v4236 = vadd.f32 %v3215, %v4202
      %v4237 = vadd.f32 %v3216, %v4204
      %4238 = vst [vmem:[#allocation4] sm:$0xff] %v4206
      %4239 = vst [vmem:[#allocation4 + $0x8] sm:$0xff] %v4207
      %4240 = vst [vmem:[#allocation4 + $0x10] sm:$0xff] %v4208
      %4241 = vst [vmem:[#allocation4 + $0x18] sm:$0xff] %v4209
      %4242 = vst [vmem:[#allocation4 + $0x20] sm:$0xff] %v4210
      %4243 = vst [vmem:[#allocation4 + $0x28] sm:$0xff] %v4211
      %4244 = vst [vmem:[#allocation4 + $0x30] sm:$0xff] %v4212
      %4245 = vst [vmem:[#allocation4 + $0x38] sm:$0xff] %v4213
      %4246 = vst [vmem:[#allocation4 + $0x40] sm:$0xff] %v4214
      %4247 = vst [vmem:[#allocation4 + $0x48] sm:$0xff] %v4215
      %4248 = vst [vmem:[#allocation4 + $0x50] sm:$0xff] %v4216
      %4249 = vst [vmem:[#allocation4 + $0x58] sm:$0xff] %v4217
      %4250 = vst [vmem:[#allocation4 + $0x60] sm:$0xff] %v4218
      %4251 = vst [vmem:[#allocation4 + $0x68] sm:$0xff] %v4219
      %4252 = vst [vmem:[#allocation4 + $0x70] sm:$0xff] %v4220
      %4253 = vst [vmem:[#allocation4 + $0x78] sm:$0xff] %v4221
      %4254 = vst [vmem:[#allocation4 + $0x80] sm:$0xff] %v4222
      %4255 = vst [vmem:[#allocation4 + $0x88] sm:$0xff] %v4223
      %4256 = vst [vmem:[#allocation4 + $0x90] sm:$0xff] %v4224
      %4257 = vst [vmem:[#allocation4 + $0x98] sm:$0xff] %v4225
      %4258 = vst [vmem:[#allocation4 + $0xa0] sm:$0xff] %v4226
      %4259 = vst [vmem:[#allocation4 + $0xa8] sm:$0xff] %v4227
      %4260 = vst [vmem:[#allocation4 + $0xb0] sm:$0xff] %v4228
      %4261 = vst [vmem:[#allocation4 + $0xb8] sm:$0xff] %v4229
      %4262 = vst [vmem:[#allocation4 + $0xc0] sm:$0xff] %v4230
      %4263 = vst [vmem:[#allocation4 + $0xc8] sm:$0xff] %v4231
      %4264 = vst [vmem:[#allocation4 + $0xd0] sm:$0xff] %v4232
      %4265 = vst [vmem:[#allocation4 + $0xd8] sm:$0xff] %v4233
      %4266 = vst [vmem:[#allocation4 + $0xe0] sm:$0xff] %v4234
      %4267 = vst [vmem:[#allocation4 + $0xe8] sm:$0xff] %v4235
      %4268 = vst [vmem:[#allocation4 + $0xf0] sm:$0xff] %v4236
      %4269 = vst [vmem:[#allocation4 + $0xf8] sm:$0xff] %v4237
      %v4270 = vld [vmem:[#allocation4] sm:$0xff]
      %v4271 = vld [vmem:[#allocation4 + $0x8] sm:$0xff]
      %v4272 = vld [vmem:[#allocation4 + $0x10] sm:$0xff]
      %v4273 = vld [vmem:[#allocation4 + $0x18] sm:$0xff]
      %v4274 = vld [vmem:[#allocation4 + $0x20] sm:$0xff]
      %v4275 = vld [vmem:[#allocation4 + $0x28] sm:$0xff]
      %v4276 = vld [vmem:[#allocation4 + $0x30] sm:$0xff]
      %v4277 = vld [vmem:[#allocation4 + $0x38] sm:$0xff]
      %v4278 = vld [vmem:[#allocation4 + $0x40] sm:$0xff]
      %v4279 = vld [vmem:[#allocation4 + $0x48] sm:$0xff]
      %v4280 = vld [vmem:[#allocation4 + $0x50] sm:$0xff]
      %v4281 = vld [vmem:[#allocation4 + $0x58] sm:$0xff]
      %v4282 = vld [vmem:[#allocation4 + $0x60] sm:$0xff]
      %v4283 = vld [vmem:[#allocation4 + $0x68] sm:$0xff]
      %v4284 = vld [vmem:[#allocation4 + $0x70] sm:$0xff]
      %v4285 = vld [vmem:[#allocation4 + $0x78] sm:$0xff]
      %v4286 = vld [vmem:[#allocation4 + $0x80] sm:$0xff]
      %v4287 = vld [vmem:[#allocation4 + $0x88] sm:$0xff]
      %v4288 = vld [vmem:[#allocation4 + $0x90] sm:$0xff]
      %v4289 = vld [vmem:[#allocation4 + $0x98] sm:$0xff]
      %v4290 = vld [vmem:[#allocation4 + $0xa0] sm:$0xff]
      %v4291 = vld [vmem:[#allocation4 + $0xa8] sm:$0xff]
      %v4292 = vld [vmem:[#allocation4 + $0xb0] sm:$0xff]
      %v4293 = vld [vmem:[#allocation4 + $0xb8] sm:$0xff]
      %v4294 = vld [vmem:[#allocation4 + $0xc0] sm:$0xff]
      %v4295 = vld [vmem:[#allocation4 + $0xc8] sm:$0xff]
      %v4296 = vld [vmem:[#allocation4 + $0xd0] sm:$0xff]
      %v4297 = vld [vmem:[#allocation4 + $0xd8] sm:$0xff]
      %v4298 = vld [vmem:[#allocation4 + $0xe0] sm:$0xff]
      %v4299 = vld [vmem:[#allocation4 + $0xe8] sm:$0xff]
      %v4300 = vld [vmem:[#allocation4 + $0xf0] sm:$0xff]
      %v4301 = vld [vmem:[#allocation4 + $0xf8] sm:$0xff]
      %v4302 = vld [vmem:[%s4] sm:$0x1]
      %v4304 = vperm.slane %v4302, 0
      %v4306 = vadd.f32 %v4270, %v4304
      %v4307 = vadd.f32 %v4271, %v4304
      %v4308 = vadd.f32 %v4272, %v4304
      %v4309 = vadd.f32 %v4273, %v4304
      %v4310 = vadd.f32 %v4274, %v4304
      %v4311 = vadd.f32 %v4275, %v4304
      %v4312 = vadd.f32 %v4276, %v4304
      %v4313 = vadd.f32 %v4277, %v4304
      %v4314 = vadd.f32 %v4278, %v4304
      %v4315 = vadd.f32 %v4279, %v4304
      %v4316 = vadd.f32 %v4280, %v4304
      %v4317 = vadd.f32 %v4281, %v4304
      %v4318 = vadd.f32 %v4282, %v4304
      %v4319 = vadd.f32 %v4283, %v4304
      %v4320 = vadd.f32 %v4284, %v4304
      %v4321 = vadd.f32 %v4285, %v4304
      %v4322 = vadd.f32 %v4286, %v4304
      %v4323 = vadd.f32 %v4287, %v4304
      %v4324 = vadd.f32 %v4288, %v4304
      %v4325 = vadd.f32 %v4289, %v4304
      %v4326 = vadd.f32 %v4290, %v4304
      %v4327 = vadd.f32 %v4291, %v4304
      %v4328 = vadd.f32 %v4292, %v4304
      %v4329 = vadd.f32 %v4293, %v4304
      %v4330 = vadd.f32 %v4294, %v4304
      %v4331 = vadd.f32 %v4295, %v4304
      %v4332 = vadd.f32 %v4296, %v4304
      %v4333 = vadd.f32 %v4297, %v4304
      %v4334 = vadd.f32 %v4298, %v4304
      %v4335 = vadd.f32 %v4299, %v4304
      %v4336 = vadd.f32 %v4300, %v4304
      %v4337 = vadd.f32 %v4301, %v4304
      %v4338 = vmax.f32 %v4306, 0.0
      %v4339 = vmax.f32 %v4307, 0.0
      %v4340 = vmax.f32 %v4308, 0.0
      %v4341 = vmax.f32 %v4309, 0.0
      %v4342 = vmax.f32 %v4310, 0.0
      %v4343 = vmax.f32 %v4311, 0.0
      %v4344 = vmax.f32 %v4312, 0.0
      %v4345 = vmax.f32 %v4313, 0.0
      %v4346 = vmax.f32 %v4314, 0.0
      %v4347 = vmax.f32 %v4315, 0.0
      %v4348 = vmax.f32 %v4316, 0.0
      %v4349 = vmax.f32 %v4317, 0.0
      %v4350 = vmax.f32 %v4318, 0.0
      %v4351 = vmax.f32 %v4319, 0.0
      %v4352 = vmax.f32 %v4320, 0.0
      %v4353 = vmax.f32 %v4321, 0.0
      %v4354 = vmax.f32 %v4322, 0.0
      %v4355 = vmax.f32 %v4323, 0.0
      %v4356 = vmax.f32 %v4324, 0.0
      %v4357 = vmax.f32 %v4325, 0.0
      %v4358 = vmax.f32 %v4326, 0.0
      %v4359 = vmax.f32 %v4327, 0.0
      %v4360 = vmax.f32 %v4328, 0.0
      %v4361 = vmax.f32 %v4329, 0.0
      %v4362 = vmax.f32 %v4330, 0.0
      %v4363 = vmax.f32 %v4331, 0.0
      %v4364 = vmax.f32 %v4332, 0.0
      %v4365 = vmax.f32 %v4333, 0.0
      %v4366 = vmax.f32 %v4334, 0.0
      %v4367 = vmax.f32 %v4335, 0.0
      %v4368 = vmax.f32 %v4336, 0.0
      %v4369 = vmax.f32 %v4337, 0.0
      %v4370 = vpack.c.bf16 %v4339, %v4338
      %v4371 = vpack.c.bf16 %v4341, %v4340
      %v4372 = vpack.c.bf16 %v4343, %v4342
      %v4373 = vpack.c.bf16 %v4345, %v4344
      %v4374 = vpack.c.bf16 %v4347, %v4346
      %v4375 = vpack.c.bf16 %v4349, %v4348
      %v4376 = vpack.c.bf16 %v4351, %v4350
      %v4377 = vpack.c.bf16 %v4353, %v4352
      %v4378 = vpack.c.bf16 %v4355, %v4354
      %v4379 = vpack.c.bf16 %v4357, %v4356
      %v4380 = vpack.c.bf16 %v4359, %v4358
      %v4381 = vpack.c.bf16 %v4361, %v4360
      %v4382 = vpack.c.bf16 %v4363, %v4362
      %v4383 = vpack.c.bf16 %v4365, %v4364
      %v4384 = vpack.c.bf16 %v4367, %v4366
      %v4385 = vpack.c.bf16 %v4369, %v4368
      %s4386 = sadd.s32 3, %s356
      %s4387 = smul.addr %s4386, 4
      %s4388 = scalar_lea.vmem [#allocation2], %s4387
      %v4389 = vld [vmem:[%s4388] sm:$0xf]
      %v4390 = vld [vmem:[%s4388 + $0x4] sm:$0xf]
      %v4391 = vld [vmem:[%s4388 + $0x8] sm:$0x1]
      %v4392 = vld [vmem:[%s4388 + $0xc] sm:$0xf]
      %v4393 = vld [vmem:[%s4388 + $0x10] sm:$0xf]
      %v4394 = vld [vmem:[%s4388 + $0x14] sm:$0x1]
      %v4395 = vld [vmem:[%s4388 + $0x18] sm:$0xf]
      %v4396 = vld [vmem:[%s4388 + $0x1c] sm:$0xf]
      %v4397 = vld [vmem:[%s4388 + $0x20] sm:$0x1]
      %v4398 = vld [vmem:[%s4388 + $0x24] sm:$0xf]
      %v4399 = vld [vmem:[%s4388 + $0x28] sm:$0xf]
      %v4400 = vld [vmem:[%s4388 + $0x2c] sm:$0x1]
      %v4401 = vld [vmem:[%s4388 + $0x30] sm:$0xf]
      %v4402 = vld [vmem:[%s4388 + $0x34] sm:$0xf]
      %v4403 = vld [vmem:[%s4388 + $0x38] sm:$0x1]
      %v4404 = vld [vmem:[%s4388 + $0x3c] sm:$0xf]
      %v4405 = vld [vmem:[%s4388 + $0x40] sm:$0xf]
      %v4406 = vld [vmem:[%s4388 + $0x44] sm:$0x1]
      %v4407 = vld [vmem:[%s4388 + $0x48] sm:$0xf]
      %v4408 = vld [vmem:[%s4388 + $0x4c] sm:$0xf]
      %v4409 = vld [vmem:[%s4388 + $0x50] sm:$0x1]
      %v4410 = vld [vmem:[%s4388 + $0x54] sm:$0xf]
      %v4411 = vld [vmem:[%s4388 + $0x58] sm:$0xf]
      %v4412 = vld [vmem:[%s4388 + $0x5c] sm:$0x1]
      %v4413 = vld [vmem:[%s4388 + $0x60] sm:$0xf]
      %v4414 = vld [vmem:[%s4388 + $0x64] sm:$0xf]
      %v4415 = vld [vmem:[%s4388 + $0x68] sm:$0x1]
      %v4416 = vld [vmem:[%s4388 + $0x6c] sm:$0xf]
      %v4417 = vld [vmem:[%s4388 + $0x70] sm:$0xf]
      %v4418 = vld [vmem:[%s4388 + $0x74] sm:$0x1]
      %v4419 = vld [vmem:[%s4388 + $0x78] sm:$0xf]
      %v4420 = vld [vmem:[%s4388 + $0x7c] sm:$0xf]
      %v4421 = vld [vmem:[%s4388 + $0x80] sm:$0x1]
      %v4422 = vld [vmem:[%s4388 + $0x84] sm:$0xf]
      %v4423 = vld [vmem:[%s4388 + $0x88] sm:$0xf]
      %v4424 = vld [vmem:[%s4388 + $0x8c] sm:$0x1]
      %v4425 = vld [vmem:[%s4388 + $0x90] sm:$0xf]
      %v4426 = vld [vmem:[%s4388 + $0x94] sm:$0xf]
      %v4427 = vld [vmem:[%s4388 + $0x98] sm:$0x1]
      %v4428 = vld [vmem:[%s4388 + $0x9c] sm:$0xf]
      %v4429 = vld [vmem:[%s4388 + $0xa0] sm:$0xf]
      %v4430 = vld [vmem:[%s4388 + $0xa4] sm:$0x1]
      %v4431 = vld [vmem:[%s4388 + $0xa8] sm:$0xf]
      %v4432 = vld [vmem:[%s4388 + $0xac] sm:$0xf]
      %v4433 = vld [vmem:[%s4388 + $0xb0] sm:$0x1]
      %v4434 = vld [vmem:[%s4388 + $0xb4] sm:$0xf]
      %v4435 = vld [vmem:[%s4388 + $0xb8] sm:$0xf]
      %v4436 = vld [vmem:[%s4388 + $0xbc] sm:$0x1]
      %vm4437 = vsmask.f32 3328
      %vm4438 = vsmask.f32 7440
      %vm4439 = vmor %vm4437, %vm4438
      %v4441 = vshrl.u32 %v4389, 16
      %v4443 = vrot.slane %v4441, 4
      %v4444 = vshll.u32 %v4389, 16
      %v4446 = vrot.slane %v4444, 5
      %v4447 = vor.u32 %v4443, %v4446
      %v4448 = vrot.slane %v4447, 4
      %v4450 = vshll.u32 %v4390, 16
      %v4452 = vrot.slane %v4450, 5
      %v4453 = vsel %vm4439, %v4448, %v4452
      %v4454 = vshrl.u32 %v4390, 16
      %v4456 = vrot.slane %v4454, 4
      %v4457 = vor.u32 %v4456, %v4452
      %v4458 = vrot.slane %v4457, 4
      %v4460 = vshll.u32 %v4391, 16
      %v4462 = vrot.slane %v4460, 5
      %v4463 = vsel %vm4439, %v4458, %v4462
      %v4465 = vshrl.u32 %v4392, 16
      %v4467 = vrot.slane %v4465, 4
      %v4468 = vshll.u32 %v4392, 16
      %v4470 = vrot.slane %v4468, 5
      %v4471 = vor.u32 %v4467, %v4470
      %v4472 = vrot.slane %v4471, 4
      %v4474 = vshll.u32 %v4393, 16
      %v4476 = vrot.slane %v4474, 5
      %v4477 = vsel %vm4439, %v4472, %v4476
      %v4478 = vshrl.u32 %v4393, 16
      %v4480 = vrot.slane %v4478, 4
      %v4481 = vor.u32 %v4480, %v4476
      %v4482 = vrot.slane %v4481, 4
      %v4484 = vshll.u32 %v4394, 16
      %v4486 = vrot.slane %v4484, 5
      %v4487 = vsel %vm4439, %v4482, %v4486
      %v4489 = vshrl.u32 %v4395, 16
      %v4491 = vrot.slane %v4489, 4
      %v4492 = vshll.u32 %v4395, 16
      %v4494 = vrot.slane %v4492, 5
      %v4495 = vor.u32 %v4491, %v4494
      %v4496 = vrot.slane %v4495, 4
      %v4498 = vshll.u32 %v4396, 16
      %v4500 = vrot.slane %v4498, 5
      %v4501 = vsel %vm4439, %v4496, %v4500
      %v4502 = vshrl.u32 %v4396, 16
      %v4504 = vrot.slane %v4502, 4
      %v4505 = vor.u32 %v4504, %v4500
      %v4506 = vrot.slane %v4505, 4
      %v4508 = vshll.u32 %v4397, 16
      %v4510 = vrot.slane %v4508, 5
      %v4511 = vsel %vm4439, %v4506, %v4510
      %v4513 = vshrl.u32 %v4398, 16
      %v4515 = vrot.slane %v4513, 4
      %v4516 = vshll.u32 %v4398, 16
      %v4518 = vrot.slane %v4516, 5
      %v4519 = vor.u32 %v4515, %v4518
      %v4520 = vrot.slane %v4519, 4
      %v4522 = vshll.u32 %v4399, 16
      %v4524 = vrot.slane %v4522, 5
      %v4525 = vsel %vm4439, %v4520, %v4524
      %v4526 = vshrl.u32 %v4399, 16
      %v4528 = vrot.slane %v4526, 4
      %v4529 = vor.u32 %v4528, %v4524
      %v4530 = vrot.slane %v4529, 4
      %v4532 = vshll.u32 %v4400, 16
      %v4534 = vrot.slane %v4532, 5
      %v4535 = vsel %vm4439, %v4530, %v4534
      %v4537 = vshrl.u32 %v4401, 16
      %v4539 = vrot.slane %v4537, 4
      %v4540 = vshll.u32 %v4401, 16
      %v4542 = vrot.slane %v4540, 5
      %v4543 = vor.u32 %v4539, %v4542
      %v4544 = vrot.slane %v4543, 4
      %v4546 = vshll.u32 %v4402, 16
      %v4548 = vrot.slane %v4546, 5
      %v4549 = vsel %vm4439, %v4544, %v4548
      %v4550 = vshrl.u32 %v4402, 16
      %v4552 = vrot.slane %v4550, 4
      %v4553 = vor.u32 %v4552, %v4548
      %v4554 = vrot.slane %v4553, 4
      %v4556 = vshll.u32 %v4403, 16
      %v4558 = vrot.slane %v4556, 5
      %v4559 = vsel %vm4439, %v4554, %v4558
      %v4561 = vshrl.u32 %v4404, 16
      %v4563 = vrot.slane %v4561, 4
      %v4564 = vshll.u32 %v4404, 16
      %v4566 = vrot.slane %v4564, 5
      %v4567 = vor.u32 %v4563, %v4566
      %v4568 = vrot.slane %v4567, 4
      %v4570 = vshll.u32 %v4405, 16
      %v4572 = vrot.slane %v4570, 5
      %v4573 = vsel %vm4439, %v4568, %v4572
      %v4574 = vshrl.u32 %v4405, 16
      %v4576 = vrot.slane %v4574, 4
      %v4577 = vor.u32 %v4576, %v4572
      %v4578 = vrot.slane %v4577, 4
      %v4580 = vshll.u32 %v4406, 16
      %v4582 = vrot.slane %v4580, 5
      %v4583 = vsel %vm4439, %v4578, %v4582
      %v4585 = vshrl.u32 %v4407, 16
      %v4587 = vrot.slane %v4585, 4
      %v4588 = vshll.u32 %v4407, 16
      %v4590 = vrot.slane %v4588, 5
      %v4591 = vor.u32 %v4587, %v4590
      %v4592 = vrot.slane %v4591, 4
      %v4594 = vshll.u32 %v4408, 16
      %v4596 = vrot.slane %v4594, 5
      %v4597 = vsel %vm4439, %v4592, %v4596
      %v4598 = vshrl.u32 %v4408, 16
      %v4600 = vrot.slane %v4598, 4
      %v4601 = vor.u32 %v4600, %v4596
      %v4602 = vrot.slane %v4601, 4
      %v4604 = vshll.u32 %v4409, 16
      %v4606 = vrot.slane %v4604, 5
      %v4607 = vsel %vm4439, %v4602, %v4606
      %v4609 = vshrl.u32 %v4410, 16
      %v4611 = vrot.slane %v4609, 4
      %v4612 = vshll.u32 %v4410, 16
      %v4614 = vrot.slane %v4612, 5
      %v4615 = vor.u32 %v4611, %v4614
      %v4616 = vrot.slane %v4615, 4
      %v4618 = vshll.u32 %v4411, 16
      %v4620 = vrot.slane %v4618, 5
      %v4621 = vsel %vm4439, %v4616, %v4620
      %v4622 = vshrl.u32 %v4411, 16
      %v4624 = vrot.slane %v4622, 4
      %v4625 = vor.u32 %v4624, %v4620
      %v4626 = vrot.slane %v4625, 4
      %v4628 = vshll.u32 %v4412, 16
      %v4630 = vrot.slane %v4628, 5
      %v4631 = vsel %vm4439, %v4626, %v4630
      %v4633 = vshrl.u32 %v4413, 16
      %v4635 = vrot.slane %v4633, 4
      %v4636 = vshll.u32 %v4413, 16
      %v4638 = vrot.slane %v4636, 5
      %v4639 = vor.u32 %v4635, %v4638
      %v4640 = vrot.slane %v4639, 4
      %v4642 = vshll.u32 %v4414, 16
      %v4644 = vrot.slane %v4642, 5
      %v4645 = vsel %vm4439, %v4640, %v4644
      %v4646 = vshrl.u32 %v4414, 16
      %v4648 = vrot.slane %v4646, 4
      %v4649 = vor.u32 %v4648, %v4644
      %v4650 = vrot.slane %v4649, 4
      %v4652 = vshll.u32 %v4415, 16
      %v4654 = vrot.slane %v4652, 5
      %v4655 = vsel %vm4439, %v4650, %v4654
      %v4657 = vshrl.u32 %v4416, 16
      %v4659 = vrot.slane %v4657, 4
      %v4660 = vshll.u32 %v4416, 16
      %v4662 = vrot.slane %v4660, 5
      %v4663 = vor.u32 %v4659, %v4662
      %v4664 = vrot.slane %v4663, 4
      %v4666 = vshll.u32 %v4417, 16
      %v4668 = vrot.slane %v4666, 5
      %v4669 = vsel %vm4439, %v4664, %v4668
      %v4670 = vshrl.u32 %v4417, 16
      %v4672 = vrot.slane %v4670, 4
      %v4673 = vor.u32 %v4672, %v4668
      %v4674 = vrot.slane %v4673, 4
      %v4676 = vshll.u32 %v4418, 16
      %v4678 = vrot.slane %v4676, 5
      %v4679 = vsel %vm4439, %v4674, %v4678
      %v4681 = vshrl.u32 %v4419, 16
      %v4683 = vrot.slane %v4681, 4
      %v4684 = vshll.u32 %v4419, 16
      %v4686 = vrot.slane %v4684, 5
      %v4687 = vor.u32 %v4683, %v4686
      %v4688 = vrot.slane %v4687, 4
      %v4690 = vshll.u32 %v4420, 16
      %v4692 = vrot.slane %v4690, 5
      %v4693 = vsel %vm4439, %v4688, %v4692
      %v4694 = vshrl.u32 %v4420, 16
      %v4696 = vrot.slane %v4694, 4
      %v4697 = vor.u32 %v4696, %v4692
      %v4698 = vrot.slane %v4697, 4
      %v4700 = vshll.u32 %v4421, 16
      %v4702 = vrot.slane %v4700, 5
      %v4703 = vsel %vm4439, %v4698, %v4702
      %v4705 = vshrl.u32 %v4422, 16
      %v4707 = vrot.slane %v4705, 4
      %v4708 = vshll.u32 %v4422, 16
      %v4710 = vrot.slane %v4708, 5
      %v4711 = vor.u32 %v4707, %v4710
      %v4712 = vrot.slane %v4711, 4
      %v4714 = vshll.u32 %v4423, 16
      %v4716 = vrot.slane %v4714, 5
      %v4717 = vsel %vm4439, %v4712, %v4716
      %v4718 = vshrl.u32 %v4423, 16
      %v4720 = vrot.slane %v4718, 4
      %v4721 = vor.u32 %v4720, %v4716
      %v4722 = vrot.slane %v4721, 4
      %v4724 = vshll.u32 %v4424, 16
      %v4726 = vrot.slane %v4724, 5
      %v4727 = vsel %vm4439, %v4722, %v4726
      %v4729 = vshrl.u32 %v4425, 16
      %v4731 = vrot.slane %v4729, 4
      %v4732 = vshll.u32 %v4425, 16
      %v4734 = vrot.slane %v4732, 5
      %v4735 = vor.u32 %v4731, %v4734
      %v4736 = vrot.slane %v4735, 4
      %v4738 = vshll.u32 %v4426, 16
      %v4740 = vrot.slane %v4738, 5
      %v4741 = vsel %vm4439, %v4736, %v4740
      %v4742 = vshrl.u32 %v4426, 16
      %v4744 = vrot.slane %v4742, 4
      %v4745 = vor.u32 %v4744, %v4740
      %v4746 = vrot.slane %v4745, 4
      %v4748 = vshll.u32 %v4427, 16
      %v4750 = vrot.slane %v4748, 5
      %v4751 = vsel %vm4439, %v4746, %v4750
      %v4753 = vshrl.u32 %v4428, 16
      %v4755 = vrot.slane %v4753, 4
      %v4756 = vshll.u32 %v4428, 16
      %v4758 = vrot.slane %v4756, 5
      %v4759 = vor.u32 %v4755, %v4758
      %v4760 = vrot.slane %v4759, 4
      %v4762 = vshll.u32 %v4429, 16
      %v4764 = vrot.slane %v4762, 5
      %v4765 = vsel %vm4439, %v4760, %v4764
      %v4766 = vshrl.u32 %v4429, 16
      %v4768 = vrot.slane %v4766, 4
      %v4769 = vor.u32 %v4768, %v4764
      %v4770 = vrot.slane %v4769, 4
      %v4772 = vshll.u32 %v4430, 16
      %v4774 = vrot.slane %v4772, 5
      %v4775 = vsel %vm4439, %v4770, %v4774
      %v4777 = vshrl.u32 %v4431, 16
      %v4779 = vrot.slane %v4777, 4
      %v4780 = vshll.u32 %v4431, 16
      %v4782 = vrot.slane %v4780, 5
      %v4783 = vor.u32 %v4779, %v4782
      %v4784 = vrot.slane %v4783, 4
      %v4786 = vshll.u32 %v4432, 16
      %v4788 = vrot.slane %v4786, 5
      %v4789 = vsel %vm4439, %v4784, %v4788
      %v4790 = vshrl.u32 %v4432, 16
      %v4792 = vrot.slane %v4790, 4
      %v4793 = vor.u32 %v4792, %v4788
      %v4794 = vrot.slane %v4793, 4
      %v4796 = vshll.u32 %v4433, 16
      %v4798 = vrot.slane %v4796, 5
      %v4799 = vsel %vm4439, %v4794, %v4798
      %v4801 = vshrl.u32 %v4434, 16
      %v4803 = vrot.slane %v4801, 4
      %v4804 = vshll.u32 %v4434, 16
      %v4806 = vrot.slane %v4804, 5
      %v4807 = vor.u32 %v4803, %v4806
      %v4808 = vrot.slane %v4807, 4
      %v4810 = vshll.u32 %v4435, 16
      %v4812 = vrot.slane %v4810, 5
      %v4813 = vsel %vm4439, %v4808, %v4812
      %v4814 = vshrl.u32 %v4435, 16
      %v4816 = vrot.slane %v4814, 4
      %v4817 = vor.u32 %v4816, %v4812
      %v4818 = vrot.slane %v4817, 4
      %v4820 = vshll.u32 %v4436, 16
      %v4822 = vrot.slane %v4820, 5
      %v4823 = vsel %vm4439, %v4818, %v4822
      %v4856 = vld [vmem:[%s5] sm:$0xf]
      %v4857 = vld [vmem:[%s5 + $0x4] sm:$0xf]
      %v4858 = vld [vmem:[%s5 + $0x8] sm:$0xf]
      %v4859 = vld [vmem:[%s5 + $0xc] sm:$0xf]
      %v4860 = vld [vmem:[%s5 + $0x10] sm:$0xf]
      %v4861 = vld [vmem:[%s5 + $0x14] sm:$0xf]
      %v4862 = vld [vmem:[%s5 + $0x18] sm:$0xf]
      %v4863 = vld [vmem:[%s5 + $0x1c] sm:$0xf]
      %v4864 = vld [vmem:[%s5 + $0x20] sm:$0xf]
      %v4865 = vld [vmem:[%s5 + $0x24] sm:$0xf]
      %v4866 = vld [vmem:[%s5 + $0x28] sm:$0xf]
      %v4867 = vld [vmem:[%s5 + $0x2c] sm:$0xf]
      %v4868 = vld [vmem:[%s5 + $0x30] sm:$0xf]
      %v4869 = vld [vmem:[%s5 + $0x34] sm:$0xf]
      %v4870 = vld [vmem:[%s5 + $0x38] sm:$0xf]
      %v4871 = vld [vmem:[%s5 + $0x3c] sm:$0xf]
      %v4872 = vld [vmem:[%s6] sm:$0x1]
      %v4874 = vperm.slane %v4872, 0
      %v4892 = vunpack.c.l.b16 %v4856
      %v4893 = vunpack.c.l.b16 %v4857
      %v4894 = vunpack.c.l.b16 %v4858
      %v4895 = vunpack.c.l.b16 %v4859
      %v4896 = vunpack.c.l.b16 %v4860
      %v4897 = vunpack.c.l.b16 %v4861
      %v4898 = vunpack.c.l.b16 %v4862
      %v4899 = vunpack.c.l.b16 %v4863
      %v4900 = vunpack.c.l.b16 %v4864
      %v4901 = vunpack.c.l.b16 %v4865
      %v4902 = vunpack.c.l.b16 %v4866
      %v4903 = vunpack.c.l.b16 %v4867
      %v4904 = vunpack.c.l.b16 %v4868
      %v4905 = vunpack.c.l.b16 %v4869
      %v4906 = vunpack.c.l.b16 %v4870
      %v4907 = vunpack.c.l.b16 %v4871
      %v4908 = vpack.c.b16 %v4893, %v4892
      %v4909 = vpack.c.b16 %v4895, %v4894
      %v4910 = vpack.c.b16 %v4897, %v4896
      %v4911 = vpack.c.b16 %v4899, %v4898
      %v4912 = vpack.c.b16 %v4901, %v4900
      %v4913 = vpack.c.b16 %v4903, %v4902
      %v4914 = vpack.c.b16 %v4905, %v4904
      %v4915 = vpack.c.b16 %v4907, %v4906
      %4924 = vmatpush.bf16.msra.mxu0 %v4915
      %4925 = vmatpush.bf16.msra.mxu0 %v4914
      %4926 = vmatpush.bf16.msra.mxu0 %v4913
      %4927 = vmatpush.bf16.msra.mxu0 %v4912
      %4928 = vmatpush.bf16.msra.mxu0 %v4911
      %4929 = vmatpush.bf16.msra.mxu0 %v4910
      %4930 = vmatpush.bf16.msra.mxu0 %v4909
      %4931 = vmatpush.bf16.msra.mxu0 %v4908
      %4932 = vmatmul.bf16.gmra.mxu0 %v4370
      %v4933 = vpop.f32.mrf.mxu0
      %v4934 = vadd.f32 %v4874, %v4933
      %v4935 = vpop.f32.mrf.mxu0
      %v4936 = vadd.f32 %v4874, %v4935
      %4937 = vmatmul.bf16.gmra.mxu0 %v4371
      %v4938 = vpop.f32.mrf.mxu0
      %v4939 = vadd.f32 %v4874, %v4938
      %v4940 = vpop.f32.mrf.mxu0
      %v4941 = vadd.f32 %v4874, %v4940
      %4942 = vmatmul.bf16.gmra.mxu0 %v4372
      %v4943 = vpop.f32.mrf.mxu0
      %v4944 = vadd.f32 %v4874, %v4943
      %v4945 = vpop.f32.mrf.mxu0
      %v4946 = vadd.f32 %v4874, %v4945
      %4947 = vmatmul.bf16.gmra.mxu0 %v4373
      %v4948 = vpop.f32.mrf.mxu0
      %v4949 = vadd.f32 %v4874, %v4948
      %v4950 = vpop.f32.mrf.mxu0
      %v4951 = vadd.f32 %v4874, %v4950
      %4952 = vmatmul.bf16.gmra.mxu0 %v4374
      %v4953 = vpop.f32.mrf.mxu0
      %v4954 = vadd.f32 %v4874, %v4953
      %v4955 = vpop.f32.mrf.mxu0
      %v4956 = vadd.f32 %v4874, %v4955
      %4957 = vmatmul.bf16.gmra.mxu0 %v4375
      %v4958 = vpop.f32.mrf.mxu0
      %v4959 = vadd.f32 %v4874, %v4958
      %v4960 = vpop.f32.mrf.mxu0
      %v4961 = vadd.f32 %v4874, %v4960
      %4962 = vmatmul.bf16.gmra.mxu0 %v4376
      %v4963 = vpop.f32.mrf.mxu0
      %v4964 = vadd.f32 %v4874, %v4963
      %v4965 = vpop.f32.mrf.mxu0
      %v4966 = vadd.f32 %v4874, %v4965
      %4967 = vmatmul.bf16.gmra.mxu0 %v4377
      %v4968 = vpop.f32.mrf.mxu0
      %v4969 = vadd.f32 %v4874, %v4968
      %v4970 = vpop.f32.mrf.mxu0
      %v4971 = vadd.f32 %v4874, %v4970
      %4972 = vmatmul.bf16.gmra.mxu0 %v4378
      %v4973 = vpop.f32.mrf.mxu0
      %v4974 = vadd.f32 %v4874, %v4973
      %v4975 = vpop.f32.mrf.mxu0
      %v4976 = vadd.f32 %v4874, %v4975
      %4977 = vmatmul.bf16.gmra.mxu0 %v4379
      %v4978 = vpop.f32.mrf.mxu0
      %v4979 = vadd.f32 %v4874, %v4978
      %v4980 = vpop.f32.mrf.mxu0
      %v4981 = vadd.f32 %v4874, %v4980
      %4982 = vmatmul.bf16.gmra.mxu0 %v4380
      %v4983 = vpop.f32.mrf.mxu0
      %v4984 = vadd.f32 %v4874, %v4983
      %v4985 = vpop.f32.mrf.mxu0
      %v4986 = vadd.f32 %v4874, %v4985
      %4987 = vmatmul.bf16.gmra.mxu0 %v4381
      %v4988 = vpop.f32.mrf.mxu0
      %v4989 = vadd.f32 %v4874, %v4988
      %v4990 = vpop.f32.mrf.mxu0
      %v4991 = vadd.f32 %v4874, %v4990
      %4992 = vmatmul.bf16.gmra.mxu0 %v4382
      %v4993 = vpop.f32.mrf.mxu0
      %v4994 = vadd.f32 %v4874, %v4993
      %v4995 = vpop.f32.mrf.mxu0
      %v4996 = vadd.f32 %v4874, %v4995
      %4997 = vmatmul.bf16.gmra.mxu0 %v4383
      %v4998 = vpop.f32.mrf.mxu0
      %v4999 = vadd.f32 %v4874, %v4998
      %v5000 = vpop.f32.mrf.mxu0
      %v5001 = vadd.f32 %v4874, %v5000
      %5002 = vmatmul.bf16.gmra.mxu0 %v4384
      %v5003 = vpop.f32.mrf.mxu0
      %v5004 = vadd.f32 %v4874, %v5003
      %v5005 = vpop.f32.mrf.mxu0
      %v5006 = vadd.f32 %v4874, %v5005
      %5007 = vmatmul.bf16.gmra.mxu0 %v4385
      %v5008 = vpop.f32.mrf.mxu0
      %v5009 = vadd.f32 %v4874, %v5008
      %v5010 = vpop.f32.mrf.mxu0
      %v5011 = vadd.f32 %v4874, %v5010
      %5012 = vdwg.mxu0
      %v5013 = vunpack.c.l.bf16 %v4453
      %v5014 = vunpack.c.l.bf16 %v4463
      %v5015 = vunpack.c.l.bf16 %v4477
      %v5016 = vunpack.c.l.bf16 %v4487
      %v5017 = vunpack.c.l.bf16 %v4501
      %v5018 = vunpack.c.l.bf16 %v4511
      %v5019 = vunpack.c.l.bf16 %v4525
      %v5020 = vunpack.c.l.bf16 %v4535
      %v5021 = vunpack.c.l.bf16 %v4549
      %v5022 = vunpack.c.l.bf16 %v4559
      %v5023 = vunpack.c.l.bf16 %v4573
      %v5024 = vunpack.c.l.bf16 %v4583
      %v5025 = vunpack.c.l.bf16 %v4597
      %v5026 = vunpack.c.l.bf16 %v4607
      %v5027 = vunpack.c.l.bf16 %v4621
      %v5028 = vunpack.c.l.bf16 %v4631
      %v5029 = vunpack.c.l.bf16 %v4645
      %v5030 = vunpack.c.l.bf16 %v4655
      %v5031 = vunpack.c.l.bf16 %v4669
      %v5032 = vunpack.c.l.bf16 %v4679
      %v5033 = vunpack.c.l.bf16 %v4693
      %v5034 = vunpack.c.l.bf16 %v4703
      %v5035 = vunpack.c.l.bf16 %v4717
      %v5036 = vunpack.c.l.bf16 %v4727
      %v5037 = vunpack.c.l.bf16 %v4741
      %v5038 = vunpack.c.l.bf16 %v4751
      %v5039 = vunpack.c.l.bf16 %v4765
      %v5040 = vunpack.c.l.bf16 %v4775
      %v5041 = vunpack.c.l.bf16 %v4789
      %v5042 = vunpack.c.l.bf16 %v4799
      %v5043 = vunpack.c.l.bf16 %v4813
      %v5044 = vunpack.c.l.bf16 %v4823
      %v5045 = vadd.f32 %v4934, %v5013
      %v5046 = vadd.f32 %v4936, %v5014
      %v5047 = vadd.f32 %v4939, %v5015
      %v5048 = vadd.f32 %v4941, %v5016
      %v5049 = vadd.f32 %v4944, %v5017
      %v5050 = vadd.f32 %v4946, %v5018
      %v5051 = vadd.f32 %v4949, %v5019
      %v5052 = vadd.f32 %v4951, %v5020
      %v5053 = vadd.f32 %v4954, %v5021
      %v5054 = vadd.f32 %v4956, %v5022
      %v5055 = vadd.f32 %v4959, %v5023
      %v5056 = vadd.f32 %v4961, %v5024
      %v5057 = vadd.f32 %v4964, %v5025
      %v5058 = vadd.f32 %v4966, %v5026
      %v5059 = vadd.f32 %v4969, %v5027
      %v5060 = vadd.f32 %v4971, %v5028
      %v5061 = vadd.f32 %v4974, %v5029
      %v5062 = vadd.f32 %v4976, %v5030
      %v5063 = vadd.f32 %v4979, %v5031
      %v5064 = vadd.f32 %v4981, %v5032
      %v5065 = vadd.f32 %v4984, %v5033
      %v5066 = vadd.f32 %v4986, %v5034
      %v5067 = vadd.f32 %v4989, %v5035
      %v5068 = vadd.f32 %v4991, %v5036
      %v5069 = vadd.f32 %v4994, %v5037
      %v5070 = vadd.f32 %v4996, %v5038
      %v5071 = vadd.f32 %v4999, %v5039
      %v5072 = vadd.f32 %v5001, %v5040
      %v5073 = vadd.f32 %v5004, %v5041
      %v5074 = vadd.f32 %v5006, %v5042
      %v5075 = vadd.f32 %v5009, %v5043
      %v5076 = vadd.f32 %v5011, %v5044
      %v5077 = vmax.f32 %v5045, 0.0
      %v5078 = vmax.f32 %v5046, 0.0
      %v5079 = vmax.f32 %v5047, 0.0
      %v5080 = vmax.f32 %v5048, 0.0
      %v5081 = vmax.f32 %v5049, 0.0
      %v5082 = vmax.f32 %v5050, 0.0
      %v5083 = vmax.f32 %v5051, 0.0
      %v5084 = vmax.f32 %v5052, 0.0
      %v5085 = vmax.f32 %v5053, 0.0
      %v5086 = vmax.f32 %v5054, 0.0
      %v5087 = vmax.f32 %v5055, 0.0
      %v5088 = vmax.f32 %v5056, 0.0
      %v5089 = vmax.f32 %v5057, 0.0
      %v5090 = vmax.f32 %v5058, 0.0
      %v5091 = vmax.f32 %v5059, 0.0
      %v5092 = vmax.f32 %v5060, 0.0
      %v5093 = vmax.f32 %v5061, 0.0
      %v5094 = vmax.f32 %v5062, 0.0
      %v5095 = vmax.f32 %v5063, 0.0
      %v5096 = vmax.f32 %v5064, 0.0
      %v5097 = vmax.f32 %v5065, 0.0
      %v5098 = vmax.f32 %v5066, 0.0
      %v5099 = vmax.f32 %v5067, 0.0
      %v5100 = vmax.f32 %v5068, 0.0
      %v5101 = vmax.f32 %v5069, 0.0
      %v5102 = vmax.f32 %v5070, 0.0
      %v5103 = vmax.f32 %v5071, 0.0
      %v5104 = vmax.f32 %v5072, 0.0
      %v5105 = vmax.f32 %v5073, 0.0
      %v5106 = vmax.f32 %v5074, 0.0
      %v5107 = vmax.f32 %v5075, 0.0
      %v5108 = vmax.f32 %v5076, 0.0
      %v5109 = vpack.c.bf16 %v5077, %v5077
      %v5110 = vpack.c.bf16 %v5078, %v5078
      %v5111 = vpack.c.bf16 %v5079, %v5079
      %v5112 = vpack.c.bf16 %v5080, %v5080
      %v5113 = vpack.c.bf16 %v5081, %v5081
      %v5114 = vpack.c.bf16 %v5082, %v5082
      %v5115 = vpack.c.bf16 %v5083, %v5083
      %v5116 = vpack.c.bf16 %v5084, %v5084
      %v5117 = vpack.c.bf16 %v5085, %v5085
      %v5118 = vpack.c.bf16 %v5086, %v5086
      %v5119 = vpack.c.bf16 %v5087, %v5087
      %v5120 = vpack.c.bf16 %v5088, %v5088
      %v5121 = vpack.c.bf16 %v5089, %v5089
      %v5122 = vpack.c.bf16 %v5090, %v5090
      %v5123 = vpack.c.bf16 %v5091, %v5091
      %v5124 = vpack.c.bf16 %v5092, %v5092
      %v5125 = vpack.c.bf16 %v5093, %v5093
      %v5126 = vpack.c.bf16 %v5094, %v5094
      %v5127 = vpack.c.bf16 %v5095, %v5095
      %v5128 = vpack.c.bf16 %v5096, %v5096
      %v5129 = vpack.c.bf16 %v5097, %v5097
      %v5130 = vpack.c.bf16 %v5098, %v5098
      %v5131 = vpack.c.bf16 %v5099, %v5099
      %v5132 = vpack.c.bf16 %v5100, %v5100
      %v5133 = vpack.c.bf16 %v5101, %v5101
      %v5134 = vpack.c.bf16 %v5102, %v5102
      %v5135 = vpack.c.bf16 %v5103, %v5103
      %v5136 = vpack.c.bf16 %v5104, %v5104
      %v5137 = vpack.c.bf16 %v5105, %v5105
      %v5138 = vpack.c.bf16 %v5106, %v5106
      %v5139 = vpack.c.bf16 %v5107, %v5107
      %v5140 = vpack.c.bf16 %v5108, %v5108
      %5141 = vst [vmem:[%s256] sm:$0xf] %v5109
      %5142 = vst [vmem:[%s256 + $0x4] sm:$0xf] %v5110
      %5143 = vst [vmem:[%s256 + $0x8] sm:$0xf] %v5111
      %5144 = vst [vmem:[%s256 + $0xc] sm:$0xf] %v5112
      %5145 = vst [vmem:[%s256 + $0x10] sm:$0xf] %v5113
      %5146 = vst [vmem:[%s256 + $0x14] sm:$0xf] %v5114
      %5147 = vst [vmem:[%s256 + $0x18] sm:$0xf] %v5115
      %5148 = vst [vmem:[%s256 + $0x1c] sm:$0xf] %v5116
      %5149 = vst [vmem:[%s256 + $0x20] sm:$0xf] %v5117
      %5150 = vst [vmem:[%s256 + $0x24] sm:$0xf] %v5118
      %5151 = vst [vmem:[%s256 + $0x28] sm:$0xf] %v5119
      %5152 = vst [vmem:[%s256 + $0x2c] sm:$0xf] %v5120
      %5153 = vst [vmem:[%s256 + $0x30] sm:$0xf] %v5121
      %5154 = vst [vmem:[%s256 + $0x34] sm:$0xf] %v5122
      %5155 = vst [vmem:[%s256 + $0x38] sm:$0xf] %v5123
      %5156 = vst [vmem:[%s256 + $0x3c] sm:$0xf] %v5124
      %5157 = vst [vmem:[%s256 + $0x40] sm:$0xf] %v5125
      %5158 = vst [vmem:[%s256 + $0x44] sm:$0xf] %v5126
      %5159 = vst [vmem:[%s256 + $0x48] sm:$0xf] %v5127
      %5160 = vst [vmem:[%s256 + $0x4c] sm:$0xf] %v5128
      %5161 = vst [vmem:[%s256 + $0x50] sm:$0xf] %v5129
      %5162 = vst [vmem:[%s256 + $0x54] sm:$0xf] %v5130
      %5163 = vst [vmem:[%s256 + $0x58] sm:$0xf] %v5131
      %5164 = vst [vmem:[%s256 + $0x5c] sm:$0xf] %v5132
      %5165 = vst [vmem:[%s256 + $0x60] sm:$0xf] %v5133
      %5166 = vst [vmem:[%s256 + $0x64] sm:$0xf] %v5134
      %5167 = vst [vmem:[%s256 + $0x68] sm:$0xf] %v5135
      %5168 = vst [vmem:[%s256 + $0x6c] sm:$0xf] %v5136
      %5169 = vst [vmem:[%s256 + $0x70] sm:$0xf] %v5137
      %5170 = vst [vmem:[%s256 + $0x74] sm:$0xf] %v5138
      %5171 = vst [vmem:[%s256 + $0x78] sm:$0xf] %v5139
      %5172 = vst [vmem:[%s256 + $0x7c] sm:$0xf] %v5140
      %s5173 = smul.u32 16, %s23
      %p5174 = scmp.lt.s32.totalorder %s22, 1
      %s5175 = scalar_select %p5174, %s22, 1
      %p5176 = scmp.lt.s32.totalorder %s5173, 15
      %s5177 = scalar_select %p5176, %s5173, 15
      %s5178 = smul.addr %s5177, 2
      %s5179 = smul.addr %s5175, 32
      %s5180 = sadd.s32 %s5178, %s5179
      %s5181 = smul.addr %s5180, 4
      %s5182 = scalar_lea.vmem %s7, %s5181
      // Predicated region
      $region72: #{bottleneck_forward.1} parent=43 // pred_check
        %p5183 = pneg %p176
      $region73: #{bottleneck_forward.1} parent=43 // pred_check_branch
        %5185 = sbr.rel (%p5183) target = $region75
      $region74: #{bottleneck_forward.1} parent=43 // pred_region
        %s5186 = smul.u32 16, %s23
      $region75: #{bottleneck_forward.1} parent=43 // pred_fallthru
        _
    $region44: #{bottleneck_forward.1} parent=5 // pred_fallthru
      _
    %p5187 = scmp.le.s32.totalorder 2, %s13
    // Predicated region
    $region76: #{bottleneck_forward.1} parent=5 // pred_check
      %p5188 = pneg %p5187
    $region77: #{bottleneck_forward.1} parent=5 // pred_check_branch
      %5190 = sbr.rel (%p5188) target = $region79
    $region78: #{bottleneck_forward.1} parent=5 // pred_region
      %s5191 = ssub.s32 %s13, 2
      // Predicated region
      $region80: #{bottleneck_forward.1} parent=78 // pred_check
        %p5192 = pneg %p182
      $region81: #{bottleneck_forward.1} parent=78 // pred_check_branch
        %5194 = sbr.rel (%p5192) target = $region83
      $region82: #{bottleneck_forward.1} parent=78 // pred_region
        %s5195 = smul.u32 16, %s25
        %p5196 = scmp.lt.s32.totalorder %s24, 1
        %s5197 = scalar_select %p5196, %s24, 1
        %p5198 = scmp.lt.s32.totalorder %s5195, 15
        %s5199 = scalar_select %p5198, %s5195, 15
        %s5200 = smul.addr %s5199, 2
        %s5201 = smul.addr %s5197, 32
        %s5202 = sadd.s32 %s5200, %s5201
        %s5203 = smul.addr %s5202, 4
        %s5204 = scalar_lea.vmem %s7, %s5203
      $region83: #{bottleneck_forward.1} parent=78 // pred_fallthru
        _
    $region79: #{bottleneck_forward.1} parent=5 // pred_fallthru
      _
  $region6: #{bottleneck_forward.1} parent=0 // loop_footer
    %s17 = sadd.s32 1, %s13
  $region7: #{bottleneck_forward.1} parent=0 // loop_footer_branch
    %12 = sbr.rel target = $region3
  $region8: #{bottleneck_forward.1} parent=0 // loop_exit
    _
  %5205 = vsyncmov [#allocation5]
  %s5206 = vpop.sfrf %5205
  %p5207 = scmp.eq.s32.totalorder %s5206, 0
  %p5208 = pneg %p5207
  %5210 = shalt.err (%p5208)
  %s5211 = scalar_lea.sflag [#allocation5], 1
  %5212 = vsyncmov %s5211
  %s5213 = vpop.sfrf %5212
  %p5214 = scmp.eq.s32.totalorder %s5213, 0
  %p5215 = pneg %p5214
  %5217 = shalt.err (%p5215)

</llo_original>
